<compile_context>
chip_gen: v7x
topology: tpu7x:2x2x1
jax: 0.10.0
libtpu: 0.0.40
codegen_flags: <defaults>
</compile_context>

<pallas_src>
import math
from functools import partial

import jax
import jax.numpy as jnp
from jax import lax
from jax.experimental import pallas as pl
from jax.experimental.pallas import tpu as pltpu


# ---------------------------------------------------------------------------
# Pallas kernel
# ---------------------------------------------------------------------------
def _bottle2neck_kernel(nums, width, use_tpu_roll,
                        x_ref, w1p_ref, b1p_ref, cwp_ref, b2p_ref,
                        w3p_ref, b3p_ref, sew1_ref, seb1_ref, sew2_ref,
                        seb2_ref, o_ref):
    f32, bf16 = jnp.float32, jnp.bfloat16
    G, H, W2, C2 = x_ref.shape          # (G images, H, W//2, 2*Cin), pixel-pair packed
    w2c = 2 * width                     # packed per-branch channels
    M = G * H * W2                      # folded matmul rows
    Cout2 = w3p_ref.shape[-1]           # packed output channels (2*Cout)

    # ---- conv1 (1x1, bn1 scale folded): ONE fused matmul over all splits ----
    xb = x_ref[...].reshape(M, C2).astype(bf16)
    out1 = jnp.dot(xb, w1p_ref[...], preferred_element_type=f32)
    out1 = jnp.maximum(out1 + b1p_ref[...], 0.0)          # (M, scale*w2c)

    # ---- hoisted constants (masks were previously rebuilt 6x per branch) ----
    p_iota = lax.broadcasted_iota(jnp.int32, (G, H, W2, w2c), 2)
    keep = {-1: p_iota >= 1, 1: p_iota <= W2 - 2}
    zrow = jnp.zeros((G, 1, W2, w2c), f32)

    def shift_w(t, dp):
        # out[..., p, :] = t[..., p + dp, :] with zeros outside [0, W2).
        if dp == 0:
            return t
        if use_tpu_roll:
            rolled = pltpu.roll(t, (-dp) % W2, 2)          # XLU sublane rotate
        else:
            rolled = jnp.roll(t, -dp, axis=2)              # fallback path
        return jnp.where(keep[dp], rolled, 0.0)

    def branch_conv3x3(sp, i):
        # 3x3 conv for branch i as 9 accumulated tap matmuls (f32 accumulator);
        # no lane-misaligned im2col patch is ever materialized.  bn2 scale is
        # folded into cwp; bias + relu applied at the end.
        sp4 = sp.reshape(G, H, W2, w2c)
        padh = jnp.concatenate([zrow, sp4, zrow], axis=1)  # per-image H pad (major dim)
        acc = None
        t = 0
        for dy in range(3):                                # H shift: major-dim slice
            hs = padh[:, dy:dy + H]
            for dp in (-1, 0, 1):                          # W shift: roll + mask
                slab = shift_w(hs, dp).reshape(M, w2c).astype(bf16)
                d = jnp.dot(slab, cwp_ref[i, t], preferred_element_type=f32)
                acc = d if acc is None else acc + d
                t += 1
        return jnp.maximum(acc + b2p_ref[i], 0.0)

    # ---- Res2Net branches; conv3 (1x1, bn3 folded) accumulated incrementally
    y = None
    sp = None
    for i in range(nums):
        si = out1[:, i * w2c:(i + 1) * w2c]                # static lane slice
        sp = si if i == 0 else sp + si
        sp = branch_conv3x3(sp, i)
        d = jnp.dot(sp.astype(bf16), w3p_ref[i], preferred_element_type=f32)
        y = d if y is None else y + d
    last = out1[:, nums * w2c:]                            # scale != 1 pass-through split
    y = y + jnp.dot(last.astype(bf16), w3p_ref[nums], preferred_element_type=f32)
    y = y + b3p_ref[...]

    # ---- SE: per-image global avg-pool + 2 FCs; packed weights emit the gate
    yi = y.reshape(G, H * W2, Cout2)
    pooled = jnp.mean(yi, axis=1)                          # (G, 2*Cout)
    h = jnp.dot(pooled.astype(bf16), sew1_ref[...], preferred_element_type=f32)
    h = jnp.maximum(h + seb1_ref[...], 0.0)
    g = jnp.dot(h.astype(bf16), sew2_ref[...], preferred_element_type=f32)
    g = jax.nn.sigmoid(g + seb2_ref[...])                  # (G, 2*Cout)

    # ---- SE scale + residual (re-read x from VMEM: short live range) + relu -
    xres = x_ref[...].reshape(G, H * W2, C2)
    out = jnp.maximum(yi * g[:, None, :] + xres, 0.0)
    o_ref[...] = out.reshape(G, H, W2, C2)


# ---------------------------------------------------------------------------
# Batch grouping: fold batch into M on single-TC chips, parallel grid on v7x
# ---------------------------------------------------------------------------
def _default_images_per_step(B):
    try:
        kind = jax.devices()[0].device_kind.lower()
    except Exception:
        kind = ""
    single_tc = ("v5e" in kind) or ("v5 lite" in kind) or ("v6" in kind)
    if single_tc:
        return B          # one grid step; batch folded into the matmul M dim
    return 1              # dual-TC v7x / unknown: batch-parallel grid steps
    # TODO(synk): if B-per-chip == 1 on v7x, split H across a 2-step parallel
    # grid (with a 1-row halo) so the second TensorCore is not idle.


# ---------------------------------------------------------------------------
# Wrapper (NCHW in / NCHW out, matches the PyTorch module)
# ---------------------------------------------------------------------------
def bottle2neck_forward(x_nchw, pk, *, nums, width, use_tpu_roll=True,
                        images_per_step=None):
    B, Cin, H, W = x_nchw.shape
    assert W % 2 == 0, "pixel-pair packed layout needs an even spatial width"
    C2 = 2 * Cin
    assert pk["w3p"].shape[-1] == C2, "residual needs inplanes == planes*expansion"
    W2 = W // 2

    if images_per_step is None:
        images_per_step = _default_images_per_step(B)
    G = images_per_step
    assert B % G == 0
    steps = B // G

    # TODO(synk): keep activations in this packed NHWC layout across consecutive
    # Bottle2neck blocks to drop the per-block NCHW<->NHWC transposes (each is a
    # full HBM round trip of the activation).
    x_nhwc = jnp.transpose(x_nchw, (0, 2, 3, 1)).astype(jnp.float32)
    xp = x_nhwc.reshape(B, H, W2, C2)   # free reinterpretation: lane-dense view

    weights = (pk["w1p"], pk["b1p"], pk["cwp"], pk["b2p"],
               pk["w3p"], pk["b3p"], pk["sew1p"], pk["seb1"],
               pk["sew2p"], pk["seb2p"])

    def whole(a):   # VMEM-resident whole-array block, constant across the grid
        return pl.BlockSpec(a.shape, lambda s, n=a.ndim: (0,) * n)

    grid_spec = pltpu.PrefetchScalarGridSpec(
        num_scalar_prefetch=0,
        grid=(steps,),
        in_specs=[pl.BlockSpec((G, H, W2, C2), lambda s: (s, 0, 0, 0))]
                 + [whole(w) for w in weights],
        out_specs=pl.BlockSpec((G, H, W2, C2), lambda s: (s, 0, 0, 0)),
    )

    out_p = pl.pallas_call(
        partial(_bottle2neck_kernel, nums, width, use_tpu_roll),
        out_shape=jax.ShapeDtypeStruct((B, H, W2, C2), jnp.float32),
        grid_spec=grid_spec,
        compiler_params=pltpu.CompilerParams(
            dimension_semantics=("parallel",),        # megacore on v7x
            vmem_limit_bytes=32 * 1024 * 1024),
    )(xp, *weights)

    out_nhwc = out_p.reshape(B, H, W, Cin)
    return jnp.transpose(out_nhwc, (0, 3, 1, 2))


# ---------------------------------------------------------------------------
# pltpu.roll probe: validate the EXACT shifts/axis/rank the kernel uses
# ---------------------------------------------------------------------------
def _probe_pltpu_roll(shape, axis, shifts):
    x = jnp.arange(math.prod(shape), dtype=jnp.float32).reshape(shape)
    try:
        for s in shifts:
            def k(x_ref, o_ref, s=s):
                o_ref[...] = pltpu.roll(x_ref[...], s, axis)
            y = pl.pallas_call(k, out_shape=jax.ShapeDtypeStruct(shape, x.dtype))(x)
            y = jax.block_until_ready(y)
            if not bool(jnp.array_equal(y, jnp.roll(x, s, axis=axis))):
                return False
        return True
    except Exception:
        return False    # kernel falls back to a slice-based shift


# ---------------------------------------------------------------------------
# Parameter construction (module-shaped) and packing (kernel-shaped)
# ---------------------------------------------------------------------------
def make_params(key, inplanes, planes, baseWidth=26, scale=4, reduction=8):
    expansion = 4
    width = int(math.floor(planes * (baseWidth / 64.0)))
    WS = width * scale
    nums = 1 if scale == 1 else scale - 1
    Cout = planes * expansion
    eps = 1e-5
    ks = list(jax.random.split(key, 32))
    ki = iter(range(32))

    def nrm(shape, std=0.1):
        return std * jax.random.normal(ks[next(ki)], shape, jnp.float32)

    def bn_fold(c):   # eval-mode BN -> per-channel (scale, bias)
        gamma = 1.0 + nrm((c,))
        beta = nrm((c,))
        mean = nrm((c,), 0.05)
        var = 1.0 + jnp.abs(nrm((c,)))
        s = gamma / jnp.sqrt(var + eps)
        b = beta - mean * s
        return s, b

    w1 = nrm((inplanes, WS))                      # 1x1 conv as (Cin, Cout)
    bn1_s, bn1_b = bn_fold(WS)
    convw = nrm((nums, 3, 3, width, width))       # HWIO per branch
    bn2 = [bn_fold(width) for _ in range(nums)]
    bn2_s = jnp.stack([s for s, _ in bn2])
    bn2_b = jnp.stack([b for _, b in bn2])
    w3 = nrm((WS, Cout))
    bn3_s, bn3_b = bn_fold(Cout)
    se_w1 = nrm((Cout, Cout // reduction))
    se_b1 = nrm((Cout // reduction,))
    se_w2 = nrm((Cout // reduction, Cout))
    se_b2 = nrm((Cout,))

    params = dict(w1=w1, bn1_s=bn1_s, bn1_b=bn1_b, convw=convw,
                  bn2_s=bn2_s, bn2_b=bn2_b, w3=w3, bn3_s=bn3_s, bn3_b=bn3_b,
                  se_w1=se_w1, se_b1=se_b1, se_w2=se_w2, se_b2=se_b2)
    return params, width, nums


def pack_params(p, *, inplanes, planes, width, scale, nums):
    """Fold BN scales into weights and expand everything to the pixel-pair
    packed layout [even-pixel channels | odd-pixel channels]; weights -> bf16."""
    f32, bf16 = jnp.float32, jnp.bfloat16
    w, w2 = width, 2 * width
    Cin, Cout = inplanes, planes * 4
    assert Cin == Cout, "residual path assumes inplanes == planes*expansion"

    # conv1 (1x1) + bn1 scale: ALL splits packed along N for one fused matmul.
    w1f = p["w1"] * p["bn1_s"][None, :]
    w1p = jnp.zeros((2 * Cin, scale * w2), f32)
    b1p = jnp.zeros((1, scale * w2), f32)
    for i in range(scale):
        blk = w1f[:, i * w:(i + 1) * w]
        bb = p["bn1_b"][i * w:(i + 1) * w]
        w1p = w1p.at[:Cin, i * w2:i * w2 + w].set(blk)        # even-pixel half
        w1p = w1p.at[Cin:, i * w2 + w:(i + 1) * w2].set(blk)  # odd-pixel half
        b1p = b1p.at[0, i * w2:i * w2 + w].set(bb)
        b1p = b1p.at[0, i * w2 + w:(i + 1) * w2].set(bb)

    # 3x3 branch convs: per-tap (dy, dp) weight blocks over the packed layout,
    # bn2 scale folded in; shaped (nums, 9, 2w, 2w) for cheap major-dim indexing.
    Kf = p["convw"] * p["bn2_s"][:, None, None, None, :]      # (nums,3,3,w,w)
    cwp = jnp.zeros((nums, 3, 3, 2, w, 2, w), f32)            # [dy, dp, in_half, ci, out_half, co]
    for dy in range(3):
        # even output pixel 2p:  dx=-1 <- (dp=-1, odd), dx=0 <- (dp=0, even), dx=+1 <- (dp=0, odd)
        cwp = cwp.at[:, dy, 0, 1, :, 0, :].set(Kf[:, dy, 0])
        cwp = cwp.at[:, dy, 1, 0, :, 0, :].set(Kf[:, dy, 1])
        cwp = cwp.at[:, dy, 1, 1, :, 0, :].set(Kf[:, dy, 2])
        # odd output pixel 2p+1: dx=-1 <- (dp=0, even), dx=0 <- (dp=0, odd), dx=+1 <- (dp=+1, even)
        cwp = cwp.at[:, dy, 1, 0, :, 1, :].set(Kf[:, dy, 0])
        cwp = cwp.at[:, dy, 1, 1, :, 1, :].set(Kf[:, dy, 1])
        cwp = cwp.at[:, dy, 2, 0, :, 1, :].set(Kf[:, dy, 2])
    cwp = cwp.reshape(nums, 9, w2, w2)
    b2p = jnp.concatenate([p["bn2_b"], p["bn2_b"]], axis=-1)[:, None, :]

    # conv3 (1x1) + bn3 scale: per-split blocks (scale, 2w, 2*Cout) for the
    # incremental in-kernel accumulation (major-dim indexed, no sublane slices).
    w3f = (p["w3"] * p["bn3_s"][None, :]).reshape(scale, w, Cout)
    w3p = jnp.zeros((scale, 2, w, 2, Cout), f32)
    w3p = w3p.at[:, 0, :, 0, :].set(w3f)
    w3p = w3p.at[:, 1, :, 1, :].set(w3f)
    w3p = w3p.reshape(scale, w2, 2 * Cout)
    b3p = jnp.concatenate([p["bn3_b"], p["bn3_b"]])[None, :]

    # SE: fc1 averages the even/odd halves (0.5x stacked weight); fc2 emits the
    # gate already tiled to the packed 2*Cout layout.
    sew1p = 0.5 * jnp.concatenate([p["se_w1"], p["se_w1"]], axis=0)
    seb1 = p["se_b1"][None, :]
    sew2p = jnp.concatenate([p["se_w2"], p["se_w2"]], axis=1)
    seb2p = jnp.concatenate([p["se_b2"], p["se_b2"]])[None, :]

    return dict(
        w1p=w1p.astype(bf16), b1p=b1p,
        cwp=cwp.astype(bf16), b2p=b2p,
        w3p=w3p.astype(bf16), b3p=b3p,
        sew1p=sew1p.astype(bf16), seb1=seb1,
        sew2p=sew2p.astype(bf16), seb2p=seb2p,
    )


# ---------------------------------------------------------------------------
# Pure-JAX reference (NHWC), matching the kernel's bf16 MXU operand precision
# ---------------------------------------------------------------------------
def ref_forward_nhwc(x, p, *, nums, width):
    f32, bf16 = jnp.float32, jnp.bfloat16

    def dot16(a, b):
        return jnp.dot(a.astype(bf16), b.astype(bf16), preferred_element_type=f32)

    def conv1x1(t, w):
        B, H, W, C = t.shape
        return dot16(t.reshape(-1, C), w).reshape(B, H, W, -1)

    out = jnp.maximum(conv1x1(x, p["w1"]) * p["bn1_s"] + p["bn1_b"], 0.0)
    branches = []
    sp = None
    for i in range(nums):
        spx_i = out[..., i * width:(i + 1) * width]
        sp = spx_i if i == 0 else sp + spx_i
        sp = lax.conv_general_dilated(
            sp.astype(bf16), p["convw"][i].astype(bf16), (1, 1), "SAME",
            dimension_numbers=("NHWC", "HWIO", "NHWC"),
            preferred_element_type=f32)
        sp = jnp.maximum(sp * p["bn2_s"][i] + p["bn2_b"][i], 0.0)
        branches.append(sp)
    branches.append(out[..., nums * width:])
    cat = jnp.concatenate(branches, axis=-1)
    y = conv1x1(cat, p["w3"]) * p["bn3_s"] + p["bn3_b"]
    pooled = y.mean(axis=(1, 2))
    h = jnp.maximum(dot16(pooled, p["se_w1"]) + p["se_b1"], 0.0)
    s = jax.nn.sigmoid(dot16(h, p["se_w2"]) + p["se_b2"])
    y = y * s[:, None, None, :]
    return jnp.maximum(y + x, 0.0)


# ---------------------------------------------------------------------------
if __name__ == "__main__":
    key = jax.random.PRNGKey(0)
    kx, kp = jax.random.split(key)

    B, inplanes, H, W = 2, 64, 16, 16
    planes, baseWidth, scale, reduction = 16, 26, 4, 8

    params, width, nums = make_params(kp, inplanes, planes, baseWidth, scale,
                                      reduction)
    pk = pack_params(params, inplanes=inplanes, planes=planes, width=width,
                     scale=scale, nums=nums)
    x_nchw = jax.random.normal(kx, (B, inplanes, H, W), jnp.float32)

    G = _default_images_per_step(B)
    use_tpu_roll = _probe_pltpu_roll((G, H, W // 2, 2 * width), axis=2,
                                     shifts=(1, W // 2 - 1))

    out_nchw = bottle2neck_forward(x_nchw, pk, nums=nums, width=width,
                                   use_tpu_roll=use_tpu_roll,
                                   images_per_step=G)
    out_nchw = jax.block_until_ready(out_nchw)

    # Correctness check vs. a pure-JAX reference (bf16-matmul matched).
    x_nhwc = jnp.transpose(x_nchw, (0, 2, 3, 1))
    ref_nhwc = ref_forward_nhwc(x_nhwc, params, nums=nums, width=width)
    ref_nchw = jnp.transpose(ref_nhwc, (0, 3, 1, 2))
    max_err = float(jnp.max(jnp.abs(out_nchw - ref_nchw)))
    # Tolerance covers bf16 rounding-order differences (BN scales are folded
    # into the weights before the bf16 cast in the kernel, after it in the ref).
    assert max_err < 3e-2, f"max abs error {max_err}"

    print("KERNEL_OK")
</pallas_src>

<mosaic_0001>
module attributes {stable_mosaic.version = 11 : i64} {
  func.func @k(%arg0: memref<1x16x8x12xf32, #tpu.memory_space<vmem>>, %arg1: memref<1x16x8x12xf32, #tpu.memory_space<vmem>>) attributes {dimension_semantics = [], scalar_prefetch = 0 : i64, scratch_operands = 0 : i64, tpu.core_type = #tpu.core_type<tc>} {
    %c0 = arith.constant 0 : index
    %c0_0 = arith.constant 0 : index
    %c0_1 = arith.constant 0 : index
    %c0_2 = arith.constant 0 : index
    %0 = vector.load %arg0[%c0, %c0_0, %c0_1, %c0_2] : memref<1x16x8x12xf32, #tpu.memory_space<vmem>>, vector<1x16x8x12xf32>
    %c1_i32 = arith.constant 1 : i32
    %1 = tpu.dynamic_rotate %0 by %c1_i32 dim 2 : vector<1x16x8x12xf32>, i32 -> vector<1x16x8x12xf32>
    %c0_3 = arith.constant 0 : index
    %c0_4 = arith.constant 0 : index
    %c0_5 = arith.constant 0 : index
    %c0_6 = arith.constant 0 : index
    %2 = vector.load %arg1[%c0_3, %c0_4, %c0_5, %c0_6] : memref<1x16x8x12xf32, #tpu.memory_space<vmem>>, vector<1x16x8x12xf32>
    tpu.vector_store %arg1[%c0_3, %c0_4, %c0_5, %c0_6], %1 {strides = array<i32>} : memref<1x16x8x12xf32, #tpu.memory_space<vmem>>, vector<1x16x8x12xf32>,
    return
  }
}

module attributes {stable_mosaic.version = 11 : i64} {
  func.func @_bottle2neck_kernel(%arg0: i32, %arg1: memref<1x16x8x128xf32, #tpu.memory_space<vmem>>, %arg2: memref<128x48xbf16, #tpu.memory_space<vmem>>, %arg3: memref<1x48xf32, #tpu.memory_space<vmem>>, %arg4: memref<3x9x12x12xbf16, #tpu.memory_space<vmem>>, %arg5: memref<3x1x12xf32, #tpu.memory_space<vmem>>, %arg6: memref<4x12x128xbf16, #tpu.memory_space<vmem>>, %arg7: memref<1x128xf32, #tpu.memory_space<vmem>>, %arg8: memref<128x8xbf16, #tpu.memory_space<vmem>>, %arg9: memref<1x8xf32, #tpu.memory_space<vmem>>, %arg10: memref<8x128xbf16, #tpu.memory_space<vmem>>, %arg11: memref<1x128xf32, #tpu.memory_space<vmem>>, %arg12: memref<1x16x8x128xf32, #tpu.memory_space<vmem>>) attributes {dimension_semantics = [#tpu.dimension_semantics<parallel>], iteration_bounds = array<i64: 2>, scalar_prefetch = 0 : i64, scratch_operands = 0 : i64, tpu.core_type = #tpu.core_type<tc>, window_params = [{transform_indices = @transform_0, window_bounds = array<i64: 1, 16, 8, 128>}, {pipeline_mode = #tpu.pipeline_mode<synchronous>, transform_indices = @transform_1, window_bounds = array<i64: 128, 48>}, {pipeline_mode = #tpu.pipeline_mode<synchronous>, transform_indices = @transform_2, window_bounds = array<i64: 1, 48>}, {pipeline_mode = #tpu.pipeline_mode<synchronous>, transform_indices = @transform_3, window_bounds = array<i64: 3, 9, 12, 12>}, {pipeline_mode = #tpu.pipeline_mode<synchronous>, transform_indices = @transform_4, window_bounds = array<i64: 3, 1, 12>}, {pipeline_mode = #tpu.pipeline_mode<synchronous>, transform_indices = @transform_5, window_bounds = array<i64: 4, 12, 128>}, {pipeline_mode = #tpu.pipeline_mode<synchronous>, transform_indices = @transform_6, window_bounds = array<i64: 1, 128>}, {pipeline_mode = #tpu.pipeline_mode<synchronous>, transform_indices = @transform_7, window_bounds = array<i64: 128, 8>}, {pipeline_mode = #tpu.pipeline_mode<synchronous>, transform_indices = @transform_8, window_bounds = array<i64: 1, 8>}, {pipeline_mode = #tpu.pipeline_mode<synchronous>, transform_indices = @transform_9, window_bounds = array<i64: 8, 128>}, {pipeline_mode = #tpu.pipeline_mode<synchronous>, transform_indices = @transform_10, window_bounds = array<i64: 1, 128>}, {transform_indices = @transform_11, window_bounds = array<i64: 1, 16, 8, 128>}]} {
    %c0 = arith.constant 0 : index
    %c0_0 = arith.constant 0 : index
    %c0_1 = arith.constant 0 : index
    %c0_2 = arith.constant 0 : index
    %0 = vector.load %arg1[%c0, %c0_0, %c0_1, %c0_2] : memref<1x16x8x128xf32, #tpu.memory_space<vmem>>, vector<1x16x8x128xf32>
    %1 = vector.shape_cast %0 : vector<1x16x8x128xf32> to vector<128x128xf32>
    %2 = arith.truncf %1 : vector<128x128xf32> to vector<128x128xbf16>
    %c0_3 = arith.constant 0 : index
    %c0_4 = arith.constant 0 : index
    %3 = vector.load %arg2[%c0_3, %c0_4] : memref<128x48xbf16, #tpu.memory_space<vmem>>, vector<128x48xbf16>
    %cst = arith.constant dense<0.000000e+00> : vector<128x48xf32>
    %4 = tpu.matmul %2, %3, %cst {dimension_numbers = #tpu.dot_dimension_numbers<[1], [0], [0], [1], [0, 0, 1, 1], [], []>} : vector<128x128xbf16>, vector<128x48xbf16>, vector<128x48xf32> -> vector<128x48xf32>
    %c0_5 = arith.constant 0 : index
    %c0_6 = arith.constant 0 : index
    %5 = vector.load %arg3[%c0_5, %c0_6] : memref<1x48xf32, #tpu.memory_space<vmem>>, vector<1x48xf32>
    %6 = vector.broadcast %5 : vector<1x48xf32> to vector<128x48xf32>
    %7 = arith.addf %4, %6 : vector<128x48xf32>
    %cst_7 = arith.constant 0.000000e+00 : f32
    %8 = vector.broadcast %cst_7 : f32 to vector<128x48xf32>
    %9 = arith.maximumf %7, %8 : vector<128x48xf32>
    %10 = tpu.iota {dimensions = array<i32: 2>} : vector<1x16x8x12xi32>
    %c1_i32 = arith.constant 1 : i32
    %11 = vector.broadcast %c1_i32 : i32 to vector<1x16x8x12xi32>
    %12 = arith.cmpi sge, %10, %11 : vector<1x16x8x12xi32>
    %c6_i32 = arith.constant 6 : i32
    %13 = vector.broadcast %c6_i32 : i32 to vector<1x16x8x12xi32>
    %14 = arith.cmpi sle, %10, %13 : vector<1x16x8x12xi32>
    %cst_8 = arith.constant 0.000000e+00 : f32
    %15 = vector.broadcast %cst_8 : f32 to vector<1x1x8x12xf32>
    %16 = vector.extract_strided_slice %9 {offsets = [0, 0], sizes = [128, 12], strides = [1, 1]} : vector<128x48xf32> to vector<128x12xf32>
    %17 = vector.shape_cast %16 : vector<128x12xf32> to vector<1x16x8x12xf32>
    %18 = tpu.concatenate %15, %17, %15 in 1 : vector<1x1x8x12xf32>, vector<1x16x8x12xf32>, vector<1x1x8x12xf32> -> vector<1x18x8x12xf32>
    %19 = vector.extract_strided_slice %18 {offsets = [0, 0, 0, 0], sizes = [1, 16, 8, 12], strides = [1, 1, 1, 1]} : vector<1x18x8x12xf32> to vector<1x16x8x12xf32>
    %20 = vector.extract_strided_slice %19 {offsets = [0, 0, 7, 0], sizes = [1, 16, 1, 12], strides = [1, 1, 1, 1]} : vector<1x16x8x12xf32> to vector<1x16x1x12xf32>
    %21 = vector.extract_strided_slice %19 {offsets = [0, 0, 0, 0], sizes = [1, 16, 7, 12], strides = [1, 1, 1, 1]} : vector<1x16x8x12xf32> to vector<1x16x7x12xf32>
    %22 = tpu.concatenate %20, %21 in 2 : vector<1x16x1x12xf32>, vector<1x16x7x12xf32> -> vector<1x16x8x12xf32>
    %cst_9 = arith.constant 0.000000e+00 : f32
    %23 = vector.broadcast %cst_9 : f32 to vector<1x16x8x12xf32>
    %24 = arith.select %12, %22, %23 : vector<1x16x8x12xi1>, vector<1x16x8x12xf32>
    %25 = vector.shape_cast %24 : vector<1x16x8x12xf32> to vector<128x12xf32>
    %26 = arith.truncf %25 : vector<128x12xf32> to vector<128x12xbf16>
    %c0_10 = arith.constant 0 : index
    %c0_11 = arith.constant 0 : index
    %c0_12 = arith.constant 0 : index
    %c0_13 = arith.constant 0 : index
    %27 = vector.load %arg4[%c0_10, %c0_11, %c0_12, %c0_13] : memref<3x9x12x12xbf16, #tpu.memory_space<vmem>>, vector<1x1x12x12xbf16>
    %28 = vector.shape_cast %27 : vector<1x1x12x12xbf16> to vector<12x12xbf16>
    %cst_14 = arith.constant dense<0.000000e+00> : vector<128x12xf32>
    %29 = tpu.matmul %26, %28, %cst_14 {dimension_numbers = #tpu.dot_dimension_numbers<[1], [0], [0], [1], [0, 0, 1, 1], [], []>} : vector<128x12xbf16>, vector<12x12xbf16>, vector<128x12xf32> -> vector<128x12xf32>
    %30 = vector.shape_cast %19 : vector<1x16x8x12xf32> to vector<128x12xf32>
    %31 = arith.truncf %30 : vector<128x12xf32> to vector<128x12xbf16>
    %c0_15 = arith.constant 0 : index
    %c1 = arith.constant 1 : index
    %c0_16 = arith.constant 0 : index
    %c0_17 = arith.constant 0 : index
    %32 = vector.load %arg4[%c0_15, %c1, %c0_16, %c0_17] : memref<3x9x12x12xbf16, #tpu.memory_space<vmem>>, vector<1x1x12x12xbf16>
    %33 = vector.shape_cast %32 : vector<1x1x12x12xbf16> to vector<12x12xbf16>
    %cst_18 = arith.constant dense<0.000000e+00> : vector<128x12xf32>
    %34 = tpu.matmul %31, %33, %cst_18 {dimension_numbers = #tpu.dot_dimension_numbers<[1], [0], [0], [1], [0, 0, 1, 1], [], []>} : vector<128x12xbf16>, vector<12x12xbf16>, vector<128x12xf32> -> vector<128x12xf32>
    %35 = arith.addf %29, %34 : vector<128x12xf32>
    %36 = vector.extract_strided_slice %19 {offsets = [0, 0, 1, 0], sizes = [1, 16, 7, 12], strides = [1, 1, 1, 1]} : vector<1x16x8x12xf32> to vector<1x16x7x12xf32>
    %37 = vector.extract_strided_slice %19 {offsets = [0, 0, 0, 0], sizes = [1, 16, 1, 12], strides = [1, 1, 1, 1]} : vector<1x16x8x12xf32> to vector<1x16x1x12xf32>
    %38 = tpu.concatenate %36, %37 in 2 : vector<1x16x7x12xf32>, vector<1x16x1x12xf32> -> vector<1x16x8x12xf32>
    %cst_19 = arith.constant 0.000000e+00 : f32
    %39 = vector.broadcast %cst_19 : f32 to vector<1x16x8x12xf32>
    %40 = arith.select %14, %38, %39 : vector<1x16x8x12xi1>, vector<1x16x8x12xf32>
    %41 = vector.shape_cast %40 : vector<1x16x8x12xf32> to vector<128x12xf32>
    %42 = arith.truncf %41 : vector<128x12xf32> to vector<128x12xbf16>
    %c0_20 = arith.constant 0 : index
    %c2 = arith.constant 2 : index
    %c0_21 = arith.constant 0 : index
    %c0_22 = arith.constant 0 : index
    %43 = vector.load %arg4[%c0_20, %c2, %c0_21, %c0_22] : memref<3x9x12x12xbf16, #tpu.memory_space<vmem>>, vector<1x1x12x12xbf16>
    %44 = vector.shape_cast %43 : vector<1x1x12x12xbf16> to vector<12x12xbf16>
    %cst_23 = arith.constant dense<0.000000e+00> : vector<128x12xf32>
    %45 = tpu.matmul %42, %44, %cst_23 {dimension_numbers = #tpu.dot_dimension_numbers<[1], [0], [0], [1], [0, 0, 1, 1], [], []>} : vector<128x12xbf16>, vector<12x12xbf16>, vector<128x12xf32> -> vector<128x12xf32>
    %46 = arith.addf %35, %45 : vector<128x12xf32>
    %47 = vector.extract_strided_slice %18 {offsets = [0, 1, 0, 0], sizes = [1, 16, 8, 12], strides = [1, 1, 1, 1]} : vector<1x18x8x12xf32> to vector<1x16x8x12xf32>
    %48 = vector.extract_strided_slice %47 {offsets = [0, 0, 7, 0], sizes = [1, 16, 1, 12], strides = [1, 1, 1, 1]} : vector<1x16x8x12xf32> to vector<1x16x1x12xf32>
    %49 = vector.extract_strided_slice %47 {offsets = [0, 0, 0, 0], sizes = [1, 16, 7, 12], strides = [1, 1, 1, 1]} : vector<1x16x8x12xf32> to vector<1x16x7x12xf32>
    %50 = tpu.concatenate %48, %49 in 2 : vector<1x16x1x12xf32>, vector<1x16x7x12xf32> -> vector<1x16x8x12xf32>
    %cst_24 = arith.constant 0.000000e+00 : f32
    %51 = vector.broadcast %cst_24 : f32 to vector<1x16x8x12xf32>
    %52 = arith.select %12, %50, %51 : vector<1x16x8x12xi1>, vector<1x16x8x12xf32>
    %53 = vector.shape_cast %52 : vector<1x16x8x12xf32> to vector<128x12xf32>
    %54 = arith.truncf %53 : vector<128x12xf32> to vector<128x12xbf16>
    %c0_25 = arith.constant 0 : index
    %c3 = arith.constant 3 : index
    %c0_26 = arith.constant 0 : index
    %c0_27 = arith.constant 0 : index
    %55 = vector.load %arg4[%c0_25, %c3, %c0_26, %c0_27] : memref<3x9x12x12xbf16, #tpu.memory_space<vmem>>, vector<1x1x12x12xbf16>
    %56 = vector.shape_cast %55 : vector<1x1x12x12xbf16> to vector<12x12xbf16>
    %cst_28 = arith.constant dense<0.000000e+00> : vector<128x12xf32>
    %57 = tpu.matmul %54, %56, %cst_28 {dimension_numbers = #tpu.dot_dimension_numbers<[1], [0], [0], [1], [0, 0, 1, 1], [], []>} : vector<128x12xbf16>, vector<12x12xbf16>, vector<128x12xf32> -> vector<128x12xf32>
    %58 = arith.addf %46, %57 : vector<128x12xf32>
    %59 = vector.shape_cast %47 : vector<1x16x8x12xf32> to vector<128x12xf32>
    %60 = arith.truncf %59 : vector<128x12xf32> to vector<128x12xbf16>
    %c0_29 = arith.constant 0 : index
    %c4 = arith.constant 4 : index
    %c0_30 = arith.constant 0 : index
    %c0_31 = arith.constant 0 : index
    %61 = vector.load %arg4[%c0_29, %c4, %c0_30, %c0_31] : memref<3x9x12x12xbf16, #tpu.memory_space<vmem>>, vector<1x1x12x12xbf16>
    %62 = vector.shape_cast %61 : vector<1x1x12x12xbf16> to vector<12x12xbf16>
    %cst_32 = arith.constant dense<0.000000e+00> : vector<128x12xf32>
    %63 = tpu.matmul %60, %62, %cst_32 {dimension_numbers = #tpu.dot_dimension_numbers<[1], [0], [0], [1], [0, 0, 1, 1], [], []>} : vector<128x12xbf16>, vector<12x12xbf16>, vector<128x12xf32> -> vector<128x12xf32>
    %64 = arith.addf %58, %63 : vector<128x12xf32>
    %65 = vector.extract_strided_slice %47 {offsets = [0, 0, 1, 0], sizes = [1, 16, 7, 12], strides = [1, 1, 1, 1]} : vector<1x16x8x12xf32> to vector<1x16x7x12xf32>
    %66 = vector.extract_strided_slice %47 {offsets = [0, 0, 0, 0], sizes = [1, 16, 1, 12], strides = [1, 1, 1, 1]} : vector<1x16x8x12xf32> to vector<1x16x1x12xf32>
    %67 = tpu.concatenate %65, %66 in 2 : vector<1x16x7x12xf32>, vector<1x16x1x12xf32> -> vector<1x16x8x12xf32>
    %cst_33 = arith.constant 0.000000e+00 : f32
    %68 = vector.broadcast %cst_33 : f32 to vector<1x16x8x12xf32>
    %69 = arith.select %14, %67, %68 : vector<1x16x8x12xi1>, vector<1x16x8x12xf32>
    %70 = vector.shape_cast %69 : vector<1x16x8x12xf32> to vector<128x12xf32>
    %71 = arith.truncf %70 : vector<128x12xf32> to vector<128x12xbf16>
    %c0_34 = arith.constant 0 : index
    %c5 = arith.constant 5 : index
    %c0_35 = arith.constant 0 : index
    %c0_36 = arith.constant 0 : index
    %72 = vector.load %arg4[%c0_34, %c5, %c0_35, %c0_36] : memref<3x9x12x12xbf16, #tpu.memory_space<vmem>>, vector<1x1x12x12xbf16>
    %73 = vector.shape_cast %72 : vector<1x1x12x12xbf16> to vector<12x12xbf16>
    %cst_37 = arith.constant dense<0.000000e+00> : vector<128x12xf32>
    %74 = tpu.matmul %71, %73, %cst_37 {dimension_numbers = #tpu.dot_dimension_numbers<[1], [0], [0], [1], [0, 0, 1, 1], [], []>} : vector<128x12xbf16>, vector<12x12xbf16>, vector<128x12xf32> -> vector<128x12xf32>
    %75 = arith.addf %64, %74 : vector<128x12xf32>
    %76 = vector.extract_strided_slice %18 {offsets = [0, 2, 0, 0], sizes = [1, 16, 8, 12], strides = [1, 1, 1, 1]} : vector<1x18x8x12xf32> to vector<1x16x8x12xf32>
    %77 = vector.extract_strided_slice %76 {offsets = [0, 0, 7, 0], sizes = [1, 16, 1, 12], strides = [1, 1, 1, 1]} : vector<1x16x8x12xf32> to vector<1x16x1x12xf32>
    %78 = vector.extract_strided_slice %76 {offsets = [0, 0, 0, 0], sizes = [1, 16, 7, 12], strides = [1, 1, 1, 1]} : vector<1x16x8x12xf32> to vector<1x16x7x12xf32>
    %79 = tpu.concatenate %77, %78 in 2 : vector<1x16x1x12xf32>, vector<1x16x7x12xf32> -> vector<1x16x8x12xf32>
    %cst_38 = arith.constant 0.000000e+00 : f32
    %80 = vector.broadcast %cst_38 : f32 to vector<1x16x8x12xf32>
    %81 = arith.select %12, %79, %80 : vector<1x16x8x12xi1>, vector<1x16x8x12xf32>
    %82 = vector.shape_cast %81 : vector<1x16x8x12xf32> to vector<128x12xf32>
    %83 = arith.truncf %82 : vector<128x12xf32> to vector<128x12xbf16>
    %c0_39 = arith.constant 0 : index
    %c6 = arith.constant 6 : index
    %c0_40 = arith.constant 0 : index
    %c0_41 = arith.constant 0 : index
    %84 = vector.load %arg4[%c0_39, %c6, %c0_40, %c0_41] : memref<3x9x12x12xbf16, #tpu.memory_space<vmem>>, vector<1x1x12x12xbf16>
    %85 = vector.shape_cast %84 : vector<1x1x12x12xbf16> to vector<12x12xbf16>
    %cst_42 = arith.constant dense<0.000000e+00> : vector<128x12xf32>
    %86 = tpu.matmul %83, %85, %cst_42 {dimension_numbers = #tpu.dot_dimension_numbers<[1], [0], [0], [1], [0, 0, 1, 1], [], []>} : vector<128x12xbf16>, vector<12x12xbf16>, vector<128x12xf32> -> vector<128x12xf32>
    %87 = arith.addf %75, %86 : vector<128x12xf32>
    %88 = vector.shape_cast %76 : vector<1x16x8x12xf32> to vector<128x12xf32>
    %89 = arith.truncf %88 : vector<128x12xf32> to vector<128x12xbf16>
    %c0_43 = arith.constant 0 : index
    %c7 = arith.constant 7 : index
    %c0_44 = arith.constant 0 : index
    %c0_45 = arith.constant 0 : index
    %90 = vector.load %arg4[%c0_43, %c7, %c0_44, %c0_45] : memref<3x9x12x12xbf16, #tpu.memory_space<vmem>>, vector<1x1x12x12xbf16>
    %91 = vector.shape_cast %90 : vector<1x1x12x12xbf16> to vector<12x12xbf16>
    %cst_46 = arith.constant dense<0.000000e+00> : vector<128x12xf32>
    %92 = tpu.matmul %89, %91, %cst_46 {dimension_numbers = #tpu.dot_dimension_numbers<[1], [0], [0], [1], [0, 0, 1, 1], [], []>} : vector<128x12xbf16>, vector<12x12xbf16>, vector<128x12xf32> -> vector<128x12xf32>
    %93 = arith.addf %87, %92 : vector<128x12xf32>
    %94 = vector.extract_strided_slice %76 {offsets = [0, 0, 1, 0], sizes = [1, 16, 7, 12], strides = [1, 1, 1, 1]} : vector<1x16x8x12xf32> to vector<1x16x7x12xf32>
    %95 = vector.extract_strided_slice %76 {offsets = [0, 0, 0, 0], sizes = [1, 16, 1, 12], strides = [1, 1, 1, 1]} : vector<1x16x8x12xf32> to vector<1x16x1x12xf32>
    %96 = tpu.concatenate %94, %95 in 2 : vector<1x16x7x12xf32>, vector<1x16x1x12xf32> -> vector<1x16x8x12xf32>
    %cst_47 = arith.constant 0.000000e+00 : f32
    %97 = vector.broadcast %cst_47 : f32 to vector<1x16x8x12xf32>
    %98 = arith.select %14, %96, %97 : vector<1x16x8x12xi1>, vector<1x16x8x12xf32>
    %99 = vector.shape_cast %98 : vector<1x16x8x12xf32> to vector<128x12xf32>
    %100 = arith.truncf %99 : vector<128x12xf32> to vector<128x12xbf16>
    %c0_48 = arith.constant 0 : index
    %c8 = arith.constant 8 : index
    %c0_49 = arith.constant 0 : index
    %c0_50 = arith.constant 0 : index
    %101 = vector.load %arg4[%c0_48, %c8, %c0_49, %c0_50] : memref<3x9x12x12xbf16, #tpu.memory_space<vmem>>, vector<1x1x12x12xbf16>
    %102 = vector.shape_cast %101 : vector<1x1x12x12xbf16> to vector<12x12xbf16>
    %cst_51 = arith.constant dense<0.000000e+00> : vector<128x12xf32>
    %103 = tpu.matmul %100, %102, %cst_51 {dimension_numbers = #tpu.dot_dimension_numbers<[1], [0], [0], [1], [0, 0, 1, 1], [], []>} : vector<128x12xbf16>, vector<12x12xbf16>, vector<128x12xf32> -> vector<128x12xf32>
    %104 = arith.addf %93, %103 : vector<128x12xf32>
    %c0_52 = arith.constant 0 : index
    %c0_53 = arith.constant 0 : index
    %c0_54 = arith.constant 0 : index
    %105 = vector.load %arg5[%c0_52, %c0_53, %c0_54] : memref<3x1x12xf32, #tpu.memory_space<vmem>>, vector<1x1x12xf32>
    %106 = vector.shape_cast %105 : vector<1x1x12xf32> to vector<1x12xf32>
    %107 = vector.broadcast %106 : vector<1x12xf32> to vector<128x12xf32>
    %108 = arith.addf %104, %107 : vector<128x12xf32>
    %cst_55 = arith.constant 0.000000e+00 : f32
    %109 = vector.broadcast %cst_55 : f32 to vector<128x12xf32>
    %110 = arith.maximumf %108, %109 : vector<128x12xf32>
    %111 = arith.truncf %110 : vector<128x12xf32> to vector<128x12xbf16>
    %c0_56 = arith.constant 0 : index
    %c0_57 = arith.constant 0 : index
    %c0_58 = arith.constant 0 : index
    %112 = vector.load %arg6[%c0_56, %c0_57, %c0_58] : memref<4x12x128xbf16, #tpu.memory_space<vmem>>, vector<1x12x128xbf16>
    %113 = vector.shape_cast %112 : vector<1x12x128xbf16> to vector<12x128xbf16>
    %cst_59 = arith.constant dense<0.000000e+00> : vector<128x128xf32>
    %114 = tpu.matmul %111, %113, %cst_59 {dimension_numbers = #tpu.dot_dimension_numbers<[1], [0], [0], [1], [0, 0, 1, 1], [], []>} : vector<128x12xbf16>, vector<12x128xbf16>, vector<128x128xf32> -> vector<128x128xf32>
    %115 = vector.extract_strided_slice %9 {offsets = [0, 12], sizes = [128, 12], strides = [1, 1]} : vector<128x48xf32> to vector<128x12xf32>
    %116 = arith.addf %110, %115 : vector<128x12xf32>
    %117 = vector.shape_cast %116 : vector<128x12xf32> to vector<1x16x8x12xf32>
    %118 = tpu.concatenate %15, %117, %15 in 1 : vector<1x1x8x12xf32>, vector<1x16x8x12xf32>, vector<1x1x8x12xf32> -> vector<1x18x8x12xf32>
    %119 = vector.extract_strided_slice %118 {offsets = [0, 0, 0, 0], sizes = [1, 16, 8, 12], strides = [1, 1, 1, 1]} : vector<1x18x8x12xf32> to vector<1x16x8x12xf32>
    %120 = vector.extract_strided_slice %119 {offsets = [0, 0, 7, 0], sizes = [1, 16, 1, 12], strides = [1, 1, 1, 1]} : vector<1x16x8x12xf32> to vector<1x16x1x12xf32>
    %121 = vector.extract_strided_slice %119 {offsets = [0, 0, 0, 0], sizes = [1, 16, 7, 12], strides = [1, 1, 1, 1]} : vector<1x16x8x12xf32> to vector<1x16x7x12xf32>
    %122 = tpu.concatenate %120, %121 in 2 : vector<1x16x1x12xf32>, vector<1x16x7x12xf32> -> vector<1x16x8x12xf32>
    %cst_60 = arith.constant 0.000000e+00 : f32
    %123 = vector.broadcast %cst_60 : f32 to vector<1x16x8x12xf32>
    %124 = arith.select %12, %122, %123 : vector<1x16x8x12xi1>, vector<1x16x8x12xf32>
    %125 = vector.shape_cast %124 : vector<1x16x8x12xf32> to vector<128x12xf32>
    %126 = arith.truncf %125 : vector<128x12xf32> to vector<128x12xbf16>
    %c1_61 = arith.constant 1 : index
    %c0_62 = arith.constant 0 : index
    %c0_63 = arith.constant 0 : index
    %c0_64 = arith.constant 0 : index
    %127 = vector.load %arg4[%c1_61, %c0_62, %c0_63, %c0_64] : memref<3x9x12x12xbf16, #tpu.memory_space<vmem>>, vector<1x1x12x12xbf16>
    %128 = vector.shape_cast %127 : vector<1x1x12x12xbf16> to vector<12x12xbf16>
    %cst_65 = arith.constant dense<0.000000e+00> : vector<128x12xf32>
    %129 = tpu.matmul %126, %128, %cst_65 {dimension_numbers = #tpu.dot_dimension_numbers<[1], [0], [0], [1], [0, 0, 1, 1], [], []>} : vector<128x12xbf16>, vector<12x12xbf16>, vector<128x12xf32> -> vector<128x12xf32>
    %130 = vector.shape_cast %119 : vector<1x16x8x12xf32> to vector<128x12xf32>
    %131 = arith.truncf %130 : vector<128x12xf32> to vector<128x12xbf16>
    %c1_66 = arith.constant 1 : index
    %c1_67 = arith.constant 1 : index
    %c0_68 = arith.constant 0 : index
    %c0_69 = arith.constant 0 : index
    %132 = vector.load %arg4[%c1_66, %c1_67, %c0_68, %c0_69] : memref<3x9x12x12xbf16, #tpu.memory_space<vmem>>, vector<1x1x12x12xbf16>
    %133 = vector.shape_cast %132 : vector<1x1x12x12xbf16> to vector<12x12xbf16>
    %cst_70 = arith.constant dense<0.000000e+00> : vector<128x12xf32>
    %134 = tpu.matmul %131, %133, %cst_70 {dimension_numbers = #tpu.dot_dimension_numbers<[1], [0], [0], [1], [0, 0, 1, 1], [], []>} : vector<128x12xbf16>, vector<12x12xbf16>, vector<128x12xf32> -> vector<128x12xf32>
    %135 = arith.addf %129, %134 : vector<128x12xf32>
    %136 = vector.extract_strided_slice %119 {offsets = [0, 0, 1, 0], sizes = [1, 16, 7, 12], strides = [1, 1, 1, 1]} : vector<1x16x8x12xf32> to vector<1x16x7x12xf32>
    %137 = vector.extract_strided_slice %119 {offsets = [0, 0, 0, 0], sizes = [1, 16, 1, 12], strides = [1, 1, 1, 1]} : vector<1x16x8x12xf32> to vector<1x16x1x12xf32>
    %138 = tpu.concatenate %136, %137 in 2 : vector<1x16x7x12xf32>, vector<1x16x1x12xf32> -> vector<1x16x8x12xf32>
    %cst_71 = arith.constant 0.000000e+00 : f32
    %139 = vector.broadcast %cst_71 : f32 to vector<1x16x8x12xf32>
    %140 = arith.select %14, %138, %139 : vector<1x16x8x12xi1>, vector<1x16x8x12xf32>
    %141 = vector.shape_cast %140 : vector<1x16x8x12xf32> to vector<128x12xf32>
    %142 = arith.truncf %141 : vector<128x12xf32> to vector<128x12xbf16>
    %c1_72 = arith.constant 1 : index
    %c2_73 = arith.constant 2 : index
    %c0_74 = arith.constant 0 : index
    %c0_75 = arith.constant 0 : index
    %143 = vector.load %arg4[%c1_72, %c2_73, %c0_74, %c0_75] : memref<3x9x12x12xbf16, #tpu.memory_space<vmem>>, vector<1x1x12x12xbf16>
    %144 = vector.shape_cast %143 : vector<1x1x12x12xbf16> to vector<12x12xbf16>
    %cst_76 = arith.constant dense<0.000000e+00> : vector<128x12xf32>
    %145 = tpu.matmul %142, %144, %cst_76 {dimension_numbers = #tpu.dot_dimension_numbers<[1], [0], [0], [1], [0, 0, 1, 1], [], []>} : vector<128x12xbf16>, vector<12x12xbf16>, vector<128x12xf32> -> vector<128x12xf32>
    %146 = arith.addf %135, %145 : vector<128x12xf32>
    %147 = vector.extract_strided_slice %118 {offsets = [0, 1, 0, 0], sizes = [1, 16, 8, 12], strides = [1, 1, 1, 1]} : vector<1x18x8x12xf32> to vector<1x16x8x12xf32>
    %148 = vector.extract_strided_slice %147 {offsets = [0, 0, 7, 0], sizes = [1, 16, 1, 12], strides = [1, 1, 1, 1]} : vector<1x16x8x12xf32> to vector<1x16x1x12xf32>
    %149 = vector.extract_strided_slice %147 {offsets = [0, 0, 0, 0], sizes = [1, 16, 7, 12], strides = [1, 1, 1, 1]} : vector<1x16x8x12xf32> to vector<1x16x7x12xf32>
    %150 = tpu.concatenate %148, %149 in 2 : vector<1x16x1x12xf32>, vector<1x16x7x12xf32> -> vector<1x16x8x12xf32>
    %cst_77 = arith.constant 0.000000e+00 : f32
    %151 = vector.broadcast %cst_77 : f32 to vector<1x16x8x12xf32>
    %152 = arith.select %12, %150, %151 : vector<1x16x8x12xi1>, vector<1x16x8x12xf32>
    %153 = vector.shape_cast %152 : vector<1x16x8x12xf32> to vector<128x12xf32>
    %154 = arith.truncf %153 : vector<128x12xf32> to vector<128x12xbf16>
    %c1_78 = arith.constant 1 : index
    %c3_79 = arith.constant 3 : index
    %c0_80 = arith.constant 0 : index
    %c0_81 = arith.constant 0 : index
    %155 = vector.load %arg4[%c1_78, %c3_79, %c0_80, %c0_81] : memref<3x9x12x12xbf16, #tpu.memory_space<vmem>>, vector<1x1x12x12xbf16>
    %156 = vector.shape_cast %155 : vector<1x1x12x12xbf16> to vector<12x12xbf16>
    %cst_82 = arith.constant dense<0.000000e+00> : vector<128x12xf32>
    %157 = tpu.matmul %154, %156, %cst_82 {dimension_numbers = #tpu.dot_dimension_numbers<[1], [0], [0], [1], [0, 0, 1, 1], [], []>} : vector<128x12xbf16>, vector<12x12xbf16>, vector<128x12xf32> -> vector<128x12xf32>
    %158 = arith.addf %146, %157 : vector<128x12xf32>
    %159 = vector.shape_cast %147 : vector<1x16x8x12xf32> to vector<128x12xf32>
    %160 = arith.truncf %159 : vector<128x12xf32> to vector<128x12xbf16>
    %c1_83 = arith.constant 1 : index
    %c4_84 = arith.constant 4 : index
    %c0_85 = arith.constant 0 : index
    %c0_86 = arith.constant 0 : index
    %161 = vector.load %arg4[%c1_83, %c4_84, %c0_85, %c0_86] : memref<3x9x12x12xbf16, #tpu.memory_space<vmem>>, vector<1x1x12x12xbf16>
    %162 = vector.shape_cast %161 : vector<1x1x12x12xbf16> to vector<12x12xbf16>
    %cst_87 = arith.constant dense<0.000000e+00> : vector<128x12xf32>
    %163 = tpu.matmul %160, %162, %cst_87 {dimension_numbers = #tpu.dot_dimension_numbers<[1], [0], [0], [1], [0, 0, 1, 1], [], []>} : vector<128x12xbf16>, vector<12x12xbf16>, vector<128x12xf32> -> vector<128x12xf32>
    %164 = arith.addf %158, %163 : vector<128x12xf32>
    %165 = vector.extract_strided_slice %147 {offsets = [0, 0, 1, 0], sizes = [1, 16, 7, 12], strides = [1, 1, 1, 1]} : vector<1x16x8x12xf32> to vector<1x16x7x12xf32>
    %166 = vector.extract_strided_slice %147 {offsets = [0, 0, 0, 0], sizes = [1, 16, 1, 12], strides = [1, 1, 1, 1]} : vector<1x16x8x12xf32> to vector<1x16x1x12xf32>
    %167 = tpu.concatenate %165, %166 in 2 : vector<1x16x7x12xf32>, vector<1x16x1x12xf32> -> vector<1x16x8x12xf32>
    %cst_88 = arith.constant 0.000000e+00 : f32
    %168 = vector.broadcast %cst_88 : f32 to vector<1x16x8x12xf32>
    %169 = arith.select %14, %167, %168 : vector<1x16x8x12xi1>, vector<1x16x8x12xf32>
    %170 = vector.shape_cast %169 : vector<1x16x8x12xf32> to vector<128x12xf32>
    %171 = arith.truncf %170 : vector<128x12xf32> to vector<128x12xbf16>
    %c1_89 = arith.constant 1 : index
    %c5_90 = arith.constant 5 : index
    %c0_91 = arith.constant 0 : index
    %c0_92 = arith.constant 0 : index
    %172 = vector.load %arg4[%c1_89, %c5_90, %c0_91, %c0_92] : memref<3x9x12x12xbf16, #tpu.memory_space<vmem>>, vector<1x1x12x12xbf16>
    %173 = vector.shape_cast %172 : vector<1x1x12x12xbf16> to vector<12x12xbf16>
    %cst_93 = arith.constant dense<0.000000e+00> : vector<128x12xf32>
    %174 = tpu.matmul %171, %173, %cst_93 {dimension_numbers = #tpu.dot_dimension_numbers<[1], [0], [0], [1], [0, 0, 1, 1], [], []>} : vector<128x12xbf16>, vector<12x12xbf16>, vector<128x12xf32> -> vector<128x12xf32>
    %175 = arith.addf %164, %174 : vector<128x12xf32>
    %176 = vector.extract_strided_slice %118 {offsets = [0, 2, 0, 0], sizes = [1, 16, 8, 12], strides = [1, 1, 1, 1]} : vector<1x18x8x12xf32> to vector<1x16x8x12xf32>
    %177 = vector.extract_strided_slice %176 {offsets = [0, 0, 7, 0], sizes = [1, 16, 1, 12], strides = [1, 1, 1, 1]} : vector<1x16x8x12xf32> to vector<1x16x1x12xf32>
    %178 = vector.extract_strided_slice %176 {offsets = [0, 0, 0, 0], sizes = [1, 16, 7, 12], strides = [1, 1, 1, 1]} : vector<1x16x8x12xf32> to vector<1x16x7x12xf32>
    %179 = tpu.concatenate %177, %178 in 2 : vector<1x16x1x12xf32>, vector<1x16x7x12xf32> -> vector<1x16x8x12xf32>
    %cst_94 = arith.constant 0.000000e+00 : f32
    %180 = vector.broadcast %cst_94 : f32 to vector<1x16x8x12xf32>
    %181 = arith.select %12, %179, %180 : vector<1x16x8x12xi1>, vector<1x16x8x12xf32>
    %182 = vector.shape_cast %181 : vector<1x16x8x12xf32> to vector<128x12xf32>
    %183 = arith.truncf %182 : vector<128x12xf32> to vector<128x12xbf16>
    %c1_95 = arith.constant 1 : index
    %c6_96 = arith.constant 6 : index
    %c0_97 = arith.constant 0 : index
    %c0_98 = arith.constant 0 : index
    %184 = vector.load %arg4[%c1_95, %c6_96, %c0_97, %c0_98] : memref<3x9x12x12xbf16, #tpu.memory_space<vmem>>, vector<1x1x12x12xbf16>
    %185 = vector.shape_cast %184 : vector<1x1x12x12xbf16> to vector<12x12xbf16>
    %cst_99 = arith.constant dense<0.000000e+00> : vector<128x12xf32>
    %186 = tpu.matmul %183, %185, %cst_99 {dimension_numbers = #tpu.dot_dimension_numbers<[1], [0], [0], [1], [0, 0, 1, 1], [], []>} : vector<128x12xbf16>, vector<12x12xbf16>, vector<128x12xf32> -> vector<128x12xf32>
    %187 = arith.addf %175, %186 : vector<128x12xf32>
    %188 = vector.shape_cast %176 : vector<1x16x8x12xf32> to vector<128x12xf32>
    %189 = arith.truncf %188 : vector<128x12xf32> to vector<128x12xbf16>
    %c1_100 = arith.constant 1 : index
    %c7_101 = arith.constant 7 : index
    %c0_102 = arith.constant 0 : index
    %c0_103 = arith.constant 0 : index
    %190 = vector.load %arg4[%c1_100, %c7_101, %c0_102, %c0_103] : memref<3x9x12x12xbf16, #tpu.memory_space<vmem>>, vector<1x1x12x12xbf16>
    %191 = vector.shape_cast %190 : vector<1x1x12x12xbf16> to vector<12x12xbf16>
    %cst_104 = arith.constant dense<0.000000e+00> : vector<128x12xf32>
    %192 = tpu.matmul %189, %191, %cst_104 {dimension_numbers = #tpu.dot_dimension_numbers<[1], [0], [0], [1], [0, 0, 1, 1], [], []>} : vector<128x12xbf16>, vector<12x12xbf16>, vector<128x12xf32> -> vector<128x12xf32>
    %193 = arith.addf %187, %192 : vector<128x12xf32>
    %194 = vector.extract_strided_slice %176 {offsets = [0, 0, 1, 0], sizes = [1, 16, 7, 12], strides = [1, 1, 1, 1]} : vector<1x16x8x12xf32> to vector<1x16x7x12xf32>
    %195 = vector.extract_strided_slice %176 {offsets = [0, 0, 0, 0], sizes = [1, 16, 1, 12], strides = [1, 1, 1, 1]} : vector<1x16x8x12xf32> to vector<1x16x1x12xf32>
    %196 = tpu.concatenate %194, %195 in 2 : vector<1x16x7x12xf32>, vector<1x16x1x12xf32> -> vector<1x16x8x12xf32>
    %cst_105 = arith.constant 0.000000e+00 : f32
    %197 = vector.broadcast %cst_105 : f32 to vector<1x16x8x12xf32>
    %198 = arith.select %14, %196, %197 : vector<1x16x8x12xi1>, vector<1x16x8x12xf32>
    %199 = vector.shape_cast %198 : vector<1x16x8x12xf32> to vector<128x12xf32>
    %200 = arith.truncf %199 : vector<128x12xf32> to vector<128x12xbf16>
    %c1_106 = arith.constant 1 : index
    %c8_107 = arith.constant 8 : index
    %c0_108 = arith.constant 0 : index
    %c0_109 = arith.constant 0 : index
    %201 = vector.load %arg4[%c1_106, %c8_107, %c0_108, %c0_109] : memref<3x9x12x12xbf16, #tpu.memory_space<vmem>>, vector<1x1x12x12xbf16>
    %202 = vector.shape_cast %201 : vector<1x1x12x12xbf16> to vector<12x12xbf16>
    %cst_110 = arith.constant dense<0.000000e+00> : vector<128x12xf32>
    %203 = tpu.matmul %200, %202, %cst_110 {dimension_numbers = #tpu.dot_dimension_numbers<[1], [0], [0], [1], [0, 0, 1, 1], [], []>} : vector<128x12xbf16>, vector<12x12xbf16>, vector<128x12xf32> -> vector<128x12xf32>
    %204 = arith.addf %193, %203 : vector<128x12xf32>
    %c1_111 = arith.constant 1 : index
    %c0_112 = arith.constant 0 : index
    %c0_113 = arith.constant 0 : index
    %205 = vector.load %arg5[%c1_111, %c0_112, %c0_113] : memref<3x1x12xf32, #tpu.memory_space<vmem>>, vector<1x1x12xf32>
    %206 = vector.shape_cast %205 : vector<1x1x12xf32> to vector<1x12xf32>
    %207 = vector.broadcast %206 : vector<1x12xf32> to vector<128x12xf32>
    %208 = arith.addf %204, %207 : vector<128x12xf32>
    %cst_114 = arith.constant 0.000000e+00 : f32
    %209 = vector.broadcast %cst_114 : f32 to vector<128x12xf32>
    %210 = arith.maximumf %208, %209 : vector<128x12xf32>
    %211 = arith.truncf %210 : vector<128x12xf32> to vector<128x12xbf16>
    %c1_115 = arith.constant 1 : index
    %c0_116 = arith.constant 0 : index
    %c0_117 = arith.constant 0 : index
    %212 = vector.load %arg6[%c1_115, %c0_116, %c0_117] : memref<4x12x128xbf16, #tpu.memory_space<vmem>>, vector<1x12x128xbf16>
    %213 = vector.shape_cast %212 : vector<1x12x128xbf16> to vector<12x128xbf16>
    %cst_118 = arith.constant dense<0.000000e+00> : vector<128x128xf32>
    %214 = tpu.matmul %211, %213, %cst_118 {dimension_numbers = #tpu.dot_dimension_numbers<[1], [0], [0], [1], [0, 0, 1, 1], [], []>} : vector<128x12xbf16>, vector<12x128xbf16>, vector<128x128xf32> -> vector<128x128xf32>
    %215 = arith.addf %114, %214 : vector<128x128xf32>
    %216 = vector.extract_strided_slice %9 {offsets = [0, 24], sizes = [128, 12], strides = [1, 1]} : vector<128x48xf32> to vector<128x12xf32>
    %217 = arith.addf %210, %216 : vector<128x12xf32>
    %218 = vector.shape_cast %217 : vector<128x12xf32> to vector<1x16x8x12xf32>
    %219 = tpu.concatenate %15, %218, %15 in 1 : vector<1x1x8x12xf32>, vector<1x16x8x12xf32>, vector<1x1x8x12xf32> -> vector<1x18x8x12xf32>
    %220 = vector.extract_strided_slice %219 {offsets = [0, 0, 0, 0], sizes = [1, 16, 8, 12], strides = [1, 1, 1, 1]} : vector<1x18x8x12xf32> to vector<1x16x8x12xf32>
    %221 = vector.extract_strided_slice %220 {offsets = [0, 0, 7, 0], sizes = [1, 16, 1, 12], strides = [1, 1, 1, 1]} : vector<1x16x8x12xf32> to vector<1x16x1x12xf32>
    %222 = vector.extract_strided_slice %220 {offsets = [0, 0, 0, 0], sizes = [1, 16, 7, 12], strides = [1, 1, 1, 1]} : vector<1x16x8x12xf32> to vector<1x16x7x12xf32>
    %223 = tpu.concatenate %221, %222 in 2 : vector<1x16x1x12xf32>, vector<1x16x7x12xf32> -> vector<1x16x8x12xf32>
    %cst_119 = arith.constant 0.000000e+00 : f32
    %224 = vector.broadcast %cst_119 : f32 to vector<1x16x8x12xf32>
    %225 = arith.select %12, %223, %224 : vector<1x16x8x12xi1>, vector<1x16x8x12xf32>
    %226 = vector.shape_cast %225 : vector<1x16x8x12xf32> to vector<128x12xf32>
    %227 = arith.truncf %226 : vector<128x12xf32> to vector<128x12xbf16>
    %c2_120 = arith.constant 2 : index
    %c0_121 = arith.constant 0 : index
    %c0_122 = arith.constant 0 : index
    %c0_123 = arith.constant 0 : index
    %228 = vector.load %arg4[%c2_120, %c0_121, %c0_122, %c0_123] : memref<3x9x12x12xbf16, #tpu.memory_space<vmem>>, vector<1x1x12x12xbf16>
    %229 = vector.shape_cast %228 : vector<1x1x12x12xbf16> to vector<12x12xbf16>
    %cst_124 = arith.constant dense<0.000000e+00> : vector<128x12xf32>
    %230 = tpu.matmul %227, %229, %cst_124 {dimension_numbers = #tpu.dot_dimension_numbers<[1], [0], [0], [1], [0, 0, 1, 1], [], []>} : vector<128x12xbf16>, vector<12x12xbf16>, vector<128x12xf32> -> vector<128x12xf32>
    %231 = vector.shape_cast %220 : vector<1x16x8x12xf32> to vector<128x12xf32>
    %232 = arith.truncf %231 : vector<128x12xf32> to vector<128x12xbf16>
    %c2_125 = arith.constant 2 : index
    %c1_126 = arith.constant 1 : index
    %c0_127 = arith.constant 0 : index
    %c0_128 = arith.constant 0 : index
    %233 = vector.load %arg4[%c2_125, %c1_126, %c0_127, %c0_128] : memref<3x9x12x12xbf16, #tpu.memory_space<vmem>>, vector<1x1x12x12xbf16>
    %234 = vector.shape_cast %233 : vector<1x1x12x12xbf16> to vector<12x12xbf16>
    %cst_129 = arith.constant dense<0.000000e+00> : vector<128x12xf32>
    %235 = tpu.matmul %232, %234, %cst_129 {dimension_numbers = #tpu.dot_dimension_numbers<[1], [0], [0], [1], [0, 0, 1, 1], [], []>} : vector<128x12xbf16>, vector<12x12xbf16>, vector<128x12xf32> -> vector<128x12xf32>
    %236 = arith.addf %230, %235 : vector<128x12xf32>
    %237 = vector.extract_strided_slice %220 {offsets = [0, 0, 1, 0], sizes = [1, 16, 7, 12], strides = [1, 1, 1, 1]} : vector<1x16x8x12xf32> to vector<1x16x7x12xf32>
    %238 = vector.extract_strided_slice %220 {offsets = [0, 0, 0, 0], sizes = [1, 16, 1, 12], strides = [1, 1, 1, 1]} : vector<1x16x8x12xf32> to vector<1x16x1x12xf32>
    %239 = tpu.concatenate %237, %238 in 2 : vector<1x16x7x12xf32>, vector<1x16x1x12xf32> -> vector<1x16x8x12xf32>
    %cst_130 = arith.constant 0.000000e+00 : f32
    %240 = vector.broadcast %cst_130 : f32 to vector<1x16x8x12xf32>
    %241 = arith.select %14, %239, %240 : vector<1x16x8x12xi1>, vector<1x16x8x12xf32>
    %242 = vector.shape_cast %241 : vector<1x16x8x12xf32> to vector<128x12xf32>
    %243 = arith.truncf %242 : vector<128x12xf32> to vector<128x12xbf16>
    %c2_131 = arith.constant 2 : index
    %c2_132 = arith.constant 2 : index
    %c0_133 = arith.constant 0 : index
    %c0_134 = arith.constant 0 : index
    %244 = vector.load %arg4[%c2_131, %c2_132, %c0_133, %c0_134] : memref<3x9x12x12xbf16, #tpu.memory_space<vmem>>, vector<1x1x12x12xbf16>
    %245 = vector.shape_cast %244 : vector<1x1x12x12xbf16> to vector<12x12xbf16>
    %cst_135 = arith.constant dense<0.000000e+00> : vector<128x12xf32>
    %246 = tpu.matmul %243, %245, %cst_135 {dimension_numbers = #tpu.dot_dimension_numbers<[1], [0], [0], [1], [0, 0, 1, 1], [], []>} : vector<128x12xbf16>, vector<12x12xbf16>, vector<128x12xf32> -> vector<128x12xf32>
    %247 = arith.addf %236, %246 : vector<128x12xf32>
    %248 = vector.extract_strided_slice %219 {offsets = [0, 1, 0, 0], sizes = [1, 16, 8, 12], strides = [1, 1, 1, 1]} : vector<1x18x8x12xf32> to vector<1x16x8x12xf32>
    %249 = vector.extract_strided_slice %248 {offsets = [0, 0, 7, 0], sizes = [1, 16, 1, 12], strides = [1, 1, 1, 1]} : vector<1x16x8x12xf32> to vector<1x16x1x12xf32>
    %250 = vector.extract_strided_slice %248 {offsets = [0, 0, 0, 0], sizes = [1, 16, 7, 12], strides = [1, 1, 1, 1]} : vector<1x16x8x12xf32> to vector<1x16x7x12xf32>
    %251 = tpu.concatenate %249, %250 in 2 : vector<1x16x1x12xf32>, vector<1x16x7x12xf32> -> vector<1x16x8x12xf32>
    %cst_136 = arith.constant 0.000000e+00 : f32
    %252 = vector.broadcast %cst_136 : f32 to vector<1x16x8x12xf32>
    %253 = arith.select %12, %251, %252 : vector<1x16x8x12xi1>, vector<1x16x8x12xf32>
    %254 = vector.shape_cast %253 : vector<1x16x8x12xf32> to vector<128x12xf32>
    %255 = arith.truncf %254 : vector<128x12xf32> to vector<128x12xbf16>
    %c2_137 = arith.constant 2 : index
    %c3_138 = arith.constant 3 : index
    %c0_139 = arith.constant 0 : index
    %c0_140 = arith.constant 0 : index
    %256 = vector.load %arg4[%c2_137, %c3_138, %c0_139, %c0_140] : memref<3x9x12x12xbf16, #tpu.memory_space<vmem>>, vector<1x1x12x12xbf16>
    %257 = vector.shape_cast %256 : vector<1x1x12x12xbf16> to vector<12x12xbf16>
    %cst_141 = arith.constant dense<0.000000e+00> : vector<128x12xf32>
    %258 = tpu.matmul %255, %257, %cst_141 {dimension_numbers = #tpu.dot_dimension_numbers<[1], [0], [0], [1], [0, 0, 1, 1], [], []>} : vector<128x12xbf16>, vector<12x12xbf16>, vector<128x12xf32> -> vector<128x12xf32>
    %259 = arith.addf %247, %258 : vector<128x12xf32>
    %260 = vector.shape_cast %248 : vector<1x16x8x12xf32> to vector<128x12xf32>
    %261 = arith.truncf %260 : vector<128x12xf32> to vector<128x12xbf16>
    %c2_142 = arith.constant 2 : index
    %c4_143 = arith.constant 4 : index
    %c0_144 = arith.constant 0 : index
    %c0_145 = arith.constant 0 : index
    %262 = vector.load %arg4[%c2_142, %c4_143, %c0_144, %c0_145] : memref<3x9x12x12xbf16, #tpu.memory_space<vmem>>, vector<1x1x12x12xbf16>
    %263 = vector.shape_cast %262 : vector<1x1x12x12xbf16> to vector<12x12xbf16>
    %cst_146 = arith.constant dense<0.000000e+00> : vector<128x12xf32>
    %264 = tpu.matmul %261, %263, %cst_146 {dimension_numbers = #tpu.dot_dimension_numbers<[1], [0], [0], [1], [0, 0, 1, 1], [], []>} : vector<128x12xbf16>, vector<12x12xbf16>, vector<128x12xf32> -> vector<128x12xf32>
    %265 = arith.addf %259, %264 : vector<128x12xf32>
    %266 = vector.extract_strided_slice %248 {offsets = [0, 0, 1, 0], sizes = [1, 16, 7, 12], strides = [1, 1, 1, 1]} : vector<1x16x8x12xf32> to vector<1x16x7x12xf32>
    %267 = vector.extract_strided_slice %248 {offsets = [0, 0, 0, 0], sizes = [1, 16, 1, 12], strides = [1, 1, 1, 1]} : vector<1x16x8x12xf32> to vector<1x16x1x12xf32>
    %268 = tpu.concatenate %266, %267 in 2 : vector<1x16x7x12xf32>, vector<1x16x1x12xf32> -> vector<1x16x8x12xf32>
    %cst_147 = arith.constant 0.000000e+00 : f32
    %269 = vector.broadcast %cst_147 : f32 to vector<1x16x8x12xf32>
    %270 = arith.select %14, %268, %269 : vector<1x16x8x12xi1>, vector<1x16x8x12xf32>
    %271 = vector.shape_cast %270 : vector<1x16x8x12xf32> to vector<128x12xf32>
    %272 = arith.truncf %271 : vector<128x12xf32> to vector<128x12xbf16>
    %c2_148 = arith.constant 2 : index
    %c5_149 = arith.constant 5 : index
    %c0_150 = arith.constant 0 : index
    %c0_151 = arith.constant 0 : index
    %273 = vector.load %arg4[%c2_148, %c5_149, %c0_150, %c0_151] : memref<3x9x12x12xbf16, #tpu.memory_space<vmem>>, vector<1x1x12x12xbf16>
    %274 = vector.shape_cast %273 : vector<1x1x12x12xbf16> to vector<12x12xbf16>
    %cst_152 = arith.constant dense<0.000000e+00> : vector<128x12xf32>
    %275 = tpu.matmul %272, %274, %cst_152 {dimension_numbers = #tpu.dot_dimension_numbers<[1], [0], [0], [1], [0, 0, 1, 1], [], []>} : vector<128x12xbf16>, vector<12x12xbf16>, vector<128x12xf32> -> vector<128x12xf32>
    %276 = arith.addf %265, %275 : vector<128x12xf32>
    %277 = vector.extract_strided_slice %219 {offsets = [0, 2, 0, 0], sizes = [1, 16, 8, 12], strides = [1, 1, 1, 1]} : vector<1x18x8x12xf32> to vector<1x16x8x12xf32>
    %278 = vector.extract_strided_slice %277 {offsets = [0, 0, 7, 0], sizes = [1, 16, 1, 12], strides = [1, 1, 1, 1]} : vector<1x16x8x12xf32> to vector<1x16x1x12xf32>
    %279 = vector.extract_strided_slice %277 {offsets = [0, 0, 0, 0], sizes = [1, 16, 7, 12], strides = [1, 1, 1, 1]} : vector<1x16x8x12xf32> to vector<1x16x7x12xf32>
    %280 = tpu.concatenate %278, %279 in 2 : vector<1x16x1x12xf32>, vector<1x16x7x12xf32> -> vector<1x16x8x12xf32>
    %cst_153 = arith.constant 0.000000e+00 : f32
    %281 = vector.broadcast %cst_153 : f32 to vector<1x16x8x12xf32>
    %282 = arith.select %12, %280, %281 : vector<1x16x8x12xi1>, vector<1x16x8x12xf32>
    %283 = vector.shape_cast %282 : vector<1x16x8x12xf32> to vector<128x12xf32>
    %284 = arith.truncf %283 : vector<128x12xf32> to vector<128x12xbf16>
    %c2_154 = arith.constant 2 : index
    %c6_155 = arith.constant 6 : index
    %c0_156 = arith.constant 0 : index
    %c0_157 = arith.constant 0 : index
    %285 = vector.load %arg4[%c2_154, %c6_155, %c0_156, %c0_157] : memref<3x9x12x12xbf16, #tpu.memory_space<vmem>>, vector<1x1x12x12xbf16>
    %286 = vector.shape_cast %285 : vector<1x1x12x12xbf16> to vector<12x12xbf16>
    %cst_158 = arith.constant dense<0.000000e+00> : vector<128x12xf32>
    %287 = tpu.matmul %284, %286, %cst_158 {dimension_numbers = #tpu.dot_dimension_numbers<[1], [0], [0], [1], [0, 0, 1, 1], [], []>} : vector<128x12xbf16>, vector<12x12xbf16>, vector<128x12xf32> -> vector<128x12xf32>
    %288 = arith.addf %276, %287 : vector<128x12xf32>
    %289 = vector.shape_cast %277 : vector<1x16x8x12xf32> to vector<128x12xf32>
    %290 = arith.truncf %289 : vector<128x12xf32> to vector<128x12xbf16>
    %c2_159 = arith.constant 2 : index
    %c7_160 = arith.constant 7 : index
    %c0_161 = arith.constant 0 : index
    %c0_162 = arith.constant 0 : index
    %291 = vector.load %arg4[%c2_159, %c7_160, %c0_161, %c0_162] : memref<3x9x12x12xbf16, #tpu.memory_space<vmem>>, vector<1x1x12x12xbf16>
    %292 = vector.shape_cast %291 : vector<1x1x12x12xbf16> to vector<12x12xbf16>
    %cst_163 = arith.constant dense<0.000000e+00> : vector<128x12xf32>
    %293 = tpu.matmul %290, %292, %cst_163 {dimension_numbers = #tpu.dot_dimension_numbers<[1], [0], [0], [1], [0, 0, 1, 1], [], []>} : vector<128x12xbf16>, vector<12x12xbf16>, vector<128x12xf32> -> vector<128x12xf32>
    %294 = arith.addf %288, %293 : vector<128x12xf32>
    %295 = vector.extract_strided_slice %277 {offsets = [0, 0, 1, 0], sizes = [1, 16, 7, 12], strides = [1, 1, 1, 1]} : vector<1x16x8x12xf32> to vector<1x16x7x12xf32>
    %296 = vector.extract_strided_slice %277 {offsets = [0, 0, 0, 0], sizes = [1, 16, 1, 12], strides = [1, 1, 1, 1]} : vector<1x16x8x12xf32> to vector<1x16x1x12xf32>
    %297 = tpu.concatenate %295, %296 in 2 : vector<1x16x7x12xf32>, vector<1x16x1x12xf32> -> vector<1x16x8x12xf32>
    %cst_164 = arith.constant 0.000000e+00 : f32
    %298 = vector.broadcast %cst_164 : f32 to vector<1x16x8x12xf32>
    %299 = arith.select %14, %297, %298 : vector<1x16x8x12xi1>, vector<1x16x8x12xf32>
    %300 = vector.shape_cast %299 : vector<1x16x8x12xf32> to vector<128x12xf32>
    %301 = arith.truncf %300 : vector<128x12xf32> to vector<128x12xbf16>
    %c2_165 = arith.constant 2 : index
    %c8_166 = arith.constant 8 : index
    %c0_167 = arith.constant 0 : index
    %c0_168 = arith.constant 0 : index
    %302 = vector.load %arg4[%c2_165, %c8_166, %c0_167, %c0_168] : memref<3x9x12x12xbf16, #tpu.memory_space<vmem>>, vector<1x1x12x12xbf16>
    %303 = vector.shape_cast %302 : vector<1x1x12x12xbf16> to vector<12x12xbf16>
    %cst_169 = arith.constant dense<0.000000e+00> : vector<128x12xf32>
    %304 = tpu.matmul %301, %303, %cst_169 {dimension_numbers = #tpu.dot_dimension_numbers<[1], [0], [0], [1], [0, 0, 1, 1], [], []>} : vector<128x12xbf16>, vector<12x12xbf16>, vector<128x12xf32> -> vector<128x12xf32>
    %305 = arith.addf %294, %304 : vector<128x12xf32>
    %c2_170 = arith.constant 2 : index
    %c0_171 = arith.constant 0 : index
    %c0_172 = arith.constant 0 : index
    %306 = vector.load %arg5[%c2_170, %c0_171, %c0_172] : memref<3x1x12xf32, #tpu.memory_space<vmem>>, vector<1x1x12xf32>
    %307 = vector.shape_cast %306 : vector<1x1x12xf32> to vector<1x12xf32>
    %308 = vector.broadcast %307 : vector<1x12xf32> to vector<128x12xf32>
    %309 = arith.addf %305, %308 : vector<128x12xf32>
    %cst_173 = arith.constant 0.000000e+00 : f32
    %310 = vector.broadcast %cst_173 : f32 to vector<128x12xf32>
    %311 = arith.maximumf %309, %310 : vector<128x12xf32>
    %312 = arith.truncf %311 : vector<128x12xf32> to vector<128x12xbf16>
    %c2_174 = arith.constant 2 : index
    %c0_175 = arith.constant 0 : index
    %c0_176 = arith.constant 0 : index
    %313 = vector.load %arg6[%c2_174, %c0_175, %c0_176] : memref<4x12x128xbf16, #tpu.memory_space<vmem>>, vector<1x12x128xbf16>
    %314 = vector.shape_cast %313 : vector<1x12x128xbf16> to vector<12x128xbf16>
    %cst_177 = arith.constant dense<0.000000e+00> : vector<128x128xf32>
    %315 = tpu.matmul %312, %314, %cst_177 {dimension_numbers = #tpu.dot_dimension_numbers<[1], [0], [0], [1], [0, 0, 1, 1], [], []>} : vector<128x12xbf16>, vector<12x128xbf16>, vector<128x128xf32> -> vector<128x128xf32>
    %316 = arith.addf %215, %315 : vector<128x128xf32>
    %317 = vector.extract_strided_slice %9 {offsets = [0, 36], sizes = [128, 12], strides = [1, 1]} : vector<128x48xf32> to vector<128x12xf32>
    %318 = arith.truncf %317 : vector<128x12xf32> to vector<128x12xbf16>
    %c3_178 = arith.constant 3 : index
    %c0_179 = arith.constant 0 : index
    %c0_180 = arith.constant 0 : index
    %319 = vector.load %arg6[%c3_178, %c0_179, %c0_180] : memref<4x12x128xbf16, #tpu.memory_space<vmem>>, vector<1x12x128xbf16>
    %320 = vector.shape_cast %319 : vector<1x12x128xbf16> to vector<12x128xbf16>
    %cst_181 = arith.constant dense<0.000000e+00> : vector<128x128xf32>
    %321 = tpu.matmul %318, %320, %cst_181 {dimension_numbers = #tpu.dot_dimension_numbers<[1], [0], [0], [1], [0, 0, 1, 1], [], []>} : vector<128x12xbf16>, vector<12x128xbf16>, vector<128x128xf32> -> vector<128x128xf32>
    %322 = arith.addf %316, %321 : vector<128x128xf32>
    %c0_182 = arith.constant 0 : index
    %c0_183 = arith.constant 0 : index
    %323 = vector.load %arg7[%c0_182, %c0_183] : memref<1x128xf32, #tpu.memory_space<vmem>>, vector<1x128xf32>
    %324 = vector.broadcast %323 : vector<1x128xf32> to vector<128x128xf32>
    %325 = arith.addf %322, %324 : vector<128x128xf32>
    %326 = vector.shape_cast %325 : vector<128x128xf32> to vector<1x128x128xf32>
    %cst_184 = arith.constant dense<0.000000e+00> : vector<1x128xf32>
    %327 = vector.multi_reduction <add>, %326, %cst_184 [1] : vector<1x128x128xf32> to vector<1x128xf32>
    %cst_185 = arith.constant 1.280000e+02 : f32
    %328 = vector.broadcast %cst_185 : f32 to vector<1x128xf32>
    %329 = arith.divf %327, %328 : vector<1x128xf32>
    %330 = arith.truncf %329 : vector<1x128xf32> to vector<1x128xbf16>
    %c0_186 = arith.constant 0 : index
    %c0_187 = arith.constant 0 : index
    %331 = vector.load %arg8[%c0_186, %c0_187] : memref<128x8xbf16, #tpu.memory_space<vmem>>, vector<128x8xbf16>
    %cst_188 = arith.constant dense<0.000000e+00> : vector<1x8xf32>
    %332 = tpu.matmul %330, %331, %cst_188 {dimension_numbers = #tpu.dot_dimension_numbers<[1], [0], [0], [1], [0, 0, 1, 1], [], []>} : vector<1x128xbf16>, vector<128x8xbf16>, vector<1x8xf32> -> vector<1x8xf32>
    %c0_189 = arith.constant 0 : index
    %c0_190 = arith.constant 0 : index
    %333 = vector.load %arg9[%c0_189, %c0_190] : memref<1x8xf32, #tpu.memory_space<vmem>>, vector<1x8xf32>
    %334 = arith.addf %332, %333 : vector<1x8xf32>
    %cst_191 = arith.constant 0.000000e+00 : f32
    %335 = vector.broadcast %cst_191 : f32 to vector<1x8xf32>
    %336 = arith.maximumf %334, %335 : vector<1x8xf32>
    %337 = arith.truncf %336 : vector<1x8xf32> to vector<1x8xbf16>
    %c0_192 = arith.constant 0 : index
    %c0_193 = arith.constant 0 : index
    %338 = vector.load %arg10[%c0_192, %c0_193] : memref<8x128xbf16, #tpu.memory_space<vmem>>, vector<8x128xbf16>
    %cst_194 = arith.constant dense<0.000000e+00> : vector<1x128xf32>
    %339 = tpu.matmul %337, %338, %cst_194 {dimension_numbers = #tpu.dot_dimension_numbers<[1], [0], [0], [1], [0, 0, 1, 1], [], []>} : vector<1x8xbf16>, vector<8x128xbf16>, vector<1x128xf32> -> vector<1x128xf32>
    %c0_195 = arith.constant 0 : index
    %c0_196 = arith.constant 0 : index
    %340 = vector.load %arg11[%c0_195, %c0_196] : memref<1x128xf32, #tpu.memory_space<vmem>>, vector<1x128xf32>
    %341 = arith.addf %339, %340 : vector<1x128xf32>
    %342 = arith.negf %341 : vector<1x128xf32>
    %343 = math.exp %342 : vector<1x128xf32>
    %cst_197 = arith.constant 1.000000e+00 : f32
    %344 = vector.broadcast %cst_197 : f32 to vector<1x128xf32>
    %345 = arith.addf %344, %343 : vector<1x128xf32>
    %346 = arith.divf %344, %345 : vector<1x128xf32>
    %c0_198 = arith.constant 0 : index
    %c0_199 = arith.constant 0 : index
    %c0_200 = arith.constant 0 : index
    %c0_201 = arith.constant 0 : index
    %347 = vector.load %arg1[%c0_198, %c0_199, %c0_200, %c0_201] : memref<1x16x8x128xf32, #tpu.memory_space<vmem>>, vector<1x16x8x128xf32>
    %348 = vector.shape_cast %347 : vector<1x16x8x128xf32> to vector<1x128x128xf32>
    %349 = vector.shape_cast %346 : vector<1x128xf32> to vector<1x1x128xf32>
    %350 = vector.broadcast %349 : vector<1x1x128xf32> to vector<1x128x128xf32>
    %351 = arith.mulf %326, %350 : vector<1x128x128xf32>
    %352 = arith.addf %351, %348 : vector<1x128x128xf32>
    %cst_202 = arith.constant 0.000000e+00 : f32
    %353 = vector.broadcast %cst_202 : f32 to vector<1x128x128xf32>
    %354 = arith.maximumf %352, %353 : vector<1x128x128xf32>
    %355 = vector.shape_cast %354 : vector<1x128x128xf32> to vector<1x16x8x128xf32>
    %c0_203 = arith.constant 0 : index
    %c0_204 = arith.constant 0 : index
    %c0_205 = arith.constant 0 : index
    %c0_206 = arith.constant 0 : index
    %356 = vector.load %arg12[%c0_203, %c0_204, %c0_205, %c0_206] : memref<1x16x8x128xf32, #tpu.memory_space<vmem>>, vector<1x16x8x128xf32>
    tpu.vector_store %arg12[%c0_203, %c0_204, %c0_205, %c0_206], %355 {strides = array<i32>} : memref<1x16x8x128xf32, #tpu.memory_space<vmem>>, vector<1x16x8x128xf32>,
    return
  }
  func.func @transform_0(%arg0: i32) -> (i32, i32, i32, i32) {
    %c0_i32 = arith.constant 0 : i32
    %c0_i32_0 = arith.constant 0 : i32
    %c0_i32_1 = arith.constant 0 : i32
    %c0_i32_2 = arith.constant 0 : i32
    return %arg0, %c0_i32, %c0_i32_0, %c0_i32_1 : i32, i32, i32, i32
  }
  func.func @transform_1(%arg0: i32) -> (i32, i32) {
    %c0_i32 = arith.constant 0 : i32
    %c0_i32_0 = arith.constant 0 : i32
    %c0_i32_1 = arith.constant 0 : i32
    return %c0_i32, %c0_i32_0 : i32, i32
  }
  func.func @transform_2(%arg0: i32) -> (i32, i32) {
    %c0_i32 = arith.constant 0 : i32
    %c0_i32_0 = arith.constant 0 : i32
    %c0_i32_1 = arith.constant 0 : i32
    return %c0_i32, %c0_i32_0 : i32, i32
  }
  func.func @transform_3(%arg0: i32) -> (i32, i32, i32, i32) {
    %c0_i32 = arith.constant 0 : i32
    %c0_i32_0 = arith.constant 0 : i32
    %c0_i32_1 = arith.constant 0 : i32
    %c0_i32_2 = arith.constant 0 : i32
    %c0_i32_3 = arith.constant 0 : i32
    return %c0_i32, %c0_i32_0, %c0_i32_1, %c0_i32_2 : i32, i32, i32, i32
  }
  func.func @transform_4(%arg0: i32) -> (i32, i32, i32) {
    %c0_i32 = arith.constant 0 : i32
    %c0_i32_0 = arith.constant 0 : i32
    %c0_i32_1 = arith.constant 0 : i32
    %c0_i32_2 = arith.constant 0 : i32
    return %c0_i32, %c0_i32_0, %c0_i32_1 : i32, i32, i32
  }
  func.func @transform_5(%arg0: i32) -> (i32, i32, i32) {
    %c0_i32 = arith.constant 0 : i32
    %c0_i32_0 = arith.constant 0 : i32
    %c0_i32_1 = arith.constant 0 : i32
    %c0_i32_2 = arith.constant 0 : i32
    return %c0_i32, %c0_i32_0, %c0_i32_1 : i32, i32, i32
  }
  func.func @transform_6(%arg0: i32) -> (i32, i32) {
    %c0_i32 = arith.constant 0 : i32
    %c0_i32_0 = arith.constant 0 : i32
    %c0_i32_1 = arith.constant 0 : i32
    return %c0_i32, %c0_i32_0 : i32, i32
  }
  func.func @transform_7(%arg0: i32) -> (i32, i32) {
    %c0_i32 = arith.constant 0 : i32
    %c0_i32_0 = arith.constant 0 : i32
    %c0_i32_1 = arith.constant 0 : i32
    return %c0_i32, %c0_i32_0 : i32, i32
  }
  func.func @transform_8(%arg0: i32) -> (i32, i32) {
    %c0_i32 = arith.constant 0 : i32
    %c0_i32_0 = arith.constant 0 : i32
    %c0_i32_1 = arith.constant 0 : i32
    return %c0_i32, %c0_i32_0 : i32, i32
  }
  func.func @transform_9(%arg0: i32) -> (i32, i32) {
    %c0_i32 = arith.constant 0 : i32
    %c0_i32_0 = arith.constant 0 : i32
    %c0_i32_1 = arith.constant 0 : i32
    return %c0_i32, %c0_i32_0 : i32, i32
  }
  func.func @transform_10(%arg0: i32) -> (i32, i32) {
    %c0_i32 = arith.constant 0 : i32
    %c0_i32_0 = arith.constant 0 : i32
    %c0_i32_1 = arith.constant 0 : i32
    return %c0_i32, %c0_i32_0 : i32, i32
  }
  func.func @transform_11(%arg0: i32) -> (i32, i32, i32, i32) {
    %c0_i32 = arith.constant 0 : i32
    %c0_i32_0 = arith.constant 0 : i32
    %c0_i32_1 = arith.constant 0 : i32
    %c0_i32_2 = arith.constant 0 : i32
    return %arg0, %c0_i32, %c0_i32_0, %c0_i32_1 : i32, i32, i32, i32
  }
}

</mosaic_0001>

<llo_original>
// kernel: tpu_custom_call.1
$region0: #{tpu_custom_call.1}
  #allocation0 [shape = 'u32[]', space=smem, size = 0x4, offset = 0x4, fixed_abs, tag = 'smem constant byte address 0x4 - core index']
  #allocation1 [shape = 'u32[144,128]{1,0:T(1,128)}', space=vmem, size = 0x12000, scoped, tag = 'internal scratch']
  %s0 = inlined_call_operand.vmem [shape: f32[1,16,8,12], index: 0, kind: input, shape index: {}]
  %s1 = inlined_call_operand.vmem [shape: f32[1,16,8,12], index: 1, kind: output, shape index: {}]
  %s2 = sld [smem:[#allocation0]]
  $region14: #{tpu_custom_call.1} parent=0
    _
  %s4 = ssub.s32 1, %s2
  %s5 = scalar_select 0, %s4, %s2
  // Predicated region
  $region2: #{tpu_custom_call.1} parent=0 // pred_check
    _
  $region3: #{tpu_custom_call.1} parent=0 // pred_check_branch
    %7 = sbr.rel (0) target = $region5
  $region4: #{tpu_custom_call.1} parent=0 // pred_region
    _
  $region5: #{tpu_custom_call.1} parent=0 // pred_fallthru
    _
  %v8 = vld [vmem:[%s0] sm:$0xff]
  %v9 = vld [vmem:[%s0 + $0x8] sm:$0xff]
  %v10 = vld [vmem:[%s0 + $0x10] sm:$0xff]
  %v11 = vld [vmem:[%s0 + $0x18] sm:$0xff]
  %v12 = vld [vmem:[%s0 + $0x20] sm:$0xff]
  %v13 = vld [vmem:[%s0 + $0x28] sm:$0xff]
  %v14 = vld [vmem:[%s0 + $0x30] sm:$0xff]
  %v15 = vld [vmem:[%s0 + $0x38] sm:$0xff]
  %v16 = vld [vmem:[%s0 + $0x40] sm:$0xff]
  %v17 = vld [vmem:[%s0 + $0x48] sm:$0xff]
  %v18 = vld [vmem:[%s0 + $0x50] sm:$0xff]
  %v19 = vld [vmem:[%s0 + $0x58] sm:$0xff]
  %v20 = vld [vmem:[%s0 + $0x60] sm:$0xff]
  %v21 = vld [vmem:[%s0 + $0x68] sm:$0xff]
  %v22 = vld [vmem:[%s0 + $0x70] sm:$0xff]
  %v23 = vld [vmem:[%s0 + $0x78] sm:$0xff]
  %v24 = vrot.slane %v8, 7
  %v25 = vrot.slane %v9, 7
  %v26 = vrot.slane %v10, 7
  %v27 = vrot.slane %v11, 7
  %v28 = vrot.slane %v12, 7
  %v29 = vrot.slane %v13, 7
  %v30 = vrot.slane %v14, 7
  %v31 = vrot.slane %v15, 7
  %v32 = vrot.slane %v16, 7
  %v33 = vrot.slane %v17, 7
  %v34 = vrot.slane %v18, 7
  %v35 = vrot.slane %v19, 7
  %v36 = vrot.slane %v20, 7
  %v37 = vrot.slane %v21, 7
  %v38 = vrot.slane %v22, 7
  %v39 = vrot.slane %v23, 7
  %vm40 = vcmask 97280
  %41 = vst.msk [vmem:[%s1] sm:$0xff] %vm40, %v24
  %42 = vst.msk [vmem:[%s1 + $0x8] sm:$0xff] %vm40, %v25
  %43 = vst.msk [vmem:[%s1 + $0x10] sm:$0xff] %vm40, %v26
  %44 = vst.msk [vmem:[%s1 + $0x18] sm:$0xff] %vm40, %v27
  %45 = vst.msk [vmem:[%s1 + $0x20] sm:$0xff] %vm40, %v28
  %46 = vst.msk [vmem:[%s1 + $0x28] sm:$0xff] %vm40, %v29
  %47 = vst.msk [vmem:[%s1 + $0x30] sm:$0xff] %vm40, %v30
  %48 = vst.msk [vmem:[%s1 + $0x38] sm:$0xff] %vm40, %v31
  %49 = vst.msk [vmem:[%s1 + $0x40] sm:$0xff] %vm40, %v32
  %50 = vst.msk [vmem:[%s1 + $0x48] sm:$0xff] %vm40, %v33
  %51 = vst.msk [vmem:[%s1 + $0x50] sm:$0xff] %vm40, %v34
  %52 = vst.msk [vmem:[%s1 + $0x58] sm:$0xff] %vm40, %v35
  %53 = vst.msk [vmem:[%s1 + $0x60] sm:$0xff] %vm40, %v36
  %54 = vst.msk [vmem:[%s1 + $0x68] sm:$0xff] %vm40, %v37
  %55 = vst.msk [vmem:[%s1 + $0x70] sm:$0xff] %vm40, %v38
  %56 = vst.msk [vmem:[%s1 + $0x78] sm:$0xff] %vm40, %v39
  // Predicated region
  $region6: #{tpu_custom_call.1} parent=0 // pred_check
    _
  $region7: #{tpu_custom_call.1} parent=0 // pred_check_branch
    %58 = sbr.rel (0) target = $region9
  $region8: #{tpu_custom_call.1} parent=0 // pred_region
    _
  $region9: #{tpu_custom_call.1} parent=0 // pred_fallthru
    _
  // Predicated region
  $region10: #{tpu_custom_call.1} parent=0 // pred_check
    _
  $region11: #{tpu_custom_call.1} parent=0 // pred_check_branch
    %60 = sbr.rel (0) target = $region13
  $region12: #{tpu_custom_call.1} parent=0 // pred_region
    _
  $region13: #{tpu_custom_call.1} parent=0 // pred_fallthru
    _

// kernel: tpu_custom_call.1
$region0: #{tpu_custom_call.1}
  #allocation0 [shape = 'u32[]', space=smem, size = 0x4, offset = 0x4, fixed_abs, tag = 'smem constant byte address 0x4 - core index']
  #allocation1 [shape = 'u32[144,128]{1,0:T(1,128)}', space=vmem, size = 0x12000, scoped, tag = 'internal scratch']
  %s0 = inlined_call_operand.hbm [shape: f32[2,16,8,128], index: 0, kind: input, shape index: {}]
  %s1 = inlined_call_operand.vmem [shape: bf16[128,48], index: 1, kind: input, shape index: {}]
  %s2 = inlined_call_operand.hbm [shape: f32[1,48], index: 2, kind: input, shape index: {}]
  %s3 = inlined_call_operand.vmem [shape: bf16[3,9,12,12], index: 3, kind: input, shape index: {}]
  %s4 = inlined_call_operand.vmem [shape: f32[3,1,12], index: 4, kind: input, shape index: {}]
  %s5 = inlined_call_operand.vmem [shape: bf16[4,12,128], index: 5, kind: input, shape index: {}]
  %s6 = inlined_call_operand.vmem [shape: f32[1,128], index: 6, kind: input, shape index: {}]
  %s7 = inlined_call_operand.vmem [shape: bf16[128,8], index: 7, kind: input, shape index: {}]
  %s8 = inlined_call_operand.vmem [shape: f32[1,8], index: 8, kind: input, shape index: {}]
  %s9 = inlined_call_operand.vmem [shape: bf16[8,128], index: 9, kind: input, shape index: {}]
  %s10 = inlined_call_operand.vmem [shape: f32[1,128], index: 10, kind: input, shape index: {}]
  %s11 = inlined_call_operand.hbm [shape: f32[2,16,8,128], index: 11, kind: output, shape index: {}]
  %s12 = sld [smem:[#allocation0]]
  $region85: #{tpu_custom_call.1} parent=0
    _
  %s14 = ssub.s32 1, %s12
  %s15 = scalar_select 0, %s14, %s12
  $region1: #{tpu_custom_call.1} parent=0
    #allocation2 [shape = 'u8[131072]{0}', space=vmem, size = 0x20000, scoped, tag = 'input window, operand 0']
    #allocation3 [shape = 's32[2]{0}', space=sflag, size = 0x8, scoped, tag = 'scoped memory for tpu_custom_call.1']
    #allocation4 [shape = 's32[2]{0}', space=sflag, size = 0x8, scoped, tag = 'scoped memory for tpu_custom_call.1']
    #allocation5 [shape = 'u8[512]{0}', space=vmem, size = 0x400, scoped, tag = 'input window, operand 2, single buffered']
    #allocation6 [shape = 's32[1]{0}', space=sflag, size = 0x4, scoped, tag = 'scoped memory for tpu_custom_call.1']
    #allocation7 [shape = 'u8[131072]{0}', space=vmem, size = 0x20000, scoped, tag = 'output window, operand 0']
    %16 = vsyncpa [#allocation3], 0
    %s17 = scalar_lea.sflag [#allocation3], 1
    %18 = vsyncpa %s17, 0
    %19 = vsyncpa [#allocation6], 0
    %20 = vsyncpa [#allocation4], 0
    %s21 = scalar_lea.sflag [#allocation4], 1
    %22 = vsyncpa %s21, 0
    loop: start=0, step=1, limit=4
    $region2: #{tpu_custom_call.1} parent=1 // loop_pre_header
      _
    $region3: #{tpu_custom_call.1} parent=1 // loop_header
      %s24 = sphi 0, %s28
      %p25 = scmp.ge.s32.totalorder %s24, 4
      %s34 = sphi 0, %s36
      %s37 = sphi 0, %s34
      %s38 = sphi 0, %s37
      %s54 = sphi 0, %s38
      %s58 = sphi 0, %s58
      %s60 = sphi 0, %s58
      %s61 = sphi 0, %s60
      %s75 = sphi 0, %s61
      %s79 = sphi 0, %s79
      %s81 = sphi 0, %s79
      %s82 = sphi 0, %s81
      %s96 = sphi 0, %s82
      %s100 = sphi 0, %s100
      %s102 = sphi 0, %s100
      %s103 = sphi 0, %s102
      %s117 = sphi 0, %s103
      %s121 = sphi 0, %s121
      %s123 = sphi 0, %s121
      %s124 = sphi 0, %s123
      %s138 = sphi 0, %s124
      %s142 = sphi 0, %s142
      %s144 = sphi 0, %s142
      %s145 = sphi 0, %s144
      %s159 = sphi 0, %s145
      %s163 = sphi 0, %s163
      %s165 = sphi 0, %s163
      %s166 = sphi 0, %s165
      %s180 = sphi 0, %s166
      %s184 = sphi 0, %s184
      %s186 = sphi 0, %s184
      %s187 = sphi 0, %s186
      %s201 = sphi 0, %s187
      %s205 = sphi 0, %s205
      %s207 = sphi 0, %s205
      %s208 = sphi 0, %s207
      %s222 = sphi 0, %s208
      %s226 = sphi 0, %s226
      %s228 = sphi 0, %s226
      %s229 = sphi 0, %s228
      %s243 = sphi 0, %s229
      %s247 = sphi 0, %s247
      %s249 = sphi 0, %s247
      %s250 = sphi 0, %s249
      %s264 = sphi 0, %s250
      %s270 = sphi 0, %s272
      %s273 = sphi 0, %s270
      %s274 = sphi 0, %s273
      %s290 = sphi 0, %s274
    $region4: #{tpu_custom_call.1} parent=1 // loop_header_branch
      %27 = sbr.rel (%p25) target = $region8
    $region5: #{tpu_custom_call.1} parent=1 // loop_body
      %s29 = ssub.s32 %s24, 1
      %s30 = ssub.s32 %s24, 2
      %s31 = sadd.s32 %s24, 1
      %s32 = ssub.s32 %s24, %s31
      %p33 = scmp.eq.s32.totalorder %s32, 0
      %s35 = sadd.s32 %s34, 1
      %s36 = scalar_select %p33, %s34, %s35
      %p39 = pneg %p33
      %p40 = scmp.eq.s32.totalorder %s24, 1
      %p41 = por %p39, %p40
      %p42 = scmp.ne.s32.totalorder %s34, %s37
      %p43 = scmp.eq.s32.totalorder %s24, 0
      %p44 = por %p42, %p43
      %p45 = scmp.ne.s32.totalorder %s34, %s37
      %p46 = scmp.eq.s32.totalorder %s29, 1
      %p47 = por %p45, %p46
      %p48 = scmp.ne.s32.totalorder %s37, %s38
      %p49 = scmp.eq.s32.totalorder %s29, 0
      %p50 = por %p48, %p49
      %p51 = scmp.ne.s32.totalorder %s37, %s38
      %p52 = scmp.eq.s32.totalorder %s30, 1
      %p53 = por %p51, %p52
      %p55 = scmp.ne.s32.totalorder %s38, %s54
      %p56 = scmp.eq.s32.totalorder %s30, 0
      %p57 = por %p55, %p56
      %s59 = sadd.s32 %s58, 1
      %p62 = scmp.eq.s32.totalorder %s24, 1
      %p63 = scmp.ne.s32.totalorder %s58, %s60
      %p64 = scmp.eq.s32.totalorder %s24, 0
      %p65 = por %p63, %p64
      %p66 = scmp.ne.s32.totalorder %s58, %s60
      %p67 = scmp.eq.s32.totalorder %s29, 1
      %p68 = por %p66, %p67
      %p69 = scmp.ne.s32.totalorder %s60, %s61
      %p70 = scmp.eq.s32.totalorder %s29, 0
      %p71 = por %p69, %p70
      %p72 = scmp.ne.s32.totalorder %s60, %s61
      %p73 = scmp.eq.s32.totalorder %s30, 1
      %p74 = por %p72, %p73
      %p76 = scmp.ne.s32.totalorder %s61, %s75
      %p77 = scmp.eq.s32.totalorder %s30, 0
      %p78 = por %p76, %p77
      %s80 = sadd.s32 %s79, 1
      %p83 = scmp.eq.s32.totalorder %s24, 1
      %p84 = scmp.ne.s32.totalorder %s79, %s81
      %p85 = scmp.eq.s32.totalorder %s24, 0
      %p86 = por %p84, %p85
      %p87 = scmp.ne.s32.totalorder %s79, %s81
      %p88 = scmp.eq.s32.totalorder %s29, 1
      %p89 = por %p87, %p88
      %p90 = scmp.ne.s32.totalorder %s81, %s82
      %p91 = scmp.eq.s32.totalorder %s29, 0
      %p92 = por %p90, %p91
      %p93 = scmp.ne.s32.totalorder %s81, %s82
      %p94 = scmp.eq.s32.totalorder %s30, 1
      %p95 = por %p93, %p94
      %p97 = scmp.ne.s32.totalorder %s82, %s96
      %p98 = scmp.eq.s32.totalorder %s30, 0
      %p99 = por %p97, %p98
      %s101 = sadd.s32 %s100, 1
      %p104 = scmp.eq.s32.totalorder %s24, 1
      %p105 = scmp.ne.s32.totalorder %s100, %s102
      %p106 = scmp.eq.s32.totalorder %s24, 0
      %p107 = por %p105, %p106
      %p108 = scmp.ne.s32.totalorder %s100, %s102
      %p109 = scmp.eq.s32.totalorder %s29, 1
      %p110 = por %p108, %p109
      %p111 = scmp.ne.s32.totalorder %s102, %s103
      %p112 = scmp.eq.s32.totalorder %s29, 0
      %p113 = por %p111, %p112
      %p114 = scmp.ne.s32.totalorder %s102, %s103
      %p115 = scmp.eq.s32.totalorder %s30, 1
      %p116 = por %p114, %p115
      %p118 = scmp.ne.s32.totalorder %s103, %s117
      %p119 = scmp.eq.s32.totalorder %s30, 0
      %p120 = por %p118, %p119
      %s122 = sadd.s32 %s121, 1
      %p125 = scmp.eq.s32.totalorder %s24, 1
      %p126 = scmp.ne.s32.totalorder %s121, %s123
      %p127 = scmp.eq.s32.totalorder %s24, 0
      %p128 = por %p126, %p127
      %p129 = scmp.ne.s32.totalorder %s121, %s123
      %p130 = scmp.eq.s32.totalorder %s29, 1
      %p131 = por %p129, %p130
      %p132 = scmp.ne.s32.totalorder %s123, %s124
      %p133 = scmp.eq.s32.totalorder %s29, 0
      %p134 = por %p132, %p133
      %p135 = scmp.ne.s32.totalorder %s123, %s124
      %p136 = scmp.eq.s32.totalorder %s30, 1
      %p137 = por %p135, %p136
      %p139 = scmp.ne.s32.totalorder %s124, %s138
      %p140 = scmp.eq.s32.totalorder %s30, 0
      %p141 = por %p139, %p140
      %s143 = sadd.s32 %s142, 1
      %p146 = scmp.eq.s32.totalorder %s24, 1
      %p147 = scmp.ne.s32.totalorder %s142, %s144
      %p148 = scmp.eq.s32.totalorder %s24, 0
      %p149 = por %p147, %p148
      %p150 = scmp.ne.s32.totalorder %s142, %s144
      %p151 = scmp.eq.s32.totalorder %s29, 1
      %p152 = por %p150, %p151
      %p153 = scmp.ne.s32.totalorder %s144, %s145
      %p154 = scmp.eq.s32.totalorder %s29, 0
      %p155 = por %p153, %p154
      %p156 = scmp.ne.s32.totalorder %s144, %s145
      %p157 = scmp.eq.s32.totalorder %s30, 1
      %p158 = por %p156, %p157
      %p160 = scmp.ne.s32.totalorder %s145, %s159
      %p161 = scmp.eq.s32.totalorder %s30, 0
      %p162 = por %p160, %p161
      %s164 = sadd.s32 %s163, 1
      %p167 = scmp.eq.s32.totalorder %s24, 1
      %p168 = scmp.ne.s32.totalorder %s163, %s165
      %p169 = scmp.eq.s32.totalorder %s24, 0
      %p170 = por %p168, %p169
      %p171 = scmp.ne.s32.totalorder %s163, %s165
      %p172 = scmp.eq.s32.totalorder %s29, 1
      %p173 = por %p171, %p172
      %p174 = scmp.ne.s32.totalorder %s165, %s166
      %p175 = scmp.eq.s32.totalorder %s29, 0
      %p176 = por %p174, %p175
      %p177 = scmp.ne.s32.totalorder %s165, %s166
      %p178 = scmp.eq.s32.totalorder %s30, 1
      %p179 = por %p177, %p178
      %p181 = scmp.ne.s32.totalorder %s166, %s180
      %p182 = scmp.eq.s32.totalorder %s30, 0
      %p183 = por %p181, %p182
      %s185 = sadd.s32 %s184, 1
      %p188 = scmp.eq.s32.totalorder %s24, 1
      %p189 = scmp.ne.s32.totalorder %s184, %s186
      %p190 = scmp.eq.s32.totalorder %s24, 0
      %p191 = por %p189, %p190
      %p192 = scmp.ne.s32.totalorder %s184, %s186
      %p193 = scmp.eq.s32.totalorder %s29, 1
      %p194 = por %p192, %p193
      %p195 = scmp.ne.s32.totalorder %s186, %s187
      %p196 = scmp.eq.s32.totalorder %s29, 0
      %p197 = por %p195, %p196
      %p198 = scmp.ne.s32.totalorder %s186, %s187
      %p199 = scmp.eq.s32.totalorder %s30, 1
      %p200 = por %p198, %p199
      %p202 = scmp.ne.s32.totalorder %s187, %s201
      %p203 = scmp.eq.s32.totalorder %s30, 0
      %p204 = por %p202, %p203
      %s206 = sadd.s32 %s205, 1
      %p209 = scmp.eq.s32.totalorder %s24, 1
      %p210 = scmp.ne.s32.totalorder %s205, %s207
      %p211 = scmp.eq.s32.totalorder %s24, 0
      %p212 = por %p210, %p211
      %p213 = scmp.ne.s32.totalorder %s205, %s207
      %p214 = scmp.eq.s32.totalorder %s29, 1
      %p215 = por %p213, %p214
      %p216 = scmp.ne.s32.totalorder %s207, %s208
      %p217 = scmp.eq.s32.totalorder %s29, 0
      %p218 = por %p216, %p217
      %p219 = scmp.ne.s32.totalorder %s207, %s208
      %p220 = scmp.eq.s32.totalorder %s30, 1
      %p221 = por %p219, %p220
      %p223 = scmp.ne.s32.totalorder %s208, %s222
      %p224 = scmp.eq.s32.totalorder %s30, 0
      %p225 = por %p223, %p224
      %s227 = sadd.s32 %s226, 1
      %p230 = scmp.eq.s32.totalorder %s24, 1
      %p231 = scmp.ne.s32.totalorder %s226, %s228
      %p232 = scmp.eq.s32.totalorder %s24, 0
      %p233 = por %p231, %p232
      %p234 = scmp.ne.s32.totalorder %s226, %s228
      %p235 = scmp.eq.s32.totalorder %s29, 1
      %p236 = por %p234, %p235
      %p237 = scmp.ne.s32.totalorder %s228, %s229
      %p238 = scmp.eq.s32.totalorder %s29, 0
      %p239 = por %p237, %p238
      %p240 = scmp.ne.s32.totalorder %s228, %s229
      %p241 = scmp.eq.s32.totalorder %s30, 1
      %p242 = por %p240, %p241
      %p244 = scmp.ne.s32.totalorder %s229, %s243
      %p245 = scmp.eq.s32.totalorder %s30, 0
      %p246 = por %p244, %p245
      %s248 = sadd.s32 %s247, 1
      %p251 = scmp.eq.s32.totalorder %s24, 1
      %p252 = scmp.ne.s32.totalorder %s247, %s249
      %p253 = scmp.eq.s32.totalorder %s24, 0
      %p254 = por %p252, %p253
      %p255 = scmp.ne.s32.totalorder %s247, %s249
      %p256 = scmp.eq.s32.totalorder %s29, 1
      %p257 = por %p255, %p256
      %p258 = scmp.ne.s32.totalorder %s249, %s250
      %p259 = scmp.eq.s32.totalorder %s29, 0
      %p260 = por %p258, %p259
      %p261 = scmp.ne.s32.totalorder %s249, %s250
      %p262 = scmp.eq.s32.totalorder %s30, 1
      %p263 = por %p261, %p262
      %p265 = scmp.ne.s32.totalorder %s250, %s264
      %p266 = scmp.eq.s32.totalorder %s30, 0
      %p267 = por %p265, %p266
      %s268 = ssub.s32 %s24, %s31
      %p269 = scmp.eq.s32.totalorder %s268, 0
      %s271 = sadd.s32 %s270, 1
      %s272 = scalar_select %p269, %s270, %s271
      %p275 = pneg %p269
      %p276 = scmp.eq.s32.totalorder %s24, 1
      %p277 = por %p275, %p276
      %p278 = scmp.ne.s32.totalorder %s270, %s273
      %p279 = scmp.eq.s32.totalorder %s24, 0
      %p280 = por %p278, %p279
      %p281 = scmp.ne.s32.totalorder %s270, %s273
      %p282 = scmp.eq.s32.totalorder %s29, 1
      %p283 = por %p281, %p282
      %p284 = scmp.ne.s32.totalorder %s273, %s274
      %p285 = scmp.eq.s32.totalorder %s29, 0
      %p286 = por %p284, %p285
      %p287 = scmp.ne.s32.totalorder %s273, %s274
      %p288 = scmp.eq.s32.totalorder %s30, 1
      %p289 = por %p287, %p288
      %p291 = scmp.ne.s32.totalorder %s274, %s290
      %p292 = scmp.eq.s32.totalorder %s30, 0
      %p293 = por %p291, %p292
      %p294 = scmp.le.s32.totalorder 1, %s24
      %p295 = scmp.lt.s32.totalorder %s24, 3
      %p296 = pnand %p294, %p295
      %p297 = pneg %p296
      // Predicated region
      $region9: #{tpu_custom_call.1} parent=5 // pred_check
        _
      $region10: #{tpu_custom_call.1} parent=5 // pred_check_branch
        %299 = sbr.rel (%p296) target = $region12
      $region11: #{tpu_custom_call.1} parent=5 // pred_region
        %s300 = ssub.s32 %s24, 1
        // Predicated region
        $region13: #{tpu_custom_call.1} parent=11 // pred_check
          %p301 = pneg %p71
        $region14: #{tpu_custom_call.1} parent=11 // pred_check_branch
          %303 = sbr.rel (%p301) target = $region16
        $region15: #{tpu_custom_call.1} parent=11 // pred_region
          _
        $region16: #{tpu_custom_call.1} parent=11 // pred_fallthru
          _
        // Predicated region
        $region17: #{tpu_custom_call.1} parent=11 // pred_check
          %p304 = pneg %p92
        $region18: #{tpu_custom_call.1} parent=11 // pred_check_branch
          %306 = sbr.rel (%p304) target = $region20
        $region19: #{tpu_custom_call.1} parent=11 // pred_region
          %s308 = ssub.s32 16, 16
          %309 = vsyncadd [#allocation6], %s308
          %s311 = sshll.u32 [#allocation5], 4
          %s312 = int_to_ptr.vmem [resolvable:$true] %s311
          %314 = dma.hbm_to_vmem [thread:$0]  %s2, 16, %s312, [#allocation6]
        $region20: #{tpu_custom_call.1} parent=11 // pred_fallthru
          _
        // Predicated region
        $region21: #{tpu_custom_call.1} parent=11 // pred_check
          %p315 = pneg %p113
        $region22: #{tpu_custom_call.1} parent=11 // pred_check_branch
          %317 = sbr.rel (%p315) target = $region24
        $region23: #{tpu_custom_call.1} parent=11 // pred_region
          _
        $region24: #{tpu_custom_call.1} parent=11 // pred_fallthru
          _
        // Predicated region
        $region25: #{tpu_custom_call.1} parent=11 // pred_check
          %p318 = pneg %p134
        $region26: #{tpu_custom_call.1} parent=11 // pred_check_branch
          %320 = sbr.rel (%p318) target = $region28
        $region27: #{tpu_custom_call.1} parent=11 // pred_region
          _
        $region28: #{tpu_custom_call.1} parent=11 // pred_fallthru
          _
        // Predicated region
        $region29: #{tpu_custom_call.1} parent=11 // pred_check
          %p321 = pneg %p155
        $region30: #{tpu_custom_call.1} parent=11 // pred_check_branch
          %323 = sbr.rel (%p321) target = $region32
        $region31: #{tpu_custom_call.1} parent=11 // pred_region
          _
        $region32: #{tpu_custom_call.1} parent=11 // pred_fallthru
          _
        // Predicated region
        $region33: #{tpu_custom_call.1} parent=11 // pred_check
          %p324 = pneg %p176
        $region34: #{tpu_custom_call.1} parent=11 // pred_check_branch
          %326 = sbr.rel (%p324) target = $region36
        $region35: #{tpu_custom_call.1} parent=11 // pred_region
          _
        $region36: #{tpu_custom_call.1} parent=11 // pred_fallthru
          _
        // Predicated region
        $region37: #{tpu_custom_call.1} parent=11 // pred_check
          %p327 = pneg %p197
        $region38: #{tpu_custom_call.1} parent=11 // pred_check_branch
          %329 = sbr.rel (%p327) target = $region40
        $region39: #{tpu_custom_call.1} parent=11 // pred_region
          _
        $region40: #{tpu_custom_call.1} parent=11 // pred_fallthru
          _
        // Predicated region
        $region41: #{tpu_custom_call.1} parent=11 // pred_check
          %p330 = pneg %p218
        $region42: #{tpu_custom_call.1} parent=11 // pred_check_branch
          %332 = sbr.rel (%p330) target = $region44
        $region43: #{tpu_custom_call.1} parent=11 // pred_region
          _
        $region44: #{tpu_custom_call.1} parent=11 // pred_fallthru
          _
        // Predicated region
        $region45: #{tpu_custom_call.1} parent=11 // pred_check
          %p333 = pneg %p239
        $region46: #{tpu_custom_call.1} parent=11 // pred_check_branch
          %335 = sbr.rel (%p333) target = $region48
        $region47: #{tpu_custom_call.1} parent=11 // pred_region
          _
        $region48: #{tpu_custom_call.1} parent=11 // pred_fallthru
          _
        // Predicated region
        $region49: #{tpu_custom_call.1} parent=11 // pred_check
          %p336 = pneg %p260
        $region50: #{tpu_custom_call.1} parent=11 // pred_check_branch
          %338 = sbr.rel (%p336) target = $region52
        $region51: #{tpu_custom_call.1} parent=11 // pred_region
          _
        $region52: #{tpu_custom_call.1} parent=11 // pred_fallthru
          _
      $region12: #{tpu_custom_call.1} parent=5 // pred_fallthru
        _
      %p339 = scmp.lt.s32.totalorder %s24, 2
      // Predicated region
      $region53: #{tpu_custom_call.1} parent=5 // pred_check
        %p340 = pneg %p339
      $region54: #{tpu_custom_call.1} parent=5 // pred_check_branch
        %342 = sbr.rel (%p340) target = $region56
      $region55: #{tpu_custom_call.1} parent=5 // pred_region
        // Predicated region
        $region57: #{tpu_custom_call.1} parent=55 // pred_check
          %p343 = pneg %p44
        $region58: #{tpu_custom_call.1} parent=55 // pred_check_branch
          %345 = sbr.rel (%p343) target = $region60
        $region59: #{tpu_custom_call.1} parent=55 // pred_region
          %s346 = sand.u32 %s34, 1
          %s347 = scalar_lea.sflag [#allocation3], %s346
          %s348 = sand.u32 %s34, 1
          %s349 = smul.addr %s348, 128
          %s350 = scalar_lea.vmem [#allocation2], %s349
          %s352 = ssub.s32 2048, 2048
          %353 = vsyncadd %s347, %s352
          %s354 = smul.addr %s24, 16
          %s355 = smul.addr %s354, 128
          %s356 = scalar_lea.hbm %s0, %s355
          %s357 = sshll.u32 %s350, 4
          %s358 = int_to_ptr.vmem [resolvable:$true] %s357
          %363 = dma.hbm_to_vmem [thread:$0]  %s356, 2048, %s358, %s347, 128, 128, 8
        $region60: #{tpu_custom_call.1} parent=55 // pred_fallthru
          _
      $region56: #{tpu_custom_call.1} parent=5 // pred_fallthru
        _
      %p364 = scmp.le.s32.totalorder 1, %s24
      %p365 = scmp.lt.s32.totalorder %s24, 3
      %p366 = pnand %p364, %p365
      %p367 = pneg %p366
      // Predicated region
      $region61: #{tpu_custom_call.1} parent=5 // pred_check
        _
      $region62: #{tpu_custom_call.1} parent=5 // pred_check_branch
        %369 = sbr.rel (%p366) target = $region64
      $region63: #{tpu_custom_call.1} parent=5 // pred_region
        %s370 = ssub.s32 %s24, 1
        %s371 = sand.u32 %s37, 1
        %s372 = scalar_lea.sflag [#allocation3], %s371
        %s373 = sand.u32 %s37, 1
        %s374 = smul.addr %s373, 128
        %s375 = scalar_lea.vmem [#allocation2], %s374
        // Predicated region
        $region65: #{tpu_custom_call.1} parent=63 // pred_check
          %p376 = pneg %p50
        $region66: #{tpu_custom_call.1} parent=63 // pred_check_branch
          %378 = sbr.rel (%p376) target = $region68
        $region67: #{tpu_custom_call.1} parent=63 // pred_region
          %379 = dma.done %s372, 2048
        $region68: #{tpu_custom_call.1} parent=63 // pred_fallthru
          _
        // Predicated region
        $region69: #{tpu_custom_call.1} parent=63 // pred_check
          %p380 = pneg %p92
        $region70: #{tpu_custom_call.1} parent=63 // pred_check_branch
          %382 = sbr.rel (%p380) target = $region72
        $region71: #{tpu_custom_call.1} parent=63 // pred_region
          %383 = dma.done [#allocation6], 16
        $region72: #{tpu_custom_call.1} parent=63 // pred_fallthru
          _
        %s384 = sand.u32 %s37, 1
        %s385 = scalar_lea.sflag [#allocation3], %s384
        %s386 = sand.u32 %s37, 1
        %s387 = smul.addr %s386, 128
        %s388 = scalar_lea.vmem [#allocation2], %s387
        %p389 = pneg %p50
        %p390 = pneg %p47
        %p391 = pneg %p71
        %p392 = pneg %p68
        %p393 = pneg %p92
        %p394 = pneg %p89
        %p395 = pneg %p113
        %p396 = pneg %p110
        %p397 = pneg %p134
        %p398 = pneg %p131
        %p399 = pneg %p155
        %p400 = pneg %p152
        %p401 = pneg %p176
        %p402 = pneg %p173
        %p403 = pneg %p197
        %p404 = pneg %p194
        %p405 = pneg %p218
        %p406 = pneg %p215
        %p407 = pneg %p239
        %p408 = pneg %p236
        %p409 = pneg %p260
        %p410 = pneg %p257
        %p411 = pneg %p286
        %p412 = pneg %p283
        %s413 = sand.u32 %s273, 1
        %s414 = scalar_lea.sflag [#allocation4], %s413
        %s415 = sand.u32 %s273, 1
        %s416 = smul.addr %s415, 128
        %s417 = scalar_lea.vmem [#allocation7], %s416
        %v419 = vld [vmem:[%s375] sm:$0xff]
        %v420 = vld [vmem:[%s375 + $0x8] sm:$0xff]
        %v421 = vld [vmem:[%s375 + $0x10] sm:$0xff]
        %v422 = vld [vmem:[%s375 + $0x18] sm:$0xff]
        %v423 = vld [vmem:[%s375 + $0x20] sm:$0xff]
        %v424 = vld [vmem:[%s375 + $0x28] sm:$0xff]
        %v425 = vld [vmem:[%s375 + $0x30] sm:$0xff]
        %v426 = vld [vmem:[%s375 + $0x38] sm:$0xff]
        %v427 = vld [vmem:[%s375 + $0x40] sm:$0xff]
        %v428 = vld [vmem:[%s375 + $0x48] sm:$0xff]
        %v429 = vld [vmem:[%s375 + $0x50] sm:$0xff]
        %v430 = vld [vmem:[%s375 + $0x58] sm:$0xff]
        %v431 = vld [vmem:[%s375 + $0x60] sm:$0xff]
        %v432 = vld [vmem:[%s375 + $0x68] sm:$0xff]
        %v433 = vld [vmem:[%s375 + $0x70] sm:$0xff]
        %v434 = vld [vmem:[%s375 + $0x78] sm:$0xff]
        %v435 = vpack.c.bf16 %v420, %v419
        %v436 = vpack.c.bf16 %v422, %v421
        %v437 = vpack.c.bf16 %v424, %v423
        %v438 = vpack.c.bf16 %v426, %v425
        %v439 = vpack.c.bf16 %v428, %v427
        %v440 = vpack.c.bf16 %v430, %v429
        %v441 = vpack.c.bf16 %v432, %v431
        %v442 = vpack.c.bf16 %v434, %v433
        %v443 = vld [vmem:[%s1] sm:$0xf]
        %v444 = vld [vmem:[%s1 + $0x4] sm:$0xf]
        %v445 = vld [vmem:[%s1 + $0x8] sm:$0xf]
        %v446 = vld [vmem:[%s1 + $0xc] sm:$0xf]
        %v447 = vld [vmem:[%s1 + $0x10] sm:$0xf]
        %v448 = vld [vmem:[%s1 + $0x14] sm:$0xf]
        %v449 = vld [vmem:[%s1 + $0x18] sm:$0xf]
        %v450 = vld [vmem:[%s1 + $0x1c] sm:$0xf]
        %v451 = vld [vmem:[%s1 + $0x20] sm:$0xf]
        %v452 = vld [vmem:[%s1 + $0x24] sm:$0xf]
        %v453 = vld [vmem:[%s1 + $0x28] sm:$0xf]
        %v454 = vld [vmem:[%s1 + $0x2c] sm:$0xf]
        %v455 = vld [vmem:[%s1 + $0x30] sm:$0xf]
        %v456 = vld [vmem:[%s1 + $0x34] sm:$0xf]
        %v457 = vld [vmem:[%s1 + $0x38] sm:$0xf]
        %v458 = vld [vmem:[%s1 + $0x3c] sm:$0xf]
        %v459 = vld [vmem:[#allocation5] sm:$0x1]
        %v461 = vlaneseq
        %v462 = vshrl.u32 %v461, 7
        %v463 = vsub.s32 0, %v462
        %v464 = vrot.slane %v459, %v463
        %v482 = vunpack.c.l.b16 %v443
        %v483 = vunpack.c.l.b16 %v444
        %v484 = vunpack.c.l.b16 %v445
        %v485 = vunpack.c.l.b16 %v446
        %v486 = vunpack.c.l.b16 %v447
        %v487 = vunpack.c.l.b16 %v448
        %v488 = vunpack.c.l.b16 %v449
        %v489 = vunpack.c.l.b16 %v450
        %v490 = vunpack.c.l.b16 %v451
        %v491 = vunpack.c.l.b16 %v452
        %v492 = vunpack.c.l.b16 %v453
        %v493 = vunpack.c.l.b16 %v454
        %v494 = vunpack.c.l.b16 %v455
        %v495 = vunpack.c.l.b16 %v456
        %v496 = vunpack.c.l.b16 %v457
        %v497 = vunpack.c.l.b16 %v458
        %v498 = vpack.c.b16 %v483, %v482
        %v499 = vpack.c.b16 %v485, %v484
        %v500 = vpack.c.b16 %v487, %v486
        %v501 = vpack.c.b16 %v489, %v488
        %v502 = vpack.c.b16 %v491, %v490
        %v503 = vpack.c.b16 %v493, %v492
        %v504 = vpack.c.b16 %v495, %v494
        %v505 = vpack.c.b16 %v497, %v496
        %514 = vmatprep.subr.bf16.mxu0 0
        %515 = vmatpush1.bf16.msra.mxu0 %v498
        %516 = vmatprep.subr.bf16.mxu0 0
        %517 = vmatpush1.bf16.msra.mxu0 %v499
        %518 = vmatprep.subr.bf16.mxu0 0
        %519 = vmatpush1.bf16.msra.mxu0 %v500
        %520 = vmatprep.subr.bf16.mxu0 0
        %521 = vmatpush1.bf16.msra.mxu0 %v501
        %522 = vmatprep.subr.bf16.mxu0 0
        %523 = vmatpush1.bf16.msra.mxu0 %v502
        %524 = vmatprep.subr.bf16.mxu0 0
        %525 = vmatpush1.bf16.msra.mxu0 %v503
        %526 = vmatprep.subr.bf16.mxu0 0
        %527 = vmatpush1.bf16.msra.mxu0 %v504
        %528 = vmatprep.subr.bf16.mxu0 0
        %529 = vmatpush1.bf16.msra.mxu0 %v505
        %530 = vmatprep.subr.bf16.mxu0 0
        %531 = vmatpush1.bf16.msra.mxu0 0
        %532 = vmatprep.subr.bf16.mxu0 0
        %533 = vmatpush1.bf16.msra.mxu0 0
        %534 = vmatprep.subr.bf16.mxu0 0
        %535 = vmatpush1.bf16.msra.mxu0 0
        %536 = vmatprep.subr.bf16.mxu0 0
        %537 = vmatpush1.bf16.msra.mxu0 0
        %538 = vmatprep.subr.bf16.mxu0 0
        %539 = vmatpush1.bf16.msra.mxu0 0
        %540 = vmatprep.subr.bf16.mxu0 0
        %541 = vmatpush1.bf16.msra.mxu0 0
        %542 = vmatprep.subr.bf16.mxu0 0
        %543 = vmatpush1.bf16.msra.mxu0 0
        %544 = vmatprep.subr.bf16.mxu0 0
        %545 = vmatpush1.bf16.msra.mxu0 0
        %546 = vmatprep.mubr.bf16.mxu0 0
        %547 = vmatmul.mubr.bf16.gmra.mrb[0].mxu0 %v435
        %v548 = vpop.f32.mrb[0].mxu0
        %v549 = vadd.f32 %v464, %v548
        %v550 = vpop.f32.mrb[0].mxu0
        %v551 = vpop.f32.mrb[0].mxu0
        %v552 = vadd.f32 %v464, %v551
        %v553 = vpop.f32.mrb[0].mxu0
        %554 = vmatprep.mubr.bf16.mxu0 0
        %555 = vmatmul.mubr.bf16.gmra.mrb[0].mxu0 %v436
        %v556 = vpop.f32.mrb[0].mxu0
        %v557 = vadd.f32 %v464, %v556
        %v558 = vpop.f32.mrb[0].mxu0
        %v559 = vpop.f32.mrb[0].mxu0
        %v560 = vadd.f32 %v464, %v559
        %v561 = vpop.f32.mrb[0].mxu0
        %562 = vmatprep.mubr.bf16.mxu0 0
        %563 = vmatmul.mubr.bf16.gmra.mrb[0].mxu0 %v437
        %v564 = vpop.f32.mrb[0].mxu0
        %v565 = vadd.f32 %v464, %v564
        %v566 = vpop.f32.mrb[0].mxu0
        %v567 = vpop.f32.mrb[0].mxu0
        %v568 = vadd.f32 %v464, %v567
        %v569 = vpop.f32.mrb[0].mxu0
        %570 = vmatprep.mubr.bf16.mxu0 0
        %571 = vmatmul.mubr.bf16.gmra.mrb[0].mxu0 %v438
        %v572 = vpop.f32.mrb[0].mxu0
        %v573 = vadd.f32 %v464, %v572
        %v574 = vpop.f32.mrb[0].mxu0
        %v575 = vpop.f32.mrb[0].mxu0
        %v576 = vadd.f32 %v464, %v575
        %v577 = vpop.f32.mrb[0].mxu0
        %578 = vmatprep.mubr.bf16.mxu0 0
        %579 = vmatmul.mubr.bf16.gmra.mrb[0].mxu0 %v439
        %v580 = vpop.f32.mrb[0].mxu0
        %v581 = vadd.f32 %v464, %v580
        %v582 = vpop.f32.mrb[0].mxu0
        %v583 = vpop.f32.mrb[0].mxu0
        %v584 = vadd.f32 %v464, %v583
        %v585 = vpop.f32.mrb[0].mxu0
        %586 = vmatprep.mubr.bf16.mxu0 0
        %587 = vmatmul.mubr.bf16.gmra.mrb[0].mxu0 %v440
        %v588 = vpop.f32.mrb[0].mxu0
        %v589 = vadd.f32 %v464, %v588
        %v590 = vpop.f32.mrb[0].mxu0
        %v591 = vpop.f32.mrb[0].mxu0
        %v592 = vadd.f32 %v464, %v591
        %v593 = vpop.f32.mrb[0].mxu0
        %594 = vmatprep.mubr.bf16.mxu0 0
        %595 = vmatmul.mubr.bf16.gmra.mrb[0].mxu0 %v441
        %v596 = vpop.f32.mrb[0].mxu0
        %v597 = vadd.f32 %v464, %v596
        %v598 = vpop.f32.mrb[0].mxu0
        %v599 = vpop.f32.mrb[0].mxu0
        %v600 = vadd.f32 %v464, %v599
        %v601 = vpop.f32.mrb[0].mxu0
        %602 = vmatprep.mubr.bf16.mxu0 0
        %603 = vmatmul.mubr.bf16.gmra.mrb[0].mxu0 %v442
        %v604 = vpop.f32.mrb[0].mxu0
        %v605 = vadd.f32 %v464, %v604
        %v606 = vpop.f32.mrb[0].mxu0
        %v607 = vpop.f32.mrb[0].mxu0
        %v608 = vadd.f32 %v464, %v607
        %v609 = vpop.f32.mrb[0].mxu0
        %610 = vdwg.mxu0
        %v611 = vmax.f32 %v549, 0.0
        %v612 = vmax.f32 %v552, 0.0
        %v613 = vmax.f32 %v557, 0.0
        %v614 = vmax.f32 %v560, 0.0
        %v615 = vmax.f32 %v565, 0.0
        %v616 = vmax.f32 %v568, 0.0
        %v617 = vmax.f32 %v573, 0.0
        %v618 = vmax.f32 %v576, 0.0
        %v619 = vmax.f32 %v581, 0.0
        %v620 = vmax.f32 %v584, 0.0
        %v621 = vmax.f32 %v589, 0.0
        %v622 = vmax.f32 %v592, 0.0
        %v623 = vmax.f32 %v597, 0.0
        %v624 = vmax.f32 %v600, 0.0
        %v625 = vmax.f32 %v605, 0.0
        %v626 = vmax.f32 %v608, 0.0
        %v627 = vlaneseq
        %v628 = vshrl.u32 %v627, 7
        %vm629 = vcmp.ge.s32.totalorder %v628, 1
        %vm630 = vcmp.le.s32.totalorder %v628, 6
        %v647 = vrot.slane 0.0, 7
        %v648 = vrot.slane %v611, 7
        %v649 = vrot.slane %v612, 7
        %v650 = vrot.slane %v613, 7
        %v651 = vrot.slane %v614, 7
        %v652 = vrot.slane %v615, 7
        %v653 = vrot.slane %v616, 7
        %v654 = vrot.slane %v617, 7
        %v655 = vrot.slane %v618, 7
        %v656 = vrot.slane %v619, 7
        %v657 = vrot.slane %v620, 7
        %v658 = vrot.slane %v621, 7
        %v659 = vrot.slane %v622, 7
        %v660 = vrot.slane %v623, 7
        %v661 = vrot.slane %v624, 7
        %v662 = vrot.slane %v625, 7
        %vm679 = vcmask 1040384
        %v680 = vsel %vm679, %v647, %v647
        %v681 = vsel %vm679, %v648, %v648
        %v682 = vsel %vm679, %v649, %v649
        %v683 = vsel %vm679, %v650, %v650
        %v684 = vsel %vm679, %v651, %v651
        %v685 = vsel %vm679, %v652, %v652
        %v686 = vsel %vm679, %v653, %v653
        %v687 = vsel %vm679, %v654, %v654
        %v688 = vsel %vm679, %v655, %v655
        %v689 = vsel %vm679, %v656, %v656
        %v690 = vsel %vm679, %v657, %v657
        %v691 = vsel %vm679, %v658, %v658
        %v692 = vsel %vm679, %v659, %v659
        %v693 = vsel %vm679, %v660, %v660
        %v694 = vsel %vm679, %v661, %v661
        %v695 = vsel %vm679, %v662, %v662
        %v696 = vsel %vm629, %v680, 0.0
        %v697 = vsel %vm629, %v681, 0.0
        %v698 = vsel %vm629, %v682, 0.0
        %v699 = vsel %vm629, %v683, 0.0
        %v700 = vsel %vm629, %v684, 0.0
        %v701 = vsel %vm629, %v685, 0.0
        %v702 = vsel %vm629, %v686, 0.0
        %v703 = vsel %vm629, %v687, 0.0
        %v704 = vsel %vm629, %v688, 0.0
        %v705 = vsel %vm629, %v689, 0.0
        %v706 = vsel %vm629, %v690, 0.0
        %v707 = vsel %vm629, %v691, 0.0
        %v708 = vsel %vm629, %v692, 0.0
        %v709 = vsel %vm629, %v693, 0.0
        %v710 = vsel %vm629, %v694, 0.0
        %v711 = vsel %vm629, %v695, 0.0
        %v712 = vpack.c.bf16 %v697, %v696
        %v713 = vpack.c.bf16 %v699, %v698
        %v714 = vpack.c.bf16 %v701, %v700
        %v715 = vpack.c.bf16 %v703, %v702
        %v716 = vpack.c.bf16 %v705, %v704
        %v717 = vpack.c.bf16 %v707, %v706
        %v718 = vpack.c.bf16 %v709, %v708
        %v719 = vpack.c.bf16 %v711, %v710
        %v720 = vld [vmem:[%s3] sm:$0xf]
        %v721 = vld [vmem:[%s3 + $0x4] sm:$0x3]
        %v722 = vpack.c.bf16 %v611, 0.0
        %v723 = vpack.c.bf16 %v613, %v612
        %v724 = vpack.c.bf16 %v615, %v614
        %v725 = vpack.c.bf16 %v617, %v616
        %v726 = vpack.c.bf16 %v619, %v618
        %v727 = vpack.c.bf16 %v621, %v620
        %v728 = vpack.c.bf16 %v623, %v622
        %v729 = vpack.c.bf16 %v625, %v624
        %s730 = scalar_lea.vmem %s3, 8
        %v731 = vld [vmem:[%s730] sm:$0xf]
        %v732 = vld [vmem:[%s730 + $0x4] sm:$0x3]
        %v735 = vunpack.c.l.b16 %v731
        %v736 = vunpack.c.l.b16 %v732
        %v737 = vpack.c.b16 %v736, %v735
        %vm738 = vcmask 97280
        %v740 = vsel %vm738, %v722, 0
        %v743 = vsel %vm738, %v723, 0
        %v746 = vsel %vm738, %v724, 0
        %v749 = vsel %vm738, %v725, 0
        %v752 = vsel %vm738, %v726, 0
        %v755 = vsel %vm738, %v727, 0
        %v758 = vsel %vm738, %v728, 0
        %v761 = vsel %vm738, %v729, 0
        %vm763 = vcmask 1045504
        %v765 = vsel %vm763, %v737, 0
        %767 = vmatprep.subr.bf16.mxu0 0
        %768 = vmatpush1.bf16.msra.mxu0 %v765
        %769 = vmatprep.subr.bf16.mxu0 0
        %770 = vmatpush1.bf16.msra.mxu0 0
        %771 = vmatprep.subr.bf16.mxu0 0
        %772 = vmatpush1.bf16.msra.mxu0 0
        %773 = vmatprep.subr.bf16.mxu0 0
        %774 = vmatpush1.bf16.msra.mxu0 0
        %775 = vmatprep.subr.bf16.mxu0 0
        %776 = vmatpush1.bf16.msra.mxu0 0
        %777 = vmatprep.subr.bf16.mxu0 0
        %778 = vmatpush1.bf16.msra.mxu0 0
        %779 = vmatprep.subr.bf16.mxu0 0
        %780 = vmatpush1.bf16.msra.mxu0 0
        %781 = vmatprep.subr.bf16.mxu0 0
        %782 = vmatpush1.bf16.msra.mxu0 0
        %783 = vmatprep.subr.bf16.mxu0 0
        %784 = vmatpush1.bf16.msra.mxu0 0
        %785 = vmatprep.subr.bf16.mxu0 0
        %786 = vmatpush1.bf16.msra.mxu0 0
        %787 = vmatprep.subr.bf16.mxu0 0
        %788 = vmatpush1.bf16.msra.mxu0 0
        %789 = vmatprep.subr.bf16.mxu0 0
        %790 = vmatpush1.bf16.msra.mxu0 0
        %791 = vmatprep.subr.bf16.mxu0 0
        %792 = vmatpush1.bf16.msra.mxu0 0
        %793 = vmatprep.subr.bf16.mxu0 0
        %794 = vmatpush1.bf16.msra.mxu0 0
        %795 = vmatprep.subr.bf16.mxu0 0
        %796 = vmatpush1.bf16.msra.mxu0 0
        %797 = vmatprep.subr.bf16.mxu0 0
        %798 = vmatpush1.bf16.msra.mxu0 0
        %799 = vmatprep.mubr.bf16.mxu0 0
        %800 = vmatmul.mubr.bf16.gmra.mrb[0].mxu0 %v740
        %v801 = vpop.f32.mrb[0].mxu0
        %v802 = vadd.f32 0.0, %v801
        %v803 = vpop.f32.mrb[0].mxu0
        %v804 = vpop.f32.mrb[0].mxu0
        %v805 = vadd.f32 0.0, %v804
        %v806 = vpop.f32.mrb[0].mxu0
        %807 = vmatprep.mubr.bf16.mxu0 0
        %808 = vmatmul.mubr.bf16.gmra.mrb[0].mxu0 %v743
        %v809 = vpop.f32.mrb[0].mxu0
        %v810 = vadd.f32 0.0, %v809
        %v811 = vpop.f32.mrb[0].mxu0
        %v812 = vpop.f32.mrb[0].mxu0
        %v813 = vadd.f32 0.0, %v812
        %v814 = vpop.f32.mrb[0].mxu0
        %815 = vmatprep.mubr.bf16.mxu0 0
        %816 = vmatmul.mubr.bf16.gmra.mrb[0].mxu0 %v746
        %v817 = vpop.f32.mrb[0].mxu0
        %v818 = vadd.f32 0.0, %v817
        %v819 = vpop.f32.mrb[0].mxu0
        %v820 = vpop.f32.mrb[0].mxu0
        %v821 = vadd.f32 0.0, %v820
        %v822 = vpop.f32.mrb[0].mxu0
        %823 = vmatprep.mubr.bf16.mxu0 0
        %824 = vmatmul.mubr.bf16.gmra.mrb[0].mxu0 %v749
        %v825 = vpop.f32.mrb[0].mxu0
        %v826 = vadd.f32 0.0, %v825
        %v827 = vpop.f32.mrb[0].mxu0
        %v828 = vpop.f32.mrb[0].mxu0
        %v829 = vadd.f32 0.0, %v828
        %v830 = vpop.f32.mrb[0].mxu0
        %831 = vmatprep.mubr.bf16.mxu0 0
        %832 = vmatmul.mubr.bf16.gmra.mrb[0].mxu0 %v752
        %v833 = vpop.f32.mrb[0].mxu0
        %v834 = vadd.f32 0.0, %v833
        %v835 = vpop.f32.mrb[0].mxu0
        %v836 = vpop.f32.mrb[0].mxu0
        %v837 = vadd.f32 0.0, %v836
        %v838 = vpop.f32.mrb[0].mxu0
        %839 = vmatprep.mubr.bf16.mxu0 0
        %840 = vmatmul.mubr.bf16.gmra.mrb[0].mxu0 %v755
        %v841 = vpop.f32.mrb[0].mxu0
        %v842 = vadd.f32 0.0, %v841
        %v843 = vpop.f32.mrb[0].mxu0
        %v844 = vpop.f32.mrb[0].mxu0
        %v845 = vadd.f32 0.0, %v844
        %v846 = vpop.f32.mrb[0].mxu0
        %847 = vmatprep.mubr.bf16.mxu0 0
        %848 = vmatmul.mubr.bf16.gmra.mrb[0].mxu0 %v758
        %v849 = vpop.f32.mrb[0].mxu0
        %v850 = vadd.f32 0.0, %v849
        %v851 = vpop.f32.mrb[0].mxu0
        %v852 = vpop.f32.mrb[0].mxu0
        %v853 = vadd.f32 0.0, %v852
        %v854 = vpop.f32.mrb[0].mxu0
        %855 = vmatprep.mubr.bf16.mxu0 0
        %856 = vmatmul.mubr.bf16.gmra.mrb[0].mxu0 %v761
        %v857 = vpop.f32.mrb[0].mxu0
        %v858 = vadd.f32 0.0, %v857
        %v859 = vpop.f32.mrb[0].mxu0
        %v860 = vpop.f32.mrb[0].mxu0
        %v861 = vadd.f32 0.0, %v860
        %v862 = vpop.f32.mrb[0].mxu0
        %863 = vdwg.mxu0
        %v866 = vunpack.c.l.b16 %v720
        %v867 = vunpack.c.l.b16 %v721
        %v868 = vpack.c.b16 %v867, %v866
        %v870 = vsel %vm738, %v712, 0
        %v873 = vsel %vm738, %v713, 0
        %v876 = vsel %vm738, %v714, 0
        %v879 = vsel %vm738, %v715, 0
        %v882 = vsel %vm738, %v716, 0
        %v885 = vsel %vm738, %v717, 0
        %v888 = vsel %vm738, %v718, 0
        %v891 = vsel %vm738, %v719, 0
        %v894 = vsel %vm763, %v868, 0
        %896 = vmatprep.subr.bf16.mxu0 0
        %897 = vmatpush1.bf16.msra.mxu0 %v894
        %898 = vmatprep.subr.bf16.mxu0 0
        %899 = vmatpush1.bf16.msra.mxu0 0
        %900 = vmatprep.subr.bf16.mxu0 0
        %901 = vmatpush1.bf16.msra.mxu0 0
        %902 = vmatprep.subr.bf16.mxu0 0
        %903 = vmatpush1.bf16.msra.mxu0 0
        %904 = vmatprep.subr.bf16.mxu0 0
        %905 = vmatpush1.bf16.msra.mxu0 0
        %906 = vmatprep.subr.bf16.mxu0 0
        %907 = vmatpush1.bf16.msra.mxu0 0
        %908 = vmatprep.subr.bf16.mxu0 0
        %909 = vmatpush1.bf16.msra.mxu0 0
        %910 = vmatprep.subr.bf16.mxu0 0
        %911 = vmatpush1.bf16.msra.mxu0 0
        %912 = vmatprep.subr.bf16.mxu0 0
        %913 = vmatpush1.bf16.msra.mxu0 0
        %914 = vmatprep.subr.bf16.mxu0 0
        %915 = vmatpush1.bf16.msra.mxu0 0
        %916 = vmatprep.subr.bf16.mxu0 0
        %917 = vmatpush1.bf16.msra.mxu0 0
        %918 = vmatprep.subr.bf16.mxu0 0
        %919 = vmatpush1.bf16.msra.mxu0 0
        %920 = vmatprep.subr.bf16.mxu0 0
        %921 = vmatpush1.bf16.msra.mxu0 0
        %922 = vmatprep.subr.bf16.mxu0 0
        %923 = vmatpush1.bf16.msra.mxu0 0
        %924 = vmatprep.subr.bf16.mxu0 0
        %925 = vmatpush1.bf16.msra.mxu0 0
        %926 = vmatprep.subr.bf16.mxu0 0
        %927 = vmatpush1.bf16.msra.mxu0 0
        %928 = vmatprep.mubr.bf16.mxu0 0
        %929 = vmatmul.mubr.bf16.gmra.mrb[0].mxu0 %v870
        %v930 = vpop.f32.mrb[0].mxu0
        %v931 = vadd.f32 %v802, %v930
        %v932 = vpop.f32.mrb[0].mxu0
        %v933 = vpop.f32.mrb[0].mxu0
        %v934 = vadd.f32 %v805, %v933
        %v935 = vpop.f32.mrb[0].mxu0
        %936 = vmatprep.mubr.bf16.mxu0 0
        %937 = vmatmul.mubr.bf16.gmra.mrb[0].mxu0 %v873
        %v938 = vpop.f32.mrb[0].mxu0
        %v939 = vadd.f32 %v810, %v938
        %v940 = vpop.f32.mrb[0].mxu0
        %v941 = vpop.f32.mrb[0].mxu0
        %v942 = vadd.f32 %v813, %v941
        %v943 = vpop.f32.mrb[0].mxu0
        %944 = vmatprep.mubr.bf16.mxu0 0
        %945 = vmatmul.mubr.bf16.gmra.mrb[0].mxu0 %v876
        %v946 = vpop.f32.mrb[0].mxu0
        %v947 = vadd.f32 %v818, %v946
        %v948 = vpop.f32.mrb[0].mxu0
        %v949 = vpop.f32.mrb[0].mxu0
        %v950 = vadd.f32 %v821, %v949
        %v951 = vpop.f32.mrb[0].mxu0
        %952 = vmatprep.mubr.bf16.mxu0 0
        %953 = vmatmul.mubr.bf16.gmra.mrb[0].mxu0 %v879
        %v954 = vpop.f32.mrb[0].mxu0
        %v955 = vadd.f32 %v826, %v954
        %v956 = vpop.f32.mrb[0].mxu0
        %v957 = vpop.f32.mrb[0].mxu0
        %v958 = vadd.f32 %v829, %v957
        %v959 = vpop.f32.mrb[0].mxu0
        %960 = vmatprep.mubr.bf16.mxu0 0
        %961 = vmatmul.mubr.bf16.gmra.mrb[0].mxu0 %v882
        %v962 = vpop.f32.mrb[0].mxu0
        %v963 = vadd.f32 %v834, %v962
        %v964 = vpop.f32.mrb[0].mxu0
        %v965 = vpop.f32.mrb[0].mxu0
        %v966 = vadd.f32 %v837, %v965
        %v967 = vpop.f32.mrb[0].mxu0
        %968 = vmatprep.mubr.bf16.mxu0 0
        %969 = vmatmul.mubr.bf16.gmra.mrb[0].mxu0 %v885
        %v970 = vpop.f32.mrb[0].mxu0
        %v971 = vadd.f32 %v842, %v970
        %v972 = vpop.f32.mrb[0].mxu0
        %v973 = vpop.f32.mrb[0].mxu0
        %v974 = vadd.f32 %v845, %v973
        %v975 = vpop.f32.mrb[0].mxu0
        %976 = vmatprep.mubr.bf16.mxu0 0
        %977 = vmatmul.mubr.bf16.gmra.mrb[0].mxu0 %v888
        %v978 = vpop.f32.mrb[0].mxu0
        %v979 = vadd.f32 %v850, %v978
        %v980 = vpop.f32.mrb[0].mxu0
        %v981 = vpop.f32.mrb[0].mxu0
        %v982 = vadd.f32 %v853, %v981
        %v983 = vpop.f32.mrb[0].mxu0
        %984 = vmatprep.mubr.bf16.mxu0 0
        %985 = vmatmul.mubr.bf16.gmra.mrb[0].mxu0 %v891
        %v986 = vpop.f32.mrb[0].mxu0
        %v987 = vadd.f32 %v858, %v986
        %v988 = vpop.f32.mrb[0].mxu0
        %v989 = vpop.f32.mrb[0].mxu0
        %v990 = vadd.f32 %v861, %v989
        %v991 = vpop.f32.mrb[0].mxu0
        %992 = vdwg.mxu0
        %v993 = vrot.slane 0.0, 1
        %v994 = vrot.slane %v611, 1
        %v995 = vrot.slane %v612, 1
        %v996 = vrot.slane %v613, 1
        %v997 = vrot.slane %v614, 1
        %v998 = vrot.slane %v615, 1
        %v999 = vrot.slane %v616, 1
        %v1000 = vrot.slane %v617, 1
        %v1001 = vrot.slane %v618, 1
        %v1002 = vrot.slane %v619, 1
        %v1003 = vrot.slane %v620, 1
        %v1004 = vrot.slane %v621, 1
        %v1005 = vrot.slane %v622, 1
        %v1006 = vrot.slane %v623, 1
        %v1007 = vrot.slane %v624, 1
        %v1008 = vrot.slane %v625, 1
        %vm1025 = vcmask 1046528
        %v1026 = vsel %vm1025, %v993, %v993
        %v1027 = vsel %vm1025, %v994, %v994
        %v1028 = vsel %vm1025, %v995, %v995
        %v1029 = vsel %vm1025, %v996, %v996
        %v1030 = vsel %vm1025, %v997, %v997
        %v1031 = vsel %vm1025, %v998, %v998
        %v1032 = vsel %vm1025, %v999, %v999
        %v1033 = vsel %vm1025, %v1000, %v1000
        %v1034 = vsel %vm1025, %v1001, %v1001
        %v1035 = vsel %vm1025, %v1002, %v1002
        %v1036 = vsel %vm1025, %v1003, %v1003
        %v1037 = vsel %vm1025, %v1004, %v1004
        %v1038 = vsel %vm1025, %v1005, %v1005
        %v1039 = vsel %vm1025, %v1006, %v1006
        %v1040 = vsel %vm1025, %v1007, %v1007
        %v1041 = vsel %vm1025, %v1008, %v1008
        %v1042 = vsel %vm630, %v1026, 0.0
        %v1043 = vsel %vm630, %v1027, 0.0
        %v1044 = vsel %vm630, %v1028, 0.0
        %v1045 = vsel %vm630, %v1029, 0.0
        %v1046 = vsel %vm630, %v1030, 0.0
        %v1047 = vsel %vm630, %v1031, 0.0
        %v1048 = vsel %vm630, %v1032, 0.0
        %v1049 = vsel %vm630, %v1033, 0.0
        %v1050 = vsel %vm630, %v1034, 0.0
        %v1051 = vsel %vm630, %v1035, 0.0
        %v1052 = vsel %vm630, %v1036, 0.0
        %v1053 = vsel %vm630, %v1037, 0.0
        %v1054 = vsel %vm630, %v1038, 0.0
        %v1055 = vsel %vm630, %v1039, 0.0
        %v1056 = vsel %vm630, %v1040, 0.0
        %v1057 = vsel %vm630, %v1041, 0.0
        %v1058 = vpack.c.bf16 %v1043, %v1042
        %v1059 = vpack.c.bf16 %v1045, %v1044
        %v1060 = vpack.c.bf16 %v1047, %v1046
        %v1061 = vpack.c.bf16 %v1049, %v1048
        %v1062 = vpack.c.bf16 %v1051, %v1050
        %v1063 = vpack.c.bf16 %v1053, %v1052
        %v1064 = vpack.c.bf16 %v1055, %v1054
        %v1065 = vpack.c.bf16 %v1057, %v1056
        %s1066 = scalar_lea.vmem %s3, 16
        %v1067 = vld [vmem:[%s1066] sm:$0xf]
        %v1068 = vld [vmem:[%s1066 + $0x4] sm:$0x3]
        %v1071 = vunpack.c.l.b16 %v1067
        %v1072 = vunpack.c.l.b16 %v1068
        %v1073 = vpack.c.b16 %v1072, %v1071
        %v1075 = vsel %vm738, %v1058, 0
        %v1078 = vsel %vm738, %v1059, 0
        %v1081 = vsel %vm738, %v1060, 0
        %v1084 = vsel %vm738, %v1061, 0
        %v1087 = vsel %vm738, %v1062, 0
        %v1090 = vsel %vm738, %v1063, 0
        %v1093 = vsel %vm738, %v1064, 0
        %v1096 = vsel %vm738, %v1065, 0
        %v1099 = vsel %vm763, %v1073, 0
        %1101 = vmatprep.subr.bf16.mxu0 0
        %1102 = vmatpush1.bf16.msra.mxu0 %v1099
        %1103 = vmatprep.subr.bf16.mxu0 0
        %1104 = vmatpush1.bf16.msra.mxu0 0
        %1105 = vmatprep.subr.bf16.mxu0 0
        %1106 = vmatpush1.bf16.msra.mxu0 0
        %1107 = vmatprep.subr.bf16.mxu0 0
        %1108 = vmatpush1.bf16.msra.mxu0 0
        %1109 = vmatprep.subr.bf16.mxu0 0
        %1110 = vmatpush1.bf16.msra.mxu0 0
        %1111 = vmatprep.subr.bf16.mxu0 0
        %1112 = vmatpush1.bf16.msra.mxu0 0
        %1113 = vmatprep.subr.bf16.mxu0 0
        %1114 = vmatpush1.bf16.msra.mxu0 0
        %1115 = vmatprep.subr.bf16.mxu0 0
        %1116 = vmatpush1.bf16.msra.mxu0 0
        %1117 = vmatprep.subr.bf16.mxu0 0
        %1118 = vmatpush1.bf16.msra.mxu0 0
        %1119 = vmatprep.subr.bf16.mxu0 0
        %1120 = vmatpush1.bf16.msra.mxu0 0
        %1121 = vmatprep.subr.bf16.mxu0 0
        %1122 = vmatpush1.bf16.msra.mxu0 0
        %1123 = vmatprep.subr.bf16.mxu0 0
        %1124 = vmatpush1.bf16.msra.mxu0 0
        %1125 = vmatprep.subr.bf16.mxu0 0
        %1126 = vmatpush1.bf16.msra.mxu0 0
        %1127 = vmatprep.subr.bf16.mxu0 0
        %1128 = vmatpush1.bf16.msra.mxu0 0
        %1129 = vmatprep.subr.bf16.mxu0 0
        %1130 = vmatpush1.bf16.msra.mxu0 0
        %1131 = vmatprep.subr.bf16.mxu0 0
        %1132 = vmatpush1.bf16.msra.mxu0 0
        %1133 = vmatprep.mubr.bf16.mxu0 0
        %1134 = vmatmul.mubr.bf16.gmra.mrb[0].mxu0 %v1075
        %v1135 = vpop.f32.mrb[0].mxu0
        %v1136 = vadd.f32 0.0, %v1135
        %v1137 = vpop.f32.mrb[0].mxu0
        %v1138 = vpop.f32.mrb[0].mxu0
        %v1139 = vadd.f32 0.0, %v1138
        %v1140 = vpop.f32.mrb[0].mxu0
        %1141 = vmatprep.mubr.bf16.mxu0 0
        %1142 = vmatmul.mubr.bf16.gmra.mrb[0].mxu0 %v1078
        %v1143 = vpop.f32.mrb[0].mxu0
        %v1144 = vadd.f32 0.0, %v1143
        %v1145 = vpop.f32.mrb[0].mxu0
        %v1146 = vpop.f32.mrb[0].mxu0
        %v1147 = vadd.f32 0.0, %v1146
        %v1148 = vpop.f32.mrb[0].mxu0
        %1149 = vmatprep.mubr.bf16.mxu0 0
        %1150 = vmatmul.mubr.bf16.gmra.mrb[0].mxu0 %v1081
        %v1151 = vpop.f32.mrb[0].mxu0
        %v1152 = vadd.f32 0.0, %v1151
        %v1153 = vpop.f32.mrb[0].mxu0
        %v1154 = vpop.f32.mrb[0].mxu0
        %v1155 = vadd.f32 0.0, %v1154
        %v1156 = vpop.f32.mrb[0].mxu0
        %1157 = vmatprep.mubr.bf16.mxu0 0
        %1158 = vmatmul.mubr.bf16.gmra.mrb[0].mxu0 %v1084
        %v1159 = vpop.f32.mrb[0].mxu0
        %v1160 = vadd.f32 0.0, %v1159
        %v1161 = vpop.f32.mrb[0].mxu0
        %v1162 = vpop.f32.mrb[0].mxu0
        %v1163 = vadd.f32 0.0, %v1162
        %v1164 = vpop.f32.mrb[0].mxu0
        %1165 = vmatprep.mubr.bf16.mxu0 0
        %1166 = vmatmul.mubr.bf16.gmra.mrb[0].mxu0 %v1087
        %v1167 = vpop.f32.mrb[0].mxu0
        %v1168 = vadd.f32 0.0, %v1167
        %v1169 = vpop.f32.mrb[0].mxu0
        %v1170 = vpop.f32.mrb[0].mxu0
        %v1171 = vadd.f32 0.0, %v1170
        %v1172 = vpop.f32.mrb[0].mxu0
        %1173 = vmatprep.mubr.bf16.mxu0 0
        %1174 = vmatmul.mubr.bf16.gmra.mrb[0].mxu0 %v1090
        %v1175 = vpop.f32.mrb[0].mxu0
        %v1176 = vadd.f32 0.0, %v1175
        %v1177 = vpop.f32.mrb[0].mxu0
        %v1178 = vpop.f32.mrb[0].mxu0
        %v1179 = vadd.f32 0.0, %v1178
        %v1180 = vpop.f32.mrb[0].mxu0
        %1181 = vmatprep.mubr.bf16.mxu0 0
        %1182 = vmatmul.mubr.bf16.gmra.mrb[0].mxu0 %v1093
        %v1183 = vpop.f32.mrb[0].mxu0
        %v1184 = vadd.f32 0.0, %v1183
        %v1185 = vpop.f32.mrb[0].mxu0
        %v1186 = vpop.f32.mrb[0].mxu0
        %v1187 = vadd.f32 0.0, %v1186
        %v1188 = vpop.f32.mrb[0].mxu0
        %1189 = vmatprep.mubr.bf16.mxu0 0
        %1190 = vmatmul.mubr.bf16.gmra.mrb[0].mxu0 %v1096
        %v1191 = vpop.f32.mrb[0].mxu0
        %v1192 = vadd.f32 0.0, %v1191
        %v1193 = vpop.f32.mrb[0].mxu0
        %v1194 = vpop.f32.mrb[0].mxu0
        %v1195 = vadd.f32 0.0, %v1194
        %v1196 = vpop.f32.mrb[0].mxu0
        %1197 = vdwg.mxu0
        %v1198 = vadd.f32 %v931, %v1136
        %v1199 = vadd.f32 %v934, %v1139
        %v1200 = vadd.f32 %v939, %v1144
        %v1201 = vadd.f32 %v942, %v1147
        %v1202 = vadd.f32 %v947, %v1152
        %v1203 = vadd.f32 %v950, %v1155
        %v1204 = vadd.f32 %v955, %v1160
        %v1205 = vadd.f32 %v958, %v1163
        %v1206 = vadd.f32 %v963, %v1168
        %v1207 = vadd.f32 %v966, %v1171
        %v1208 = vadd.f32 %v971, %v1176
        %v1209 = vadd.f32 %v974, %v1179
        %v1210 = vadd.f32 %v979, %v1184
        %v1211 = vadd.f32 %v982, %v1187
        %v1212 = vadd.f32 %v987, %v1192
        %v1213 = vadd.f32 %v990, %v1195
        %v1215 = vrot.slane %v626, 7
        %v1217 = vsel %vm679, %v1215, %v1215
        %v1218 = vsel %vm629, %v1217, 0.0
        %v1219 = vpack.c.bf16 %v698, %v697
        %v1220 = vpack.c.bf16 %v700, %v699
        %v1221 = vpack.c.bf16 %v702, %v701
        %v1222 = vpack.c.bf16 %v704, %v703
        %v1223 = vpack.c.bf16 %v706, %v705
        %v1224 = vpack.c.bf16 %v708, %v707
        %v1225 = vpack.c.bf16 %v710, %v709
        %v1226 = vpack.c.bf16 %v1218, %v711
        %s1227 = scalar_lea.vmem %s3, 24
        %v1228 = vld [vmem:[%s1227] sm:$0xf]
        %v1229 = vld [vmem:[%s1227 + $0x4] sm:$0x3]
        %v1232 = vunpack.c.l.b16 %v1228
        %v1233 = vunpack.c.l.b16 %v1229
        %v1234 = vpack.c.b16 %v1233, %v1232
        %v1236 = vsel %vm738, %v1219, 0
        %v1239 = vsel %vm738, %v1220, 0
        %v1242 = vsel %vm738, %v1221, 0
        %v1245 = vsel %vm738, %v1222, 0
        %v1248 = vsel %vm738, %v1223, 0
        %v1251 = vsel %vm738, %v1224, 0
        %v1254 = vsel %vm738, %v1225, 0
        %v1257 = vsel %vm738, %v1226, 0
        %v1260 = vsel %vm763, %v1234, 0
        %1262 = vmatprep.subr.bf16.mxu0 0
        %1263 = vmatpush1.bf16.msra.mxu0 %v1260
        %1264 = vmatprep.subr.bf16.mxu0 0
        %1265 = vmatpush1.bf16.msra.mxu0 0
        %1266 = vmatprep.subr.bf16.mxu0 0
        %1267 = vmatpush1.bf16.msra.mxu0 0
        %1268 = vmatprep.subr.bf16.mxu0 0
        %1269 = vmatpush1.bf16.msra.mxu0 0
        %1270 = vmatprep.subr.bf16.mxu0 0
        %1271 = vmatpush1.bf16.msra.mxu0 0
        %1272 = vmatprep.subr.bf16.mxu0 0
        %1273 = vmatpush1.bf16.msra.mxu0 0
        %1274 = vmatprep.subr.bf16.mxu0 0
        %1275 = vmatpush1.bf16.msra.mxu0 0
        %1276 = vmatprep.subr.bf16.mxu0 0
        %1277 = vmatpush1.bf16.msra.mxu0 0
        %1278 = vmatprep.subr.bf16.mxu0 0
        %1279 = vmatpush1.bf16.msra.mxu0 0
        %1280 = vmatprep.subr.bf16.mxu0 0
        %1281 = vmatpush1.bf16.msra.mxu0 0
        %1282 = vmatprep.subr.bf16.mxu0 0
        %1283 = vmatpush1.bf16.msra.mxu0 0
        %1284 = vmatprep.subr.bf16.mxu0 0
        %1285 = vmatpush1.bf16.msra.mxu0 0
        %1286 = vmatprep.subr.bf16.mxu0 0
        %1287 = vmatpush1.bf16.msra.mxu0 0
        %1288 = vmatprep.subr.bf16.mxu0 0
        %1289 = vmatpush1.bf16.msra.mxu0 0
        %1290 = vmatprep.subr.bf16.mxu0 0
        %1291 = vmatpush1.bf16.msra.mxu0 0
        %1292 = vmatprep.subr.bf16.mxu0 0
        %1293 = vmatpush1.bf16.msra.mxu0 0
        %1294 = vmatprep.mubr.bf16.mxu0 0
        %1295 = vmatmul.mubr.bf16.gmra.mrb[0].mxu0 %v1236
        %v1296 = vpop.f32.mrb[0].mxu0
        %v1297 = vadd.f32 0.0, %v1296
        %v1298 = vpop.f32.mrb[0].mxu0
        %v1299 = vpop.f32.mrb[0].mxu0
        %v1300 = vadd.f32 0.0, %v1299
        %v1301 = vpop.f32.mrb[0].mxu0
        %1302 = vmatprep.mubr.bf16.mxu0 0
        %1303 = vmatmul.mubr.bf16.gmra.mrb[0].mxu0 %v1239
        %v1304 = vpop.f32.mrb[0].mxu0
        %v1305 = vadd.f32 0.0, %v1304
        %v1306 = vpop.f32.mrb[0].mxu0
        %v1307 = vpop.f32.mrb[0].mxu0
        %v1308 = vadd.f32 0.0, %v1307
        %v1309 = vpop.f32.mrb[0].mxu0
        %1310 = vmatprep.mubr.bf16.mxu0 0
        %1311 = vmatmul.mubr.bf16.gmra.mrb[0].mxu0 %v1242
        %v1312 = vpop.f32.mrb[0].mxu0
        %v1313 = vadd.f32 0.0, %v1312
        %v1314 = vpop.f32.mrb[0].mxu0
        %v1315 = vpop.f32.mrb[0].mxu0
        %v1316 = vadd.f32 0.0, %v1315
        %v1317 = vpop.f32.mrb[0].mxu0
        %1318 = vmatprep.mubr.bf16.mxu0 0
        %1319 = vmatmul.mubr.bf16.gmra.mrb[0].mxu0 %v1245
        %v1320 = vpop.f32.mrb[0].mxu0
        %v1321 = vadd.f32 0.0, %v1320
        %v1322 = vpop.f32.mrb[0].mxu0
        %v1323 = vpop.f32.mrb[0].mxu0
        %v1324 = vadd.f32 0.0, %v1323
        %v1325 = vpop.f32.mrb[0].mxu0
        %1326 = vmatprep.mubr.bf16.mxu0 0
        %1327 = vmatmul.mubr.bf16.gmra.mrb[0].mxu0 %v1248
        %v1328 = vpop.f32.mrb[0].mxu0
        %v1329 = vadd.f32 0.0, %v1328
        %v1330 = vpop.f32.mrb[0].mxu0
        %v1331 = vpop.f32.mrb[0].mxu0
        %v1332 = vadd.f32 0.0, %v1331
        %v1333 = vpop.f32.mrb[0].mxu0
        %1334 = vmatprep.mubr.bf16.mxu0 0
        %1335 = vmatmul.mubr.bf16.gmra.mrb[0].mxu0 %v1251
        %v1336 = vpop.f32.mrb[0].mxu0
        %v1337 = vadd.f32 0.0, %v1336
        %v1338 = vpop.f32.mrb[0].mxu0
        %v1339 = vpop.f32.mrb[0].mxu0
        %v1340 = vadd.f32 0.0, %v1339
        %v1341 = vpop.f32.mrb[0].mxu0
        %1342 = vmatprep.mubr.bf16.mxu0 0
        %1343 = vmatmul.mubr.bf16.gmra.mrb[0].mxu0 %v1254
        %v1344 = vpop.f32.mrb[0].mxu0
        %v1345 = vadd.f32 0.0, %v1344
        %v1346 = vpop.f32.mrb[0].mxu0
        %v1347 = vpop.f32.mrb[0].mxu0
        %v1348 = vadd.f32 0.0, %v1347
        %v1349 = vpop.f32.mrb[0].mxu0
        %1350 = vmatprep.mubr.bf16.mxu0 0
        %1351 = vmatmul.mubr.bf16.gmra.mrb[0].mxu0 %v1257
        %v1352 = vpop.f32.mrb[0].mxu0
        %v1353 = vadd.f32 0.0, %v1352
        %v1354 = vpop.f32.mrb[0].mxu0
        %v1355 = vpop.f32.mrb[0].mxu0
        %v1356 = vadd.f32 0.0, %v1355
        %v1357 = vpop.f32.mrb[0].mxu0
        %1358 = vdwg.mxu0
        %v1359 = vadd.f32 %v1198, %v1297
        %v1360 = vadd.f32 %v1199, %v1300
        %v1361 = vadd.f32 %v1200, %v1305
        %v1362 = vadd.f32 %v1201, %v1308
        %v1363 = vadd.f32 %v1202, %v1313
        %v1364 = vadd.f32 %v1203, %v1316
        %v1365 = vadd.f32 %v1204, %v1321
        %v1366 = vadd.f32 %v1205, %v1324
        %v1367 = vadd.f32 %v1206, %v1329
        %v1368 = vadd.f32 %v1207, %v1332
        %v1369 = vadd.f32 %v1208, %v1337
        %v1370 = vadd.f32 %v1209, %v1340
        %v1371 = vadd.f32 %v1210, %v1345
        %v1372 = vadd.f32 %v1211, %v1348
        %v1373 = vadd.f32 %v1212, %v1353
        %v1374 = vadd.f32 %v1213, %v1356
        %v1375 = vpack.c.bf16 %v612, %v611
        %v1376 = vpack.c.bf16 %v614, %v613
        %v1377 = vpack.c.bf16 %v616, %v615
        %v1378 = vpack.c.bf16 %v618, %v617
        %v1379 = vpack.c.bf16 %v620, %v619
        %v1380 = vpack.c.bf16 %v622, %v621
        %v1381 = vpack.c.bf16 %v624, %v623
        %v1382 = vpack.c.bf16 %v626, %v625
        %s1383 = scalar_lea.vmem %s3, 32
        %v1384 = vld [vmem:[%s1383] sm:$0xf]
        %v1385 = vld [vmem:[%s1383 + $0x4] sm:$0x3]
        %v1388 = vunpack.c.l.b16 %v1384
        %v1389 = vunpack.c.l.b16 %v1385
        %v1390 = vpack.c.b16 %v1389, %v1388
        %v1392 = vsel %vm738, %v1375, 0
        %v1395 = vsel %vm738, %v1376, 0
        %v1398 = vsel %vm738, %v1377, 0
        %v1401 = vsel %vm738, %v1378, 0
        %v1404 = vsel %vm738, %v1379, 0
        %v1407 = vsel %vm738, %v1380, 0
        %v1410 = vsel %vm738, %v1381, 0
        %v1413 = vsel %vm738, %v1382, 0
        %v1416 = vsel %vm763, %v1390, 0
        %1418 = vmatprep.subr.bf16.mxu0 0
        %1419 = vmatpush1.bf16.msra.mxu0 %v1416
        %1420 = vmatprep.subr.bf16.mxu0 0
        %1421 = vmatpush1.bf16.msra.mxu0 0
        %1422 = vmatprep.subr.bf16.mxu0 0
        %1423 = vmatpush1.bf16.msra.mxu0 0
        %1424 = vmatprep.subr.bf16.mxu0 0
        %1425 = vmatpush1.bf16.msra.mxu0 0
        %1426 = vmatprep.subr.bf16.mxu0 0
        %1427 = vmatpush1.bf16.msra.mxu0 0
        %1428 = vmatprep.subr.bf16.mxu0 0
        %1429 = vmatpush1.bf16.msra.mxu0 0
        %1430 = vmatprep.subr.bf16.mxu0 0
        %1431 = vmatpush1.bf16.msra.mxu0 0
        %1432 = vmatprep.subr.bf16.mxu0 0
        %1433 = vmatpush1.bf16.msra.mxu0 0
        %1434 = vmatprep.subr.bf16.mxu0 0
        %1435 = vmatpush1.bf16.msra.mxu0 0
        %1436 = vmatprep.subr.bf16.mxu0 0
        %1437 = vmatpush1.bf16.msra.mxu0 0
        %1438 = vmatprep.subr.bf16.mxu0 0
        %1439 = vmatpush1.bf16.msra.mxu0 0
        %1440 = vmatprep.subr.bf16.mxu0 0
        %1441 = vmatpush1.bf16.msra.mxu0 0
        %1442 = vmatprep.subr.bf16.mxu0 0
        %1443 = vmatpush1.bf16.msra.mxu0 0
        %1444 = vmatprep.subr.bf16.mxu0 0
        %1445 = vmatpush1.bf16.msra.mxu0 0
        %1446 = vmatprep.subr.bf16.mxu0 0
        %1447 = vmatpush1.bf16.msra.mxu0 0
        %1448 = vmatprep.subr.bf16.mxu0 0
        %1449 = vmatpush1.bf16.msra.mxu0 0
        %1450 = vmatprep.mubr.bf16.mxu0 0
        %1451 = vmatmul.mubr.bf16.gmra.mrb[0].mxu0 %v1392
        %v1452 = vpop.f32.mrb[0].mxu0
        %v1453 = vadd.f32 0.0, %v1452
        %v1454 = vpop.f32.mrb[0].mxu0
        %v1455 = vpop.f32.mrb[0].mxu0
        %v1456 = vadd.f32 0.0, %v1455
        %v1457 = vpop.f32.mrb[0].mxu0
        %1458 = vmatprep.mubr.bf16.mxu0 0
        %1459 = vmatmul.mubr.bf16.gmra.mrb[0].mxu0 %v1395
        %v1460 = vpop.f32.mrb[0].mxu0
        %v1461 = vadd.f32 0.0, %v1460
        %v1462 = vpop.f32.mrb[0].mxu0
        %v1463 = vpop.f32.mrb[0].mxu0
        %v1464 = vadd.f32 0.0, %v1463
        %v1465 = vpop.f32.mrb[0].mxu0
        %1466 = vmatprep.mubr.bf16.mxu0 0
        %1467 = vmatmul.mubr.bf16.gmra.mrb[0].mxu0 %v1398
        %v1468 = vpop.f32.mrb[0].mxu0
        %v1469 = vadd.f32 0.0, %v1468
        %v1470 = vpop.f32.mrb[0].mxu0
        %v1471 = vpop.f32.mrb[0].mxu0
        %v1472 = vadd.f32 0.0, %v1471
        %v1473 = vpop.f32.mrb[0].mxu0
        %1474 = vmatprep.mubr.bf16.mxu0 0
        %1475 = vmatmul.mubr.bf16.gmra.mrb[0].mxu0 %v1401
        %v1476 = vpop.f32.mrb[0].mxu0
        %v1477 = vadd.f32 0.0, %v1476
        %v1478 = vpop.f32.mrb[0].mxu0
        %v1479 = vpop.f32.mrb[0].mxu0
        %v1480 = vadd.f32 0.0, %v1479
        %v1481 = vpop.f32.mrb[0].mxu0
        %1482 = vmatprep.mubr.bf16.mxu0 0
        %1483 = vmatmul.mubr.bf16.gmra.mrb[0].mxu0 %v1404
        %v1484 = vpop.f32.mrb[0].mxu0
        %v1485 = vadd.f32 0.0, %v1484
        %v1486 = vpop.f32.mrb[0].mxu0
        %v1487 = vpop.f32.mrb[0].mxu0
        %v1488 = vadd.f32 0.0, %v1487
        %v1489 = vpop.f32.mrb[0].mxu0
        %1490 = vmatprep.mubr.bf16.mxu0 0
        %1491 = vmatmul.mubr.bf16.gmra.mrb[0].mxu0 %v1407
        %v1492 = vpop.f32.mrb[0].mxu0
        %v1493 = vadd.f32 0.0, %v1492
        %v1494 = vpop.f32.mrb[0].mxu0
        %v1495 = vpop.f32.mrb[0].mxu0
        %v1496 = vadd.f32 0.0, %v1495
        %v1497 = vpop.f32.mrb[0].mxu0
        %1498 = vmatprep.mubr.bf16.mxu0 0
        %1499 = vmatmul.mubr.bf16.gmra.mrb[0].mxu0 %v1410
        %v1500 = vpop.f32.mrb[0].mxu0
        %v1501 = vadd.f32 0.0, %v1500
        %v1502 = vpop.f32.mrb[0].mxu0
        %v1503 = vpop.f32.mrb[0].mxu0
        %v1504 = vadd.f32 0.0, %v1503
        %v1505 = vpop.f32.mrb[0].mxu0
        %1506 = vmatprep.mubr.bf16.mxu0 0
        %1507 = vmatmul.mubr.bf16.gmra.mrb[0].mxu0 %v1413
        %v1508 = vpop.f32.mrb[0].mxu0
        %v1509 = vadd.f32 0.0, %v1508
        %v1510 = vpop.f32.mrb[0].mxu0
        %v1511 = vpop.f32.mrb[0].mxu0
        %v1512 = vadd.f32 0.0, %v1511
        %v1513 = vpop.f32.mrb[0].mxu0
        %1514 = vdwg.mxu0
        %v1515 = vadd.f32 %v1359, %v1453
        %v1516 = vadd.f32 %v1360, %v1456
        %v1517 = vadd.f32 %v1361, %v1461
        %v1518 = vadd.f32 %v1362, %v1464
        %v1519 = vadd.f32 %v1363, %v1469
        %v1520 = vadd.f32 %v1364, %v1472
        %v1521 = vadd.f32 %v1365, %v1477
        %v1522 = vadd.f32 %v1366, %v1480
        %v1523 = vadd.f32 %v1367, %v1485
        %v1524 = vadd.f32 %v1368, %v1488
        %v1525 = vadd.f32 %v1369, %v1493
        %v1526 = vadd.f32 %v1370, %v1496
        %v1527 = vadd.f32 %v1371, %v1501
        %v1528 = vadd.f32 %v1372, %v1504
        %v1529 = vadd.f32 %v1373, %v1509
        %v1530 = vadd.f32 %v1374, %v1512
        %v1531 = vrot.slane %v626, 1
        %v1533 = vsel %vm1025, %v1531, %v1531
        %v1534 = vsel %vm630, %v1533, 0.0
        %v1535 = vpack.c.bf16 %v1044, %v1043
        %v1536 = vpack.c.bf16 %v1046, %v1045
        %v1537 = vpack.c.bf16 %v1048, %v1047
        %v1538 = vpack.c.bf16 %v1050, %v1049
        %v1539 = vpack.c.bf16 %v1052, %v1051
        %v1540 = vpack.c.bf16 %v1054, %v1053
        %v1541 = vpack.c.bf16 %v1056, %v1055
        %v1542 = vpack.c.bf16 %v1534, %v1057
        %s1543 = scalar_lea.vmem %s3, 40
        %v1544 = vld [vmem:[%s1543] sm:$0xf]
        %v1545 = vld [vmem:[%s1543 + $0x4] sm:$0x3]
        %v1548 = vunpack.c.l.b16 %v1544
        %v1549 = vunpack.c.l.b16 %v1545
        %v1550 = vpack.c.b16 %v1549, %v1548
        %v1552 = vsel %vm738, %v1535, 0
        %v1555 = vsel %vm738, %v1536, 0
        %v1558 = vsel %vm738, %v1537, 0
        %v1561 = vsel %vm738, %v1538, 0
        %v1564 = vsel %vm738, %v1539, 0
        %v1567 = vsel %vm738, %v1540, 0
        %v1570 = vsel %vm738, %v1541, 0
        %v1573 = vsel %vm738, %v1542, 0
        %v1576 = vsel %vm763, %v1550, 0
        %1578 = vmatprep.subr.bf16.mxu0 0
        %1579 = vmatpush1.bf16.msra.mxu0 %v1576
        %1580 = vmatprep.subr.bf16.mxu0 0
        %1581 = vmatpush1.bf16.msra.mxu0 0
        %1582 = vmatprep.subr.bf16.mxu0 0
        %1583 = vmatpush1.bf16.msra.mxu0 0
        %1584 = vmatprep.subr.bf16.mxu0 0
        %1585 = vmatpush1.bf16.msra.mxu0 0
        %1586 = vmatprep.subr.bf16.mxu0 0
        %1587 = vmatpush1.bf16.msra.mxu0 0
        %1588 = vmatprep.subr.bf16.mxu0 0
        %1589 = vmatpush1.bf16.msra.mxu0 0
        %1590 = vmatprep.subr.bf16.mxu0 0
        %1591 = vmatpush1.bf16.msra.mxu0 0
        %1592 = vmatprep.subr.bf16.mxu0 0
        %1593 = vmatpush1.bf16.msra.mxu0 0
        %1594 = vmatprep.subr.bf16.mxu0 0
        %1595 = vmatpush1.bf16.msra.mxu0 0
        %1596 = vmatprep.subr.bf16.mxu0 0
        %1597 = vmatpush1.bf16.msra.mxu0 0
        %1598 = vmatprep.subr.bf16.mxu0 0
        %1599 = vmatpush1.bf16.msra.mxu0 0
        %1600 = vmatprep.subr.bf16.mxu0 0
        %1601 = vmatpush1.bf16.msra.mxu0 0
        %1602 = vmatprep.subr.bf16.mxu0 0
        %1603 = vmatpush1.bf16.msra.mxu0 0
        %1604 = vmatprep.subr.bf16.mxu0 0
        %1605 = vmatpush1.bf16.msra.mxu0 0
        %1606 = vmatprep.subr.bf16.mxu0 0
        %1607 = vmatpush1.bf16.msra.mxu0 0
        %1608 = vmatprep.subr.bf16.mxu0 0
        %1609 = vmatpush1.bf16.msra.mxu0 0
        %1610 = vmatprep.mubr.bf16.mxu0 0
        %1611 = vmatmul.mubr.bf16.gmra.mrb[0].mxu0 %v1552
        %v1612 = vpop.f32.mrb[0].mxu0
        %v1613 = vadd.f32 0.0, %v1612
        %v1614 = vpop.f32.mrb[0].mxu0
        %v1615 = vpop.f32.mrb[0].mxu0
        %v1616 = vadd.f32 0.0, %v1615
        %v1617 = vpop.f32.mrb[0].mxu0
        %1618 = vmatprep.mubr.bf16.mxu0 0
        %1619 = vmatmul.mubr.bf16.gmra.mrb[0].mxu0 %v1555
        %v1620 = vpop.f32.mrb[0].mxu0
        %v1621 = vadd.f32 0.0, %v1620
        %v1622 = vpop.f32.mrb[0].mxu0
        %v1623 = vpop.f32.mrb[0].mxu0
        %v1624 = vadd.f32 0.0, %v1623
        %v1625 = vpop.f32.mrb[0].mxu0
        %1626 = vmatprep.mubr.bf16.mxu0 0
        %1627 = vmatmul.mubr.bf16.gmra.mrb[0].mxu0 %v1558
        %v1628 = vpop.f32.mrb[0].mxu0
        %v1629 = vadd.f32 0.0, %v1628
        %v1630 = vpop.f32.mrb[0].mxu0
        %v1631 = vpop.f32.mrb[0].mxu0
        %v1632 = vadd.f32 0.0, %v1631
        %v1633 = vpop.f32.mrb[0].mxu0
        %1634 = vmatprep.mubr.bf16.mxu0 0
        %1635 = vmatmul.mubr.bf16.gmra.mrb[0].mxu0 %v1561
        %v1636 = vpop.f32.mrb[0].mxu0
        %v1637 = vadd.f32 0.0, %v1636
        %v1638 = vpop.f32.mrb[0].mxu0
        %v1639 = vpop.f32.mrb[0].mxu0
        %v1640 = vadd.f32 0.0, %v1639
        %v1641 = vpop.f32.mrb[0].mxu0
        %1642 = vmatprep.mubr.bf16.mxu0 0
        %1643 = vmatmul.mubr.bf16.gmra.mrb[0].mxu0 %v1564
        %v1644 = vpop.f32.mrb[0].mxu0
        %v1645 = vadd.f32 0.0, %v1644
        %v1646 = vpop.f32.mrb[0].mxu0
        %v1647 = vpop.f32.mrb[0].mxu0
        %v1648 = vadd.f32 0.0, %v1647
        %v1649 = vpop.f32.mrb[0].mxu0
        %1650 = vmatprep.mubr.bf16.mxu0 0
        %1651 = vmatmul.mubr.bf16.gmra.mrb[0].mxu0 %v1567
        %v1652 = vpop.f32.mrb[0].mxu0
        %v1653 = vadd.f32 0.0, %v1652
        %v1654 = vpop.f32.mrb[0].mxu0
        %v1655 = vpop.f32.mrb[0].mxu0
        %v1656 = vadd.f32 0.0, %v1655
        %v1657 = vpop.f32.mrb[0].mxu0
        %1658 = vmatprep.mubr.bf16.mxu0 0
        %1659 = vmatmul.mubr.bf16.gmra.mrb[0].mxu0 %v1570
        %v1660 = vpop.f32.mrb[0].mxu0
        %v1661 = vadd.f32 0.0, %v1660
        %v1662 = vpop.f32.mrb[0].mxu0
        %v1663 = vpop.f32.mrb[0].mxu0
        %v1664 = vadd.f32 0.0, %v1663
        %v1665 = vpop.f32.mrb[0].mxu0
        %1666 = vmatprep.mubr.bf16.mxu0 0
        %1667 = vmatmul.mubr.bf16.gmra.mrb[0].mxu0 %v1573
        %v1668 = vpop.f32.mrb[0].mxu0
        %v1669 = vadd.f32 0.0, %v1668
        %v1670 = vpop.f32.mrb[0].mxu0
        %v1671 = vpop.f32.mrb[0].mxu0
        %v1672 = vadd.f32 0.0, %v1671
        %v1673 = vpop.f32.mrb[0].mxu0
        %1674 = vdwg.mxu0
        %v1675 = vadd.f32 %v1515, %v1613
        %v1676 = vadd.f32 %v1516, %v1616
        %v1677 = vadd.f32 %v1517, %v1621
        %v1678 = vadd.f32 %v1518, %v1624
        %v1679 = vadd.f32 %v1519, %v1629
        %v1680 = vadd.f32 %v1520, %v1632
        %v1681 = vadd.f32 %v1521, %v1637
        %v1682 = vadd.f32 %v1522, %v1640
        %v1683 = vadd.f32 %v1523, %v1645
        %v1684 = vadd.f32 %v1524, %v1648
        %v1685 = vadd.f32 %v1525, %v1653
        %v1686 = vadd.f32 %v1526, %v1656
        %v1687 = vadd.f32 %v1527, %v1661
        %v1688 = vadd.f32 %v1528, %v1664
        %v1689 = vadd.f32 %v1529, %v1669
        %v1690 = vadd.f32 %v1530, %v1672
        %v1691 = vpack.c.bf16 %v696, %v1218
        %s1692 = scalar_lea.vmem %s3, 48
        %v1693 = vld [vmem:[%s1692] sm:$0xf]
        %v1694 = vld [vmem:[%s1692 + $0x4] sm:$0x3]
        %v1697 = vunpack.c.l.b16 %v1693
        %v1698 = vunpack.c.l.b16 %v1694
        %v1699 = vpack.c.b16 %v1698, %v1697
        %v1701 = vsel %vm738, %v1691, 0
        %v1704 = vsel %vm763, %v1699, 0
        %1706 = vmatprep.subr.bf16.mxu0 0
        %1707 = vmatpush1.bf16.msra.mxu0 %v1704
        %1708 = vmatprep.subr.bf16.mxu0 0
        %1709 = vmatpush1.bf16.msra.mxu0 0
        %1710 = vmatprep.subr.bf16.mxu0 0
        %1711 = vmatpush1.bf16.msra.mxu0 0
        %1712 = vmatprep.subr.bf16.mxu0 0
        %1713 = vmatpush1.bf16.msra.mxu0 0
        %1714 = vmatprep.subr.bf16.mxu0 0
        %1715 = vmatpush1.bf16.msra.mxu0 0
        %1716 = vmatprep.subr.bf16.mxu0 0
        %1717 = vmatpush1.bf16.msra.mxu0 0
        %1718 = vmatprep.subr.bf16.mxu0 0
        %1719 = vmatpush1.bf16.msra.mxu0 0
        %1720 = vmatprep.subr.bf16.mxu0 0
        %1721 = vmatpush1.bf16.msra.mxu0 0
        %1722 = vmatprep.subr.bf16.mxu0 0
        %1723 = vmatpush1.bf16.msra.mxu0 0
        %1724 = vmatprep.subr.bf16.mxu0 0
        %1725 = vmatpush1.bf16.msra.mxu0 0
        %1726 = vmatprep.subr.bf16.mxu0 0
        %1727 = vmatpush1.bf16.msra.mxu0 0
        %1728 = vmatprep.subr.bf16.mxu0 0
        %1729 = vmatpush1.bf16.msra.mxu0 0
        %1730 = vmatprep.subr.bf16.mxu0 0
        %1731 = vmatpush1.bf16.msra.mxu0 0
        %1732 = vmatprep.subr.bf16.mxu0 0
        %1733 = vmatpush1.bf16.msra.mxu0 0
        %1734 = vmatprep.subr.bf16.mxu0 0
        %1735 = vmatpush1.bf16.msra.mxu0 0
        %1736 = vmatprep.subr.bf16.mxu0 0
        %1737 = vmatpush1.bf16.msra.mxu0 0
        %1738 = vmatprep.mubr.bf16.mxu0 0
        %1739 = vmatmul.mubr.bf16.gmra.mrb[0].mxu0 %v873
        %v1740 = vpop.f32.mrb[0].mxu0
        %v1741 = vadd.f32 0.0, %v1740
        %v1742 = vpop.f32.mrb[0].mxu0
        %v1743 = vpop.f32.mrb[0].mxu0
        %v1744 = vadd.f32 0.0, %v1743
        %v1745 = vpop.f32.mrb[0].mxu0
        %1746 = vmatprep.mubr.bf16.mxu0 0
        %1747 = vmatmul.mubr.bf16.gmra.mrb[0].mxu0 %v876
        %v1748 = vpop.f32.mrb[0].mxu0
        %v1749 = vadd.f32 0.0, %v1748
        %v1750 = vpop.f32.mrb[0].mxu0
        %v1751 = vpop.f32.mrb[0].mxu0
        %v1752 = vadd.f32 0.0, %v1751
        %v1753 = vpop.f32.mrb[0].mxu0
        %1754 = vmatprep.mubr.bf16.mxu0 0
        %1755 = vmatmul.mubr.bf16.gmra.mrb[0].mxu0 %v879
        %v1756 = vpop.f32.mrb[0].mxu0
        %v1757 = vadd.f32 0.0, %v1756
        %v1758 = vpop.f32.mrb[0].mxu0
        %v1759 = vpop.f32.mrb[0].mxu0
        %v1760 = vadd.f32 0.0, %v1759
        %v1761 = vpop.f32.mrb[0].mxu0
        %1762 = vmatprep.mubr.bf16.mxu0 0
        %1763 = vmatmul.mubr.bf16.gmra.mrb[0].mxu0 %v882
        %v1764 = vpop.f32.mrb[0].mxu0
        %v1765 = vadd.f32 0.0, %v1764
        %v1766 = vpop.f32.mrb[0].mxu0
        %v1767 = vpop.f32.mrb[0].mxu0
        %v1768 = vadd.f32 0.0, %v1767
        %v1769 = vpop.f32.mrb[0].mxu0
        %1770 = vmatprep.mubr.bf16.mxu0 0
        %1771 = vmatmul.mubr.bf16.gmra.mrb[0].mxu0 %v885
        %v1772 = vpop.f32.mrb[0].mxu0
        %v1773 = vadd.f32 0.0, %v1772
        %v1774 = vpop.f32.mrb[0].mxu0
        %v1775 = vpop.f32.mrb[0].mxu0
        %v1776 = vadd.f32 0.0, %v1775
        %v1777 = vpop.f32.mrb[0].mxu0
        %1778 = vmatprep.mubr.bf16.mxu0 0
        %1779 = vmatmul.mubr.bf16.gmra.mrb[0].mxu0 %v888
        %v1780 = vpop.f32.mrb[0].mxu0
        %v1781 = vadd.f32 0.0, %v1780
        %v1782 = vpop.f32.mrb[0].mxu0
        %v1783 = vpop.f32.mrb[0].mxu0
        %v1784 = vadd.f32 0.0, %v1783
        %v1785 = vpop.f32.mrb[0].mxu0
        %1786 = vmatprep.mubr.bf16.mxu0 0
        %1787 = vmatmul.mubr.bf16.gmra.mrb[0].mxu0 %v891
        %v1788 = vpop.f32.mrb[0].mxu0
        %v1789 = vadd.f32 0.0, %v1788
        %v1790 = vpop.f32.mrb[0].mxu0
        %v1791 = vpop.f32.mrb[0].mxu0
        %v1792 = vadd.f32 0.0, %v1791
        %v1793 = vpop.f32.mrb[0].mxu0
        %1794 = vmatprep.mubr.bf16.mxu0 0
        %1795 = vmatmul.mubr.bf16.gmra.mrb[0].mxu0 %v1701
        %v1796 = vpop.f32.mrb[0].mxu0
        %v1797 = vadd.f32 0.0, %v1796
        %v1798 = vpop.f32.mrb[0].mxu0
        %v1799 = vpop.f32.mrb[0].mxu0
        %v1800 = vadd.f32 0.0, %v1799
        %v1801 = vpop.f32.mrb[0].mxu0
        %1802 = vdwg.mxu0
        %v1803 = vadd.f32 %v1675, %v1741
        %v1804 = vadd.f32 %v1676, %v1744
        %v1805 = vadd.f32 %v1677, %v1749
        %v1806 = vadd.f32 %v1678, %v1752
        %v1807 = vadd.f32 %v1679, %v1757
        %v1808 = vadd.f32 %v1680, %v1760
        %v1809 = vadd.f32 %v1681, %v1765
        %v1810 = vadd.f32 %v1682, %v1768
        %v1811 = vadd.f32 %v1683, %v1773
        %v1812 = vadd.f32 %v1684, %v1776
        %v1813 = vadd.f32 %v1685, %v1781
        %v1814 = vadd.f32 %v1686, %v1784
        %v1815 = vadd.f32 %v1687, %v1789
        %v1816 = vadd.f32 %v1688, %v1792
        %v1817 = vadd.f32 %v1689, %v1797
        %v1818 = vadd.f32 %v1690, %v1800
        %v1819 = vpack.c.bf16 0.0, %v626
        %s1820 = scalar_lea.vmem %s3, 56
        %v1821 = vld [vmem:[%s1820] sm:$0xf]
        %v1822 = vld [vmem:[%s1820 + $0x4] sm:$0x3]
        %v1825 = vunpack.c.l.b16 %v1821
        %v1826 = vunpack.c.l.b16 %v1822
        %v1827 = vpack.c.b16 %v1826, %v1825
        %v1829 = vsel %vm738, %v1819, 0
        %v1832 = vsel %vm763, %v1827, 0
        %1834 = vmatprep.subr.bf16.mxu0 0
        %1835 = vmatpush1.bf16.msra.mxu0 %v1832
        %1836 = vmatprep.subr.bf16.mxu0 0
        %1837 = vmatpush1.bf16.msra.mxu0 0
        %1838 = vmatprep.subr.bf16.mxu0 0
        %1839 = vmatpush1.bf16.msra.mxu0 0
        %1840 = vmatprep.subr.bf16.mxu0 0
        %1841 = vmatpush1.bf16.msra.mxu0 0
        %1842 = vmatprep.subr.bf16.mxu0 0
        %1843 = vmatpush1.bf16.msra.mxu0 0
        %1844 = vmatprep.subr.bf16.mxu0 0
        %1845 = vmatpush1.bf16.msra.mxu0 0
        %1846 = vmatprep.subr.bf16.mxu0 0
        %1847 = vmatpush1.bf16.msra.mxu0 0
        %1848 = vmatprep.subr.bf16.mxu0 0
        %1849 = vmatpush1.bf16.msra.mxu0 0
        %1850 = vmatprep.subr.bf16.mxu0 0
        %1851 = vmatpush1.bf16.msra.mxu0 0
        %1852 = vmatprep.subr.bf16.mxu0 0
        %1853 = vmatpush1.bf16.msra.mxu0 0
        %1854 = vmatprep.subr.bf16.mxu0 0
        %1855 = vmatpush1.bf16.msra.mxu0 0
        %1856 = vmatprep.subr.bf16.mxu0 0
        %1857 = vmatpush1.bf16.msra.mxu0 0
        %1858 = vmatprep.subr.bf16.mxu0 0
        %1859 = vmatpush1.bf16.msra.mxu0 0
        %1860 = vmatprep.subr.bf16.mxu0 0
        %1861 = vmatpush1.bf16.msra.mxu0 0
        %1862 = vmatprep.subr.bf16.mxu0 0
        %1863 = vmatpush1.bf16.msra.mxu0 0
        %1864 = vmatprep.subr.bf16.mxu0 0
        %1865 = vmatpush1.bf16.msra.mxu0 0
        %1866 = vmatprep.mubr.bf16.mxu0 0
        %1867 = vmatmul.mubr.bf16.gmra.mrb[0].mxu0 %v743
        %v1868 = vpop.f32.mrb[0].mxu0
        %v1869 = vadd.f32 0.0, %v1868
        %v1870 = vpop.f32.mrb[0].mxu0
        %v1871 = vpop.f32.mrb[0].mxu0
        %v1872 = vadd.f32 0.0, %v1871
        %v1873 = vpop.f32.mrb[0].mxu0
        %1874 = vmatprep.mubr.bf16.mxu0 0
        %1875 = vmatmul.mubr.bf16.gmra.mrb[0].mxu0 %v746
        %v1876 = vpop.f32.mrb[0].mxu0
        %v1877 = vadd.f32 0.0, %v1876
        %v1878 = vpop.f32.mrb[0].mxu0
        %v1879 = vpop.f32.mrb[0].mxu0
        %v1880 = vadd.f32 0.0, %v1879
        %v1881 = vpop.f32.mrb[0].mxu0
        %1882 = vmatprep.mubr.bf16.mxu0 0
        %1883 = vmatmul.mubr.bf16.gmra.mrb[0].mxu0 %v749
        %v1884 = vpop.f32.mrb[0].mxu0
        %v1885 = vadd.f32 0.0, %v1884
        %v1886 = vpop.f32.mrb[0].mxu0
        %v1887 = vpop.f32.mrb[0].mxu0
        %v1888 = vadd.f32 0.0, %v1887
        %v1889 = vpop.f32.mrb[0].mxu0
        %1890 = vmatprep.mubr.bf16.mxu0 0
        %1891 = vmatmul.mubr.bf16.gmra.mrb[0].mxu0 %v752
        %v1892 = vpop.f32.mrb[0].mxu0
        %v1893 = vadd.f32 0.0, %v1892
        %v1894 = vpop.f32.mrb[0].mxu0
        %v1895 = vpop.f32.mrb[0].mxu0
        %v1896 = vadd.f32 0.0, %v1895
        %v1897 = vpop.f32.mrb[0].mxu0
        %1898 = vmatprep.mubr.bf16.mxu0 0
        %1899 = vmatmul.mubr.bf16.gmra.mrb[0].mxu0 %v755
        %v1900 = vpop.f32.mrb[0].mxu0
        %v1901 = vadd.f32 0.0, %v1900
        %v1902 = vpop.f32.mrb[0].mxu0
        %v1903 = vpop.f32.mrb[0].mxu0
        %v1904 = vadd.f32 0.0, %v1903
        %v1905 = vpop.f32.mrb[0].mxu0
        %1906 = vmatprep.mubr.bf16.mxu0 0
        %1907 = vmatmul.mubr.bf16.gmra.mrb[0].mxu0 %v758
        %v1908 = vpop.f32.mrb[0].mxu0
        %v1909 = vadd.f32 0.0, %v1908
        %v1910 = vpop.f32.mrb[0].mxu0
        %v1911 = vpop.f32.mrb[0].mxu0
        %v1912 = vadd.f32 0.0, %v1911
        %v1913 = vpop.f32.mrb[0].mxu0
        %1914 = vmatprep.mubr.bf16.mxu0 0
        %1915 = vmatmul.mubr.bf16.gmra.mrb[0].mxu0 %v761
        %v1916 = vpop.f32.mrb[0].mxu0
        %v1917 = vadd.f32 0.0, %v1916
        %v1918 = vpop.f32.mrb[0].mxu0
        %v1919 = vpop.f32.mrb[0].mxu0
        %v1920 = vadd.f32 0.0, %v1919
        %v1921 = vpop.f32.mrb[0].mxu0
        %1922 = vmatprep.mubr.bf16.mxu0 0
        %1923 = vmatmul.mubr.bf16.gmra.mrb[0].mxu0 %v1829
        %v1924 = vpop.f32.mrb[0].mxu0
        %v1925 = vadd.f32 0.0, %v1924
        %v1926 = vpop.f32.mrb[0].mxu0
        %v1927 = vpop.f32.mrb[0].mxu0
        %v1928 = vadd.f32 0.0, %v1927
        %v1929 = vpop.f32.mrb[0].mxu0
        %1930 = vdwg.mxu0
        %v1931 = vadd.f32 %v1803, %v1869
        %v1932 = vadd.f32 %v1804, %v1872
        %v1933 = vadd.f32 %v1805, %v1877
        %v1934 = vadd.f32 %v1806, %v1880
        %v1935 = vadd.f32 %v1807, %v1885
        %v1936 = vadd.f32 %v1808, %v1888
        %v1937 = vadd.f32 %v1809, %v1893
        %v1938 = vadd.f32 %v1810, %v1896
        %v1939 = vadd.f32 %v1811, %v1901
        %v1940 = vadd.f32 %v1812, %v1904
        %v1941 = vadd.f32 %v1813, %v1909
        %v1942 = vadd.f32 %v1814, %v1912
        %v1943 = vadd.f32 %v1815, %v1917
        %v1944 = vadd.f32 %v1816, %v1920
        %v1945 = vadd.f32 %v1817, %v1925
        %v1946 = vadd.f32 %v1818, %v1928
        %v1947 = vpack.c.bf16 %v1042, %v1534
        %s1948 = scalar_lea.vmem %s3, 64
        %v1949 = vld [vmem:[%s1948] sm:$0xf]
        %v1950 = vld [vmem:[%s1948 + $0x4] sm:$0x3]
        %v1953 = vunpack.c.l.b16 %v1949
        %v1954 = vunpack.c.l.b16 %v1950
        %v1955 = vpack.c.b16 %v1954, %v1953
        %v1957 = vsel %vm738, %v1947, 0
        %v1960 = vsel %vm763, %v1955, 0
        %1962 = vmatprep.subr.bf16.mxu0 0
        %1963 = vmatpush1.bf16.msra.mxu0 %v1960
        %1964 = vmatprep.subr.bf16.mxu0 0
        %1965 = vmatpush1.bf16.msra.mxu0 0
        %1966 = vmatprep.subr.bf16.mxu0 0
        %1967 = vmatpush1.bf16.msra.mxu0 0
        %1968 = vmatprep.subr.bf16.mxu0 0
        %1969 = vmatpush1.bf16.msra.mxu0 0
        %1970 = vmatprep.subr.bf16.mxu0 0
        %1971 = vmatpush1.bf16.msra.mxu0 0
        %1972 = vmatprep.subr.bf16.mxu0 0
        %1973 = vmatpush1.bf16.msra.mxu0 0
        %1974 = vmatprep.subr.bf16.mxu0 0
        %1975 = vmatpush1.bf16.msra.mxu0 0
        %1976 = vmatprep.subr.bf16.mxu0 0
        %1977 = vmatpush1.bf16.msra.mxu0 0
        %1978 = vmatprep.subr.bf16.mxu0 0
        %1979 = vmatpush1.bf16.msra.mxu0 0
        %1980 = vmatprep.subr.bf16.mxu0 0
        %1981 = vmatpush1.bf16.msra.mxu0 0
        %1982 = vmatprep.subr.bf16.mxu0 0
        %1983 = vmatpush1.bf16.msra.mxu0 0
        %1984 = vmatprep.subr.bf16.mxu0 0
        %1985 = vmatpush1.bf16.msra.mxu0 0
        %1986 = vmatprep.subr.bf16.mxu0 0
        %1987 = vmatpush1.bf16.msra.mxu0 0
        %1988 = vmatprep.subr.bf16.mxu0 0
        %1989 = vmatpush1.bf16.msra.mxu0 0
        %1990 = vmatprep.subr.bf16.mxu0 0
        %1991 = vmatpush1.bf16.msra.mxu0 0
        %1992 = vmatprep.subr.bf16.mxu0 0
        %1993 = vmatpush1.bf16.msra.mxu0 0
        %1994 = vmatprep.mubr.bf16.mxu0 0
        %1995 = vmatmul.mubr.bf16.gmra.mrb[0].mxu0 %v1078
        %v1996 = vpop.f32.mrb[0].mxu0
        %v1997 = vadd.f32 0.0, %v1996
        %v1998 = vpop.f32.mrb[0].mxu0
        %v1999 = vpop.f32.mrb[0].mxu0
        %v2000 = vadd.f32 0.0, %v1999
        %v2001 = vpop.f32.mrb[0].mxu0
        %2002 = vmatprep.mubr.bf16.mxu0 0
        %2003 = vmatmul.mubr.bf16.gmra.mrb[0].mxu0 %v1081
        %v2004 = vpop.f32.mrb[0].mxu0
        %v2005 = vadd.f32 0.0, %v2004
        %v2006 = vpop.f32.mrb[0].mxu0
        %v2007 = vpop.f32.mrb[0].mxu0
        %v2008 = vadd.f32 0.0, %v2007
        %v2009 = vpop.f32.mrb[0].mxu0
        %2010 = vmatprep.mubr.bf16.mxu0 0
        %2011 = vmatmul.mubr.bf16.gmra.mrb[0].mxu0 %v1084
        %v2012 = vpop.f32.mrb[0].mxu0
        %v2013 = vadd.f32 0.0, %v2012
        %v2014 = vpop.f32.mrb[0].mxu0
        %v2015 = vpop.f32.mrb[0].mxu0
        %v2016 = vadd.f32 0.0, %v2015
        %v2017 = vpop.f32.mrb[0].mxu0
        %2018 = vmatprep.mubr.bf16.mxu0 0
        %2019 = vmatmul.mubr.bf16.gmra.mrb[0].mxu0 %v1087
        %v2020 = vpop.f32.mrb[0].mxu0
        %v2021 = vadd.f32 0.0, %v2020
        %v2022 = vpop.f32.mrb[0].mxu0
        %v2023 = vpop.f32.mrb[0].mxu0
        %v2024 = vadd.f32 0.0, %v2023
        %v2025 = vpop.f32.mrb[0].mxu0
        %2026 = vmatprep.mubr.bf16.mxu0 0
        %2027 = vmatmul.mubr.bf16.gmra.mrb[0].mxu0 %v1090
        %v2028 = vpop.f32.mrb[0].mxu0
        %v2029 = vadd.f32 0.0, %v2028
        %v2030 = vpop.f32.mrb[0].mxu0
        %v2031 = vpop.f32.mrb[0].mxu0
        %v2032 = vadd.f32 0.0, %v2031
        %v2033 = vpop.f32.mrb[0].mxu0
        %2034 = vmatprep.mubr.bf16.mxu0 0
        %2035 = vmatmul.mubr.bf16.gmra.mrb[0].mxu0 %v1093
        %v2036 = vpop.f32.mrb[0].mxu0
        %v2037 = vadd.f32 0.0, %v2036
        %v2038 = vpop.f32.mrb[0].mxu0
        %v2039 = vpop.f32.mrb[0].mxu0
        %v2040 = vadd.f32 0.0, %v2039
        %v2041 = vpop.f32.mrb[0].mxu0
        %2042 = vmatprep.mubr.bf16.mxu0 0
        %2043 = vmatmul.mubr.bf16.gmra.mrb[0].mxu0 %v1096
        %v2044 = vpop.f32.mrb[0].mxu0
        %v2045 = vadd.f32 0.0, %v2044
        %v2046 = vpop.f32.mrb[0].mxu0
        %v2047 = vpop.f32.mrb[0].mxu0
        %v2048 = vadd.f32 0.0, %v2047
        %v2049 = vpop.f32.mrb[0].mxu0
        %2050 = vmatprep.mubr.bf16.mxu0 0
        %2051 = vmatmul.mubr.bf16.gmra.mrb[0].mxu0 %v1957
        %v2052 = vpop.f32.mrb[0].mxu0
        %v2053 = vadd.f32 0.0, %v2052
        %v2054 = vpop.f32.mrb[0].mxu0
        %v2055 = vpop.f32.mrb[0].mxu0
        %v2056 = vadd.f32 0.0, %v2055
        %v2057 = vpop.f32.mrb[0].mxu0
        %2058 = vdwg.mxu0
        %v2059 = vadd.f32 %v1931, %v1997
        %v2060 = vadd.f32 %v1932, %v2000
        %v2061 = vadd.f32 %v1933, %v2005
        %v2062 = vadd.f32 %v1934, %v2008
        %v2063 = vadd.f32 %v1935, %v2013
        %v2064 = vadd.f32 %v1936, %v2016
        %v2065 = vadd.f32 %v1937, %v2021
        %v2066 = vadd.f32 %v1938, %v2024
        %v2067 = vadd.f32 %v1939, %v2029
        %v2068 = vadd.f32 %v1940, %v2032
        %v2069 = vadd.f32 %v1941, %v2037
        %v2070 = vadd.f32 %v1942, %v2040
        %v2071 = vadd.f32 %v1943, %v2045
        %v2072 = vadd.f32 %v1944, %v2048
        %v2073 = vadd.f32 %v1945, %v2053
        %v2074 = vadd.f32 %v1946, %v2056
        %v2075 = vld [vmem:[%s4] sm:$0x1]
        %v2077 = vlaneseq
        %v2078 = vshrl.u32 %v2077, 7
        %v2079 = vsub.s32 0, %v2078
        %v2080 = vrot.slane %v2075, %v2079
        %v2082 = vadd.f32 %v2059, %v2080
        %v2083 = vadd.f32 %v2060, %v2080
        %v2084 = vadd.f32 %v2061, %v2080
        %v2085 = vadd.f32 %v2062, %v2080
        %v2086 = vadd.f32 %v2063, %v2080
        %v2087 = vadd.f32 %v2064, %v2080
        %v2088 = vadd.f32 %v2065, %v2080
        %v2089 = vadd.f32 %v2066, %v2080
        %v2090 = vadd.f32 %v2067, %v2080
        %v2091 = vadd.f32 %v2068, %v2080
        %v2092 = vadd.f32 %v2069, %v2080
        %v2093 = vadd.f32 %v2070, %v2080
        %v2094 = vadd.f32 %v2071, %v2080
        %v2095 = vadd.f32 %v2072, %v2080
        %v2096 = vadd.f32 %v2073, %v2080
        %v2097 = vadd.f32 %v2074, %v2080
        %v2098 = vmax.f32 %v2082, 0.0
        %v2099 = vmax.f32 %v2083, 0.0
        %v2100 = vmax.f32 %v2084, 0.0
        %v2101 = vmax.f32 %v2085, 0.0
        %v2102 = vmax.f32 %v2086, 0.0
        %v2103 = vmax.f32 %v2087, 0.0
        %v2104 = vmax.f32 %v2088, 0.0
        %v2105 = vmax.f32 %v2089, 0.0
        %v2106 = vmax.f32 %v2090, 0.0
        %v2107 = vmax.f32 %v2091, 0.0
        %v2108 = vmax.f32 %v2092, 0.0
        %v2109 = vmax.f32 %v2093, 0.0
        %v2110 = vmax.f32 %v2094, 0.0
        %v2111 = vmax.f32 %v2095, 0.0
        %v2112 = vmax.f32 %v2096, 0.0
        %v2113 = vmax.f32 %v2097, 0.0
        %v2114 = vpack.c.bf16 %v2099, %v2098
        %v2115 = vpack.c.bf16 %v2101, %v2100
        %v2116 = vpack.c.bf16 %v2103, %v2102
        %v2117 = vpack.c.bf16 %v2105, %v2104
        %v2118 = vpack.c.bf16 %v2107, %v2106
        %v2119 = vpack.c.bf16 %v2109, %v2108
        %v2120 = vpack.c.bf16 %v2111, %v2110
        %v2121 = vpack.c.bf16 %v2113, %v2112
        %v2122 = vld [vmem:[%s5] sm:$0xf]
        %v2123 = vld [vmem:[%s5 + $0x4] sm:$0x3]
        %2124 = vrot.lane.b32.xlu0 %v611, 116
        %v2125 = vpop.permute.xlu0 %2124
        %2126 = vrot.lane.b32.xlu0 %v612, 116
        %v2127 = vpop.permute.xlu0 %2126
        %2128 = vrot.lane.b32.xlu0 %v613, 116
        %v2129 = vpop.permute.xlu0 %2128
        %2130 = vrot.lane.b32.xlu0 %v614, 116
        %v2131 = vpop.permute.xlu0 %2130
        %2132 = vrot.lane.b32.xlu0 %v615, 116
        %v2133 = vpop.permute.xlu0 %2132
        %2134 = vrot.lane.b32.xlu0 %v616, 116
        %v2135 = vpop.permute.xlu0 %2134
        %2136 = vrot.lane.b32.xlu0 %v617, 116
        %v2137 = vpop.permute.xlu0 %2136
        %2138 = vrot.lane.b32.xlu0 %v618, 116
        %v2139 = vpop.permute.xlu0 %2138
        %2140 = vrot.lane.b32.xlu0 %v619, 116
        %v2141 = vpop.permute.xlu0 %2140
        %2142 = vrot.lane.b32.xlu0 %v620, 116
        %v2143 = vpop.permute.xlu0 %2142
        %2144 = vrot.lane.b32.xlu0 %v621, 116
        %v2145 = vpop.permute.xlu0 %2144
        %2146 = vrot.lane.b32.xlu0 %v622, 116
        %v2147 = vpop.permute.xlu0 %2146
        %2148 = vrot.lane.b32.xlu0 %v623, 116
        %v2149 = vpop.permute.xlu0 %2148
        %2150 = vrot.lane.b32.xlu0 %v624, 116
        %v2151 = vpop.permute.xlu0 %2150
        %2152 = vrot.lane.b32.xlu0 %v625, 116
        %v2153 = vpop.permute.xlu0 %2152
        %2154 = vrot.lane.b32.xlu0 %v626, 116
        %v2155 = vpop.permute.xlu0 %2154
        %v2172 = vadd.f32 %v2098, %v2125
        %v2173 = vadd.f32 %v2099, %v2127
        %v2174 = vadd.f32 %v2100, %v2129
        %v2175 = vadd.f32 %v2101, %v2131
        %v2176 = vadd.f32 %v2102, %v2133
        %v2177 = vadd.f32 %v2103, %v2135
        %v2178 = vadd.f32 %v2104, %v2137
        %v2179 = vadd.f32 %v2105, %v2139
        %v2180 = vadd.f32 %v2106, %v2141
        %v2181 = vadd.f32 %v2107, %v2143
        %v2182 = vadd.f32 %v2108, %v2145
        %v2183 = vadd.f32 %v2109, %v2147
        %v2184 = vadd.f32 %v2110, %v2149
        %v2185 = vadd.f32 %v2111, %v2151
        %v2186 = vadd.f32 %v2112, %v2153
        %v2187 = vadd.f32 %v2113, %v2155
        %v2203 = vrot.slane %v2172, 7
        %v2204 = vrot.slane %v2173, 7
        %v2205 = vrot.slane %v2174, 7
        %v2206 = vrot.slane %v2175, 7
        %v2207 = vrot.slane %v2176, 7
        %v2208 = vrot.slane %v2177, 7
        %v2209 = vrot.slane %v2178, 7
        %v2210 = vrot.slane %v2179, 7
        %v2211 = vrot.slane %v2180, 7
        %v2212 = vrot.slane %v2181, 7
        %v2213 = vrot.slane %v2182, 7
        %v2214 = vrot.slane %v2183, 7
        %v2215 = vrot.slane %v2184, 7
        %v2216 = vrot.slane %v2185, 7
        %v2217 = vrot.slane %v2186, 7
        %v2233 = vsel %vm679, %v2203, %v2203
        %v2234 = vsel %vm679, %v2204, %v2204
        %v2235 = vsel %vm679, %v2205, %v2205
        %v2236 = vsel %vm679, %v2206, %v2206
        %v2237 = vsel %vm679, %v2207, %v2207
        %v2238 = vsel %vm679, %v2208, %v2208
        %v2239 = vsel %vm679, %v2209, %v2209
        %v2240 = vsel %vm679, %v2210, %v2210
        %v2241 = vsel %vm679, %v2211, %v2211
        %v2242 = vsel %vm679, %v2212, %v2212
        %v2243 = vsel %vm679, %v2213, %v2213
        %v2244 = vsel %vm679, %v2214, %v2214
        %v2245 = vsel %vm679, %v2215, %v2215
        %v2246 = vsel %vm679, %v2216, %v2216
        %v2247 = vsel %vm679, %v2217, %v2217
        %v2248 = vsel %vm629, %v2233, 0.0
        %v2249 = vsel %vm629, %v2234, 0.0
        %v2250 = vsel %vm629, %v2235, 0.0
        %v2251 = vsel %vm629, %v2236, 0.0
        %v2252 = vsel %vm629, %v2237, 0.0
        %v2253 = vsel %vm629, %v2238, 0.0
        %v2254 = vsel %vm629, %v2239, 0.0
        %v2255 = vsel %vm629, %v2240, 0.0
        %v2256 = vsel %vm629, %v2241, 0.0
        %v2257 = vsel %vm629, %v2242, 0.0
        %v2258 = vsel %vm629, %v2243, 0.0
        %v2259 = vsel %vm629, %v2244, 0.0
        %v2260 = vsel %vm629, %v2245, 0.0
        %v2261 = vsel %vm629, %v2246, 0.0
        %v2262 = vsel %vm629, %v2247, 0.0
        %v2263 = vpack.c.bf16 %v2248, %v696
        %v2264 = vpack.c.bf16 %v2250, %v2249
        %v2265 = vpack.c.bf16 %v2252, %v2251
        %v2266 = vpack.c.bf16 %v2254, %v2253
        %v2267 = vpack.c.bf16 %v2256, %v2255
        %v2268 = vpack.c.bf16 %v2258, %v2257
        %v2269 = vpack.c.bf16 %v2260, %v2259
        %v2270 = vpack.c.bf16 %v2262, %v2261
        %s2271 = scalar_lea.vmem %s3, 72
        %v2272 = vld [vmem:[%s2271] sm:$0xf]
        %v2273 = vld [vmem:[%s2271 + $0x4] sm:$0x3]
        %v2274 = vpack.c.bf16 %v2172, 0.0
        %v2275 = vpack.c.bf16 %v2174, %v2173
        %v2276 = vpack.c.bf16 %v2176, %v2175
        %v2277 = vpack.c.bf16 %v2178, %v2177
        %v2278 = vpack.c.bf16 %v2180, %v2179
        %v2279 = vpack.c.bf16 %v2182, %v2181
        %v2280 = vpack.c.bf16 %v2184, %v2183
        %v2281 = vpack.c.bf16 %v2186, %v2185
        %s2282 = scalar_lea.vmem %s3, 80
        %v2283 = vld [vmem:[%s2282] sm:$0xf]
        %v2284 = vld [vmem:[%s2282 + $0x4] sm:$0x3]
        %v2287 = vunpack.c.l.b16 %v2283
        %v2288 = vunpack.c.l.b16 %v2284
        %v2289 = vpack.c.b16 %v2288, %v2287
        %v2291 = vsel %vm738, %v2274, 0
        %v2294 = vsel %vm738, %v2275, 0
        %v2297 = vsel %vm738, %v2276, 0
        %v2300 = vsel %vm738, %v2277, 0
        %v2303 = vsel %vm738, %v2278, 0
        %v2306 = vsel %vm738, %v2279, 0
        %v2309 = vsel %vm738, %v2280, 0
        %v2312 = vsel %vm738, %v2281, 0
        %v2315 = vsel %vm763, %v2289, 0
        %2317 = vmatprep.subr.bf16.mxu0 0
        %2318 = vmatpush1.bf16.msra.mxu0 %v2315
        %2319 = vmatprep.subr.bf16.mxu0 0
        %2320 = vmatpush1.bf16.msra.mxu0 0
        %2321 = vmatprep.subr.bf16.mxu0 0
        %2322 = vmatpush1.bf16.msra.mxu0 0
        %2323 = vmatprep.subr.bf16.mxu0 0
        %2324 = vmatpush1.bf16.msra.mxu0 0
        %2325 = vmatprep.subr.bf16.mxu0 0
        %2326 = vmatpush1.bf16.msra.mxu0 0
        %2327 = vmatprep.subr.bf16.mxu0 0
        %2328 = vmatpush1.bf16.msra.mxu0 0
        %2329 = vmatprep.subr.bf16.mxu0 0
        %2330 = vmatpush1.bf16.msra.mxu0 0
        %2331 = vmatprep.subr.bf16.mxu0 0
        %2332 = vmatpush1.bf16.msra.mxu0 0
        %2333 = vmatprep.subr.bf16.mxu0 0
        %2334 = vmatpush1.bf16.msra.mxu0 0
        %2335 = vmatprep.subr.bf16.mxu0 0
        %2336 = vmatpush1.bf16.msra.mxu0 0
        %2337 = vmatprep.subr.bf16.mxu0 0
        %2338 = vmatpush1.bf16.msra.mxu0 0
        %2339 = vmatprep.subr.bf16.mxu0 0
        %2340 = vmatpush1.bf16.msra.mxu0 0
        %2341 = vmatprep.subr.bf16.mxu0 0
        %2342 = vmatpush1.bf16.msra.mxu0 0
        %2343 = vmatprep.subr.bf16.mxu0 0
        %2344 = vmatpush1.bf16.msra.mxu0 0
        %2345 = vmatprep.subr.bf16.mxu0 0
        %2346 = vmatpush1.bf16.msra.mxu0 0
        %2347 = vmatprep.subr.bf16.mxu0 0
        %2348 = vmatpush1.bf16.msra.mxu0 0
        %2349 = vmatprep.mubr.bf16.mxu0 0
        %2350 = vmatmul.mubr.bf16.gmra.mrb[0].mxu0 %v2291
        %v2351 = vpop.f32.mrb[0].mxu0
        %v2352 = vadd.f32 0.0, %v2351
        %v2353 = vpop.f32.mrb[0].mxu0
        %v2354 = vpop.f32.mrb[0].mxu0
        %v2355 = vadd.f32 0.0, %v2354
        %v2356 = vpop.f32.mrb[0].mxu0
        %2357 = vmatprep.mubr.bf16.mxu0 0
        %2358 = vmatmul.mubr.bf16.gmra.mrb[0].mxu0 %v2294
        %v2359 = vpop.f32.mrb[0].mxu0
        %v2360 = vadd.f32 0.0, %v2359
        %v2361 = vpop.f32.mrb[0].mxu0
        %v2362 = vpop.f32.mrb[0].mxu0
        %v2363 = vadd.f32 0.0, %v2362
        %v2364 = vpop.f32.mrb[0].mxu0
        %2365 = vmatprep.mubr.bf16.mxu0 0
        %2366 = vmatmul.mubr.bf16.gmra.mrb[0].mxu0 %v2297
        %v2367 = vpop.f32.mrb[0].mxu0
        %v2368 = vadd.f32 0.0, %v2367
        %v2369 = vpop.f32.mrb[0].mxu0
        %v2370 = vpop.f32.mrb[0].mxu0
        %v2371 = vadd.f32 0.0, %v2370
        %v2372 = vpop.f32.mrb[0].mxu0
        %2373 = vmatprep.mubr.bf16.mxu0 0
        %2374 = vmatmul.mubr.bf16.gmra.mrb[0].mxu0 %v2300
        %v2375 = vpop.f32.mrb[0].mxu0
        %v2376 = vadd.f32 0.0, %v2375
        %v2377 = vpop.f32.mrb[0].mxu0
        %v2378 = vpop.f32.mrb[0].mxu0
        %v2379 = vadd.f32 0.0, %v2378
        %v2380 = vpop.f32.mrb[0].mxu0
        %2381 = vmatprep.mubr.bf16.mxu0 0
        %2382 = vmatmul.mubr.bf16.gmra.mrb[0].mxu0 %v2303
        %v2383 = vpop.f32.mrb[0].mxu0
        %v2384 = vadd.f32 0.0, %v2383
        %v2385 = vpop.f32.mrb[0].mxu0
        %v2386 = vpop.f32.mrb[0].mxu0
        %v2387 = vadd.f32 0.0, %v2386
        %v2388 = vpop.f32.mrb[0].mxu0
        %2389 = vmatprep.mubr.bf16.mxu0 0
        %2390 = vmatmul.mubr.bf16.gmra.mrb[0].mxu0 %v2306
        %v2391 = vpop.f32.mrb[0].mxu0
        %v2392 = vadd.f32 0.0, %v2391
        %v2393 = vpop.f32.mrb[0].mxu0
        %v2394 = vpop.f32.mrb[0].mxu0
        %v2395 = vadd.f32 0.0, %v2394
        %v2396 = vpop.f32.mrb[0].mxu0
        %2397 = vmatprep.mubr.bf16.mxu0 0
        %2398 = vmatmul.mubr.bf16.gmra.mrb[0].mxu0 %v2309
        %v2399 = vpop.f32.mrb[0].mxu0
        %v2400 = vadd.f32 0.0, %v2399
        %v2401 = vpop.f32.mrb[0].mxu0
        %v2402 = vpop.f32.mrb[0].mxu0
        %v2403 = vadd.f32 0.0, %v2402
        %v2404 = vpop.f32.mrb[0].mxu0
        %2405 = vmatprep.mubr.bf16.mxu0 0
        %2406 = vmatmul.mubr.bf16.gmra.mrb[0].mxu0 %v2312
        %v2407 = vpop.f32.mrb[0].mxu0
        %v2408 = vadd.f32 0.0, %v2407
        %v2409 = vpop.f32.mrb[0].mxu0
        %v2410 = vpop.f32.mrb[0].mxu0
        %v2411 = vadd.f32 0.0, %v2410
        %v2412 = vpop.f32.mrb[0].mxu0
        %2413 = vdwg.mxu0
        %v2416 = vunpack.c.l.b16 %v2272
        %v2417 = vunpack.c.l.b16 %v2273
        %v2418 = vpack.c.b16 %v2417, %v2416
        %v2420 = vsel %vm738, %v2263, 0
        %v2423 = vsel %vm738, %v2264, 0
        %v2426 = vsel %vm738, %v2265, 0
        %v2429 = vsel %vm738, %v2266, 0
        %v2432 = vsel %vm738, %v2267, 0
        %v2435 = vsel %vm738, %v2268, 0
        %v2438 = vsel %vm738, %v2269, 0
        %v2441 = vsel %vm738, %v2270, 0
        %v2444 = vsel %vm763, %v2418, 0
        %2446 = vmatprep.subr.bf16.mxu0 0
        %2447 = vmatpush1.bf16.msra.mxu0 %v2444
        %2448 = vmatprep.subr.bf16.mxu0 0
        %2449 = vmatpush1.bf16.msra.mxu0 0
        %2450 = vmatprep.subr.bf16.mxu0 0
        %2451 = vmatpush1.bf16.msra.mxu0 0
        %2452 = vmatprep.subr.bf16.mxu0 0
        %2453 = vmatpush1.bf16.msra.mxu0 0
        %2454 = vmatprep.subr.bf16.mxu0 0
        %2455 = vmatpush1.bf16.msra.mxu0 0
        %2456 = vmatprep.subr.bf16.mxu0 0
        %2457 = vmatpush1.bf16.msra.mxu0 0
        %2458 = vmatprep.subr.bf16.mxu0 0
        %2459 = vmatpush1.bf16.msra.mxu0 0
        %2460 = vmatprep.subr.bf16.mxu0 0
        %2461 = vmatpush1.bf16.msra.mxu0 0
        %2462 = vmatprep.subr.bf16.mxu0 0
        %2463 = vmatpush1.bf16.msra.mxu0 0
        %2464 = vmatprep.subr.bf16.mxu0 0
        %2465 = vmatpush1.bf16.msra.mxu0 0
        %2466 = vmatprep.subr.bf16.mxu0 0
        %2467 = vmatpush1.bf16.msra.mxu0 0
        %2468 = vmatprep.subr.bf16.mxu0 0
        %2469 = vmatpush1.bf16.msra.mxu0 0
        %2470 = vmatprep.subr.bf16.mxu0 0
        %2471 = vmatpush1.bf16.msra.mxu0 0
        %2472 = vmatprep.subr.bf16.mxu0 0
        %2473 = vmatpush1.bf16.msra.mxu0 0
        %2474 = vmatprep.subr.bf16.mxu0 0
        %2475 = vmatpush1.bf16.msra.mxu0 0
        %2476 = vmatprep.subr.bf16.mxu0 0
        %2477 = vmatpush1.bf16.msra.mxu0 0
        %2478 = vmatprep.mubr.bf16.mxu0 0
        %2479 = vmatmul.mubr.bf16.gmra.mrb[0].mxu0 %v2420
        %v2480 = vpop.f32.mrb[0].mxu0
        %v2481 = vadd.f32 %v2352, %v2480
        %v2482 = vpop.f32.mrb[0].mxu0
        %v2483 = vpop.f32.mrb[0].mxu0
        %v2484 = vadd.f32 %v2355, %v2483
        %v2485 = vpop.f32.mrb[0].mxu0
        %2486 = vmatprep.mubr.bf16.mxu0 0
        %2487 = vmatmul.mubr.bf16.gmra.mrb[0].mxu0 %v2423
        %v2488 = vpop.f32.mrb[0].mxu0
        %v2489 = vadd.f32 %v2360, %v2488
        %v2490 = vpop.f32.mrb[0].mxu0
        %v2491 = vpop.f32.mrb[0].mxu0
        %v2492 = vadd.f32 %v2363, %v2491
        %v2493 = vpop.f32.mrb[0].mxu0
        %2494 = vmatprep.mubr.bf16.mxu0 0
        %2495 = vmatmul.mubr.bf16.gmra.mrb[0].mxu0 %v2426
        %v2496 = vpop.f32.mrb[0].mxu0
        %v2497 = vadd.f32 %v2368, %v2496
        %v2498 = vpop.f32.mrb[0].mxu0
        %v2499 = vpop.f32.mrb[0].mxu0
        %v2500 = vadd.f32 %v2371, %v2499
        %v2501 = vpop.f32.mrb[0].mxu0
        %2502 = vmatprep.mubr.bf16.mxu0 0
        %2503 = vmatmul.mubr.bf16.gmra.mrb[0].mxu0 %v2429
        %v2504 = vpop.f32.mrb[0].mxu0
        %v2505 = vadd.f32 %v2376, %v2504
        %v2506 = vpop.f32.mrb[0].mxu0
        %v2507 = vpop.f32.mrb[0].mxu0
        %v2508 = vadd.f32 %v2379, %v2507
        %v2509 = vpop.f32.mrb[0].mxu0
        %2510 = vmatprep.mubr.bf16.mxu0 0
        %2511 = vmatmul.mubr.bf16.gmra.mrb[0].mxu0 %v2432
        %v2512 = vpop.f32.mrb[0].mxu0
        %v2513 = vadd.f32 %v2384, %v2512
        %v2514 = vpop.f32.mrb[0].mxu0
        %v2515 = vpop.f32.mrb[0].mxu0
        %v2516 = vadd.f32 %v2387, %v2515
        %v2517 = vpop.f32.mrb[0].mxu0
        %2518 = vmatprep.mubr.bf16.mxu0 0
        %2519 = vmatmul.mubr.bf16.gmra.mrb[0].mxu0 %v2435
        %v2520 = vpop.f32.mrb[0].mxu0
        %v2521 = vadd.f32 %v2392, %v2520
        %v2522 = vpop.f32.mrb[0].mxu0
        %v2523 = vpop.f32.mrb[0].mxu0
        %v2524 = vadd.f32 %v2395, %v2523
        %v2525 = vpop.f32.mrb[0].mxu0
        %2526 = vmatprep.mubr.bf16.mxu0 0
        %2527 = vmatmul.mubr.bf16.gmra.mrb[0].mxu0 %v2438
        %v2528 = vpop.f32.mrb[0].mxu0
        %v2529 = vadd.f32 %v2400, %v2528
        %v2530 = vpop.f32.mrb[0].mxu0
        %v2531 = vpop.f32.mrb[0].mxu0
        %v2532 = vadd.f32 %v2403, %v2531
        %v2533 = vpop.f32.mrb[0].mxu0
        %2534 = vmatprep.mubr.bf16.mxu0 0
        %2535 = vmatmul.mubr.bf16.gmra.mrb[0].mxu0 %v2441
        %v2536 = vpop.f32.mrb[0].mxu0
        %v2537 = vadd.f32 %v2408, %v2536
        %v2538 = vpop.f32.mrb[0].mxu0
        %v2539 = vpop.f32.mrb[0].mxu0
        %v2540 = vadd.f32 %v2411, %v2539
        %v2541 = vpop.f32.mrb[0].mxu0
        %2542 = vdwg.mxu0
        %v2543 = vrot.slane %v2172, 1
        %v2544 = vrot.slane %v2173, 1
        %v2545 = vrot.slane %v2174, 1
        %v2546 = vrot.slane %v2175, 1
        %v2547 = vrot.slane %v2176, 1
        %v2548 = vrot.slane %v2177, 1
        %v2549 = vrot.slane %v2178, 1
        %v2550 = vrot.slane %v2179, 1
        %v2551 = vrot.slane %v2180, 1
        %v2552 = vrot.slane %v2181, 1
        %v2553 = vrot.slane %v2182, 1
        %v2554 = vrot.slane %v2183, 1
        %v2555 = vrot.slane %v2184, 1
        %v2556 = vrot.slane %v2185, 1
        %v2557 = vrot.slane %v2186, 1
        %v2573 = vsel %vm1025, %v2543, %v2543
        %v2574 = vsel %vm1025, %v2544, %v2544
        %v2575 = vsel %vm1025, %v2545, %v2545
        %v2576 = vsel %vm1025, %v2546, %v2546
        %v2577 = vsel %vm1025, %v2547, %v2547
        %v2578 = vsel %vm1025, %v2548, %v2548
        %v2579 = vsel %vm1025, %v2549, %v2549
        %v2580 = vsel %vm1025, %v2550, %v2550
        %v2581 = vsel %vm1025, %v2551, %v2551
        %v2582 = vsel %vm1025, %v2552, %v2552
        %v2583 = vsel %vm1025, %v2553, %v2553
        %v2584 = vsel %vm1025, %v2554, %v2554
        %v2585 = vsel %vm1025, %v2555, %v2555
        %v2586 = vsel %vm1025, %v2556, %v2556
        %v2587 = vsel %vm1025, %v2557, %v2557
        %v2588 = vsel %vm630, %v2573, 0.0
        %v2589 = vsel %vm630, %v2574, 0.0
        %v2590 = vsel %vm630, %v2575, 0.0
        %v2591 = vsel %vm630, %v2576, 0.0
        %v2592 = vsel %vm630, %v2577, 0.0
        %v2593 = vsel %vm630, %v2578, 0.0
        %v2594 = vsel %vm630, %v2579, 0.0
        %v2595 = vsel %vm630, %v2580, 0.0
        %v2596 = vsel %vm630, %v2581, 0.0
        %v2597 = vsel %vm630, %v2582, 0.0
        %v2598 = vsel %vm630, %v2583, 0.0
        %v2599 = vsel %vm630, %v2584, 0.0
        %v2600 = vsel %vm630, %v2585, 0.0
        %v2601 = vsel %vm630, %v2586, 0.0
        %v2602 = vsel %vm630, %v2587, 0.0
        %v2603 = vpack.c.bf16 %v2588, %v1042
        %v2604 = vpack.c.bf16 %v2590, %v2589
        %v2605 = vpack.c.bf16 %v2592, %v2591
        %v2606 = vpack.c.bf16 %v2594, %v2593
        %v2607 = vpack.c.bf16 %v2596, %v2595
        %v2608 = vpack.c.bf16 %v2598, %v2597
        %v2609 = vpack.c.bf16 %v2600, %v2599
        %v2610 = vpack.c.bf16 %v2602, %v2601
        %s2611 = scalar_lea.vmem %s3, 88
        %v2612 = vld [vmem:[%s2611] sm:$0xf]
        %v2613 = vld [vmem:[%s2611 + $0x4] sm:$0x3]
        %v2616 = vunpack.c.l.b16 %v2612
        %v2617 = vunpack.c.l.b16 %v2613
        %v2618 = vpack.c.b16 %v2617, %v2616
        %v2620 = vsel %vm738, %v2603, 0
        %v2623 = vsel %vm738, %v2604, 0
        %v2626 = vsel %vm738, %v2605, 0
        %v2629 = vsel %vm738, %v2606, 0
        %v2632 = vsel %vm738, %v2607, 0
        %v2635 = vsel %vm738, %v2608, 0
        %v2638 = vsel %vm738, %v2609, 0
        %v2641 = vsel %vm738, %v2610, 0
        %v2644 = vsel %vm763, %v2618, 0
        %2646 = vmatprep.subr.bf16.mxu0 0
        %2647 = vmatpush1.bf16.msra.mxu0 %v2644
        %2648 = vmatprep.subr.bf16.mxu0 0
        %2649 = vmatpush1.bf16.msra.mxu0 0
        %2650 = vmatprep.subr.bf16.mxu0 0
        %2651 = vmatpush1.bf16.msra.mxu0 0
        %2652 = vmatprep.subr.bf16.mxu0 0
        %2653 = vmatpush1.bf16.msra.mxu0 0
        %2654 = vmatprep.subr.bf16.mxu0 0
        %2655 = vmatpush1.bf16.msra.mxu0 0
        %2656 = vmatprep.subr.bf16.mxu0 0
        %2657 = vmatpush1.bf16.msra.mxu0 0
        %2658 = vmatprep.subr.bf16.mxu0 0
        %2659 = vmatpush1.bf16.msra.mxu0 0
        %2660 = vmatprep.subr.bf16.mxu0 0
        %2661 = vmatpush1.bf16.msra.mxu0 0
        %2662 = vmatprep.subr.bf16.mxu0 0
        %2663 = vmatpush1.bf16.msra.mxu0 0
        %2664 = vmatprep.subr.bf16.mxu0 0
        %2665 = vmatpush1.bf16.msra.mxu0 0
        %2666 = vmatprep.subr.bf16.mxu0 0
        %2667 = vmatpush1.bf16.msra.mxu0 0
        %2668 = vmatprep.subr.bf16.mxu0 0
        %2669 = vmatpush1.bf16.msra.mxu0 0
        %2670 = vmatprep.subr.bf16.mxu0 0
        %2671 = vmatpush1.bf16.msra.mxu0 0
        %2672 = vmatprep.subr.bf16.mxu0 0
        %2673 = vmatpush1.bf16.msra.mxu0 0
        %2674 = vmatprep.subr.bf16.mxu0 0
        %2675 = vmatpush1.bf16.msra.mxu0 0
        %2676 = vmatprep.subr.bf16.mxu0 0
        %2677 = vmatpush1.bf16.msra.mxu0 0
        %2678 = vmatprep.mubr.bf16.mxu0 0
        %2679 = vmatmul.mubr.bf16.gmra.mrb[0].mxu0 %v2620
        %v2680 = vpop.f32.mrb[0].mxu0
        %v2681 = vadd.f32 0.0, %v2680
        %v2682 = vpop.f32.mrb[0].mxu0
        %v2683 = vpop.f32.mrb[0].mxu0
        %v2684 = vadd.f32 0.0, %v2683
        %v2685 = vpop.f32.mrb[0].mxu0
        %2686 = vmatprep.mubr.bf16.mxu0 0
        %2687 = vmatmul.mubr.bf16.gmra.mrb[0].mxu0 %v2623
        %v2688 = vpop.f32.mrb[0].mxu0
        %v2689 = vadd.f32 0.0, %v2688
        %v2690 = vpop.f32.mrb[0].mxu0
        %v2691 = vpop.f32.mrb[0].mxu0
        %v2692 = vadd.f32 0.0, %v2691
        %v2693 = vpop.f32.mrb[0].mxu0
        %2694 = vmatprep.mubr.bf16.mxu0 0
        %2695 = vmatmul.mubr.bf16.gmra.mrb[0].mxu0 %v2626
        %v2696 = vpop.f32.mrb[0].mxu0
        %v2697 = vadd.f32 0.0, %v2696
        %v2698 = vpop.f32.mrb[0].mxu0
        %v2699 = vpop.f32.mrb[0].mxu0
        %v2700 = vadd.f32 0.0, %v2699
        %v2701 = vpop.f32.mrb[0].mxu0
        %2702 = vmatprep.mubr.bf16.mxu0 0
        %2703 = vmatmul.mubr.bf16.gmra.mrb[0].mxu0 %v2629
        %v2704 = vpop.f32.mrb[0].mxu0
        %v2705 = vadd.f32 0.0, %v2704
        %v2706 = vpop.f32.mrb[0].mxu0
        %v2707 = vpop.f32.mrb[0].mxu0
        %v2708 = vadd.f32 0.0, %v2707
        %v2709 = vpop.f32.mrb[0].mxu0
        %2710 = vmatprep.mubr.bf16.mxu0 0
        %2711 = vmatmul.mubr.bf16.gmra.mrb[0].mxu0 %v2632
        %v2712 = vpop.f32.mrb[0].mxu0
        %v2713 = vadd.f32 0.0, %v2712
        %v2714 = vpop.f32.mrb[0].mxu0
        %v2715 = vpop.f32.mrb[0].mxu0
        %v2716 = vadd.f32 0.0, %v2715
        %v2717 = vpop.f32.mrb[0].mxu0
        %2718 = vmatprep.mubr.bf16.mxu0 0
        %2719 = vmatmul.mubr.bf16.gmra.mrb[0].mxu0 %v2635
        %v2720 = vpop.f32.mrb[0].mxu0
        %v2721 = vadd.f32 0.0, %v2720
        %v2722 = vpop.f32.mrb[0].mxu0
        %v2723 = vpop.f32.mrb[0].mxu0
        %v2724 = vadd.f32 0.0, %v2723
        %v2725 = vpop.f32.mrb[0].mxu0
        %2726 = vmatprep.mubr.bf16.mxu0 0
        %2727 = vmatmul.mubr.bf16.gmra.mrb[0].mxu0 %v2638
        %v2728 = vpop.f32.mrb[0].mxu0
        %v2729 = vadd.f32 0.0, %v2728
        %v2730 = vpop.f32.mrb[0].mxu0
        %v2731 = vpop.f32.mrb[0].mxu0
        %v2732 = vadd.f32 0.0, %v2731
        %v2733 = vpop.f32.mrb[0].mxu0
        %2734 = vmatprep.mubr.bf16.mxu0 0
        %2735 = vmatmul.mubr.bf16.gmra.mrb[0].mxu0 %v2641
        %v2736 = vpop.f32.mrb[0].mxu0
        %v2737 = vadd.f32 0.0, %v2736
        %v2738 = vpop.f32.mrb[0].mxu0
        %v2739 = vpop.f32.mrb[0].mxu0
        %v2740 = vadd.f32 0.0, %v2739
        %v2741 = vpop.f32.mrb[0].mxu0
        %2742 = vdwg.mxu0
        %v2743 = vadd.f32 %v2481, %v2681
        %v2744 = vadd.f32 %v2484, %v2684
        %v2745 = vadd.f32 %v2489, %v2689
        %v2746 = vadd.f32 %v2492, %v2692
        %v2747 = vadd.f32 %v2497, %v2697
        %v2748 = vadd.f32 %v2500, %v2700
        %v2749 = vadd.f32 %v2505, %v2705
        %v2750 = vadd.f32 %v2508, %v2708
        %v2751 = vadd.f32 %v2513, %v2713
        %v2752 = vadd.f32 %v2516, %v2716
        %v2753 = vadd.f32 %v2521, %v2721
        %v2754 = vadd.f32 %v2524, %v2724
        %v2755 = vadd.f32 %v2529, %v2729
        %v2756 = vadd.f32 %v2532, %v2732
        %v2757 = vadd.f32 %v2537, %v2737
        %v2758 = vadd.f32 %v2540, %v2740
        %v2760 = vrot.slane %v2187, 7
        %v2762 = vsel %vm679, %v2760, %v2760
        %v2763 = vsel %vm629, %v2762, 0.0
        %v2764 = vpack.c.bf16 %v2249, %v2248
        %v2765 = vpack.c.bf16 %v2251, %v2250
        %v2766 = vpack.c.bf16 %v2253, %v2252
        %v2767 = vpack.c.bf16 %v2255, %v2254
        %v2768 = vpack.c.bf16 %v2257, %v2256
        %v2769 = vpack.c.bf16 %v2259, %v2258
        %v2770 = vpack.c.bf16 %v2261, %v2260
        %v2771 = vpack.c.bf16 %v2763, %v2262
        %s2772 = scalar_lea.vmem %s3, 96
        %v2773 = vld [vmem:[%s2772] sm:$0xf]
        %v2774 = vld [vmem:[%s2772 + $0x4] sm:$0x3]
        %v2777 = vunpack.c.l.b16 %v2773
        %v2778 = vunpack.c.l.b16 %v2774
        %v2779 = vpack.c.b16 %v2778, %v2777
        %v2781 = vsel %vm738, %v2764, 0
        %v2784 = vsel %vm738, %v2765, 0
        %v2787 = vsel %vm738, %v2766, 0
        %v2790 = vsel %vm738, %v2767, 0
        %v2793 = vsel %vm738, %v2768, 0
        %v2796 = vsel %vm738, %v2769, 0
        %v2799 = vsel %vm738, %v2770, 0
        %v2802 = vsel %vm738, %v2771, 0
        %v2805 = vsel %vm763, %v2779, 0
        %2807 = vmatprep.subr.bf16.mxu0 0
        %2808 = vmatpush1.bf16.msra.mxu0 %v2805
        %2809 = vmatprep.subr.bf16.mxu0 0
        %2810 = vmatpush1.bf16.msra.mxu0 0
        %2811 = vmatprep.subr.bf16.mxu0 0
        %2812 = vmatpush1.bf16.msra.mxu0 0
        %2813 = vmatprep.subr.bf16.mxu0 0
        %2814 = vmatpush1.bf16.msra.mxu0 0
        %2815 = vmatprep.subr.bf16.mxu0 0
        %2816 = vmatpush1.bf16.msra.mxu0 0
        %2817 = vmatprep.subr.bf16.mxu0 0
        %2818 = vmatpush1.bf16.msra.mxu0 0
        %2819 = vmatprep.subr.bf16.mxu0 0
        %2820 = vmatpush1.bf16.msra.mxu0 0
        %2821 = vmatprep.subr.bf16.mxu0 0
        %2822 = vmatpush1.bf16.msra.mxu0 0
        %2823 = vmatprep.subr.bf16.mxu0 0
        %2824 = vmatpush1.bf16.msra.mxu0 0
        %2825 = vmatprep.subr.bf16.mxu0 0
        %2826 = vmatpush1.bf16.msra.mxu0 0
        %2827 = vmatprep.subr.bf16.mxu0 0
        %2828 = vmatpush1.bf16.msra.mxu0 0
        %2829 = vmatprep.subr.bf16.mxu0 0
        %2830 = vmatpush1.bf16.msra.mxu0 0
        %2831 = vmatprep.subr.bf16.mxu0 0
        %2832 = vmatpush1.bf16.msra.mxu0 0
        %2833 = vmatprep.subr.bf16.mxu0 0
        %2834 = vmatpush1.bf16.msra.mxu0 0
        %2835 = vmatprep.subr.bf16.mxu0 0
        %2836 = vmatpush1.bf16.msra.mxu0 0
        %2837 = vmatprep.subr.bf16.mxu0 0
        %2838 = vmatpush1.bf16.msra.mxu0 0
        %2839 = vmatprep.mubr.bf16.mxu0 0
        %2840 = vmatmul.mubr.bf16.gmra.mrb[0].mxu0 %v2781
        %v2841 = vpop.f32.mrb[0].mxu0
        %v2842 = vadd.f32 0.0, %v2841
        %v2843 = vpop.f32.mrb[0].mxu0
        %v2844 = vpop.f32.mrb[0].mxu0
        %v2845 = vadd.f32 0.0, %v2844
        %v2846 = vpop.f32.mrb[0].mxu0
        %2847 = vmatprep.mubr.bf16.mxu0 0
        %2848 = vmatmul.mubr.bf16.gmra.mrb[0].mxu0 %v2784
        %v2849 = vpop.f32.mrb[0].mxu0
        %v2850 = vadd.f32 0.0, %v2849
        %v2851 = vpop.f32.mrb[0].mxu0
        %v2852 = vpop.f32.mrb[0].mxu0
        %v2853 = vadd.f32 0.0, %v2852
        %v2854 = vpop.f32.mrb[0].mxu0
        %2855 = vmatprep.mubr.bf16.mxu0 0
        %2856 = vmatmul.mubr.bf16.gmra.mrb[0].mxu0 %v2787
        %v2857 = vpop.f32.mrb[0].mxu0
        %v2858 = vadd.f32 0.0, %v2857
        %v2859 = vpop.f32.mrb[0].mxu0
        %v2860 = vpop.f32.mrb[0].mxu0
        %v2861 = vadd.f32 0.0, %v2860
        %v2862 = vpop.f32.mrb[0].mxu0
        %2863 = vmatprep.mubr.bf16.mxu0 0
        %2864 = vmatmul.mubr.bf16.gmra.mrb[0].mxu0 %v2790
        %v2865 = vpop.f32.mrb[0].mxu0
        %v2866 = vadd.f32 0.0, %v2865
        %v2867 = vpop.f32.mrb[0].mxu0
        %v2868 = vpop.f32.mrb[0].mxu0
        %v2869 = vadd.f32 0.0, %v2868
        %v2870 = vpop.f32.mrb[0].mxu0
        %2871 = vmatprep.mubr.bf16.mxu0 0
        %2872 = vmatmul.mubr.bf16.gmra.mrb[0].mxu0 %v2793
        %v2873 = vpop.f32.mrb[0].mxu0
        %v2874 = vadd.f32 0.0, %v2873
        %v2875 = vpop.f32.mrb[0].mxu0
        %v2876 = vpop.f32.mrb[0].mxu0
        %v2877 = vadd.f32 0.0, %v2876
        %v2878 = vpop.f32.mrb[0].mxu0
        %2879 = vmatprep.mubr.bf16.mxu0 0
        %2880 = vmatmul.mubr.bf16.gmra.mrb[0].mxu0 %v2796
        %v2881 = vpop.f32.mrb[0].mxu0
        %v2882 = vadd.f32 0.0, %v2881
        %v2883 = vpop.f32.mrb[0].mxu0
        %v2884 = vpop.f32.mrb[0].mxu0
        %v2885 = vadd.f32 0.0, %v2884
        %v2886 = vpop.f32.mrb[0].mxu0
        %2887 = vmatprep.mubr.bf16.mxu0 0
        %2888 = vmatmul.mubr.bf16.gmra.mrb[0].mxu0 %v2799
        %v2889 = vpop.f32.mrb[0].mxu0
        %v2890 = vadd.f32 0.0, %v2889
        %v2891 = vpop.f32.mrb[0].mxu0
        %v2892 = vpop.f32.mrb[0].mxu0
        %v2893 = vadd.f32 0.0, %v2892
        %v2894 = vpop.f32.mrb[0].mxu0
        %2895 = vmatprep.mubr.bf16.mxu0 0
        %2896 = vmatmul.mubr.bf16.gmra.mrb[0].mxu0 %v2802
        %v2897 = vpop.f32.mrb[0].mxu0
        %v2898 = vadd.f32 0.0, %v2897
        %v2899 = vpop.f32.mrb[0].mxu0
        %v2900 = vpop.f32.mrb[0].mxu0
        %v2901 = vadd.f32 0.0, %v2900
        %v2902 = vpop.f32.mrb[0].mxu0
        %2903 = vdwg.mxu0
        %v2904 = vadd.f32 %v2743, %v2842
        %v2905 = vadd.f32 %v2744, %v2845
        %v2906 = vadd.f32 %v2745, %v2850
        %v2907 = vadd.f32 %v2746, %v2853
        %v2908 = vadd.f32 %v2747, %v2858
        %v2909 = vadd.f32 %v2748, %v2861
        %v2910 = vadd.f32 %v2749, %v2866
        %v2911 = vadd.f32 %v2750, %v2869
        %v2912 = vadd.f32 %v2751, %v2874
        %v2913 = vadd.f32 %v2752, %v2877
        %v2914 = vadd.f32 %v2753, %v2882
        %v2915 = vadd.f32 %v2754, %v2885
        %v2916 = vadd.f32 %v2755, %v2890
        %v2917 = vadd.f32 %v2756, %v2893
        %v2918 = vadd.f32 %v2757, %v2898
        %v2919 = vadd.f32 %v2758, %v2901
        %v2920 = vpack.c.bf16 %v2173, %v2172
        %v2921 = vpack.c.bf16 %v2175, %v2174
        %v2922 = vpack.c.bf16 %v2177, %v2176
        %v2923 = vpack.c.bf16 %v2179, %v2178
        %v2924 = vpack.c.bf16 %v2181, %v2180
        %v2925 = vpack.c.bf16 %v2183, %v2182
        %v2926 = vpack.c.bf16 %v2185, %v2184
        %v2927 = vpack.c.bf16 %v2187, %v2186
        %s2928 = scalar_lea.vmem %s3, 104
        %v2929 = vld [vmem:[%s2928] sm:$0xf]
        %v2930 = vld [vmem:[%s2928 + $0x4] sm:$0x3]
        %v2933 = vunpack.c.l.b16 %v2929
        %v2934 = vunpack.c.l.b16 %v2930
        %v2935 = vpack.c.b16 %v2934, %v2933
        %v2937 = vsel %vm738, %v2920, 0
        %v2940 = vsel %vm738, %v2921, 0
        %v2943 = vsel %vm738, %v2922, 0
        %v2946 = vsel %vm738, %v2923, 0
        %v2949 = vsel %vm738, %v2924, 0
        %v2952 = vsel %vm738, %v2925, 0
        %v2955 = vsel %vm738, %v2926, 0
        %v2958 = vsel %vm738, %v2927, 0
        %v2961 = vsel %vm763, %v2935, 0
        %2963 = vmatprep.subr.bf16.mxu0 0
        %2964 = vmatpush1.bf16.msra.mxu0 %v2961
        %2965 = vmatprep.subr.bf16.mxu0 0
        %2966 = vmatpush1.bf16.msra.mxu0 0
        %2967 = vmatprep.subr.bf16.mxu0 0
        %2968 = vmatpush1.bf16.msra.mxu0 0
        %2969 = vmatprep.subr.bf16.mxu0 0
        %2970 = vmatpush1.bf16.msra.mxu0 0
        %2971 = vmatprep.subr.bf16.mxu0 0
        %2972 = vmatpush1.bf16.msra.mxu0 0
        %2973 = vmatprep.subr.bf16.mxu0 0
        %2974 = vmatpush1.bf16.msra.mxu0 0
        %2975 = vmatprep.subr.bf16.mxu0 0
        %2976 = vmatpush1.bf16.msra.mxu0 0
        %2977 = vmatprep.subr.bf16.mxu0 0
        %2978 = vmatpush1.bf16.msra.mxu0 0
        %2979 = vmatprep.subr.bf16.mxu0 0
        %2980 = vmatpush1.bf16.msra.mxu0 0
        %2981 = vmatprep.subr.bf16.mxu0 0
        %2982 = vmatpush1.bf16.msra.mxu0 0
        %2983 = vmatprep.subr.bf16.mxu0 0
        %2984 = vmatpush1.bf16.msra.mxu0 0
        %2985 = vmatprep.subr.bf16.mxu0 0
        %2986 = vmatpush1.bf16.msra.mxu0 0
        %2987 = vmatprep.subr.bf16.mxu0 0
        %2988 = vmatpush1.bf16.msra.mxu0 0
        %2989 = vmatprep.subr.bf16.mxu0 0
        %2990 = vmatpush1.bf16.msra.mxu0 0
        %2991 = vmatprep.subr.bf16.mxu0 0
        %2992 = vmatpush1.bf16.msra.mxu0 0
        %2993 = vmatprep.subr.bf16.mxu0 0
        %2994 = vmatpush1.bf16.msra.mxu0 0
        %2995 = vmatprep.mubr.bf16.mxu0 0
        %2996 = vmatmul.mubr.bf16.gmra.mrb[0].mxu0 %v2937
        %v2997 = vpop.f32.mrb[0].mxu0
        %v2998 = vadd.f32 0.0, %v2997
        %v2999 = vpop.f32.mrb[0].mxu0
        %v3000 = vpop.f32.mrb[0].mxu0
        %v3001 = vadd.f32 0.0, %v3000
        %v3002 = vpop.f32.mrb[0].mxu0
        %3003 = vmatprep.mubr.bf16.mxu0 0
        %3004 = vmatmul.mubr.bf16.gmra.mrb[0].mxu0 %v2940
        %v3005 = vpop.f32.mrb[0].mxu0
        %v3006 = vadd.f32 0.0, %v3005
        %v3007 = vpop.f32.mrb[0].mxu0
        %v3008 = vpop.f32.mrb[0].mxu0
        %v3009 = vadd.f32 0.0, %v3008
        %v3010 = vpop.f32.mrb[0].mxu0
        %3011 = vmatprep.mubr.bf16.mxu0 0
        %3012 = vmatmul.mubr.bf16.gmra.mrb[0].mxu0 %v2943
        %v3013 = vpop.f32.mrb[0].mxu0
        %v3014 = vadd.f32 0.0, %v3013
        %v3015 = vpop.f32.mrb[0].mxu0
        %v3016 = vpop.f32.mrb[0].mxu0
        %v3017 = vadd.f32 0.0, %v3016
        %v3018 = vpop.f32.mrb[0].mxu0
        %3019 = vmatprep.mubr.bf16.mxu0 0
        %3020 = vmatmul.mubr.bf16.gmra.mrb[0].mxu0 %v2946
        %v3021 = vpop.f32.mrb[0].mxu0
        %v3022 = vadd.f32 0.0, %v3021
        %v3023 = vpop.f32.mrb[0].mxu0
        %v3024 = vpop.f32.mrb[0].mxu0
        %v3025 = vadd.f32 0.0, %v3024
        %v3026 = vpop.f32.mrb[0].mxu0
        %3027 = vmatprep.mubr.bf16.mxu0 0
        %3028 = vmatmul.mubr.bf16.gmra.mrb[0].mxu0 %v2949
        %v3029 = vpop.f32.mrb[0].mxu0
        %v3030 = vadd.f32 0.0, %v3029
        %v3031 = vpop.f32.mrb[0].mxu0
        %v3032 = vpop.f32.mrb[0].mxu0
        %v3033 = vadd.f32 0.0, %v3032
        %v3034 = vpop.f32.mrb[0].mxu0
        %3035 = vmatprep.mubr.bf16.mxu0 0
        %3036 = vmatmul.mubr.bf16.gmra.mrb[0].mxu0 %v2952
        %v3037 = vpop.f32.mrb[0].mxu0
        %v3038 = vadd.f32 0.0, %v3037
        %v3039 = vpop.f32.mrb[0].mxu0
        %v3040 = vpop.f32.mrb[0].mxu0
        %v3041 = vadd.f32 0.0, %v3040
        %v3042 = vpop.f32.mrb[0].mxu0
        %3043 = vmatprep.mubr.bf16.mxu0 0
        %3044 = vmatmul.mubr.bf16.gmra.mrb[0].mxu0 %v2955
        %v3045 = vpop.f32.mrb[0].mxu0
        %v3046 = vadd.f32 0.0, %v3045
        %v3047 = vpop.f32.mrb[0].mxu0
        %v3048 = vpop.f32.mrb[0].mxu0
        %v3049 = vadd.f32 0.0, %v3048
        %v3050 = vpop.f32.mrb[0].mxu0
        %3051 = vmatprep.mubr.bf16.mxu0 0
        %3052 = vmatmul.mubr.bf16.gmra.mrb[0].mxu0 %v2958
        %v3053 = vpop.f32.mrb[0].mxu0
        %v3054 = vadd.f32 0.0, %v3053
        %v3055 = vpop.f32.mrb[0].mxu0
        %v3056 = vpop.f32.mrb[0].mxu0
        %v3057 = vadd.f32 0.0, %v3056
        %v3058 = vpop.f32.mrb[0].mxu0
        %3059 = vdwg.mxu0
        %v3060 = vadd.f32 %v2904, %v2998
        %v3061 = vadd.f32 %v2905, %v3001
        %v3062 = vadd.f32 %v2906, %v3006
        %v3063 = vadd.f32 %v2907, %v3009
        %v3064 = vadd.f32 %v2908, %v3014
        %v3065 = vadd.f32 %v2909, %v3017
        %v3066 = vadd.f32 %v2910, %v3022
        %v3067 = vadd.f32 %v2911, %v3025
        %v3068 = vadd.f32 %v2912, %v3030
        %v3069 = vadd.f32 %v2913, %v3033
        %v3070 = vadd.f32 %v2914, %v3038
        %v3071 = vadd.f32 %v2915, %v3041
        %v3072 = vadd.f32 %v2916, %v3046
        %v3073 = vadd.f32 %v2917, %v3049
        %v3074 = vadd.f32 %v2918, %v3054
        %v3075 = vadd.f32 %v2919, %v3057
        %v3076 = vrot.slane %v2187, 1
        %v3078 = vsel %vm1025, %v3076, %v3076
        %v3079 = vsel %vm630, %v3078, 0.0
        %v3080 = vpack.c.bf16 %v2589, %v2588
        %v3081 = vpack.c.bf16 %v2591, %v2590
        %v3082 = vpack.c.bf16 %v2593, %v2592
        %v3083 = vpack.c.bf16 %v2595, %v2594
        %v3084 = vpack.c.bf16 %v2597, %v2596
        %v3085 = vpack.c.bf16 %v2599, %v2598
        %v3086 = vpack.c.bf16 %v2601, %v2600
        %v3087 = vpack.c.bf16 %v3079, %v2602
        %s3088 = scalar_lea.vmem %s3, 112
        %v3089 = vld [vmem:[%s3088] sm:$0xf]
        %v3090 = vld [vmem:[%s3088 + $0x4] sm:$0x3]
        %v3093 = vunpack.c.l.b16 %v3089
        %v3094 = vunpack.c.l.b16 %v3090
        %v3095 = vpack.c.b16 %v3094, %v3093
        %v3097 = vsel %vm738, %v3080, 0
        %v3100 = vsel %vm738, %v3081, 0
        %v3103 = vsel %vm738, %v3082, 0
        %v3106 = vsel %vm738, %v3083, 0
        %v3109 = vsel %vm738, %v3084, 0
        %v3112 = vsel %vm738, %v3085, 0
        %v3115 = vsel %vm738, %v3086, 0
        %v3118 = vsel %vm738, %v3087, 0
        %v3121 = vsel %vm763, %v3095, 0
        %3123 = vmatprep.subr.bf16.mxu0 0
        %3124 = vmatpush1.bf16.msra.mxu0 %v3121
        %3125 = vmatprep.subr.bf16.mxu0 0
        %3126 = vmatpush1.bf16.msra.mxu0 0
        %3127 = vmatprep.subr.bf16.mxu0 0
        %3128 = vmatpush1.bf16.msra.mxu0 0
        %3129 = vmatprep.subr.bf16.mxu0 0
        %3130 = vmatpush1.bf16.msra.mxu0 0
        %3131 = vmatprep.subr.bf16.mxu0 0
        %3132 = vmatpush1.bf16.msra.mxu0 0
        %3133 = vmatprep.subr.bf16.mxu0 0
        %3134 = vmatpush1.bf16.msra.mxu0 0
        %3135 = vmatprep.subr.bf16.mxu0 0
        %3136 = vmatpush1.bf16.msra.mxu0 0
        %3137 = vmatprep.subr.bf16.mxu0 0
        %3138 = vmatpush1.bf16.msra.mxu0 0
        %3139 = vmatprep.subr.bf16.mxu0 0
        %3140 = vmatpush1.bf16.msra.mxu0 0
        %3141 = vmatprep.subr.bf16.mxu0 0
        %3142 = vmatpush1.bf16.msra.mxu0 0
        %3143 = vmatprep.subr.bf16.mxu0 0
        %3144 = vmatpush1.bf16.msra.mxu0 0
        %3145 = vmatprep.subr.bf16.mxu0 0
        %3146 = vmatpush1.bf16.msra.mxu0 0
        %3147 = vmatprep.subr.bf16.mxu0 0
        %3148 = vmatpush1.bf16.msra.mxu0 0
        %3149 = vmatprep.subr.bf16.mxu0 0
        %3150 = vmatpush1.bf16.msra.mxu0 0
        %3151 = vmatprep.subr.bf16.mxu0 0
        %3152 = vmatpush1.bf16.msra.mxu0 0
        %3153 = vmatprep.subr.bf16.mxu0 0
        %3154 = vmatpush1.bf16.msra.mxu0 0
        %3155 = vmatprep.mubr.bf16.mxu0 0
        %3156 = vmatmul.mubr.bf16.gmra.mrb[0].mxu0 %v3097
        %v3157 = vpop.f32.mrb[0].mxu0
        %v3158 = vadd.f32 0.0, %v3157
        %v3159 = vpop.f32.mrb[0].mxu0
        %v3160 = vpop.f32.mrb[0].mxu0
        %v3161 = vadd.f32 0.0, %v3160
        %v3162 = vpop.f32.mrb[0].mxu0
        %3163 = vmatprep.mubr.bf16.mxu0 0
        %3164 = vmatmul.mubr.bf16.gmra.mrb[0].mxu0 %v3100
        %v3165 = vpop.f32.mrb[0].mxu0
        %v3166 = vadd.f32 0.0, %v3165
        %v3167 = vpop.f32.mrb[0].mxu0
        %v3168 = vpop.f32.mrb[0].mxu0
        %v3169 = vadd.f32 0.0, %v3168
        %v3170 = vpop.f32.mrb[0].mxu0
        %3171 = vmatprep.mubr.bf16.mxu0 0
        %3172 = vmatmul.mubr.bf16.gmra.mrb[0].mxu0 %v3103
        %v3173 = vpop.f32.mrb[0].mxu0
        %v3174 = vadd.f32 0.0, %v3173
        %v3175 = vpop.f32.mrb[0].mxu0
        %v3176 = vpop.f32.mrb[0].mxu0
        %v3177 = vadd.f32 0.0, %v3176
        %v3178 = vpop.f32.mrb[0].mxu0
        %3179 = vmatprep.mubr.bf16.mxu0 0
        %3180 = vmatmul.mubr.bf16.gmra.mrb[0].mxu0 %v3106
        %v3181 = vpop.f32.mrb[0].mxu0
        %v3182 = vadd.f32 0.0, %v3181
        %v3183 = vpop.f32.mrb[0].mxu0
        %v3184 = vpop.f32.mrb[0].mxu0
        %v3185 = vadd.f32 0.0, %v3184
        %v3186 = vpop.f32.mrb[0].mxu0
        %3187 = vmatprep.mubr.bf16.mxu0 0
        %3188 = vmatmul.mubr.bf16.gmra.mrb[0].mxu0 %v3109
        %v3189 = vpop.f32.mrb[0].mxu0
        %v3190 = vadd.f32 0.0, %v3189
        %v3191 = vpop.f32.mrb[0].mxu0
        %v3192 = vpop.f32.mrb[0].mxu0
        %v3193 = vadd.f32 0.0, %v3192
        %v3194 = vpop.f32.mrb[0].mxu0
        %3195 = vmatprep.mubr.bf16.mxu0 0
        %3196 = vmatmul.mubr.bf16.gmra.mrb[0].mxu0 %v3112
        %v3197 = vpop.f32.mrb[0].mxu0
        %v3198 = vadd.f32 0.0, %v3197
        %v3199 = vpop.f32.mrb[0].mxu0
        %v3200 = vpop.f32.mrb[0].mxu0
        %v3201 = vadd.f32 0.0, %v3200
        %v3202 = vpop.f32.mrb[0].mxu0
        %3203 = vmatprep.mubr.bf16.mxu0 0
        %3204 = vmatmul.mubr.bf16.gmra.mrb[0].mxu0 %v3115
        %v3205 = vpop.f32.mrb[0].mxu0
        %v3206 = vadd.f32 0.0, %v3205
        %v3207 = vpop.f32.mrb[0].mxu0
        %v3208 = vpop.f32.mrb[0].mxu0
        %v3209 = vadd.f32 0.0, %v3208
        %v3210 = vpop.f32.mrb[0].mxu0
        %3211 = vmatprep.mubr.bf16.mxu0 0
        %3212 = vmatmul.mubr.bf16.gmra.mrb[0].mxu0 %v3118
        %v3213 = vpop.f32.mrb[0].mxu0
        %v3214 = vadd.f32 0.0, %v3213
        %v3215 = vpop.f32.mrb[0].mxu0
        %v3216 = vpop.f32.mrb[0].mxu0
        %v3217 = vadd.f32 0.0, %v3216
        %v3218 = vpop.f32.mrb[0].mxu0
        %3219 = vdwg.mxu0
        %v3220 = vadd.f32 %v3060, %v3158
        %v3221 = vadd.f32 %v3061, %v3161
        %v3222 = vadd.f32 %v3062, %v3166
        %v3223 = vadd.f32 %v3063, %v3169
        %v3224 = vadd.f32 %v3064, %v3174
        %v3225 = vadd.f32 %v3065, %v3177
        %v3226 = vadd.f32 %v3066, %v3182
        %v3227 = vadd.f32 %v3067, %v3185
        %v3228 = vadd.f32 %v3068, %v3190
        %v3229 = vadd.f32 %v3069, %v3193
        %v3230 = vadd.f32 %v3070, %v3198
        %v3231 = vadd.f32 %v3071, %v3201
        %v3232 = vadd.f32 %v3072, %v3206
        %v3233 = vadd.f32 %v3073, %v3209
        %v3234 = vadd.f32 %v3074, %v3214
        %v3235 = vadd.f32 %v3075, %v3217
        %v3236 = vpack.c.bf16 %v696, %v2763
        %s3237 = scalar_lea.vmem %s3, 120
        %v3238 = vld [vmem:[%s3237] sm:$0xf]
        %v3239 = vld [vmem:[%s3237 + $0x4] sm:$0x3]
        %v3242 = vunpack.c.l.b16 %v3238
        %v3243 = vunpack.c.l.b16 %v3239
        %v3244 = vpack.c.b16 %v3243, %v3242
        %v3246 = vsel %vm738, %v3236, 0
        %v3249 = vsel %vm763, %v3244, 0
        %3251 = vmatprep.subr.bf16.mxu0 0
        %3252 = vmatpush1.bf16.msra.mxu0 %v3249
        %3253 = vmatprep.subr.bf16.mxu0 0
        %3254 = vmatpush1.bf16.msra.mxu0 0
        %3255 = vmatprep.subr.bf16.mxu0 0
        %3256 = vmatpush1.bf16.msra.mxu0 0
        %3257 = vmatprep.subr.bf16.mxu0 0
        %3258 = vmatpush1.bf16.msra.mxu0 0
        %3259 = vmatprep.subr.bf16.mxu0 0
        %3260 = vmatpush1.bf16.msra.mxu0 0
        %3261 = vmatprep.subr.bf16.mxu0 0
        %3262 = vmatpush1.bf16.msra.mxu0 0
        %3263 = vmatprep.subr.bf16.mxu0 0
        %3264 = vmatpush1.bf16.msra.mxu0 0
        %3265 = vmatprep.subr.bf16.mxu0 0
        %3266 = vmatpush1.bf16.msra.mxu0 0
        %3267 = vmatprep.subr.bf16.mxu0 0
        %3268 = vmatpush1.bf16.msra.mxu0 0
        %3269 = vmatprep.subr.bf16.mxu0 0
        %3270 = vmatpush1.bf16.msra.mxu0 0
        %3271 = vmatprep.subr.bf16.mxu0 0
        %3272 = vmatpush1.bf16.msra.mxu0 0
        %3273 = vmatprep.subr.bf16.mxu0 0
        %3274 = vmatpush1.bf16.msra.mxu0 0
        %3275 = vmatprep.subr.bf16.mxu0 0
        %3276 = vmatpush1.bf16.msra.mxu0 0
        %3277 = vmatprep.subr.bf16.mxu0 0
        %3278 = vmatpush1.bf16.msra.mxu0 0
        %3279 = vmatprep.subr.bf16.mxu0 0
        %3280 = vmatpush1.bf16.msra.mxu0 0
        %3281 = vmatprep.subr.bf16.mxu0 0
        %3282 = vmatpush1.bf16.msra.mxu0 0
        %3283 = vmatprep.mubr.bf16.mxu0 0
        %3284 = vmatmul.mubr.bf16.gmra.mrb[0].mxu0 %v2423
        %v3285 = vpop.f32.mrb[0].mxu0
        %v3286 = vadd.f32 0.0, %v3285
        %v3287 = vpop.f32.mrb[0].mxu0
        %v3288 = vpop.f32.mrb[0].mxu0
        %v3289 = vadd.f32 0.0, %v3288
        %v3290 = vpop.f32.mrb[0].mxu0
        %3291 = vmatprep.mubr.bf16.mxu0 0
        %3292 = vmatmul.mubr.bf16.gmra.mrb[0].mxu0 %v2426
        %v3293 = vpop.f32.mrb[0].mxu0
        %v3294 = vadd.f32 0.0, %v3293
        %v3295 = vpop.f32.mrb[0].mxu0
        %v3296 = vpop.f32.mrb[0].mxu0
        %v3297 = vadd.f32 0.0, %v3296
        %v3298 = vpop.f32.mrb[0].mxu0
        %3299 = vmatprep.mubr.bf16.mxu0 0
        %3300 = vmatmul.mubr.bf16.gmra.mrb[0].mxu0 %v2429
        %v3301 = vpop.f32.mrb[0].mxu0
        %v3302 = vadd.f32 0.0, %v3301
        %v3303 = vpop.f32.mrb[0].mxu0
        %v3304 = vpop.f32.mrb[0].mxu0
        %v3305 = vadd.f32 0.0, %v3304
        %v3306 = vpop.f32.mrb[0].mxu0
        %3307 = vmatprep.mubr.bf16.mxu0 0
        %3308 = vmatmul.mubr.bf16.gmra.mrb[0].mxu0 %v2432
        %v3309 = vpop.f32.mrb[0].mxu0
        %v3310 = vadd.f32 0.0, %v3309
        %v3311 = vpop.f32.mrb[0].mxu0
        %v3312 = vpop.f32.mrb[0].mxu0
        %v3313 = vadd.f32 0.0, %v3312
        %v3314 = vpop.f32.mrb[0].mxu0
        %3315 = vmatprep.mubr.bf16.mxu0 0
        %3316 = vmatmul.mubr.bf16.gmra.mrb[0].mxu0 %v2435
        %v3317 = vpop.f32.mrb[0].mxu0
        %v3318 = vadd.f32 0.0, %v3317
        %v3319 = vpop.f32.mrb[0].mxu0
        %v3320 = vpop.f32.mrb[0].mxu0
        %v3321 = vadd.f32 0.0, %v3320
        %v3322 = vpop.f32.mrb[0].mxu0
        %3323 = vmatprep.mubr.bf16.mxu0 0
        %3324 = vmatmul.mubr.bf16.gmra.mrb[0].mxu0 %v2438
        %v3325 = vpop.f32.mrb[0].mxu0
        %v3326 = vadd.f32 0.0, %v3325
        %v3327 = vpop.f32.mrb[0].mxu0
        %v3328 = vpop.f32.mrb[0].mxu0
        %v3329 = vadd.f32 0.0, %v3328
        %v3330 = vpop.f32.mrb[0].mxu0
        %3331 = vmatprep.mubr.bf16.mxu0 0
        %3332 = vmatmul.mubr.bf16.gmra.mrb[0].mxu0 %v2441
        %v3333 = vpop.f32.mrb[0].mxu0
        %v3334 = vadd.f32 0.0, %v3333
        %v3335 = vpop.f32.mrb[0].mxu0
        %v3336 = vpop.f32.mrb[0].mxu0
        %v3337 = vadd.f32 0.0, %v3336
        %v3338 = vpop.f32.mrb[0].mxu0
        %3339 = vmatprep.mubr.bf16.mxu0 0
        %3340 = vmatmul.mubr.bf16.gmra.mrb[0].mxu0 %v3246
        %v3341 = vpop.f32.mrb[0].mxu0
        %v3342 = vadd.f32 0.0, %v3341
        %v3343 = vpop.f32.mrb[0].mxu0
        %v3344 = vpop.f32.mrb[0].mxu0
        %v3345 = vadd.f32 0.0, %v3344
        %v3346 = vpop.f32.mrb[0].mxu0
        %3347 = vdwg.mxu0
        %v3348 = vadd.f32 %v3220, %v3286
        %v3349 = vadd.f32 %v3221, %v3289
        %v3350 = vadd.f32 %v3222, %v3294
        %v3351 = vadd.f32 %v3223, %v3297
        %v3352 = vadd.f32 %v3224, %v3302
        %v3353 = vadd.f32 %v3225, %v3305
        %v3354 = vadd.f32 %v3226, %v3310
        %v3355 = vadd.f32 %v3227, %v3313
        %v3356 = vadd.f32 %v3228, %v3318
        %v3357 = vadd.f32 %v3229, %v3321
        %v3358 = vadd.f32 %v3230, %v3326
        %v3359 = vadd.f32 %v3231, %v3329
        %v3360 = vadd.f32 %v3232, %v3334
        %v3361 = vadd.f32 %v3233, %v3337
        %v3362 = vadd.f32 %v3234, %v3342
        %v3363 = vadd.f32 %v3235, %v3345
        %v3364 = vpack.c.bf16 0.0, %v2187
        %s3365 = scalar_lea.vmem %s3, 128
        %v3366 = vld [vmem:[%s3365] sm:$0xf]
        %v3367 = vld [vmem:[%s3365 + $0x4] sm:$0x3]
        %v3370 = vunpack.c.l.b16 %v3366
        %v3371 = vunpack.c.l.b16 %v3367
        %v3372 = vpack.c.b16 %v3371, %v3370
        %v3374 = vsel %vm738, %v3364, 0
        %v3377 = vsel %vm763, %v3372, 0
        %3379 = vmatprep.subr.bf16.mxu0 0
        %3380 = vmatpush1.bf16.msra.mxu0 %v3377
        %3381 = vmatprep.subr.bf16.mxu0 0
        %3382 = vmatpush1.bf16.msra.mxu0 0
        %3383 = vmatprep.subr.bf16.mxu0 0
        %3384 = vmatpush1.bf16.msra.mxu0 0
        %3385 = vmatprep.subr.bf16.mxu0 0
        %3386 = vmatpush1.bf16.msra.mxu0 0
        %3387 = vmatprep.subr.bf16.mxu0 0
        %3388 = vmatpush1.bf16.msra.mxu0 0
        %3389 = vmatprep.subr.bf16.mxu0 0
        %3390 = vmatpush1.bf16.msra.mxu0 0
        %3391 = vmatprep.subr.bf16.mxu0 0
        %3392 = vmatpush1.bf16.msra.mxu0 0
        %3393 = vmatprep.subr.bf16.mxu0 0
        %3394 = vmatpush1.bf16.msra.mxu0 0
        %3395 = vmatprep.subr.bf16.mxu0 0
        %3396 = vmatpush1.bf16.msra.mxu0 0
        %3397 = vmatprep.subr.bf16.mxu0 0
        %3398 = vmatpush1.bf16.msra.mxu0 0
        %3399 = vmatprep.subr.bf16.mxu0 0
        %3400 = vmatpush1.bf16.msra.mxu0 0
        %3401 = vmatprep.subr.bf16.mxu0 0
        %3402 = vmatpush1.bf16.msra.mxu0 0
        %3403 = vmatprep.subr.bf16.mxu0 0
        %3404 = vmatpush1.bf16.msra.mxu0 0
        %3405 = vmatprep.subr.bf16.mxu0 0
        %3406 = vmatpush1.bf16.msra.mxu0 0
        %3407 = vmatprep.subr.bf16.mxu0 0
        %3408 = vmatpush1.bf16.msra.mxu0 0
        %3409 = vmatprep.subr.bf16.mxu0 0
        %3410 = vmatpush1.bf16.msra.mxu0 0
        %3411 = vmatprep.mubr.bf16.mxu0 0
        %3412 = vmatmul.mubr.bf16.gmra.mrb[0].mxu0 %v2294
        %v3413 = vpop.f32.mrb[0].mxu0
        %v3414 = vadd.f32 0.0, %v3413
        %v3415 = vpop.f32.mrb[0].mxu0
        %v3416 = vpop.f32.mrb[0].mxu0
        %v3417 = vadd.f32 0.0, %v3416
        %v3418 = vpop.f32.mrb[0].mxu0
        %3419 = vmatprep.mubr.bf16.mxu0 0
        %3420 = vmatmul.mubr.bf16.gmra.mrb[0].mxu0 %v2297
        %v3421 = vpop.f32.mrb[0].mxu0
        %v3422 = vadd.f32 0.0, %v3421
        %v3423 = vpop.f32.mrb[0].mxu0
        %v3424 = vpop.f32.mrb[0].mxu0
        %v3425 = vadd.f32 0.0, %v3424
        %v3426 = vpop.f32.mrb[0].mxu0
        %3427 = vmatprep.mubr.bf16.mxu0 0
        %3428 = vmatmul.mubr.bf16.gmra.mrb[0].mxu0 %v2300
        %v3429 = vpop.f32.mrb[0].mxu0
        %v3430 = vadd.f32 0.0, %v3429
        %v3431 = vpop.f32.mrb[0].mxu0
        %v3432 = vpop.f32.mrb[0].mxu0
        %v3433 = vadd.f32 0.0, %v3432
        %v3434 = vpop.f32.mrb[0].mxu0
        %3435 = vmatprep.mubr.bf16.mxu0 0
        %3436 = vmatmul.mubr.bf16.gmra.mrb[0].mxu0 %v2303
        %v3437 = vpop.f32.mrb[0].mxu0
        %v3438 = vadd.f32 0.0, %v3437
        %v3439 = vpop.f32.mrb[0].mxu0
        %v3440 = vpop.f32.mrb[0].mxu0
        %v3441 = vadd.f32 0.0, %v3440
        %v3442 = vpop.f32.mrb[0].mxu0
        %3443 = vmatprep.mubr.bf16.mxu0 0
        %3444 = vmatmul.mubr.bf16.gmra.mrb[0].mxu0 %v2306
        %v3445 = vpop.f32.mrb[0].mxu0
        %v3446 = vadd.f32 0.0, %v3445
        %v3447 = vpop.f32.mrb[0].mxu0
        %v3448 = vpop.f32.mrb[0].mxu0
        %v3449 = vadd.f32 0.0, %v3448
        %v3450 = vpop.f32.mrb[0].mxu0
        %3451 = vmatprep.mubr.bf16.mxu0 0
        %3452 = vmatmul.mubr.bf16.gmra.mrb[0].mxu0 %v2309
        %v3453 = vpop.f32.mrb[0].mxu0
        %v3454 = vadd.f32 0.0, %v3453
        %v3455 = vpop.f32.mrb[0].mxu0
        %v3456 = vpop.f32.mrb[0].mxu0
        %v3457 = vadd.f32 0.0, %v3456
        %v3458 = vpop.f32.mrb[0].mxu0
        %3459 = vmatprep.mubr.bf16.mxu0 0
        %3460 = vmatmul.mubr.bf16.gmra.mrb[0].mxu0 %v2312
        %v3461 = vpop.f32.mrb[0].mxu0
        %v3462 = vadd.f32 0.0, %v3461
        %v3463 = vpop.f32.mrb[0].mxu0
        %v3464 = vpop.f32.mrb[0].mxu0
        %v3465 = vadd.f32 0.0, %v3464
        %v3466 = vpop.f32.mrb[0].mxu0
        %3467 = vmatprep.mubr.bf16.mxu0 0
        %3468 = vmatmul.mubr.bf16.gmra.mrb[0].mxu0 %v3374
        %v3469 = vpop.f32.mrb[0].mxu0
        %v3470 = vadd.f32 0.0, %v3469
        %v3471 = vpop.f32.mrb[0].mxu0
        %v3472 = vpop.f32.mrb[0].mxu0
        %v3473 = vadd.f32 0.0, %v3472
        %v3474 = vpop.f32.mrb[0].mxu0
        %3475 = vdwg.mxu0
        %v3476 = vadd.f32 %v3348, %v3414
        %v3477 = vadd.f32 %v3349, %v3417
        %v3478 = vadd.f32 %v3350, %v3422
        %v3479 = vadd.f32 %v3351, %v3425
        %v3480 = vadd.f32 %v3352, %v3430
        %v3481 = vadd.f32 %v3353, %v3433
        %v3482 = vadd.f32 %v3354, %v3438
        %v3483 = vadd.f32 %v3355, %v3441
        %v3484 = vadd.f32 %v3356, %v3446
        %v3485 = vadd.f32 %v3357, %v3449
        %v3486 = vadd.f32 %v3358, %v3454
        %v3487 = vadd.f32 %v3359, %v3457
        %v3488 = vadd.f32 %v3360, %v3462
        %v3489 = vadd.f32 %v3361, %v3465
        %v3490 = vadd.f32 %v3362, %v3470
        %v3491 = vadd.f32 %v3363, %v3473
        %v3492 = vpack.c.bf16 %v1042, %v3079
        %s3493 = scalar_lea.vmem %s3, 136
        %v3494 = vld [vmem:[%s3493] sm:$0xf]
        %v3495 = vld [vmem:[%s3493 + $0x4] sm:$0x3]
        %v3498 = vunpack.c.l.b16 %v3494
        %v3499 = vunpack.c.l.b16 %v3495
        %v3500 = vpack.c.b16 %v3499, %v3498
        %v3502 = vsel %vm738, %v3492, 0
        %v3505 = vsel %vm763, %v3500, 0
        %3507 = vmatprep.subr.bf16.mxu0 0
        %3508 = vmatpush1.bf16.msra.mxu0 %v3505
        %3509 = vmatprep.subr.bf16.mxu0 0
        %3510 = vmatpush1.bf16.msra.mxu0 0
        %3511 = vmatprep.subr.bf16.mxu0 0
        %3512 = vmatpush1.bf16.msra.mxu0 0
        %3513 = vmatprep.subr.bf16.mxu0 0
        %3514 = vmatpush1.bf16.msra.mxu0 0
        %3515 = vmatprep.subr.bf16.mxu0 0
        %3516 = vmatpush1.bf16.msra.mxu0 0
        %3517 = vmatprep.subr.bf16.mxu0 0
        %3518 = vmatpush1.bf16.msra.mxu0 0
        %3519 = vmatprep.subr.bf16.mxu0 0
        %3520 = vmatpush1.bf16.msra.mxu0 0
        %3521 = vmatprep.subr.bf16.mxu0 0
        %3522 = vmatpush1.bf16.msra.mxu0 0
        %3523 = vmatprep.subr.bf16.mxu0 0
        %3524 = vmatpush1.bf16.msra.mxu0 0
        %3525 = vmatprep.subr.bf16.mxu0 0
        %3526 = vmatpush1.bf16.msra.mxu0 0
        %3527 = vmatprep.subr.bf16.mxu0 0
        %3528 = vmatpush1.bf16.msra.mxu0 0
        %3529 = vmatprep.subr.bf16.mxu0 0
        %3530 = vmatpush1.bf16.msra.mxu0 0
        %3531 = vmatprep.subr.bf16.mxu0 0
        %3532 = vmatpush1.bf16.msra.mxu0 0
        %3533 = vmatprep.subr.bf16.mxu0 0
        %3534 = vmatpush1.bf16.msra.mxu0 0
        %3535 = vmatprep.subr.bf16.mxu0 0
        %3536 = vmatpush1.bf16.msra.mxu0 0
        %3537 = vmatprep.subr.bf16.mxu0 0
        %3538 = vmatpush1.bf16.msra.mxu0 0
        %3539 = vmatprep.mubr.bf16.mxu0 0
        %3540 = vmatmul.mubr.bf16.gmra.mrb[0].mxu0 %v2623
        %v3541 = vpop.f32.mrb[0].mxu0
        %v3542 = vadd.f32 0.0, %v3541
        %v3543 = vpop.f32.mrb[0].mxu0
        %v3544 = vpop.f32.mrb[0].mxu0
        %v3545 = vadd.f32 0.0, %v3544
        %v3546 = vpop.f32.mrb[0].mxu0
        %3547 = vmatprep.mubr.bf16.mxu0 0
        %3548 = vmatmul.mubr.bf16.gmra.mrb[0].mxu0 %v2626
        %v3549 = vpop.f32.mrb[0].mxu0
        %v3550 = vadd.f32 0.0, %v3549
        %v3551 = vpop.f32.mrb[0].mxu0
        %v3552 = vpop.f32.mrb[0].mxu0
        %v3553 = vadd.f32 0.0, %v3552
        %v3554 = vpop.f32.mrb[0].mxu0
        %3555 = vmatprep.mubr.bf16.mxu0 0
        %3556 = vmatmul.mubr.bf16.gmra.mrb[0].mxu0 %v2629
        %v3557 = vpop.f32.mrb[0].mxu0
        %v3558 = vadd.f32 0.0, %v3557
        %v3559 = vpop.f32.mrb[0].mxu0
        %v3560 = vpop.f32.mrb[0].mxu0
        %v3561 = vadd.f32 0.0, %v3560
        %v3562 = vpop.f32.mrb[0].mxu0
        %3563 = vmatprep.mubr.bf16.mxu0 0
        %3564 = vmatmul.mubr.bf16.gmra.mrb[0].mxu0 %v2632
        %v3565 = vpop.f32.mrb[0].mxu0
        %v3566 = vadd.f32 0.0, %v3565
        %v3567 = vpop.f32.mrb[0].mxu0
        %v3568 = vpop.f32.mrb[0].mxu0
        %v3569 = vadd.f32 0.0, %v3568
        %v3570 = vpop.f32.mrb[0].mxu0
        %3571 = vmatprep.mubr.bf16.mxu0 0
        %3572 = vmatmul.mubr.bf16.gmra.mrb[0].mxu0 %v2635
        %v3573 = vpop.f32.mrb[0].mxu0
        %v3574 = vadd.f32 0.0, %v3573
        %v3575 = vpop.f32.mrb[0].mxu0
        %v3576 = vpop.f32.mrb[0].mxu0
        %v3577 = vadd.f32 0.0, %v3576
        %v3578 = vpop.f32.mrb[0].mxu0
        %3579 = vmatprep.mubr.bf16.mxu0 0
        %3580 = vmatmul.mubr.bf16.gmra.mrb[0].mxu0 %v2638
        %v3581 = vpop.f32.mrb[0].mxu0
        %v3582 = vadd.f32 0.0, %v3581
        %v3583 = vpop.f32.mrb[0].mxu0
        %v3584 = vpop.f32.mrb[0].mxu0
        %v3585 = vadd.f32 0.0, %v3584
        %v3586 = vpop.f32.mrb[0].mxu0
        %3587 = vmatprep.mubr.bf16.mxu0 0
        %3588 = vmatmul.mubr.bf16.gmra.mrb[0].mxu0 %v2641
        %v3589 = vpop.f32.mrb[0].mxu0
        %v3590 = vadd.f32 0.0, %v3589
        %v3591 = vpop.f32.mrb[0].mxu0
        %v3592 = vpop.f32.mrb[0].mxu0
        %v3593 = vadd.f32 0.0, %v3592
        %v3594 = vpop.f32.mrb[0].mxu0
        %3595 = vmatprep.mubr.bf16.mxu0 0
        %3596 = vmatmul.mubr.bf16.gmra.mrb[0].mxu0 %v3502
        %v3597 = vpop.f32.mrb[0].mxu0
        %v3598 = vadd.f32 0.0, %v3597
        %v3599 = vpop.f32.mrb[0].mxu0
        %v3600 = vpop.f32.mrb[0].mxu0
        %v3601 = vadd.f32 0.0, %v3600
        %v3602 = vpop.f32.mrb[0].mxu0
        %3603 = vdwg.mxu0
        %v3604 = vadd.f32 %v3476, %v3542
        %v3605 = vadd.f32 %v3477, %v3545
        %v3606 = vadd.f32 %v3478, %v3550
        %v3607 = vadd.f32 %v3479, %v3553
        %v3608 = vadd.f32 %v3480, %v3558
        %v3609 = vadd.f32 %v3481, %v3561
        %v3610 = vadd.f32 %v3482, %v3566
        %v3611 = vadd.f32 %v3483, %v3569
        %v3612 = vadd.f32 %v3484, %v3574
        %v3613 = vadd.f32 %v3485, %v3577
        %v3614 = vadd.f32 %v3486, %v3582
        %v3615 = vadd.f32 %v3487, %v3585
        %v3616 = vadd.f32 %v3488, %v3590
        %v3617 = vadd.f32 %v3489, %v3593
        %v3618 = vadd.f32 %v3490, %v3598
        %v3619 = vadd.f32 %v3491, %v3601
        %s3620 = scalar_lea.vmem %s4, 1
        %v3621 = vld [vmem:[%s3620] sm:$0x1]
        %v3623 = vlaneseq
        %v3624 = vshrl.u32 %v3623, 7
        %v3625 = vsub.s32 0, %v3624
        %v3626 = vrot.slane %v3621, %v3625
        %v3628 = vadd.f32 %v3604, %v3626
        %v3629 = vadd.f32 %v3605, %v3626
        %v3630 = vadd.f32 %v3606, %v3626
        %v3631 = vadd.f32 %v3607, %v3626
        %v3632 = vadd.f32 %v3608, %v3626
        %v3633 = vadd.f32 %v3609, %v3626
        %v3634 = vadd.f32 %v3610, %v3626
        %v3635 = vadd.f32 %v3611, %v3626
        %v3636 = vadd.f32 %v3612, %v3626
        %v3637 = vadd.f32 %v3613, %v3626
        %v3638 = vadd.f32 %v3614, %v3626
        %v3639 = vadd.f32 %v3615, %v3626
        %v3640 = vadd.f32 %v3616, %v3626
        %v3641 = vadd.f32 %v3617, %v3626
        %v3642 = vadd.f32 %v3618, %v3626
        %v3643 = vadd.f32 %v3619, %v3626
        %v3644 = vmax.f32 %v3628, 0.0
        %v3645 = vmax.f32 %v3629, 0.0
        %v3646 = vmax.f32 %v3630, 0.0
        %v3647 = vmax.f32 %v3631, 0.0
        %v3648 = vmax.f32 %v3632, 0.0
        %v3649 = vmax.f32 %v3633, 0.0
        %v3650 = vmax.f32 %v3634, 0.0
        %v3651 = vmax.f32 %v3635, 0.0
        %v3652 = vmax.f32 %v3636, 0.0
        %v3653 = vmax.f32 %v3637, 0.0
        %v3654 = vmax.f32 %v3638, 0.0
        %v3655 = vmax.f32 %v3639, 0.0
        %v3656 = vmax.f32 %v3640, 0.0
        %v3657 = vmax.f32 %v3641, 0.0
        %v3658 = vmax.f32 %v3642, 0.0
        %v3659 = vmax.f32 %v3643, 0.0
        %v3660 = vpack.c.bf16 %v3645, %v3644
        %v3661 = vpack.c.bf16 %v3647, %v3646
        %v3662 = vpack.c.bf16 %v3649, %v3648
        %v3663 = vpack.c.bf16 %v3651, %v3650
        %v3664 = vpack.c.bf16 %v3653, %v3652
        %v3665 = vpack.c.bf16 %v3655, %v3654
        %v3666 = vpack.c.bf16 %v3657, %v3656
        %v3667 = vpack.c.bf16 %v3659, %v3658
        %s3668 = scalar_lea.vmem %s5, 8
        %v3669 = vld [vmem:[%s3668] sm:$0xf]
        %v3670 = vld [vmem:[%s3668 + $0x4] sm:$0x3]
        %v3673 = vunpack.c.l.b16 %v3669
        %v3674 = vunpack.c.l.b16 %v3670
        %v3675 = vpack.c.b16 %v3674, %v3673
        %v3677 = vsel %vm738, %v3660, 0
        %v3680 = vsel %vm738, %v3661, 0
        %v3683 = vsel %vm738, %v3662, 0
        %v3686 = vsel %vm738, %v3663, 0
        %v3689 = vsel %vm738, %v3664, 0
        %v3692 = vsel %vm738, %v3665, 0
        %v3695 = vsel %vm738, %v3666, 0
        %v3698 = vsel %vm738, %v3667, 0
        %v3701 = vsel %vm763, %v3675, 0
        %3703 = vmatprep.subr.bf16.mxu0 0
        %3704 = vmatpush1.bf16.msra.mxu0 %v3701
        %3705 = vmatprep.subr.bf16.mxu0 0
        %3706 = vmatpush1.bf16.msra.mxu0 0
        %3707 = vmatprep.subr.bf16.mxu0 0
        %3708 = vmatpush1.bf16.msra.mxu0 0
        %3709 = vmatprep.subr.bf16.mxu0 0
        %3710 = vmatpush1.bf16.msra.mxu0 0
        %3711 = vmatprep.subr.bf16.mxu0 0
        %3712 = vmatpush1.bf16.msra.mxu0 0
        %3713 = vmatprep.subr.bf16.mxu0 0
        %3714 = vmatpush1.bf16.msra.mxu0 0
        %3715 = vmatprep.subr.bf16.mxu0 0
        %3716 = vmatpush1.bf16.msra.mxu0 0
        %3717 = vmatprep.subr.bf16.mxu0 0
        %3718 = vmatpush1.bf16.msra.mxu0 0
        %3719 = vmatprep.subr.bf16.mxu0 0
        %3720 = vmatpush1.bf16.msra.mxu0 0
        %3721 = vmatprep.subr.bf16.mxu0 0
        %3722 = vmatpush1.bf16.msra.mxu0 0
        %3723 = vmatprep.subr.bf16.mxu0 0
        %3724 = vmatpush1.bf16.msra.mxu0 0
        %3725 = vmatprep.subr.bf16.mxu0 0
        %3726 = vmatpush1.bf16.msra.mxu0 0
        %3727 = vmatprep.subr.bf16.mxu0 0
        %3728 = vmatpush1.bf16.msra.mxu0 0
        %3729 = vmatprep.subr.bf16.mxu0 0
        %3730 = vmatpush1.bf16.msra.mxu0 0
        %3731 = vmatprep.subr.bf16.mxu0 0
        %3732 = vmatpush1.bf16.msra.mxu0 0
        %3733 = vmatprep.subr.bf16.mxu0 0
        %3734 = vmatpush1.bf16.msra.mxu0 0
        %3735 = vmatprep.mubr.bf16.mxu0 0
        %3736 = vmatmul.mubr.bf16.gmra.mrb[0].mxu0 %v3677
        %v3737 = vpop.f32.mrb[0].mxu0
        %v3738 = vadd.f32 0.0, %v3737
        %v3739 = vpop.f32.mrb[0].mxu0
        %v3740 = vpop.f32.mrb[0].mxu0
        %v3741 = vadd.f32 0.0, %v3740
        %v3742 = vpop.f32.mrb[0].mxu0
        %3743 = vmatprep.mubr.bf16.mxu0 0
        %3744 = vmatmul.mubr.bf16.gmra.mrb[0].mxu0 %v3680
        %v3745 = vpop.f32.mrb[0].mxu0
        %v3746 = vadd.f32 0.0, %v3745
        %v3747 = vpop.f32.mrb[0].mxu0
        %v3748 = vpop.f32.mrb[0].mxu0
        %v3749 = vadd.f32 0.0, %v3748
        %v3750 = vpop.f32.mrb[0].mxu0
        %3751 = vmatprep.mubr.bf16.mxu0 0
        %3752 = vmatmul.mubr.bf16.gmra.mrb[0].mxu0 %v3683
        %v3753 = vpop.f32.mrb[0].mxu0
        %v3754 = vadd.f32 0.0, %v3753
        %v3755 = vpop.f32.mrb[0].mxu0
        %v3756 = vpop.f32.mrb[0].mxu0
        %v3757 = vadd.f32 0.0, %v3756
        %v3758 = vpop.f32.mrb[0].mxu0
        %3759 = vmatprep.mubr.bf16.mxu0 0
        %3760 = vmatmul.mubr.bf16.gmra.mrb[0].mxu0 %v3686
        %v3761 = vpop.f32.mrb[0].mxu0
        %v3762 = vadd.f32 0.0, %v3761
        %v3763 = vpop.f32.mrb[0].mxu0
        %v3764 = vpop.f32.mrb[0].mxu0
        %v3765 = vadd.f32 0.0, %v3764
        %v3766 = vpop.f32.mrb[0].mxu0
        %3767 = vmatprep.mubr.bf16.mxu0 0
        %3768 = vmatmul.mubr.bf16.gmra.mrb[0].mxu0 %v3689
        %v3769 = vpop.f32.mrb[0].mxu0
        %v3770 = vadd.f32 0.0, %v3769
        %v3771 = vpop.f32.mrb[0].mxu0
        %v3772 = vpop.f32.mrb[0].mxu0
        %v3773 = vadd.f32 0.0, %v3772
        %v3774 = vpop.f32.mrb[0].mxu0
        %3775 = vmatprep.mubr.bf16.mxu0 0
        %3776 = vmatmul.mubr.bf16.gmra.mrb[0].mxu0 %v3692
        %v3777 = vpop.f32.mrb[0].mxu0
        %v3778 = vadd.f32 0.0, %v3777
        %v3779 = vpop.f32.mrb[0].mxu0
        %v3780 = vpop.f32.mrb[0].mxu0
        %v3781 = vadd.f32 0.0, %v3780
        %v3782 = vpop.f32.mrb[0].mxu0
        %3783 = vmatprep.mubr.bf16.mxu0 0
        %3784 = vmatmul.mubr.bf16.gmra.mrb[0].mxu0 %v3695
        %v3785 = vpop.f32.mrb[0].mxu0
        %v3786 = vadd.f32 0.0, %v3785
        %v3787 = vpop.f32.mrb[0].mxu0
        %v3788 = vpop.f32.mrb[0].mxu0
        %v3789 = vadd.f32 0.0, %v3788
        %v3790 = vpop.f32.mrb[0].mxu0
        %3791 = vmatprep.mubr.bf16.mxu0 0
        %3792 = vmatmul.mubr.bf16.gmra.mrb[0].mxu0 %v3698
        %v3793 = vpop.f32.mrb[0].mxu0
        %v3794 = vadd.f32 0.0, %v3793
        %v3795 = vpop.f32.mrb[0].mxu0
        %v3796 = vpop.f32.mrb[0].mxu0
        %v3797 = vadd.f32 0.0, %v3796
        %v3798 = vpop.f32.mrb[0].mxu0
        %3799 = vdwg.mxu0
        %v3802 = vunpack.c.l.b16 %v2122
        %v3803 = vunpack.c.l.b16 %v2123
        %v3804 = vpack.c.b16 %v3803, %v3802
        %v3806 = vsel %vm738, %v2114, 0
        %v3809 = vsel %vm738, %v2115, 0
        %v3812 = vsel %vm738, %v2116, 0
        %v3815 = vsel %vm738, %v2117, 0
        %v3818 = vsel %vm738, %v2118, 0
        %v3821 = vsel %vm738, %v2119, 0
        %v3824 = vsel %vm738, %v2120, 0
        %v3827 = vsel %vm738, %v2121, 0
        %v3830 = vsel %vm763, %v3804, 0
        %3832 = vmatprep.subr.bf16.mxu0 0
        %3833 = vmatpush1.bf16.msra.mxu0 %v3830
        %3834 = vmatprep.subr.bf16.mxu0 0
        %3835 = vmatpush1.bf16.msra.mxu0 0
        %3836 = vmatprep.subr.bf16.mxu0 0
        %3837 = vmatpush1.bf16.msra.mxu0 0
        %3838 = vmatprep.subr.bf16.mxu0 0
        %3839 = vmatpush1.bf16.msra.mxu0 0
        %3840 = vmatprep.subr.bf16.mxu0 0
        %3841 = vmatpush1.bf16.msra.mxu0 0
        %3842 = vmatprep.subr.bf16.mxu0 0
        %3843 = vmatpush1.bf16.msra.mxu0 0
        %3844 = vmatprep.subr.bf16.mxu0 0
        %3845 = vmatpush1.bf16.msra.mxu0 0
        %3846 = vmatprep.subr.bf16.mxu0 0
        %3847 = vmatpush1.bf16.msra.mxu0 0
        %3848 = vmatprep.subr.bf16.mxu0 0
        %3849 = vmatpush1.bf16.msra.mxu0 0
        %3850 = vmatprep.subr.bf16.mxu0 0
        %3851 = vmatpush1.bf16.msra.mxu0 0
        %3852 = vmatprep.subr.bf16.mxu0 0
        %3853 = vmatpush1.bf16.msra.mxu0 0
        %3854 = vmatprep.subr.bf16.mxu0 0
        %3855 = vmatpush1.bf16.msra.mxu0 0
        %3856 = vmatprep.subr.bf16.mxu0 0
        %3857 = vmatpush1.bf16.msra.mxu0 0
        %3858 = vmatprep.subr.bf16.mxu0 0
        %3859 = vmatpush1.bf16.msra.mxu0 0
        %3860 = vmatprep.subr.bf16.mxu0 0
        %3861 = vmatpush1.bf16.msra.mxu0 0
        %3862 = vmatprep.subr.bf16.mxu0 0
        %3863 = vmatpush1.bf16.msra.mxu0 0
        %3864 = vmatprep.mubr.bf16.mxu0 0
        %3865 = vmatmul.mubr.bf16.gmra.mrb[0].mxu0 %v3806
        %v3866 = vpop.f32.mrb[0].mxu0
        %v3867 = vadd.f32 %v3738, %v3866
        %v3868 = vpop.f32.mrb[0].mxu0
        %v3869 = vpop.f32.mrb[0].mxu0
        %v3870 = vadd.f32 %v3741, %v3869
        %v3871 = vpop.f32.mrb[0].mxu0
        %3872 = vmatprep.mubr.bf16.mxu0 0
        %3873 = vmatmul.mubr.bf16.gmra.mrb[0].mxu0 %v3809
        %v3874 = vpop.f32.mrb[0].mxu0
        %v3875 = vadd.f32 %v3746, %v3874
        %v3876 = vpop.f32.mrb[0].mxu0
        %v3877 = vpop.f32.mrb[0].mxu0
        %v3878 = vadd.f32 %v3749, %v3877
        %v3879 = vpop.f32.mrb[0].mxu0
        %3880 = vmatprep.mubr.bf16.mxu0 0
        %3881 = vmatmul.mubr.bf16.gmra.mrb[0].mxu0 %v3812
        %v3882 = vpop.f32.mrb[0].mxu0
        %v3883 = vadd.f32 %v3754, %v3882
        %v3884 = vpop.f32.mrb[0].mxu0
        %v3885 = vpop.f32.mrb[0].mxu0
        %v3886 = vadd.f32 %v3757, %v3885
        %v3887 = vpop.f32.mrb[0].mxu0
        %3888 = vmatprep.mubr.bf16.mxu0 0
        %3889 = vmatmul.mubr.bf16.gmra.mrb[0].mxu0 %v3815
        %v3890 = vpop.f32.mrb[0].mxu0
        %v3891 = vadd.f32 %v3762, %v3890
        %v3892 = vpop.f32.mrb[0].mxu0
        %v3893 = vpop.f32.mrb[0].mxu0
        %v3894 = vadd.f32 %v3765, %v3893
        %v3895 = vpop.f32.mrb[0].mxu0
        %3896 = vmatprep.mubr.bf16.mxu0 0
        %3897 = vmatmul.mubr.bf16.gmra.mrb[0].mxu0 %v3818
        %v3898 = vpop.f32.mrb[0].mxu0
        %v3899 = vadd.f32 %v3770, %v3898
        %v3900 = vpop.f32.mrb[0].mxu0
        %v3901 = vpop.f32.mrb[0].mxu0
        %v3902 = vadd.f32 %v3773, %v3901
        %v3903 = vpop.f32.mrb[0].mxu0
        %3904 = vmatprep.mubr.bf16.mxu0 0
        %3905 = vmatmul.mubr.bf16.gmra.mrb[0].mxu0 %v3821
        %v3906 = vpop.f32.mrb[0].mxu0
        %v3907 = vadd.f32 %v3778, %v3906
        %v3908 = vpop.f32.mrb[0].mxu0
        %v3909 = vpop.f32.mrb[0].mxu0
        %v3910 = vadd.f32 %v3781, %v3909
        %v3911 = vpop.f32.mrb[0].mxu0
        %3912 = vmatprep.mubr.bf16.mxu0 0
        %3913 = vmatmul.mubr.bf16.gmra.mrb[0].mxu0 %v3824
        %v3914 = vpop.f32.mrb[0].mxu0
        %v3915 = vadd.f32 %v3786, %v3914
        %v3916 = vpop.f32.mrb[0].mxu0
        %v3917 = vpop.f32.mrb[0].mxu0
        %v3918 = vadd.f32 %v3789, %v3917
        %v3919 = vpop.f32.mrb[0].mxu0
        %3920 = vmatprep.mubr.bf16.mxu0 0
        %3921 = vmatmul.mubr.bf16.gmra.mrb[0].mxu0 %v3827
        %v3922 = vpop.f32.mrb[0].mxu0
        %v3923 = vadd.f32 %v3794, %v3922
        %v3924 = vpop.f32.mrb[0].mxu0
        %v3925 = vpop.f32.mrb[0].mxu0
        %v3926 = vadd.f32 %v3797, %v3925
        %v3927 = vpop.f32.mrb[0].mxu0
        %3928 = vdwg.mxu0
        %3929 = vrot.lane.b32.xlu0 %v611, 104
        %v3930 = vpop.permute.xlu0 %3929
        %3931 = vrot.lane.b32.xlu0 %v612, 104
        %v3932 = vpop.permute.xlu0 %3931
        %3933 = vrot.lane.b32.xlu0 %v613, 104
        %v3934 = vpop.permute.xlu0 %3933
        %3935 = vrot.lane.b32.xlu0 %v614, 104
        %v3936 = vpop.permute.xlu0 %3935
        %3937 = vrot.lane.b32.xlu0 %v615, 104
        %v3938 = vpop.permute.xlu0 %3937
        %3939 = vrot.lane.b32.xlu0 %v616, 104
        %v3940 = vpop.permute.xlu0 %3939
        %3941 = vrot.lane.b32.xlu0 %v617, 104
        %v3942 = vpop.permute.xlu0 %3941
        %3943 = vrot.lane.b32.xlu0 %v618, 104
        %v3944 = vpop.permute.xlu0 %3943
        %3945 = vrot.lane.b32.xlu0 %v619, 104
        %v3946 = vpop.permute.xlu0 %3945
        %3947 = vrot.lane.b32.xlu0 %v620, 104
        %v3948 = vpop.permute.xlu0 %3947
        %3949 = vrot.lane.b32.xlu0 %v621, 104
        %v3950 = vpop.permute.xlu0 %3949
        %3951 = vrot.lane.b32.xlu0 %v622, 104
        %v3952 = vpop.permute.xlu0 %3951
        %3953 = vrot.lane.b32.xlu0 %v623, 104
        %v3954 = vpop.permute.xlu0 %3953
        %3955 = vrot.lane.b32.xlu0 %v624, 104
        %v3956 = vpop.permute.xlu0 %3955
        %3957 = vrot.lane.b32.xlu0 %v625, 104
        %v3958 = vpop.permute.xlu0 %3957
        %3959 = vrot.lane.b32.xlu0 %v626, 104
        %v3960 = vpop.permute.xlu0 %3959
        %v3977 = vadd.f32 %v3644, %v3930
        %v3978 = vadd.f32 %v3645, %v3932
        %v3979 = vadd.f32 %v3646, %v3934
        %v3980 = vadd.f32 %v3647, %v3936
        %v3981 = vadd.f32 %v3648, %v3938
        %v3982 = vadd.f32 %v3649, %v3940
        %v3983 = vadd.f32 %v3650, %v3942
        %v3984 = vadd.f32 %v3651, %v3944
        %v3985 = vadd.f32 %v3652, %v3946
        %v3986 = vadd.f32 %v3653, %v3948
        %v3987 = vadd.f32 %v3654, %v3950
        %v3988 = vadd.f32 %v3655, %v3952
        %v3989 = vadd.f32 %v3656, %v3954
        %v3990 = vadd.f32 %v3657, %v3956
        %v3991 = vadd.f32 %v3658, %v3958
        %v3992 = vadd.f32 %v3659, %v3960
        %v4008 = vrot.slane %v3977, 7
        %v4009 = vrot.slane %v3978, 7
        %v4010 = vrot.slane %v3979, 7
        %v4011 = vrot.slane %v3980, 7
        %v4012 = vrot.slane %v3981, 7
        %v4013 = vrot.slane %v3982, 7
        %v4014 = vrot.slane %v3983, 7
        %v4015 = vrot.slane %v3984, 7
        %v4016 = vrot.slane %v3985, 7
        %v4017 = vrot.slane %v3986, 7
        %v4018 = vrot.slane %v3987, 7
        %v4019 = vrot.slane %v3988, 7
        %v4020 = vrot.slane %v3989, 7
        %v4021 = vrot.slane %v3990, 7
        %v4022 = vrot.slane %v3991, 7
        %v4038 = vsel %vm679, %v4008, %v4008
        %v4039 = vsel %vm679, %v4009, %v4009
        %v4040 = vsel %vm679, %v4010, %v4010
        %v4041 = vsel %vm679, %v4011, %v4011
        %v4042 = vsel %vm679, %v4012, %v4012
        %v4043 = vsel %vm679, %v4013, %v4013
        %v4044 = vsel %vm679, %v4014, %v4014
        %v4045 = vsel %vm679, %v4015, %v4015
        %v4046 = vsel %vm679, %v4016, %v4016
        %v4047 = vsel %vm679, %v4017, %v4017
        %v4048 = vsel %vm679, %v4018, %v4018
        %v4049 = vsel %vm679, %v4019, %v4019
        %v4050 = vsel %vm679, %v4020, %v4020
        %v4051 = vsel %vm679, %v4021, %v4021
        %v4052 = vsel %vm679, %v4022, %v4022
        %v4053 = vsel %vm629, %v4038, 0.0
        %v4054 = vsel %vm629, %v4039, 0.0
        %v4055 = vsel %vm629, %v4040, 0.0
        %v4056 = vsel %vm629, %v4041, 0.0
        %v4057 = vsel %vm629, %v4042, 0.0
        %v4058 = vsel %vm629, %v4043, 0.0
        %v4059 = vsel %vm629, %v4044, 0.0
        %v4060 = vsel %vm629, %v4045, 0.0
        %v4061 = vsel %vm629, %v4046, 0.0
        %v4062 = vsel %vm629, %v4047, 0.0
        %v4063 = vsel %vm629, %v4048, 0.0
        %v4064 = vsel %vm629, %v4049, 0.0
        %v4065 = vsel %vm629, %v4050, 0.0
        %v4066 = vsel %vm629, %v4051, 0.0
        %v4067 = vsel %vm629, %v4052, 0.0
        %v4068 = vpack.c.bf16 %v4053, %v696
        %v4069 = vpack.c.bf16 %v4055, %v4054
        %v4070 = vpack.c.bf16 %v4057, %v4056
        %v4071 = vpack.c.bf16 %v4059, %v4058
        %v4072 = vpack.c.bf16 %v4061, %v4060
        %v4073 = vpack.c.bf16 %v4063, %v4062
        %v4074 = vpack.c.bf16 %v4065, %v4064
        %v4075 = vpack.c.bf16 %v4067, %v4066
        %s4076 = scalar_lea.vmem %s3, 144
        %v4077 = vld [vmem:[%s4076] sm:$0xf]
        %v4078 = vld [vmem:[%s4076 + $0x4] sm:$0x3]
        %v4079 = vpack.c.bf16 %v3977, 0.0
        %v4080 = vpack.c.bf16 %v3979, %v3978
        %v4081 = vpack.c.bf16 %v3981, %v3980
        %v4082 = vpack.c.bf16 %v3983, %v3982
        %v4083 = vpack.c.bf16 %v3985, %v3984
        %v4084 = vpack.c.bf16 %v3987, %v3986
        %v4085 = vpack.c.bf16 %v3989, %v3988
        %v4086 = vpack.c.bf16 %v3991, %v3990
        %s4087 = scalar_lea.vmem %s3, 152
        %v4088 = vld [vmem:[%s4087] sm:$0xf]
        %v4089 = vld [vmem:[%s4087 + $0x4] sm:$0x3]
        %v4092 = vunpack.c.l.b16 %v4088
        %v4093 = vunpack.c.l.b16 %v4089
        %v4094 = vpack.c.b16 %v4093, %v4092
        %v4096 = vsel %vm738, %v4079, 0
        %v4099 = vsel %vm738, %v4080, 0
        %v4102 = vsel %vm738, %v4081, 0
        %v4105 = vsel %vm738, %v4082, 0
        %v4108 = vsel %vm738, %v4083, 0
        %v4111 = vsel %vm738, %v4084, 0
        %v4114 = vsel %vm738, %v4085, 0
        %v4117 = vsel %vm738, %v4086, 0
        %v4120 = vsel %vm763, %v4094, 0
        %4122 = vmatprep.subr.bf16.mxu0 0
        %4123 = vmatpush1.bf16.msra.mxu0 %v4120
        %4124 = vmatprep.subr.bf16.mxu0 0
        %4125 = vmatpush1.bf16.msra.mxu0 0
        %4126 = vmatprep.subr.bf16.mxu0 0
        %4127 = vmatpush1.bf16.msra.mxu0 0
        %4128 = vmatprep.subr.bf16.mxu0 0
        %4129 = vmatpush1.bf16.msra.mxu0 0
        %4130 = vmatprep.subr.bf16.mxu0 0
        %4131 = vmatpush1.bf16.msra.mxu0 0
        %4132 = vmatprep.subr.bf16.mxu0 0
        %4133 = vmatpush1.bf16.msra.mxu0 0
        %4134 = vmatprep.subr.bf16.mxu0 0
        %4135 = vmatpush1.bf16.msra.mxu0 0
        %4136 = vmatprep.subr.bf16.mxu0 0
        %4137 = vmatpush1.bf16.msra.mxu0 0
        %4138 = vmatprep.subr.bf16.mxu0 0
        %4139 = vmatpush1.bf16.msra.mxu0 0
        %4140 = vmatprep.subr.bf16.mxu0 0
        %4141 = vmatpush1.bf16.msra.mxu0 0
        %4142 = vmatprep.subr.bf16.mxu0 0
        %4143 = vmatpush1.bf16.msra.mxu0 0
        %4144 = vmatprep.subr.bf16.mxu0 0
        %4145 = vmatpush1.bf16.msra.mxu0 0
        %4146 = vmatprep.subr.bf16.mxu0 0
        %4147 = vmatpush1.bf16.msra.mxu0 0
        %4148 = vmatprep.subr.bf16.mxu0 0
        %4149 = vmatpush1.bf16.msra.mxu0 0
        %4150 = vmatprep.subr.bf16.mxu0 0
        %4151 = vmatpush1.bf16.msra.mxu0 0
        %4152 = vmatprep.subr.bf16.mxu0 0
        %4153 = vmatpush1.bf16.msra.mxu0 0
        %4154 = vmatprep.mubr.bf16.mxu0 0
        %4155 = vmatmul.mubr.bf16.gmra.mrb[0].mxu0 %v4096
        %v4156 = vpop.f32.mrb[0].mxu0
        %v4157 = vadd.f32 0.0, %v4156
        %v4158 = vpop.f32.mrb[0].mxu0
        %v4159 = vpop.f32.mrb[0].mxu0
        %v4160 = vadd.f32 0.0, %v4159
        %v4161 = vpop.f32.mrb[0].mxu0
        %4162 = vmatprep.mubr.bf16.mxu0 0
        %4163 = vmatmul.mubr.bf16.gmra.mrb[0].mxu0 %v4099
        %v4164 = vpop.f32.mrb[0].mxu0
        %v4165 = vadd.f32 0.0, %v4164
        %v4166 = vpop.f32.mrb[0].mxu0
        %v4167 = vpop.f32.mrb[0].mxu0
        %v4168 = vadd.f32 0.0, %v4167
        %v4169 = vpop.f32.mrb[0].mxu0
        %4170 = vmatprep.mubr.bf16.mxu0 0
        %4171 = vmatmul.mubr.bf16.gmra.mrb[0].mxu0 %v4102
        %v4172 = vpop.f32.mrb[0].mxu0
        %v4173 = vadd.f32 0.0, %v4172
        %v4174 = vpop.f32.mrb[0].mxu0
        %v4175 = vpop.f32.mrb[0].mxu0
        %v4176 = vadd.f32 0.0, %v4175
        %v4177 = vpop.f32.mrb[0].mxu0
        %4178 = vmatprep.mubr.bf16.mxu0 0
        %4179 = vmatmul.mubr.bf16.gmra.mrb[0].mxu0 %v4105
        %v4180 = vpop.f32.mrb[0].mxu0
        %v4181 = vadd.f32 0.0, %v4180
        %v4182 = vpop.f32.mrb[0].mxu0
        %v4183 = vpop.f32.mrb[0].mxu0
        %v4184 = vadd.f32 0.0, %v4183
        %v4185 = vpop.f32.mrb[0].mxu0
        %4186 = vmatprep.mubr.bf16.mxu0 0
        %4187 = vmatmul.mubr.bf16.gmra.mrb[0].mxu0 %v4108
        %v4188 = vpop.f32.mrb[0].mxu0
        %v4189 = vadd.f32 0.0, %v4188
        %v4190 = vpop.f32.mrb[0].mxu0
        %v4191 = vpop.f32.mrb[0].mxu0
        %v4192 = vadd.f32 0.0, %v4191
        %v4193 = vpop.f32.mrb[0].mxu0
        %4194 = vmatprep.mubr.bf16.mxu0 0
        %4195 = vmatmul.mubr.bf16.gmra.mrb[0].mxu0 %v4111
        %v4196 = vpop.f32.mrb[0].mxu0
        %v4197 = vadd.f32 0.0, %v4196
        %v4198 = vpop.f32.mrb[0].mxu0
        %v4199 = vpop.f32.mrb[0].mxu0
        %v4200 = vadd.f32 0.0, %v4199
        %v4201 = vpop.f32.mrb[0].mxu0
        %4202 = vmatprep.mubr.bf16.mxu0 0
        %4203 = vmatmul.mubr.bf16.gmra.mrb[0].mxu0 %v4114
        %v4204 = vpop.f32.mrb[0].mxu0
        %v4205 = vadd.f32 0.0, %v4204
        %v4206 = vpop.f32.mrb[0].mxu0
        %v4207 = vpop.f32.mrb[0].mxu0
        %v4208 = vadd.f32 0.0, %v4207
        %v4209 = vpop.f32.mrb[0].mxu0
        %4210 = vmatprep.mubr.bf16.mxu0 0
        %4211 = vmatmul.mubr.bf16.gmra.mrb[0].mxu0 %v4117
        %v4212 = vpop.f32.mrb[0].mxu0
        %v4213 = vadd.f32 0.0, %v4212
        %v4214 = vpop.f32.mrb[0].mxu0
        %v4215 = vpop.f32.mrb[0].mxu0
        %v4216 = vadd.f32 0.0, %v4215
        %v4217 = vpop.f32.mrb[0].mxu0
        %4218 = vdwg.mxu0
        %v4221 = vunpack.c.l.b16 %v4077
        %v4222 = vunpack.c.l.b16 %v4078
        %v4223 = vpack.c.b16 %v4222, %v4221
        %v4225 = vsel %vm738, %v4068, 0
        %v4228 = vsel %vm738, %v4069, 0
        %v4231 = vsel %vm738, %v4070, 0
        %v4234 = vsel %vm738, %v4071, 0
        %v4237 = vsel %vm738, %v4072, 0
        %v4240 = vsel %vm738, %v4073, 0
        %v4243 = vsel %vm738, %v4074, 0
        %v4246 = vsel %vm738, %v4075, 0
        %v4249 = vsel %vm763, %v4223, 0
        %4251 = vmatprep.subr.bf16.mxu0 0
        %4252 = vmatpush1.bf16.msra.mxu0 %v4249
        %4253 = vmatprep.subr.bf16.mxu0 0
        %4254 = vmatpush1.bf16.msra.mxu0 0
        %4255 = vmatprep.subr.bf16.mxu0 0
        %4256 = vmatpush1.bf16.msra.mxu0 0
        %4257 = vmatprep.subr.bf16.mxu0 0
        %4258 = vmatpush1.bf16.msra.mxu0 0
        %4259 = vmatprep.subr.bf16.mxu0 0
        %4260 = vmatpush1.bf16.msra.mxu0 0
        %4261 = vmatprep.subr.bf16.mxu0 0
        %4262 = vmatpush1.bf16.msra.mxu0 0
        %4263 = vmatprep.subr.bf16.mxu0 0
        %4264 = vmatpush1.bf16.msra.mxu0 0
        %4265 = vmatprep.subr.bf16.mxu0 0
        %4266 = vmatpush1.bf16.msra.mxu0 0
        %4267 = vmatprep.subr.bf16.mxu0 0
        %4268 = vmatpush1.bf16.msra.mxu0 0
        %4269 = vmatprep.subr.bf16.mxu0 0
        %4270 = vmatpush1.bf16.msra.mxu0 0
        %4271 = vmatprep.subr.bf16.mxu0 0
        %4272 = vmatpush1.bf16.msra.mxu0 0
        %4273 = vmatprep.subr.bf16.mxu0 0
        %4274 = vmatpush1.bf16.msra.mxu0 0
        %4275 = vmatprep.subr.bf16.mxu0 0
        %4276 = vmatpush1.bf16.msra.mxu0 0
        %4277 = vmatprep.subr.bf16.mxu0 0
        %4278 = vmatpush1.bf16.msra.mxu0 0
        %4279 = vmatprep.subr.bf16.mxu0 0
        %4280 = vmatpush1.bf16.msra.mxu0 0
        %4281 = vmatprep.subr.bf16.mxu0 0
        %4282 = vmatpush1.bf16.msra.mxu0 0
        %4283 = vmatprep.mubr.bf16.mxu0 0
        %4284 = vmatmul.mubr.bf16.gmra.mrb[0].mxu0 %v4225
        %v4285 = vpop.f32.mrb[0].mxu0
        %v4286 = vadd.f32 %v4157, %v4285
        %v4287 = vpop.f32.mrb[0].mxu0
        %v4288 = vpop.f32.mrb[0].mxu0
        %v4289 = vadd.f32 %v4160, %v4288
        %v4290 = vpop.f32.mrb[0].mxu0
        %4291 = vmatprep.mubr.bf16.mxu0 0
        %4292 = vmatmul.mubr.bf16.gmra.mrb[0].mxu0 %v4228
        %v4293 = vpop.f32.mrb[0].mxu0
        %v4294 = vadd.f32 %v4165, %v4293
        %v4295 = vpop.f32.mrb[0].mxu0
        %v4296 = vpop.f32.mrb[0].mxu0
        %v4297 = vadd.f32 %v4168, %v4296
        %v4298 = vpop.f32.mrb[0].mxu0
        %4299 = vmatprep.mubr.bf16.mxu0 0
        %4300 = vmatmul.mubr.bf16.gmra.mrb[0].mxu0 %v4231
        %v4301 = vpop.f32.mrb[0].mxu0
        %v4302 = vadd.f32 %v4173, %v4301
        %v4303 = vpop.f32.mrb[0].mxu0
        %v4304 = vpop.f32.mrb[0].mxu0
        %v4305 = vadd.f32 %v4176, %v4304
        %v4306 = vpop.f32.mrb[0].mxu0
        %4307 = vmatprep.mubr.bf16.mxu0 0
        %4308 = vmatmul.mubr.bf16.gmra.mrb[0].mxu0 %v4234
        %v4309 = vpop.f32.mrb[0].mxu0
        %v4310 = vadd.f32 %v4181, %v4309
        %v4311 = vpop.f32.mrb[0].mxu0
        %v4312 = vpop.f32.mrb[0].mxu0
        %v4313 = vadd.f32 %v4184, %v4312
        %v4314 = vpop.f32.mrb[0].mxu0
        %4315 = vmatprep.mubr.bf16.mxu0 0
        %4316 = vmatmul.mubr.bf16.gmra.mrb[0].mxu0 %v4237
        %v4317 = vpop.f32.mrb[0].mxu0
        %v4318 = vadd.f32 %v4189, %v4317
        %v4319 = vpop.f32.mrb[0].mxu0
        %v4320 = vpop.f32.mrb[0].mxu0
        %v4321 = vadd.f32 %v4192, %v4320
        %v4322 = vpop.f32.mrb[0].mxu0
        %4323 = vmatprep.mubr.bf16.mxu0 0
        %4324 = vmatmul.mubr.bf16.gmra.mrb[0].mxu0 %v4240
        %v4325 = vpop.f32.mrb[0].mxu0
        %v4326 = vadd.f32 %v4197, %v4325
        %v4327 = vpop.f32.mrb[0].mxu0
        %v4328 = vpop.f32.mrb[0].mxu0
        %v4329 = vadd.f32 %v4200, %v4328
        %v4330 = vpop.f32.mrb[0].mxu0
        %4331 = vmatprep.mubr.bf16.mxu0 0
        %4332 = vmatmul.mubr.bf16.gmra.mrb[0].mxu0 %v4243
        %v4333 = vpop.f32.mrb[0].mxu0
        %v4334 = vadd.f32 %v4205, %v4333
        %v4335 = vpop.f32.mrb[0].mxu0
        %v4336 = vpop.f32.mrb[0].mxu0
        %v4337 = vadd.f32 %v4208, %v4336
        %v4338 = vpop.f32.mrb[0].mxu0
        %4339 = vmatprep.mubr.bf16.mxu0 0
        %4340 = vmatmul.mubr.bf16.gmra.mrb[0].mxu0 %v4246
        %v4341 = vpop.f32.mrb[0].mxu0
        %v4342 = vadd.f32 %v4213, %v4341
        %v4343 = vpop.f32.mrb[0].mxu0
        %v4344 = vpop.f32.mrb[0].mxu0
        %v4345 = vadd.f32 %v4216, %v4344
        %v4346 = vpop.f32.mrb[0].mxu0
        %4347 = vdwg.mxu0
        %v4348 = vrot.slane %v3977, 1
        %v4349 = vrot.slane %v3978, 1
        %v4350 = vrot.slane %v3979, 1
        %v4351 = vrot.slane %v3980, 1
        %v4352 = vrot.slane %v3981, 1
        %v4353 = vrot.slane %v3982, 1
        %v4354 = vrot.slane %v3983, 1
        %v4355 = vrot.slane %v3984, 1
        %v4356 = vrot.slane %v3985, 1
        %v4357 = vrot.slane %v3986, 1
        %v4358 = vrot.slane %v3987, 1
        %v4359 = vrot.slane %v3988, 1
        %v4360 = vrot.slane %v3989, 1
        %v4361 = vrot.slane %v3990, 1
        %v4362 = vrot.slane %v3991, 1
        %v4378 = vsel %vm1025, %v4348, %v4348
        %v4379 = vsel %vm1025, %v4349, %v4349
        %v4380 = vsel %vm1025, %v4350, %v4350
        %v4381 = vsel %vm1025, %v4351, %v4351
        %v4382 = vsel %vm1025, %v4352, %v4352
        %v4383 = vsel %vm1025, %v4353, %v4353
        %v4384 = vsel %vm1025, %v4354, %v4354
        %v4385 = vsel %vm1025, %v4355, %v4355
        %v4386 = vsel %vm1025, %v4356, %v4356
        %v4387 = vsel %vm1025, %v4357, %v4357
        %v4388 = vsel %vm1025, %v4358, %v4358
        %v4389 = vsel %vm1025, %v4359, %v4359
        %v4390 = vsel %vm1025, %v4360, %v4360
        %v4391 = vsel %vm1025, %v4361, %v4361
        %v4392 = vsel %vm1025, %v4362, %v4362
        %v4393 = vsel %vm630, %v4378, 0.0
        %v4394 = vsel %vm630, %v4379, 0.0
        %v4395 = vsel %vm630, %v4380, 0.0
        %v4396 = vsel %vm630, %v4381, 0.0
        %v4397 = vsel %vm630, %v4382, 0.0
        %v4398 = vsel %vm630, %v4383, 0.0
        %v4399 = vsel %vm630, %v4384, 0.0
        %v4400 = vsel %vm630, %v4385, 0.0
        %v4401 = vsel %vm630, %v4386, 0.0
        %v4402 = vsel %vm630, %v4387, 0.0
        %v4403 = vsel %vm630, %v4388, 0.0
        %v4404 = vsel %vm630, %v4389, 0.0
        %v4405 = vsel %vm630, %v4390, 0.0
        %v4406 = vsel %vm630, %v4391, 0.0
        %v4407 = vsel %vm630, %v4392, 0.0
        %v4408 = vpack.c.bf16 %v4393, %v1042
        %v4409 = vpack.c.bf16 %v4395, %v4394
        %v4410 = vpack.c.bf16 %v4397, %v4396
        %v4411 = vpack.c.bf16 %v4399, %v4398
        %v4412 = vpack.c.bf16 %v4401, %v4400
        %v4413 = vpack.c.bf16 %v4403, %v4402
        %v4414 = vpack.c.bf16 %v4405, %v4404
        %v4415 = vpack.c.bf16 %v4407, %v4406
        %s4416 = scalar_lea.vmem %s3, 160
        %v4417 = vld [vmem:[%s4416] sm:$0xf]
        %v4418 = vld [vmem:[%s4416 + $0x4] sm:$0x3]
        %v4421 = vunpack.c.l.b16 %v4417
        %v4422 = vunpack.c.l.b16 %v4418
        %v4423 = vpack.c.b16 %v4422, %v4421
        %v4425 = vsel %vm738, %v4408, 0
        %v4428 = vsel %vm738, %v4409, 0
        %v4431 = vsel %vm738, %v4410, 0
        %v4434 = vsel %vm738, %v4411, 0
        %v4437 = vsel %vm738, %v4412, 0
        %v4440 = vsel %vm738, %v4413, 0
        %v4443 = vsel %vm738, %v4414, 0
        %v4446 = vsel %vm738, %v4415, 0
        %v4449 = vsel %vm763, %v4423, 0
        %4451 = vmatprep.subr.bf16.mxu0 0
        %4452 = vmatpush1.bf16.msra.mxu0 %v4449
        %4453 = vmatprep.subr.bf16.mxu0 0
        %4454 = vmatpush1.bf16.msra.mxu0 0
        %4455 = vmatprep.subr.bf16.mxu0 0
        %4456 = vmatpush1.bf16.msra.mxu0 0
        %4457 = vmatprep.subr.bf16.mxu0 0
        %4458 = vmatpush1.bf16.msra.mxu0 0
        %4459 = vmatprep.subr.bf16.mxu0 0
        %4460 = vmatpush1.bf16.msra.mxu0 0
        %4461 = vmatprep.subr.bf16.mxu0 0
        %4462 = vmatpush1.bf16.msra.mxu0 0
        %4463 = vmatprep.subr.bf16.mxu0 0
        %4464 = vmatpush1.bf16.msra.mxu0 0
        %4465 = vmatprep.subr.bf16.mxu0 0
        %4466 = vmatpush1.bf16.msra.mxu0 0
        %4467 = vmatprep.subr.bf16.mxu0 0
        %4468 = vmatpush1.bf16.msra.mxu0 0
        %4469 = vmatprep.subr.bf16.mxu0 0
        %4470 = vmatpush1.bf16.msra.mxu0 0
        %4471 = vmatprep.subr.bf16.mxu0 0
        %4472 = vmatpush1.bf16.msra.mxu0 0
        %4473 = vmatprep.subr.bf16.mxu0 0
        %4474 = vmatpush1.bf16.msra.mxu0 0
        %4475 = vmatprep.subr.bf16.mxu0 0
        %4476 = vmatpush1.bf16.msra.mxu0 0
        %4477 = vmatprep.subr.bf16.mxu0 0
        %4478 = vmatpush1.bf16.msra.mxu0 0
        %4479 = vmatprep.subr.bf16.mxu0 0
        %4480 = vmatpush1.bf16.msra.mxu0 0
        %4481 = vmatprep.subr.bf16.mxu0 0
        %4482 = vmatpush1.bf16.msra.mxu0 0
        %4483 = vmatprep.mubr.bf16.mxu0 0
        %4484 = vmatmul.mubr.bf16.gmra.mrb[0].mxu0 %v4425
        %v4485 = vpop.f32.mrb[0].mxu0
        %v4486 = vadd.f32 0.0, %v4485
        %v4487 = vpop.f32.mrb[0].mxu0
        %v4488 = vpop.f32.mrb[0].mxu0
        %v4489 = vadd.f32 0.0, %v4488
        %v4490 = vpop.f32.mrb[0].mxu0
        %4491 = vmatprep.mubr.bf16.mxu0 0
        %4492 = vmatmul.mubr.bf16.gmra.mrb[0].mxu0 %v4428
        %v4493 = vpop.f32.mrb[0].mxu0
        %v4494 = vadd.f32 0.0, %v4493
        %v4495 = vpop.f32.mrb[0].mxu0
        %v4496 = vpop.f32.mrb[0].mxu0
        %v4497 = vadd.f32 0.0, %v4496
        %v4498 = vpop.f32.mrb[0].mxu0
        %4499 = vmatprep.mubr.bf16.mxu0 0
        %4500 = vmatmul.mubr.bf16.gmra.mrb[0].mxu0 %v4431
        %v4501 = vpop.f32.mrb[0].mxu0
        %v4502 = vadd.f32 0.0, %v4501
        %v4503 = vpop.f32.mrb[0].mxu0
        %v4504 = vpop.f32.mrb[0].mxu0
        %v4505 = vadd.f32 0.0, %v4504
        %v4506 = vpop.f32.mrb[0].mxu0
        %4507 = vmatprep.mubr.bf16.mxu0 0
        %4508 = vmatmul.mubr.bf16.gmra.mrb[0].mxu0 %v4434
        %v4509 = vpop.f32.mrb[0].mxu0
        %v4510 = vadd.f32 0.0, %v4509
        %v4511 = vpop.f32.mrb[0].mxu0
        %v4512 = vpop.f32.mrb[0].mxu0
        %v4513 = vadd.f32 0.0, %v4512
        %v4514 = vpop.f32.mrb[0].mxu0
        %4515 = vmatprep.mubr.bf16.mxu0 0
        %4516 = vmatmul.mubr.bf16.gmra.mrb[0].mxu0 %v4437
        %v4517 = vpop.f32.mrb[0].mxu0
        %v4518 = vadd.f32 0.0, %v4517
        %v4519 = vpop.f32.mrb[0].mxu0
        %v4520 = vpop.f32.mrb[0].mxu0
        %v4521 = vadd.f32 0.0, %v4520
        %v4522 = vpop.f32.mrb[0].mxu0
        %4523 = vmatprep.mubr.bf16.mxu0 0
        %4524 = vmatmul.mubr.bf16.gmra.mrb[0].mxu0 %v4440
        %v4525 = vpop.f32.mrb[0].mxu0
        %v4526 = vadd.f32 0.0, %v4525
        %v4527 = vpop.f32.mrb[0].mxu0
        %v4528 = vpop.f32.mrb[0].mxu0
        %v4529 = vadd.f32 0.0, %v4528
        %v4530 = vpop.f32.mrb[0].mxu0
        %4531 = vmatprep.mubr.bf16.mxu0 0
        %4532 = vmatmul.mubr.bf16.gmra.mrb[0].mxu0 %v4443
        %v4533 = vpop.f32.mrb[0].mxu0
        %v4534 = vadd.f32 0.0, %v4533
        %v4535 = vpop.f32.mrb[0].mxu0
        %v4536 = vpop.f32.mrb[0].mxu0
        %v4537 = vadd.f32 0.0, %v4536
        %v4538 = vpop.f32.mrb[0].mxu0
        %4539 = vmatprep.mubr.bf16.mxu0 0
        %4540 = vmatmul.mubr.bf16.gmra.mrb[0].mxu0 %v4446
        %v4541 = vpop.f32.mrb[0].mxu0
        %v4542 = vadd.f32 0.0, %v4541
        %v4543 = vpop.f32.mrb[0].mxu0
        %v4544 = vpop.f32.mrb[0].mxu0
        %v4545 = vadd.f32 0.0, %v4544
        %v4546 = vpop.f32.mrb[0].mxu0
        %4547 = vdwg.mxu0
        %v4548 = vadd.f32 %v4286, %v4486
        %v4549 = vadd.f32 %v4289, %v4489
        %v4550 = vadd.f32 %v4294, %v4494
        %v4551 = vadd.f32 %v4297, %v4497
        %v4552 = vadd.f32 %v4302, %v4502
        %v4553 = vadd.f32 %v4305, %v4505
        %v4554 = vadd.f32 %v4310, %v4510
        %v4555 = vadd.f32 %v4313, %v4513
        %v4556 = vadd.f32 %v4318, %v4518
        %v4557 = vadd.f32 %v4321, %v4521
        %v4558 = vadd.f32 %v4326, %v4526
        %v4559 = vadd.f32 %v4329, %v4529
        %v4560 = vadd.f32 %v4334, %v4534
        %v4561 = vadd.f32 %v4337, %v4537
        %v4562 = vadd.f32 %v4342, %v4542
        %v4563 = vadd.f32 %v4345, %v4545
        %v4565 = vrot.slane %v3992, 7
        %v4567 = vsel %vm679, %v4565, %v4565
        %v4568 = vsel %vm629, %v4567, 0.0
        %v4569 = vpack.c.bf16 %v4054, %v4053
        %v4570 = vpack.c.bf16 %v4056, %v4055
        %v4571 = vpack.c.bf16 %v4058, %v4057
        %v4572 = vpack.c.bf16 %v4060, %v4059
        %v4573 = vpack.c.bf16 %v4062, %v4061
        %v4574 = vpack.c.bf16 %v4064, %v4063
        %v4575 = vpack.c.bf16 %v4066, %v4065
        %v4576 = vpack.c.bf16 %v4568, %v4067
        %s4577 = scalar_lea.vmem %s3, 168
        %v4578 = vld [vmem:[%s4577] sm:$0xf]
        %v4579 = vld [vmem:[%s4577 + $0x4] sm:$0x3]
        %v4582 = vunpack.c.l.b16 %v4578
        %v4583 = vunpack.c.l.b16 %v4579
        %v4584 = vpack.c.b16 %v4583, %v4582
        %v4586 = vsel %vm738, %v4569, 0
        %v4589 = vsel %vm738, %v4570, 0
        %v4592 = vsel %vm738, %v4571, 0
        %v4595 = vsel %vm738, %v4572, 0
        %v4598 = vsel %vm738, %v4573, 0
        %v4601 = vsel %vm738, %v4574, 0
        %v4604 = vsel %vm738, %v4575, 0
        %v4607 = vsel %vm738, %v4576, 0
        %v4610 = vsel %vm763, %v4584, 0
        %4612 = vmatprep.subr.bf16.mxu0 0
        %4613 = vmatpush1.bf16.msra.mxu0 %v4610
        %4614 = vmatprep.subr.bf16.mxu0 0
        %4615 = vmatpush1.bf16.msra.mxu0 0
        %4616 = vmatprep.subr.bf16.mxu0 0
        %4617 = vmatpush1.bf16.msra.mxu0 0
        %4618 = vmatprep.subr.bf16.mxu0 0
        %4619 = vmatpush1.bf16.msra.mxu0 0
        %4620 = vmatprep.subr.bf16.mxu0 0
        %4621 = vmatpush1.bf16.msra.mxu0 0
        %4622 = vmatprep.subr.bf16.mxu0 0
        %4623 = vmatpush1.bf16.msra.mxu0 0
        %4624 = vmatprep.subr.bf16.mxu0 0
        %4625 = vmatpush1.bf16.msra.mxu0 0
        %4626 = vmatprep.subr.bf16.mxu0 0
        %4627 = vmatpush1.bf16.msra.mxu0 0
        %4628 = vmatprep.subr.bf16.mxu0 0
        %4629 = vmatpush1.bf16.msra.mxu0 0
        %4630 = vmatprep.subr.bf16.mxu0 0
        %4631 = vmatpush1.bf16.msra.mxu0 0
        %4632 = vmatprep.subr.bf16.mxu0 0
        %4633 = vmatpush1.bf16.msra.mxu0 0
        %4634 = vmatprep.subr.bf16.mxu0 0
        %4635 = vmatpush1.bf16.msra.mxu0 0
        %4636 = vmatprep.subr.bf16.mxu0 0
        %4637 = vmatpush1.bf16.msra.mxu0 0
        %4638 = vmatprep.subr.bf16.mxu0 0
        %4639 = vmatpush1.bf16.msra.mxu0 0
        %4640 = vmatprep.subr.bf16.mxu0 0
        %4641 = vmatpush1.bf16.msra.mxu0 0
        %4642 = vmatprep.subr.bf16.mxu0 0
        %4643 = vmatpush1.bf16.msra.mxu0 0
        %4644 = vmatprep.mubr.bf16.mxu0 0
        %4645 = vmatmul.mubr.bf16.gmra.mrb[0].mxu0 %v4586
        %v4646 = vpop.f32.mrb[0].mxu0
        %v4647 = vadd.f32 0.0, %v4646
        %v4648 = vpop.f32.mrb[0].mxu0
        %v4649 = vpop.f32.mrb[0].mxu0
        %v4650 = vadd.f32 0.0, %v4649
        %v4651 = vpop.f32.mrb[0].mxu0
        %4652 = vmatprep.mubr.bf16.mxu0 0
        %4653 = vmatmul.mubr.bf16.gmra.mrb[0].mxu0 %v4589
        %v4654 = vpop.f32.mrb[0].mxu0
        %v4655 = vadd.f32 0.0, %v4654
        %v4656 = vpop.f32.mrb[0].mxu0
        %v4657 = vpop.f32.mrb[0].mxu0
        %v4658 = vadd.f32 0.0, %v4657
        %v4659 = vpop.f32.mrb[0].mxu0
        %4660 = vmatprep.mubr.bf16.mxu0 0
        %4661 = vmatmul.mubr.bf16.gmra.mrb[0].mxu0 %v4592
        %v4662 = vpop.f32.mrb[0].mxu0
        %v4663 = vadd.f32 0.0, %v4662
        %v4664 = vpop.f32.mrb[0].mxu0
        %v4665 = vpop.f32.mrb[0].mxu0
        %v4666 = vadd.f32 0.0, %v4665
        %v4667 = vpop.f32.mrb[0].mxu0
        %4668 = vmatprep.mubr.bf16.mxu0 0
        %4669 = vmatmul.mubr.bf16.gmra.mrb[0].mxu0 %v4595
        %v4670 = vpop.f32.mrb[0].mxu0
        %v4671 = vadd.f32 0.0, %v4670
        %v4672 = vpop.f32.mrb[0].mxu0
        %v4673 = vpop.f32.mrb[0].mxu0
        %v4674 = vadd.f32 0.0, %v4673
        %v4675 = vpop.f32.mrb[0].mxu0
        %4676 = vmatprep.mubr.bf16.mxu0 0
        %4677 = vmatmul.mubr.bf16.gmra.mrb[0].mxu0 %v4598
        %v4678 = vpop.f32.mrb[0].mxu0
        %v4679 = vadd.f32 0.0, %v4678
        %v4680 = vpop.f32.mrb[0].mxu0
        %v4681 = vpop.f32.mrb[0].mxu0
        %v4682 = vadd.f32 0.0, %v4681
        %v4683 = vpop.f32.mrb[0].mxu0
        %4684 = vmatprep.mubr.bf16.mxu0 0
        %4685 = vmatmul.mubr.bf16.gmra.mrb[0].mxu0 %v4601
        %v4686 = vpop.f32.mrb[0].mxu0
        %v4687 = vadd.f32 0.0, %v4686
        %v4688 = vpop.f32.mrb[0].mxu0
        %v4689 = vpop.f32.mrb[0].mxu0
        %v4690 = vadd.f32 0.0, %v4689
        %v4691 = vpop.f32.mrb[0].mxu0
        %4692 = vmatprep.mubr.bf16.mxu0 0
        %4693 = vmatmul.mubr.bf16.gmra.mrb[0].mxu0 %v4604
        %v4694 = vpop.f32.mrb[0].mxu0
        %v4695 = vadd.f32 0.0, %v4694
        %v4696 = vpop.f32.mrb[0].mxu0
        %v4697 = vpop.f32.mrb[0].mxu0
        %v4698 = vadd.f32 0.0, %v4697
        %v4699 = vpop.f32.mrb[0].mxu0
        %4700 = vmatprep.mubr.bf16.mxu0 0
        %4701 = vmatmul.mubr.bf16.gmra.mrb[0].mxu0 %v4607
        %v4702 = vpop.f32.mrb[0].mxu0
        %v4703 = vadd.f32 0.0, %v4702
        %v4704 = vpop.f32.mrb[0].mxu0
        %v4705 = vpop.f32.mrb[0].mxu0
        %v4706 = vadd.f32 0.0, %v4705
        %v4707 = vpop.f32.mrb[0].mxu0
        %4708 = vdwg.mxu0
        %v4709 = vadd.f32 %v4548, %v4647
        %v4710 = vadd.f32 %v4549, %v4650
        %v4711 = vadd.f32 %v4550, %v4655
        %v4712 = vadd.f32 %v4551, %v4658
        %v4713 = vadd.f32 %v4552, %v4663
        %v4714 = vadd.f32 %v4553, %v4666
        %v4715 = vadd.f32 %v4554, %v4671
        %v4716 = vadd.f32 %v4555, %v4674
        %v4717 = vadd.f32 %v4556, %v4679
        %v4718 = vadd.f32 %v4557, %v4682
        %v4719 = vadd.f32 %v4558, %v4687
        %v4720 = vadd.f32 %v4559, %v4690
        %v4721 = vadd.f32 %v4560, %v4695
        %v4722 = vadd.f32 %v4561, %v4698
        %v4723 = vadd.f32 %v4562, %v4703
        %v4724 = vadd.f32 %v4563, %v4706
        %v4725 = vpack.c.bf16 %v3978, %v3977
        %v4726 = vpack.c.bf16 %v3980, %v3979
        %v4727 = vpack.c.bf16 %v3982, %v3981
        %v4728 = vpack.c.bf16 %v3984, %v3983
        %v4729 = vpack.c.bf16 %v3986, %v3985
        %v4730 = vpack.c.bf16 %v3988, %v3987
        %v4731 = vpack.c.bf16 %v3990, %v3989
        %v4732 = vpack.c.bf16 %v3992, %v3991
        %s4733 = scalar_lea.vmem %s3, 176
        %v4734 = vld [vmem:[%s4733] sm:$0xf]
        %v4735 = vld [vmem:[%s4733 + $0x4] sm:$0x3]
        %v4738 = vunpack.c.l.b16 %v4734
        %v4739 = vunpack.c.l.b16 %v4735
        %v4740 = vpack.c.b16 %v4739, %v4738
        %v4742 = vsel %vm738, %v4725, 0
        %v4745 = vsel %vm738, %v4726, 0
        %v4748 = vsel %vm738, %v4727, 0
        %v4751 = vsel %vm738, %v4728, 0
        %v4754 = vsel %vm738, %v4729, 0
        %v4757 = vsel %vm738, %v4730, 0
        %v4760 = vsel %vm738, %v4731, 0
        %v4763 = vsel %vm738, %v4732, 0
        %v4766 = vsel %vm763, %v4740, 0
        %4768 = vmatprep.subr.bf16.mxu0 0
        %4769 = vmatpush1.bf16.msra.mxu0 %v4766
        %4770 = vmatprep.subr.bf16.mxu0 0
        %4771 = vmatpush1.bf16.msra.mxu0 0
        %4772 = vmatprep.subr.bf16.mxu0 0
        %4773 = vmatpush1.bf16.msra.mxu0 0
        %4774 = vmatprep.subr.bf16.mxu0 0
        %4775 = vmatpush1.bf16.msra.mxu0 0
        %4776 = vmatprep.subr.bf16.mxu0 0
        %4777 = vmatpush1.bf16.msra.mxu0 0
        %4778 = vmatprep.subr.bf16.mxu0 0
        %4779 = vmatpush1.bf16.msra.mxu0 0
        %4780 = vmatprep.subr.bf16.mxu0 0
        %4781 = vmatpush1.bf16.msra.mxu0 0
        %4782 = vmatprep.subr.bf16.mxu0 0
        %4783 = vmatpush1.bf16.msra.mxu0 0
        %4784 = vmatprep.subr.bf16.mxu0 0
        %4785 = vmatpush1.bf16.msra.mxu0 0
        %4786 = vmatprep.subr.bf16.mxu0 0
        %4787 = vmatpush1.bf16.msra.mxu0 0
        %4788 = vmatprep.subr.bf16.mxu0 0
        %4789 = vmatpush1.bf16.msra.mxu0 0
        %4790 = vmatprep.subr.bf16.mxu0 0
        %4791 = vmatpush1.bf16.msra.mxu0 0
        %4792 = vmatprep.subr.bf16.mxu0 0
        %4793 = vmatpush1.bf16.msra.mxu0 0
        %4794 = vmatprep.subr.bf16.mxu0 0
        %4795 = vmatpush1.bf16.msra.mxu0 0
        %4796 = vmatprep.subr.bf16.mxu0 0
        %4797 = vmatpush1.bf16.msra.mxu0 0
        %4798 = vmatprep.subr.bf16.mxu0 0
        %4799 = vmatpush1.bf16.msra.mxu0 0
        %4800 = vmatprep.mubr.bf16.mxu0 0
        %4801 = vmatmul.mubr.bf16.gmra.mrb[0].mxu0 %v4742
        %v4802 = vpop.f32.mrb[0].mxu0
        %v4803 = vadd.f32 0.0, %v4802
        %v4804 = vpop.f32.mrb[0].mxu0
        %v4805 = vpop.f32.mrb[0].mxu0
        %v4806 = vadd.f32 0.0, %v4805
        %v4807 = vpop.f32.mrb[0].mxu0
        %4808 = vmatprep.mubr.bf16.mxu0 0
        %4809 = vmatmul.mubr.bf16.gmra.mrb[0].mxu0 %v4745
        %v4810 = vpop.f32.mrb[0].mxu0
        %v4811 = vadd.f32 0.0, %v4810
        %v4812 = vpop.f32.mrb[0].mxu0
        %v4813 = vpop.f32.mrb[0].mxu0
        %v4814 = vadd.f32 0.0, %v4813
        %v4815 = vpop.f32.mrb[0].mxu0
        %4816 = vmatprep.mubr.bf16.mxu0 0
        %4817 = vmatmul.mubr.bf16.gmra.mrb[0].mxu0 %v4748
        %v4818 = vpop.f32.mrb[0].mxu0
        %v4819 = vadd.f32 0.0, %v4818
        %v4820 = vpop.f32.mrb[0].mxu0
        %v4821 = vpop.f32.mrb[0].mxu0
        %v4822 = vadd.f32 0.0, %v4821
        %v4823 = vpop.f32.mrb[0].mxu0
        %4824 = vmatprep.mubr.bf16.mxu0 0
        %4825 = vmatmul.mubr.bf16.gmra.mrb[0].mxu0 %v4751
        %v4826 = vpop.f32.mrb[0].mxu0
        %v4827 = vadd.f32 0.0, %v4826
        %v4828 = vpop.f32.mrb[0].mxu0
        %v4829 = vpop.f32.mrb[0].mxu0
        %v4830 = vadd.f32 0.0, %v4829
        %v4831 = vpop.f32.mrb[0].mxu0
        %4832 = vmatprep.mubr.bf16.mxu0 0
        %4833 = vmatmul.mubr.bf16.gmra.mrb[0].mxu0 %v4754
        %v4834 = vpop.f32.mrb[0].mxu0
        %v4835 = vadd.f32 0.0, %v4834
        %v4836 = vpop.f32.mrb[0].mxu0
        %v4837 = vpop.f32.mrb[0].mxu0
        %v4838 = vadd.f32 0.0, %v4837
        %v4839 = vpop.f32.mrb[0].mxu0
        %4840 = vmatprep.mubr.bf16.mxu0 0
        %4841 = vmatmul.mubr.bf16.gmra.mrb[0].mxu0 %v4757
        %v4842 = vpop.f32.mrb[0].mxu0
        %v4843 = vadd.f32 0.0, %v4842
        %v4844 = vpop.f32.mrb[0].mxu0
        %v4845 = vpop.f32.mrb[0].mxu0
        %v4846 = vadd.f32 0.0, %v4845
        %v4847 = vpop.f32.mrb[0].mxu0
        %4848 = vmatprep.mubr.bf16.mxu0 0
        %4849 = vmatmul.mubr.bf16.gmra.mrb[0].mxu0 %v4760
        %v4850 = vpop.f32.mrb[0].mxu0
        %v4851 = vadd.f32 0.0, %v4850
        %v4852 = vpop.f32.mrb[0].mxu0
        %v4853 = vpop.f32.mrb[0].mxu0
        %v4854 = vadd.f32 0.0, %v4853
        %v4855 = vpop.f32.mrb[0].mxu0
        %4856 = vmatprep.mubr.bf16.mxu0 0
        %4857 = vmatmul.mubr.bf16.gmra.mrb[0].mxu0 %v4763
        %v4858 = vpop.f32.mrb[0].mxu0
        %v4859 = vadd.f32 0.0, %v4858
        %v4860 = vpop.f32.mrb[0].mxu0
        %v4861 = vpop.f32.mrb[0].mxu0
        %v4862 = vadd.f32 0.0, %v4861
        %v4863 = vpop.f32.mrb[0].mxu0
        %4864 = vdwg.mxu0
        %v4865 = vadd.f32 %v4709, %v4803
        %v4866 = vadd.f32 %v4710, %v4806
        %v4867 = vadd.f32 %v4711, %v4811
        %v4868 = vadd.f32 %v4712, %v4814
        %v4869 = vadd.f32 %v4713, %v4819
        %v4870 = vadd.f32 %v4714, %v4822
        %v4871 = vadd.f32 %v4715, %v4827
        %v4872 = vadd.f32 %v4716, %v4830
        %v4873 = vadd.f32 %v4717, %v4835
        %v4874 = vadd.f32 %v4718, %v4838
        %v4875 = vadd.f32 %v4719, %v4843
        %v4876 = vadd.f32 %v4720, %v4846
        %v4877 = vadd.f32 %v4721, %v4851
        %v4878 = vadd.f32 %v4722, %v4854
        %v4879 = vadd.f32 %v4723, %v4859
        %v4880 = vadd.f32 %v4724, %v4862
        %v4881 = vrot.slane %v3992, 1
        %v4883 = vsel %vm1025, %v4881, %v4881
        %v4884 = vsel %vm630, %v4883, 0.0
        %v4885 = vpack.c.bf16 %v4394, %v4393
        %v4886 = vpack.c.bf16 %v4396, %v4395
        %v4887 = vpack.c.bf16 %v4398, %v4397
        %v4888 = vpack.c.bf16 %v4400, %v4399
        %v4889 = vpack.c.bf16 %v4402, %v4401
        %v4890 = vpack.c.bf16 %v4404, %v4403
        %v4891 = vpack.c.bf16 %v4406, %v4405
        %v4892 = vpack.c.bf16 %v4884, %v4407
        %s4893 = scalar_lea.vmem %s3, 184
        %v4894 = vld [vmem:[%s4893] sm:$0xf]
        %v4895 = vld [vmem:[%s4893 + $0x4] sm:$0x3]
        %v4898 = vunpack.c.l.b16 %v4894
        %v4899 = vunpack.c.l.b16 %v4895
        %v4900 = vpack.c.b16 %v4899, %v4898
        %v4902 = vsel %vm738, %v4885, 0
        %v4905 = vsel %vm738, %v4886, 0
        %v4908 = vsel %vm738, %v4887, 0
        %v4911 = vsel %vm738, %v4888, 0
        %v4914 = vsel %vm738, %v4889, 0
        %v4917 = vsel %vm738, %v4890, 0
        %v4920 = vsel %vm738, %v4891, 0
        %v4923 = vsel %vm738, %v4892, 0
        %v4926 = vsel %vm763, %v4900, 0
        %4928 = vmatprep.subr.bf16.mxu0 0
        %4929 = vmatpush1.bf16.msra.mxu0 %v4926
        %4930 = vmatprep.subr.bf16.mxu0 0
        %4931 = vmatpush1.bf16.msra.mxu0 0
        %4932 = vmatprep.subr.bf16.mxu0 0
        %4933 = vmatpush1.bf16.msra.mxu0 0
        %4934 = vmatprep.subr.bf16.mxu0 0
        %4935 = vmatpush1.bf16.msra.mxu0 0
        %4936 = vmatprep.subr.bf16.mxu0 0
        %4937 = vmatpush1.bf16.msra.mxu0 0
        %4938 = vmatprep.subr.bf16.mxu0 0
        %4939 = vmatpush1.bf16.msra.mxu0 0
        %4940 = vmatprep.subr.bf16.mxu0 0
        %4941 = vmatpush1.bf16.msra.mxu0 0
        %4942 = vmatprep.subr.bf16.mxu0 0
        %4943 = vmatpush1.bf16.msra.mxu0 0
        %4944 = vmatprep.subr.bf16.mxu0 0
        %4945 = vmatpush1.bf16.msra.mxu0 0
        %4946 = vmatprep.subr.bf16.mxu0 0
        %4947 = vmatpush1.bf16.msra.mxu0 0
        %4948 = vmatprep.subr.bf16.mxu0 0
        %4949 = vmatpush1.bf16.msra.mxu0 0
        %4950 = vmatprep.subr.bf16.mxu0 0
        %4951 = vmatpush1.bf16.msra.mxu0 0
        %4952 = vmatprep.subr.bf16.mxu0 0
        %4953 = vmatpush1.bf16.msra.mxu0 0
        %4954 = vmatprep.subr.bf16.mxu0 0
        %4955 = vmatpush1.bf16.msra.mxu0 0
        %4956 = vmatprep.subr.bf16.mxu0 0
        %4957 = vmatpush1.bf16.msra.mxu0 0
        %4958 = vmatprep.subr.bf16.mxu0 0
        %4959 = vmatpush1.bf16.msra.mxu0 0
        %4960 = vmatprep.mubr.bf16.mxu0 0
        %4961 = vmatmul.mubr.bf16.gmra.mrb[0].mxu0 %v4902
        %v4962 = vpop.f32.mrb[0].mxu0
        %v4963 = vadd.f32 0.0, %v4962
        %v4964 = vpop.f32.mrb[0].mxu0
        %v4965 = vpop.f32.mrb[0].mxu0
        %v4966 = vadd.f32 0.0, %v4965
        %v4967 = vpop.f32.mrb[0].mxu0
        %4968 = vmatprep.mubr.bf16.mxu0 0
        %4969 = vmatmul.mubr.bf16.gmra.mrb[0].mxu0 %v4905
        %v4970 = vpop.f32.mrb[0].mxu0
        %v4971 = vadd.f32 0.0, %v4970
        %v4972 = vpop.f32.mrb[0].mxu0
        %v4973 = vpop.f32.mrb[0].mxu0
        %v4974 = vadd.f32 0.0, %v4973
        %v4975 = vpop.f32.mrb[0].mxu0
        %4976 = vmatprep.mubr.bf16.mxu0 0
        %4977 = vmatmul.mubr.bf16.gmra.mrb[0].mxu0 %v4908
        %v4978 = vpop.f32.mrb[0].mxu0
        %v4979 = vadd.f32 0.0, %v4978
        %v4980 = vpop.f32.mrb[0].mxu0
        %v4981 = vpop.f32.mrb[0].mxu0
        %v4982 = vadd.f32 0.0, %v4981
        %v4983 = vpop.f32.mrb[0].mxu0
        %4984 = vmatprep.mubr.bf16.mxu0 0
        %4985 = vmatmul.mubr.bf16.gmra.mrb[0].mxu0 %v4911
        %v4986 = vpop.f32.mrb[0].mxu0
        %v4987 = vadd.f32 0.0, %v4986
        %v4988 = vpop.f32.mrb[0].mxu0
        %v4989 = vpop.f32.mrb[0].mxu0
        %v4990 = vadd.f32 0.0, %v4989
        %v4991 = vpop.f32.mrb[0].mxu0
        %4992 = vmatprep.mubr.bf16.mxu0 0
        %4993 = vmatmul.mubr.bf16.gmra.mrb[0].mxu0 %v4914
        %v4994 = vpop.f32.mrb[0].mxu0
        %v4995 = vadd.f32 0.0, %v4994
        %v4996 = vpop.f32.mrb[0].mxu0
        %v4997 = vpop.f32.mrb[0].mxu0
        %v4998 = vadd.f32 0.0, %v4997
        %v4999 = vpop.f32.mrb[0].mxu0
        %5000 = vmatprep.mubr.bf16.mxu0 0
        %5001 = vmatmul.mubr.bf16.gmra.mrb[0].mxu0 %v4917
        %v5002 = vpop.f32.mrb[0].mxu0
        %v5003 = vadd.f32 0.0, %v5002
        %v5004 = vpop.f32.mrb[0].mxu0
        %v5005 = vpop.f32.mrb[0].mxu0
        %v5006 = vadd.f32 0.0, %v5005
        %v5007 = vpop.f32.mrb[0].mxu0
        %5008 = vmatprep.mubr.bf16.mxu0 0
        %5009 = vmatmul.mubr.bf16.gmra.mrb[0].mxu0 %v4920
        %v5010 = vpop.f32.mrb[0].mxu0
        %v5011 = vadd.f32 0.0, %v5010
        %v5012 = vpop.f32.mrb[0].mxu0
        %v5013 = vpop.f32.mrb[0].mxu0
        %v5014 = vadd.f32 0.0, %v5013
        %v5015 = vpop.f32.mrb[0].mxu0
        %5016 = vmatprep.mubr.bf16.mxu0 0
        %5017 = vmatmul.mubr.bf16.gmra.mrb[0].mxu0 %v4923
        %v5018 = vpop.f32.mrb[0].mxu0
        %v5019 = vadd.f32 0.0, %v5018
        %v5020 = vpop.f32.mrb[0].mxu0
        %v5021 = vpop.f32.mrb[0].mxu0
        %v5022 = vadd.f32 0.0, %v5021
        %v5023 = vpop.f32.mrb[0].mxu0
        %5024 = vdwg.mxu0
        %v5025 = vadd.f32 %v4865, %v4963
        %v5026 = vadd.f32 %v4866, %v4966
        %v5027 = vadd.f32 %v4867, %v4971
        %v5028 = vadd.f32 %v4868, %v4974
        %v5029 = vadd.f32 %v4869, %v4979
        %v5030 = vadd.f32 %v4870, %v4982
        %v5031 = vadd.f32 %v4871, %v4987
        %v5032 = vadd.f32 %v4872, %v4990
        %v5033 = vadd.f32 %v4873, %v4995
        %v5034 = vadd.f32 %v4874, %v4998
        %v5035 = vadd.f32 %v4875, %v5003
        %v5036 = vadd.f32 %v4876, %v5006
        %v5037 = vadd.f32 %v4877, %v5011
        %v5038 = vadd.f32 %v4878, %v5014
        %v5039 = vadd.f32 %v4879, %v5019
        %v5040 = vadd.f32 %v4880, %v5022
        %v5041 = vpack.c.bf16 %v696, %v4568
        %s5042 = scalar_lea.vmem %s3, 192
        %v5043 = vld [vmem:[%s5042] sm:$0xf]
        %v5044 = vld [vmem:[%s5042 + $0x4] sm:$0x3]
        %v5047 = vunpack.c.l.b16 %v5043
        %v5048 = vunpack.c.l.b16 %v5044
        %v5049 = vpack.c.b16 %v5048, %v5047
        %v5051 = vsel %vm738, %v5041, 0
        %v5054 = vsel %vm763, %v5049, 0
        %5056 = vmatprep.subr.bf16.mxu0 0
        %5057 = vmatpush1.bf16.msra.mxu0 %v5054
        %5058 = vmatprep.subr.bf16.mxu0 0
        %5059 = vmatpush1.bf16.msra.mxu0 0
        %5060 = vmatprep.subr.bf16.mxu0 0
        %5061 = vmatpush1.bf16.msra.mxu0 0
        %5062 = vmatprep.subr.bf16.mxu0 0
        %5063 = vmatpush1.bf16.msra.mxu0 0
        %5064 = vmatprep.subr.bf16.mxu0 0
        %5065 = vmatpush1.bf16.msra.mxu0 0
        %5066 = vmatprep.subr.bf16.mxu0 0
        %5067 = vmatpush1.bf16.msra.mxu0 0
        %5068 = vmatprep.subr.bf16.mxu0 0
        %5069 = vmatpush1.bf16.msra.mxu0 0
        %5070 = vmatprep.subr.bf16.mxu0 0
        %5071 = vmatpush1.bf16.msra.mxu0 0
        %5072 = vmatprep.subr.bf16.mxu0 0
        %5073 = vmatpush1.bf16.msra.mxu0 0
        %5074 = vmatprep.subr.bf16.mxu0 0
        %5075 = vmatpush1.bf16.msra.mxu0 0
        %5076 = vmatprep.subr.bf16.mxu0 0
        %5077 = vmatpush1.bf16.msra.mxu0 0
        %5078 = vmatprep.subr.bf16.mxu0 0
        %5079 = vmatpush1.bf16.msra.mxu0 0
        %5080 = vmatprep.subr.bf16.mxu0 0
        %5081 = vmatpush1.bf16.msra.mxu0 0
        %5082 = vmatprep.subr.bf16.mxu0 0
        %5083 = vmatpush1.bf16.msra.mxu0 0
        %5084 = vmatprep.subr.bf16.mxu0 0
        %5085 = vmatpush1.bf16.msra.mxu0 0
        %5086 = vmatprep.subr.bf16.mxu0 0
        %5087 = vmatpush1.bf16.msra.mxu0 0
        %5088 = vmatprep.mubr.bf16.mxu0 0
        %5089 = vmatmul.mubr.bf16.gmra.mrb[0].mxu0 %v4228
        %v5090 = vpop.f32.mrb[0].mxu0
        %v5091 = vadd.f32 0.0, %v5090
        %v5092 = vpop.f32.mrb[0].mxu0
        %v5093 = vpop.f32.mrb[0].mxu0
        %v5094 = vadd.f32 0.0, %v5093
        %v5095 = vpop.f32.mrb[0].mxu0
        %5096 = vmatprep.mubr.bf16.mxu0 0
        %5097 = vmatmul.mubr.bf16.gmra.mrb[0].mxu0 %v4231
        %v5098 = vpop.f32.mrb[0].mxu0
        %v5099 = vadd.f32 0.0, %v5098
        %v5100 = vpop.f32.mrb[0].mxu0
        %v5101 = vpop.f32.mrb[0].mxu0
        %v5102 = vadd.f32 0.0, %v5101
        %v5103 = vpop.f32.mrb[0].mxu0
        %5104 = vmatprep.mubr.bf16.mxu0 0
        %5105 = vmatmul.mubr.bf16.gmra.mrb[0].mxu0 %v4234
        %v5106 = vpop.f32.mrb[0].mxu0
        %v5107 = vadd.f32 0.0, %v5106
        %v5108 = vpop.f32.mrb[0].mxu0
        %v5109 = vpop.f32.mrb[0].mxu0
        %v5110 = vadd.f32 0.0, %v5109
        %v5111 = vpop.f32.mrb[0].mxu0
        %5112 = vmatprep.mubr.bf16.mxu0 0
        %5113 = vmatmul.mubr.bf16.gmra.mrb[0].mxu0 %v4237
        %v5114 = vpop.f32.mrb[0].mxu0
        %v5115 = vadd.f32 0.0, %v5114
        %v5116 = vpop.f32.mrb[0].mxu0
        %v5117 = vpop.f32.mrb[0].mxu0
        %v5118 = vadd.f32 0.0, %v5117
        %v5119 = vpop.f32.mrb[0].mxu0
        %5120 = vmatprep.mubr.bf16.mxu0 0
        %5121 = vmatmul.mubr.bf16.gmra.mrb[0].mxu0 %v4240
        %v5122 = vpop.f32.mrb[0].mxu0
        %v5123 = vadd.f32 0.0, %v5122
        %v5124 = vpop.f32.mrb[0].mxu0
        %v5125 = vpop.f32.mrb[0].mxu0
        %v5126 = vadd.f32 0.0, %v5125
        %v5127 = vpop.f32.mrb[0].mxu0
        %5128 = vmatprep.mubr.bf16.mxu0 0
        %5129 = vmatmul.mubr.bf16.gmra.mrb[0].mxu0 %v4243
        %v5130 = vpop.f32.mrb[0].mxu0
        %v5131 = vadd.f32 0.0, %v5130
        %v5132 = vpop.f32.mrb[0].mxu0
        %v5133 = vpop.f32.mrb[0].mxu0
        %v5134 = vadd.f32 0.0, %v5133
        %v5135 = vpop.f32.mrb[0].mxu0
        %5136 = vmatprep.mubr.bf16.mxu0 0
        %5137 = vmatmul.mubr.bf16.gmra.mrb[0].mxu0 %v4246
        %v5138 = vpop.f32.mrb[0].mxu0
        %v5139 = vadd.f32 0.0, %v5138
        %v5140 = vpop.f32.mrb[0].mxu0
        %v5141 = vpop.f32.mrb[0].mxu0
        %v5142 = vadd.f32 0.0, %v5141
        %v5143 = vpop.f32.mrb[0].mxu0
        %5144 = vmatprep.mubr.bf16.mxu0 0
        %5145 = vmatmul.mubr.bf16.gmra.mrb[0].mxu0 %v5051
        %v5146 = vpop.f32.mrb[0].mxu0
        %v5147 = vadd.f32 0.0, %v5146
        %v5148 = vpop.f32.mrb[0].mxu0
        %v5149 = vpop.f32.mrb[0].mxu0
        %v5150 = vadd.f32 0.0, %v5149
        %v5151 = vpop.f32.mrb[0].mxu0
        %5152 = vdwg.mxu0
        %v5153 = vadd.f32 %v5025, %v5091
        %v5154 = vadd.f32 %v5026, %v5094
        %v5155 = vadd.f32 %v5027, %v5099
        %v5156 = vadd.f32 %v5028, %v5102
        %v5157 = vadd.f32 %v5029, %v5107
        %v5158 = vadd.f32 %v5030, %v5110
        %v5159 = vadd.f32 %v5031, %v5115
        %v5160 = vadd.f32 %v5032, %v5118
        %v5161 = vadd.f32 %v5033, %v5123
        %v5162 = vadd.f32 %v5034, %v5126
        %v5163 = vadd.f32 %v5035, %v5131
        %v5164 = vadd.f32 %v5036, %v5134
        %v5165 = vadd.f32 %v5037, %v5139
        %v5166 = vadd.f32 %v5038, %v5142
        %v5167 = vadd.f32 %v5039, %v5147
        %v5168 = vadd.f32 %v5040, %v5150
        %v5169 = vpack.c.bf16 0.0, %v3992
        %s5170 = scalar_lea.vmem %s3, 200
        %v5171 = vld [vmem:[%s5170] sm:$0xf]
        %v5172 = vld [vmem:[%s5170 + $0x4] sm:$0x3]
        %v5175 = vunpack.c.l.b16 %v5171
        %v5176 = vunpack.c.l.b16 %v5172
        %v5177 = vpack.c.b16 %v5176, %v5175
        %v5179 = vsel %vm738, %v5169, 0
        %v5182 = vsel %vm763, %v5177, 0
        %5184 = vmatprep.subr.bf16.mxu0 0
        %5185 = vmatpush1.bf16.msra.mxu0 %v5182
        %5186 = vmatprep.subr.bf16.mxu0 0
        %5187 = vmatpush1.bf16.msra.mxu0 0
        %5188 = vmatprep.subr.bf16.mxu0 0
        %5189 = vmatpush1.bf16.msra.mxu0 0
        %5190 = vmatprep.subr.bf16.mxu0 0
        %5191 = vmatpush1.bf16.msra.mxu0 0
        %5192 = vmatprep.subr.bf16.mxu0 0
        %5193 = vmatpush1.bf16.msra.mxu0 0
        %5194 = vmatprep.subr.bf16.mxu0 0
        %5195 = vmatpush1.bf16.msra.mxu0 0
        %5196 = vmatprep.subr.bf16.mxu0 0
        %5197 = vmatpush1.bf16.msra.mxu0 0
        %5198 = vmatprep.subr.bf16.mxu0 0
        %5199 = vmatpush1.bf16.msra.mxu0 0
        %5200 = vmatprep.subr.bf16.mxu0 0
        %5201 = vmatpush1.bf16.msra.mxu0 0
        %5202 = vmatprep.subr.bf16.mxu0 0
        %5203 = vmatpush1.bf16.msra.mxu0 0
        %5204 = vmatprep.subr.bf16.mxu0 0
        %5205 = vmatpush1.bf16.msra.mxu0 0
        %5206 = vmatprep.subr.bf16.mxu0 0
        %5207 = vmatpush1.bf16.msra.mxu0 0
        %5208 = vmatprep.subr.bf16.mxu0 0
        %5209 = vmatpush1.bf16.msra.mxu0 0
        %5210 = vmatprep.subr.bf16.mxu0 0
        %5211 = vmatpush1.bf16.msra.mxu0 0
        %5212 = vmatprep.subr.bf16.mxu0 0
        %5213 = vmatpush1.bf16.msra.mxu0 0
        %5214 = vmatprep.subr.bf16.mxu0 0
        %5215 = vmatpush1.bf16.msra.mxu0 0
        %5216 = vmatprep.mubr.bf16.mxu0 0
        %5217 = vmatmul.mubr.bf16.gmra.mrb[0].mxu0 %v4099
        %v5218 = vpop.f32.mrb[0].mxu0
        %v5219 = vadd.f32 0.0, %v5218
        %v5220 = vpop.f32.mrb[0].mxu0
        %v5221 = vpop.f32.mrb[0].mxu0
        %v5222 = vadd.f32 0.0, %v5221
        %v5223 = vpop.f32.mrb[0].mxu0
        %5224 = vmatprep.mubr.bf16.mxu0 0
        %5225 = vmatmul.mubr.bf16.gmra.mrb[0].mxu0 %v4102
        %v5226 = vpop.f32.mrb[0].mxu0
        %v5227 = vadd.f32 0.0, %v5226
        %v5228 = vpop.f32.mrb[0].mxu0
        %v5229 = vpop.f32.mrb[0].mxu0
        %v5230 = vadd.f32 0.0, %v5229
        %v5231 = vpop.f32.mrb[0].mxu0
        %5232 = vmatprep.mubr.bf16.mxu0 0
        %5233 = vmatmul.mubr.bf16.gmra.mrb[0].mxu0 %v4105
        %v5234 = vpop.f32.mrb[0].mxu0
        %v5235 = vadd.f32 0.0, %v5234
        %v5236 = vpop.f32.mrb[0].mxu0
        %v5237 = vpop.f32.mrb[0].mxu0
        %v5238 = vadd.f32 0.0, %v5237
        %v5239 = vpop.f32.mrb[0].mxu0
        %5240 = vmatprep.mubr.bf16.mxu0 0
        %5241 = vmatmul.mubr.bf16.gmra.mrb[0].mxu0 %v4108
        %v5242 = vpop.f32.mrb[0].mxu0
        %v5243 = vadd.f32 0.0, %v5242
        %v5244 = vpop.f32.mrb[0].mxu0
        %v5245 = vpop.f32.mrb[0].mxu0
        %v5246 = vadd.f32 0.0, %v5245
        %v5247 = vpop.f32.mrb[0].mxu0
        %5248 = vmatprep.mubr.bf16.mxu0 0
        %5249 = vmatmul.mubr.bf16.gmra.mrb[0].mxu0 %v4111
        %v5250 = vpop.f32.mrb[0].mxu0
        %v5251 = vadd.f32 0.0, %v5250
        %v5252 = vpop.f32.mrb[0].mxu0
        %v5253 = vpop.f32.mrb[0].mxu0
        %v5254 = vadd.f32 0.0, %v5253
        %v5255 = vpop.f32.mrb[0].mxu0
        %5256 = vmatprep.mubr.bf16.mxu0 0
        %5257 = vmatmul.mubr.bf16.gmra.mrb[0].mxu0 %v4114
        %v5258 = vpop.f32.mrb[0].mxu0
        %v5259 = vadd.f32 0.0, %v5258
        %v5260 = vpop.f32.mrb[0].mxu0
        %v5261 = vpop.f32.mrb[0].mxu0
        %v5262 = vadd.f32 0.0, %v5261
        %v5263 = vpop.f32.mrb[0].mxu0
        %5264 = vmatprep.mubr.bf16.mxu0 0
        %5265 = vmatmul.mubr.bf16.gmra.mrb[0].mxu0 %v4117
        %v5266 = vpop.f32.mrb[0].mxu0
        %v5267 = vadd.f32 0.0, %v5266
        %v5268 = vpop.f32.mrb[0].mxu0
        %v5269 = vpop.f32.mrb[0].mxu0
        %v5270 = vadd.f32 0.0, %v5269
        %v5271 = vpop.f32.mrb[0].mxu0
        %5272 = vmatprep.mubr.bf16.mxu0 0
        %5273 = vmatmul.mubr.bf16.gmra.mrb[0].mxu0 %v5179
        %v5274 = vpop.f32.mrb[0].mxu0
        %v5275 = vadd.f32 0.0, %v5274
        %v5276 = vpop.f32.mrb[0].mxu0
        %v5277 = vpop.f32.mrb[0].mxu0
        %v5278 = vadd.f32 0.0, %v5277
        %v5279 = vpop.f32.mrb[0].mxu0
        %5280 = vdwg.mxu0
        %v5281 = vadd.f32 %v5153, %v5219
        %v5282 = vadd.f32 %v5154, %v5222
        %v5283 = vadd.f32 %v5155, %v5227
        %v5284 = vadd.f32 %v5156, %v5230
        %v5285 = vadd.f32 %v5157, %v5235
        %v5286 = vadd.f32 %v5158, %v5238
        %v5287 = vadd.f32 %v5159, %v5243
        %v5288 = vadd.f32 %v5160, %v5246
        %v5289 = vadd.f32 %v5161, %v5251
        %v5290 = vadd.f32 %v5162, %v5254
        %v5291 = vadd.f32 %v5163, %v5259
        %v5292 = vadd.f32 %v5164, %v5262
        %v5293 = vadd.f32 %v5165, %v5267
        %v5294 = vadd.f32 %v5166, %v5270
        %v5295 = vadd.f32 %v5167, %v5275
        %v5296 = vadd.f32 %v5168, %v5278
        %v5297 = vpack.c.bf16 %v1042, %v4884
        %s5298 = scalar_lea.vmem %s3, 208
        %v5299 = vld [vmem:[%s5298] sm:$0xf]
        %v5300 = vld [vmem:[%s5298 + $0x4] sm:$0x3]
        %v5303 = vunpack.c.l.b16 %v5299
        %v5304 = vunpack.c.l.b16 %v5300
        %v5305 = vpack.c.b16 %v5304, %v5303
        %v5307 = vsel %vm738, %v5297, 0
        %v5310 = vsel %vm763, %v5305, 0
        %5312 = vmatprep.subr.bf16.mxu0 0
        %5313 = vmatpush1.bf16.msra.mxu0 %v5310
        %5314 = vmatprep.subr.bf16.mxu0 0
        %5315 = vmatpush1.bf16.msra.mxu0 0
        %5316 = vmatprep.subr.bf16.mxu0 0
        %5317 = vmatpush1.bf16.msra.mxu0 0
        %5318 = vmatprep.subr.bf16.mxu0 0
        %5319 = vmatpush1.bf16.msra.mxu0 0
        %5320 = vmatprep.subr.bf16.mxu0 0
        %5321 = vmatpush1.bf16.msra.mxu0 0
        %5322 = vmatprep.subr.bf16.mxu0 0
        %5323 = vmatpush1.bf16.msra.mxu0 0
        %5324 = vmatprep.subr.bf16.mxu0 0
        %5325 = vmatpush1.bf16.msra.mxu0 0
        %5326 = vmatprep.subr.bf16.mxu0 0
        %5327 = vmatpush1.bf16.msra.mxu0 0
        %5328 = vmatprep.subr.bf16.mxu0 0
        %5329 = vmatpush1.bf16.msra.mxu0 0
        %5330 = vmatprep.subr.bf16.mxu0 0
        %5331 = vmatpush1.bf16.msra.mxu0 0
        %5332 = vmatprep.subr.bf16.mxu0 0
        %5333 = vmatpush1.bf16.msra.mxu0 0
        %5334 = vmatprep.subr.bf16.mxu0 0
        %5335 = vmatpush1.bf16.msra.mxu0 0
        %5336 = vmatprep.subr.bf16.mxu0 0
        %5337 = vmatpush1.bf16.msra.mxu0 0
        %5338 = vmatprep.subr.bf16.mxu0 0
        %5339 = vmatpush1.bf16.msra.mxu0 0
        %5340 = vmatprep.subr.bf16.mxu0 0
        %5341 = vmatpush1.bf16.msra.mxu0 0
        %5342 = vmatprep.subr.bf16.mxu0 0
        %5343 = vmatpush1.bf16.msra.mxu0 0
        %5344 = vmatprep.mubr.bf16.mxu0 0
        %5345 = vmatmul.mubr.bf16.gmra.mrb[0].mxu0 %v4428
        %v5346 = vpop.f32.mrb[0].mxu0
        %v5347 = vadd.f32 0.0, %v5346
        %v5348 = vpop.f32.mrb[0].mxu0
        %v5349 = vpop.f32.mrb[0].mxu0
        %v5350 = vadd.f32 0.0, %v5349
        %v5351 = vpop.f32.mrb[0].mxu0
        %5352 = vmatprep.mubr.bf16.mxu0 0
        %5353 = vmatmul.mubr.bf16.gmra.mrb[0].mxu0 %v4431
        %v5354 = vpop.f32.mrb[0].mxu0
        %v5355 = vadd.f32 0.0, %v5354
        %v5356 = vpop.f32.mrb[0].mxu0
        %v5357 = vpop.f32.mrb[0].mxu0
        %v5358 = vadd.f32 0.0, %v5357
        %v5359 = vpop.f32.mrb[0].mxu0
        %5360 = vmatprep.mubr.bf16.mxu0 0
        %5361 = vmatmul.mubr.bf16.gmra.mrb[0].mxu0 %v4434
        %v5362 = vpop.f32.mrb[0].mxu0
        %v5363 = vadd.f32 0.0, %v5362
        %v5364 = vpop.f32.mrb[0].mxu0
        %v5365 = vpop.f32.mrb[0].mxu0
        %v5366 = vadd.f32 0.0, %v5365
        %v5367 = vpop.f32.mrb[0].mxu0
        %5368 = vmatprep.mubr.bf16.mxu0 0
        %5369 = vmatmul.mubr.bf16.gmra.mrb[0].mxu0 %v4437
        %v5370 = vpop.f32.mrb[0].mxu0
        %v5371 = vadd.f32 0.0, %v5370
        %v5372 = vpop.f32.mrb[0].mxu0
        %v5373 = vpop.f32.mrb[0].mxu0
        %v5374 = vadd.f32 0.0, %v5373
        %v5375 = vpop.f32.mrb[0].mxu0
        %5376 = vmatprep.mubr.bf16.mxu0 0
        %5377 = vmatmul.mubr.bf16.gmra.mrb[0].mxu0 %v4440
        %v5378 = vpop.f32.mrb[0].mxu0
        %v5379 = vadd.f32 0.0, %v5378
        %v5380 = vpop.f32.mrb[0].mxu0
        %v5381 = vpop.f32.mrb[0].mxu0
        %v5382 = vadd.f32 0.0, %v5381
        %v5383 = vpop.f32.mrb[0].mxu0
        %5384 = vmatprep.mubr.bf16.mxu0 0
        %5385 = vmatmul.mubr.bf16.gmra.mrb[0].mxu0 %v4443
        %v5386 = vpop.f32.mrb[0].mxu0
        %v5387 = vadd.f32 0.0, %v5386
        %v5388 = vpop.f32.mrb[0].mxu0
        %v5389 = vpop.f32.mrb[0].mxu0
        %v5390 = vadd.f32 0.0, %v5389
        %v5391 = vpop.f32.mrb[0].mxu0
        %5392 = vmatprep.mubr.bf16.mxu0 0
        %5393 = vmatmul.mubr.bf16.gmra.mrb[0].mxu0 %v4446
        %v5394 = vpop.f32.mrb[0].mxu0
        %v5395 = vadd.f32 0.0, %v5394
        %v5396 = vpop.f32.mrb[0].mxu0
        %v5397 = vpop.f32.mrb[0].mxu0
        %v5398 = vadd.f32 0.0, %v5397
        %v5399 = vpop.f32.mrb[0].mxu0
        %5400 = vmatprep.mubr.bf16.mxu0 0
        %5401 = vmatmul.mubr.bf16.gmra.mrb[0].mxu0 %v5307
        %v5402 = vpop.f32.mrb[0].mxu0
        %v5403 = vadd.f32 0.0, %v5402
        %v5404 = vpop.f32.mrb[0].mxu0
        %v5405 = vpop.f32.mrb[0].mxu0
        %v5406 = vadd.f32 0.0, %v5405
        %v5407 = vpop.f32.mrb[0].mxu0
        %5408 = vdwg.mxu0
        %v5409 = vadd.f32 %v5281, %v5347
        %v5410 = vadd.f32 %v5282, %v5350
        %v5411 = vadd.f32 %v5283, %v5355
        %v5412 = vadd.f32 %v5284, %v5358
        %v5413 = vadd.f32 %v5285, %v5363
        %v5414 = vadd.f32 %v5286, %v5366
        %v5415 = vadd.f32 %v5287, %v5371
        %v5416 = vadd.f32 %v5288, %v5374
        %v5417 = vadd.f32 %v5289, %v5379
        %v5418 = vadd.f32 %v5290, %v5382
        %v5419 = vadd.f32 %v5291, %v5387
        %v5420 = vadd.f32 %v5292, %v5390
        %v5421 = vadd.f32 %v5293, %v5395
        %v5422 = vadd.f32 %v5294, %v5398
        %v5423 = vadd.f32 %v5295, %v5403
        %v5424 = vadd.f32 %v5296, %v5406
        %s5425 = scalar_lea.vmem %s4, 2
        %v5426 = vld [vmem:[%s5425] sm:$0x1]
        %v5428 = vlaneseq
        %v5429 = vshrl.u32 %v5428, 7
        %v5430 = vsub.s32 0, %v5429
        %v5431 = vrot.slane %v5426, %v5430
        %v5433 = vadd.f32 %v5409, %v5431
        %v5434 = vadd.f32 %v5410, %v5431
        %v5435 = vadd.f32 %v5411, %v5431
        %v5436 = vadd.f32 %v5412, %v5431
        %v5437 = vadd.f32 %v5413, %v5431
        %v5438 = vadd.f32 %v5414, %v5431
        %v5439 = vadd.f32 %v5415, %v5431
        %v5440 = vadd.f32 %v5416, %v5431
        %v5441 = vadd.f32 %v5417, %v5431
        %v5442 = vadd.f32 %v5418, %v5431
        %v5443 = vadd.f32 %v5419, %v5431
        %v5444 = vadd.f32 %v5420, %v5431
        %v5445 = vadd.f32 %v5421, %v5431
        %v5446 = vadd.f32 %v5422, %v5431
        %v5447 = vadd.f32 %v5423, %v5431
        %v5448 = vadd.f32 %v5424, %v5431
        %v5449 = vmax.f32 %v5433, 0.0
        %v5450 = vmax.f32 %v5434, 0.0
        %v5451 = vmax.f32 %v5435, 0.0
        %v5452 = vmax.f32 %v5436, 0.0
        %v5453 = vmax.f32 %v5437, 0.0
        %v5454 = vmax.f32 %v5438, 0.0
        %v5455 = vmax.f32 %v5439, 0.0
        %v5456 = vmax.f32 %v5440, 0.0
        %v5457 = vmax.f32 %v5441, 0.0
        %v5458 = vmax.f32 %v5442, 0.0
        %v5459 = vmax.f32 %v5443, 0.0
        %v5460 = vmax.f32 %v5444, 0.0
        %v5461 = vmax.f32 %v5445, 0.0
        %v5462 = vmax.f32 %v5446, 0.0
        %v5463 = vmax.f32 %v5447, 0.0
        %v5464 = vmax.f32 %v5448, 0.0
        %v5465 = vpack.c.bf16 %v5450, %v5449
        %v5466 = vpack.c.bf16 %v5452, %v5451
        %v5467 = vpack.c.bf16 %v5454, %v5453
        %v5468 = vpack.c.bf16 %v5456, %v5455
        %v5469 = vpack.c.bf16 %v5458, %v5457
        %v5470 = vpack.c.bf16 %v5460, %v5459
        %v5471 = vpack.c.bf16 %v5462, %v5461
        %v5472 = vpack.c.bf16 %v5464, %v5463
        %s5473 = scalar_lea.vmem %s5, 16
        %v5474 = vld [vmem:[%s5473] sm:$0xf]
        %v5475 = vld [vmem:[%s5473 + $0x4] sm:$0x3]
        %v5478 = vunpack.c.l.b16 %v5474
        %v5479 = vunpack.c.l.b16 %v5475
        %v5480 = vpack.c.b16 %v5479, %v5478
        %v5482 = vsel %vm738, %v5465, 0
        %v5485 = vsel %vm738, %v5466, 0
        %v5488 = vsel %vm738, %v5467, 0
        %v5491 = vsel %vm738, %v5468, 0
        %v5494 = vsel %vm738, %v5469, 0
        %v5497 = vsel %vm738, %v5470, 0
        %v5500 = vsel %vm738, %v5471, 0
        %v5503 = vsel %vm738, %v5472, 0
        %v5506 = vsel %vm763, %v5480, 0
        %5508 = vmatprep.subr.bf16.mxu0 0
        %5509 = vmatpush1.bf16.msra.mxu0 %v5506
        %5510 = vmatprep.subr.bf16.mxu0 0
        %5511 = vmatpush1.bf16.msra.mxu0 0
        %5512 = vmatprep.subr.bf16.mxu0 0
        %5513 = vmatpush1.bf16.msra.mxu0 0
        %5514 = vmatprep.subr.bf16.mxu0 0
        %5515 = vmatpush1.bf16.msra.mxu0 0
        %5516 = vmatprep.subr.bf16.mxu0 0
        %5517 = vmatpush1.bf16.msra.mxu0 0
        %5518 = vmatprep.subr.bf16.mxu0 0
        %5519 = vmatpush1.bf16.msra.mxu0 0
        %5520 = vmatprep.subr.bf16.mxu0 0
        %5521 = vmatpush1.bf16.msra.mxu0 0
        %5522 = vmatprep.subr.bf16.mxu0 0
        %5523 = vmatpush1.bf16.msra.mxu0 0
        %5524 = vmatprep.subr.bf16.mxu0 0
        %5525 = vmatpush1.bf16.msra.mxu0 0
        %5526 = vmatprep.subr.bf16.mxu0 0
        %5527 = vmatpush1.bf16.msra.mxu0 0
        %5528 = vmatprep.subr.bf16.mxu0 0
        %5529 = vmatpush1.bf16.msra.mxu0 0
        %5530 = vmatprep.subr.bf16.mxu0 0
        %5531 = vmatpush1.bf16.msra.mxu0 0
        %5532 = vmatprep.subr.bf16.mxu0 0
        %5533 = vmatpush1.bf16.msra.mxu0 0
        %5534 = vmatprep.subr.bf16.mxu0 0
        %5535 = vmatpush1.bf16.msra.mxu0 0
        %5536 = vmatprep.subr.bf16.mxu0 0
        %5537 = vmatpush1.bf16.msra.mxu0 0
        %5538 = vmatprep.subr.bf16.mxu0 0
        %5539 = vmatpush1.bf16.msra.mxu0 0
        %5540 = vmatprep.mubr.bf16.mxu0 0
        %5541 = vmatmul.mubr.bf16.gmra.mrb[0].mxu0 %v5482
        %v5542 = vpop.f32.mrb[0].mxu0
        %v5543 = vadd.f32 0.0, %v5542
        %v5544 = vpop.f32.mrb[0].mxu0
        %v5545 = vpop.f32.mrb[0].mxu0
        %v5546 = vadd.f32 0.0, %v5545
        %v5547 = vpop.f32.mrb[0].mxu0
        %5548 = vmatprep.mubr.bf16.mxu0 0
        %5549 = vmatmul.mubr.bf16.gmra.mrb[0].mxu0 %v5485
        %v5550 = vpop.f32.mrb[0].mxu0
        %v5551 = vadd.f32 0.0, %v5550
        %v5552 = vpop.f32.mrb[0].mxu0
        %v5553 = vpop.f32.mrb[0].mxu0
        %v5554 = vadd.f32 0.0, %v5553
        %v5555 = vpop.f32.mrb[0].mxu0
        %5556 = vmatprep.mubr.bf16.mxu0 0
        %5557 = vmatmul.mubr.bf16.gmra.mrb[0].mxu0 %v5488
        %v5558 = vpop.f32.mrb[0].mxu0
        %v5559 = vadd.f32 0.0, %v5558
        %v5560 = vpop.f32.mrb[0].mxu0
        %v5561 = vpop.f32.mrb[0].mxu0
        %v5562 = vadd.f32 0.0, %v5561
        %v5563 = vpop.f32.mrb[0].mxu0
        %5564 = vmatprep.mubr.bf16.mxu0 0
        %5565 = vmatmul.mubr.bf16.gmra.mrb[0].mxu0 %v5491
        %v5566 = vpop.f32.mrb[0].mxu0
        %v5567 = vadd.f32 0.0, %v5566
        %v5568 = vpop.f32.mrb[0].mxu0
        %v5569 = vpop.f32.mrb[0].mxu0
        %v5570 = vadd.f32 0.0, %v5569
        %v5571 = vpop.f32.mrb[0].mxu0
        %5572 = vmatprep.mubr.bf16.mxu0 0
        %5573 = vmatmul.mubr.bf16.gmra.mrb[0].mxu0 %v5494
        %v5574 = vpop.f32.mrb[0].mxu0
        %v5575 = vadd.f32 0.0, %v5574
        %v5576 = vpop.f32.mrb[0].mxu0
        %v5577 = vpop.f32.mrb[0].mxu0
        %v5578 = vadd.f32 0.0, %v5577
        %v5579 = vpop.f32.mrb[0].mxu0
        %5580 = vmatprep.mubr.bf16.mxu0 0
        %5581 = vmatmul.mubr.bf16.gmra.mrb[0].mxu0 %v5497
        %v5582 = vpop.f32.mrb[0].mxu0
        %v5583 = vadd.f32 0.0, %v5582
        %v5584 = vpop.f32.mrb[0].mxu0
        %v5585 = vpop.f32.mrb[0].mxu0
        %v5586 = vadd.f32 0.0, %v5585
        %v5587 = vpop.f32.mrb[0].mxu0
        %5588 = vmatprep.mubr.bf16.mxu0 0
        %5589 = vmatmul.mubr.bf16.gmra.mrb[0].mxu0 %v5500
        %v5590 = vpop.f32.mrb[0].mxu0
        %v5591 = vadd.f32 0.0, %v5590
        %v5592 = vpop.f32.mrb[0].mxu0
        %v5593 = vpop.f32.mrb[0].mxu0
        %v5594 = vadd.f32 0.0, %v5593
        %v5595 = vpop.f32.mrb[0].mxu0
        %5596 = vmatprep.mubr.bf16.mxu0 0
        %5597 = vmatmul.mubr.bf16.gmra.mrb[0].mxu0 %v5503
        %v5598 = vpop.f32.mrb[0].mxu0
        %v5599 = vadd.f32 0.0, %v5598
        %v5600 = vpop.f32.mrb[0].mxu0
        %v5601 = vpop.f32.mrb[0].mxu0
        %v5602 = vadd.f32 0.0, %v5601
        %v5603 = vpop.f32.mrb[0].mxu0
        %5604 = vdwg.mxu0
        %v5605 = vadd.f32 %v3867, %v5543
        %v5606 = vadd.f32 %v3870, %v5546
        %v5607 = vadd.f32 %v3875, %v5551
        %v5608 = vadd.f32 %v3878, %v5554
        %v5609 = vadd.f32 %v3883, %v5559
        %v5610 = vadd.f32 %v3886, %v5562
        %v5611 = vadd.f32 %v3891, %v5567
        %v5612 = vadd.f32 %v3894, %v5570
        %v5613 = vadd.f32 %v3899, %v5575
        %v5614 = vadd.f32 %v3902, %v5578
        %v5615 = vadd.f32 %v3907, %v5583
        %v5616 = vadd.f32 %v3910, %v5586
        %v5617 = vadd.f32 %v3915, %v5591
        %v5618 = vadd.f32 %v3918, %v5594
        %v5619 = vadd.f32 %v3923, %v5599
        %v5620 = vadd.f32 %v3926, %v5602
        %s5621 = scalar_lea.vmem %s5, 24
        %v5622 = vld [vmem:[%s5621] sm:$0xf]
        %v5623 = vld [vmem:[%s5621 + $0x4] sm:$0x3]
        %5632 = vrot.lane.b32.xlu0 %v1375, 92
        %v5633 = vpop.permute.xlu0 %5632
        %5634 = vrot.lane.b32.xlu0 %v1376, 92
        %v5635 = vpop.permute.xlu0 %5634
        %5636 = vrot.lane.b32.xlu0 %v1377, 92
        %v5637 = vpop.permute.xlu0 %5636
        %5638 = vrot.lane.b32.xlu0 %v1378, 92
        %v5639 = vpop.permute.xlu0 %5638
        %5640 = vrot.lane.b32.xlu0 %v1379, 92
        %v5641 = vpop.permute.xlu0 %5640
        %5642 = vrot.lane.b32.xlu0 %v1380, 92
        %v5643 = vpop.permute.xlu0 %5642
        %5644 = vrot.lane.b32.xlu0 %v1381, 92
        %v5645 = vpop.permute.xlu0 %5644
        %5646 = vrot.lane.b32.xlu0 %v1382, 92
        %v5647 = vpop.permute.xlu0 %5646
        %v5650 = vunpack.c.l.b16 %v5622
        %v5651 = vunpack.c.l.b16 %v5623
        %v5652 = vpack.c.b16 %v5651, %v5650
        %v5654 = vsel %vm738, %v5633, 0
        %v5657 = vsel %vm738, %v5635, 0
        %v5660 = vsel %vm738, %v5637, 0
        %v5663 = vsel %vm738, %v5639, 0
        %v5666 = vsel %vm738, %v5641, 0
        %v5669 = vsel %vm738, %v5643, 0
        %v5672 = vsel %vm738, %v5645, 0
        %v5675 = vsel %vm738, %v5647, 0
        %v5678 = vsel %vm763, %v5652, 0
        %5680 = vmatprep.subr.bf16.mxu0 0
        %5681 = vmatpush1.bf16.msra.mxu0 %v5678
        %5682 = vmatprep.subr.bf16.mxu0 0
        %5683 = vmatpush1.bf16.msra.mxu0 0
        %5684 = vmatprep.subr.bf16.mxu0 0
        %5685 = vmatpush1.bf16.msra.mxu0 0
        %5686 = vmatprep.subr.bf16.mxu0 0
        %5687 = vmatpush1.bf16.msra.mxu0 0
        %5688 = vmatprep.subr.bf16.mxu0 0
        %5689 = vmatpush1.bf16.msra.mxu0 0
        %5690 = vmatprep.subr.bf16.mxu0 0
        %5691 = vmatpush1.bf16.msra.mxu0 0
        %5692 = vmatprep.subr.bf16.mxu0 0
        %5693 = vmatpush1.bf16.msra.mxu0 0
        %5694 = vmatprep.subr.bf16.mxu0 0
        %5695 = vmatpush1.bf16.msra.mxu0 0
        %5696 = vmatprep.subr.bf16.mxu0 0
        %5697 = vmatpush1.bf16.msra.mxu0 0
        %5698 = vmatprep.subr.bf16.mxu0 0
        %5699 = vmatpush1.bf16.msra.mxu0 0
        %5700 = vmatprep.subr.bf16.mxu0 0
        %5701 = vmatpush1.bf16.msra.mxu0 0
        %5702 = vmatprep.subr.bf16.mxu0 0
        %5703 = vmatpush1.bf16.msra.mxu0 0
        %5704 = vmatprep.subr.bf16.mxu0 0
        %5705 = vmatpush1.bf16.msra.mxu0 0
        %5706 = vmatprep.subr.bf16.mxu0 0
        %5707 = vmatpush1.bf16.msra.mxu0 0
        %5708 = vmatprep.subr.bf16.mxu0 0
        %5709 = vmatpush1.bf16.msra.mxu0 0
        %5710 = vmatprep.subr.bf16.mxu0 0
        %5711 = vmatpush1.bf16.msra.mxu0 0
        %5712 = vmatprep.mubr.bf16.mxu0 0
        %5713 = vmatmul.mubr.bf16.gmra.mrb[0].mxu0 %v5654
        %v5714 = vpop.f32.mrb[0].mxu0
        %v5715 = vadd.f32 0.0, %v5714
        %v5716 = vpop.f32.mrb[0].mxu0
        %v5717 = vpop.f32.mrb[0].mxu0
        %v5718 = vadd.f32 0.0, %v5717
        %v5719 = vpop.f32.mrb[0].mxu0
        %5720 = vmatprep.mubr.bf16.mxu0 0
        %5721 = vmatmul.mubr.bf16.gmra.mrb[0].mxu0 %v5657
        %v5722 = vpop.f32.mrb[0].mxu0
        %v5723 = vadd.f32 0.0, %v5722
        %v5724 = vpop.f32.mrb[0].mxu0
        %v5725 = vpop.f32.mrb[0].mxu0
        %v5726 = vadd.f32 0.0, %v5725
        %v5727 = vpop.f32.mrb[0].mxu0
        %5728 = vmatprep.mubr.bf16.mxu0 0
        %5729 = vmatmul.mubr.bf16.gmra.mrb[0].mxu0 %v5660
        %v5730 = vpop.f32.mrb[0].mxu0
        %v5731 = vadd.f32 0.0, %v5730
        %v5732 = vpop.f32.mrb[0].mxu0
        %v5733 = vpop.f32.mrb[0].mxu0
        %v5734 = vadd.f32 0.0, %v5733
        %v5735 = vpop.f32.mrb[0].mxu0
        %5736 = vmatprep.mubr.bf16.mxu0 0
        %5737 = vmatmul.mubr.bf16.gmra.mrb[0].mxu0 %v5663
        %v5738 = vpop.f32.mrb[0].mxu0
        %v5739 = vadd.f32 0.0, %v5738
        %v5740 = vpop.f32.mrb[0].mxu0
        %v5741 = vpop.f32.mrb[0].mxu0
        %v5742 = vadd.f32 0.0, %v5741
        %v5743 = vpop.f32.mrb[0].mxu0
        %5744 = vmatprep.mubr.bf16.mxu0 0
        %5745 = vmatmul.mubr.bf16.gmra.mrb[0].mxu0 %v5666
        %v5746 = vpop.f32.mrb[0].mxu0
        %v5747 = vadd.f32 0.0, %v5746
        %v5748 = vpop.f32.mrb[0].mxu0
        %v5749 = vpop.f32.mrb[0].mxu0
        %v5750 = vadd.f32 0.0, %v5749
        %v5751 = vpop.f32.mrb[0].mxu0
        %5752 = vmatprep.mubr.bf16.mxu0 0
        %5753 = vmatmul.mubr.bf16.gmra.mrb[0].mxu0 %v5669
        %v5754 = vpop.f32.mrb[0].mxu0
        %v5755 = vadd.f32 0.0, %v5754
        %v5756 = vpop.f32.mrb[0].mxu0
        %v5757 = vpop.f32.mrb[0].mxu0
        %v5758 = vadd.f32 0.0, %v5757
        %v5759 = vpop.f32.mrb[0].mxu0
        %5760 = vmatprep.mubr.bf16.mxu0 0
        %5761 = vmatmul.mubr.bf16.gmra.mrb[0].mxu0 %v5672
        %v5762 = vpop.f32.mrb[0].mxu0
        %v5763 = vadd.f32 0.0, %v5762
        %v5764 = vpop.f32.mrb[0].mxu0
        %v5765 = vpop.f32.mrb[0].mxu0
        %v5766 = vadd.f32 0.0, %v5765
        %v5767 = vpop.f32.mrb[0].mxu0
        %5768 = vmatprep.mubr.bf16.mxu0 0
        %5769 = vmatmul.mubr.bf16.gmra.mrb[0].mxu0 %v5675
        %v5770 = vpop.f32.mrb[0].mxu0
        %v5771 = vadd.f32 0.0, %v5770
        %v5772 = vpop.f32.mrb[0].mxu0
        %v5773 = vpop.f32.mrb[0].mxu0
        %v5774 = vadd.f32 0.0, %v5773
        %v5775 = vpop.f32.mrb[0].mxu0
        %5776 = vdwg.mxu0
        %v5777 = vadd.f32 %v5605, %v5715
        %v5778 = vadd.f32 %v5606, %v5718
        %v5779 = vadd.f32 %v5607, %v5723
        %v5780 = vadd.f32 %v5608, %v5726
        %v5781 = vadd.f32 %v5609, %v5731
        %v5782 = vadd.f32 %v5610, %v5734
        %v5783 = vadd.f32 %v5611, %v5739
        %v5784 = vadd.f32 %v5612, %v5742
        %v5785 = vadd.f32 %v5613, %v5747
        %v5786 = vadd.f32 %v5614, %v5750
        %v5787 = vadd.f32 %v5615, %v5755
        %v5788 = vadd.f32 %v5616, %v5758
        %v5789 = vadd.f32 %v5617, %v5763
        %v5790 = vadd.f32 %v5618, %v5766
        %v5791 = vadd.f32 %v5619, %v5771
        %v5792 = vadd.f32 %v5620, %v5774
        %v5793 = vld [vmem:[%s6] sm:$0x1]
        %v5795 = vlaneseq
        %v5796 = vshrl.u32 %v5795, 7
        %v5797 = vsub.s32 0, %v5796
        %v5798 = vrot.slane %v5793, %v5797
        %v5800 = vadd.f32 %v5777, %v5798
        %v5801 = vadd.f32 %v5778, %v5798
        %v5802 = vadd.f32 %v5779, %v5798
        %v5803 = vadd.f32 %v5780, %v5798
        %v5804 = vadd.f32 %v5781, %v5798
        %v5805 = vadd.f32 %v5782, %v5798
        %v5806 = vadd.f32 %v5783, %v5798
        %v5807 = vadd.f32 %v5784, %v5798
        %v5808 = vadd.f32 %v5785, %v5798
        %v5809 = vadd.f32 %v5786, %v5798
        %v5810 = vadd.f32 %v5787, %v5798
        %v5811 = vadd.f32 %v5788, %v5798
        %v5812 = vadd.f32 %v5789, %v5798
        %v5813 = vadd.f32 %v5790, %v5798
        %v5814 = vadd.f32 %v5791, %v5798
        %v5815 = vadd.f32 %v5792, %v5798
        %v5816 = vadd.f32 %v5800, %v5801
        %v5817 = vadd.f32 %v5816, %v5802
        %v5818 = vadd.f32 %v5817, %v5803
        %v5819 = vadd.f32 %v5818, %v5804
        %v5820 = vadd.f32 %v5819, %v5805
        %v5821 = vadd.f32 %v5820, %v5806
        %v5822 = vadd.f32 %v5821, %v5807
        %v5823 = vadd.f32 %v5822, %v5808
        %v5824 = vadd.f32 %v5823, %v5809
        %v5825 = vadd.f32 %v5824, %v5810
        %v5826 = vadd.f32 %v5825, %v5811
        %v5827 = vadd.f32 %v5826, %v5812
        %v5828 = vadd.f32 %v5827, %v5813
        %v5829 = vadd.f32 %v5828, %v5814
        %v5830 = vadd.f32 %v5829, %v5815
        %v5831 = vrot.slane %v5830, 4
        %v5832 = vadd.f32 %v5830, %v5831
        %v5833 = vrot.slane %v5832, 2
        %v5834 = vadd.f32 %v5832, %v5833
        %v5835 = vrot.slane %v5834, 1
        %v5836 = vadd.f32 %v5834, %v5835
        %v5837 = vrcp.pop 128.0
        %v5838 = vmul.f32 %v5836, %v5837
        %v5839 = vpack.c.bf16 %v5838, %v5838
        %v5840 = vld [vmem:[%s7] sm:$0xf]
        %v5841 = vld [vmem:[%s7 + $0x4] sm:$0xf]
        %v5842 = vld [vmem:[%s7 + $0x8] sm:$0xf]
        %v5843 = vld [vmem:[%s7 + $0xc] sm:$0xf]
        %v5844 = vld [vmem:[%s7 + $0x10] sm:$0xf]
        %v5845 = vld [vmem:[%s7 + $0x14] sm:$0xf]
        %v5846 = vld [vmem:[%s7 + $0x18] sm:$0xf]
        %v5847 = vld [vmem:[%s7 + $0x1c] sm:$0xf]
        %v5848 = vld [vmem:[%s7 + $0x20] sm:$0xf]
        %v5849 = vld [vmem:[%s7 + $0x24] sm:$0xf]
        %v5850 = vld [vmem:[%s7 + $0x28] sm:$0xf]
        %v5851 = vld [vmem:[%s7 + $0x2c] sm:$0xf]
        %v5852 = vld [vmem:[%s7 + $0x30] sm:$0xf]
        %v5853 = vld [vmem:[%s7 + $0x34] sm:$0xf]
        %v5854 = vld [vmem:[%s7 + $0x38] sm:$0xf]
        %v5855 = vld [vmem:[%s7 + $0x3c] sm:$0xf]
        %v5856 = vld [vmem:[%s8] sm:$0x1]
        %v5873 = vunpack.c.l.b16 %v5840
        %v5874 = vunpack.c.l.b16 %v5841
        %v5875 = vunpack.c.l.b16 %v5842
        %v5876 = vunpack.c.l.b16 %v5843
        %v5877 = vunpack.c.l.b16 %v5844
        %v5878 = vunpack.c.l.b16 %v5845
        %v5879 = vunpack.c.l.b16 %v5846
        %v5880 = vunpack.c.l.b16 %v5847
        %v5881 = vunpack.c.l.b16 %v5848
        %v5882 = vunpack.c.l.b16 %v5849
        %v5883 = vunpack.c.l.b16 %v5850
        %v5884 = vunpack.c.l.b16 %v5851
        %v5885 = vunpack.c.l.b16 %v5852
        %v5886 = vunpack.c.l.b16 %v5853
        %v5887 = vunpack.c.l.b16 %v5854
        %v5888 = vunpack.c.l.b16 %v5855
        %v5889 = vpack.c.b16 %v5874, %v5873
        %v5890 = vpack.c.b16 %v5876, %v5875
        %v5891 = vpack.c.b16 %v5878, %v5877
        %v5892 = vpack.c.b16 %v5880, %v5879
        %v5893 = vpack.c.b16 %v5882, %v5881
        %v5894 = vpack.c.b16 %v5884, %v5883
        %v5895 = vpack.c.b16 %v5886, %v5885
        %v5896 = vpack.c.b16 %v5888, %v5887
        %5905 = vmatprep.subr.bf16.mxu0 0
        %5906 = vmatpush1.bf16.msra.mxu0 %v5889
        %5907 = vmatprep.subr.bf16.mxu0 0
        %5908 = vmatpush1.bf16.msra.mxu0 %v5890
        %5909 = vmatprep.subr.bf16.mxu0 0
        %5910 = vmatpush1.bf16.msra.mxu0 %v5891
        %5911 = vmatprep.subr.bf16.mxu0 0
        %5912 = vmatpush1.bf16.msra.mxu0 %v5892
        %5913 = vmatprep.subr.bf16.mxu0 0
        %5914 = vmatpush1.bf16.msra.mxu0 %v5893
        %5915 = vmatprep.subr.bf16.mxu0 0
        %5916 = vmatpush1.bf16.msra.mxu0 %v5894
        %5917 = vmatprep.subr.bf16.mxu0 0
        %5918 = vmatpush1.bf16.msra.mxu0 %v5895
        %5919 = vmatprep.subr.bf16.mxu0 0
        %5920 = vmatpush1.bf16.msra.mxu0 %v5896
        %5921 = vmatprep.subr.bf16.mxu0 0
        %5922 = vmatpush1.bf16.msra.mxu0 0
        %5923 = vmatprep.subr.bf16.mxu0 0
        %5924 = vmatpush1.bf16.msra.mxu0 0
        %5925 = vmatprep.subr.bf16.mxu0 0
        %5926 = vmatpush1.bf16.msra.mxu0 0
        %5927 = vmatprep.subr.bf16.mxu0 0
        %5928 = vmatpush1.bf16.msra.mxu0 0
        %5929 = vmatprep.subr.bf16.mxu0 0
        %5930 = vmatpush1.bf16.msra.mxu0 0
        %5931 = vmatprep.subr.bf16.mxu0 0
        %5932 = vmatpush1.bf16.msra.mxu0 0
        %5933 = vmatprep.subr.bf16.mxu0 0
        %5934 = vmatpush1.bf16.msra.mxu0 0
        %5935 = vmatprep.subr.bf16.mxu0 0
        %5936 = vmatpush1.bf16.msra.mxu0 0
        %5937 = vmatprep.mubr.bf16.mxu0 0
        %5938 = vmatmul.mubr.bf16.gmra.mrb[0].mxu0 %v5839
        %v5939 = vpop.f32.mrb[0].mxu0
        %v5940 = vadd.f32 %v5856, %v5939
        %v5941 = vpop.f32.mrb[0].mxu0
        %v5942 = vpop.f32.mrb[0].mxu0
        %v5943 = vpop.f32.mrb[0].mxu0
        %5944 = vdwg.mxu0
        %v5945 = vmax.f32 %v5940, 0.0
        %v5946 = vpack.c.bf16 %v5945, %v5945
        %v5947 = vld [vmem:[%s9] sm:$0xf]
        %v5948 = vld [vmem:[%s10] sm:$0x1]
        %vm5949 = vcmask 64512
        %v5951 = vsel %vm5949, %v5946, 0
        %vm5953 = vcmask 1043456
        %v5955 = vsel %vm5953, %v5947, 0
        %5957 = vmatprep.subr.bf16.mxu0 0
        %5958 = vmatpush1.bf16.msra.mxu0 %v5955
        %5959 = vmatprep.subr.bf16.mxu0 0
        %5960 = vmatpush1.bf16.msra.mxu0 0
        %5961 = vmatprep.subr.bf16.mxu0 0
        %5962 = vmatpush1.bf16.msra.mxu0 0
        %5963 = vmatprep.subr.bf16.mxu0 0
        %5964 = vmatpush1.bf16.msra.mxu0 0
        %5965 = vmatprep.subr.bf16.mxu0 0
        %5966 = vmatpush1.bf16.msra.mxu0 0
        %5967 = vmatprep.subr.bf16.mxu0 0
        %5968 = vmatpush1.bf16.msra.mxu0 0
        %5969 = vmatprep.subr.bf16.mxu0 0
        %5970 = vmatpush1.bf16.msra.mxu0 0
        %5971 = vmatprep.subr.bf16.mxu0 0
        %5972 = vmatpush1.bf16.msra.mxu0 0
        %5973 = vmatprep.subr.bf16.mxu0 0
        %5974 = vmatpush1.bf16.msra.mxu0 0
        %5975 = vmatprep.subr.bf16.mxu0 0
        %5976 = vmatpush1.bf16.msra.mxu0 0
        %5977 = vmatprep.subr.bf16.mxu0 0
        %5978 = vmatpush1.bf16.msra.mxu0 0
        %5979 = vmatprep.subr.bf16.mxu0 0
        %5980 = vmatpush1.bf16.msra.mxu0 0
        %5981 = vmatprep.subr.bf16.mxu0 0
        %5982 = vmatpush1.bf16.msra.mxu0 0
        %5983 = vmatprep.subr.bf16.mxu0 0
        %5984 = vmatpush1.bf16.msra.mxu0 0
        %5985 = vmatprep.subr.bf16.mxu0 0
        %5986 = vmatpush1.bf16.msra.mxu0 0
        %5987 = vmatprep.subr.bf16.mxu0 0
        %5988 = vmatpush1.bf16.msra.mxu0 0
        %5989 = vmatprep.mubr.bf16.mxu0 0
        %5990 = vmatmul.mubr.bf16.gmra.mrb[0].mxu0 %v5951
        %v5991 = vpop.f32.mrb[0].mxu0
        %v5992 = vadd.f32 %v5948, %v5991
        %v5993 = vpop.f32.mrb[0].mxu0
        %v5994 = vpop.f32.mrb[0].mxu0
        %v5995 = vpop.f32.mrb[0].mxu0
        %5996 = vdwg.mxu0
        %v5997 = vxor.u32 %v5992, 2147483648
        %v5998 = vmul.f32 %v5997, 1.442695
        %v5999 = vpow.pop %v5998
        %v6000 = vadd.f32 %v5999, 1.0
        %v6001 = vrcp.pop %v6000
        %v6002 = vmul.f32 1.0, %v6001
        %v6003 = vlaneseq
        %v6004 = vshrl.u32 %v6003, 7
        %v6005 = vsub.s32 0, %v6004
        %v6006 = vrot.slane %v6002, %v6005
        %v6007 = vmul.f32 %v5800, %v6006
        %v6008 = vmul.f32 %v5801, %v6006
        %v6009 = vmul.f32 %v5802, %v6006
        %v6010 = vmul.f32 %v5803, %v6006
        %v6011 = vmul.f32 %v5804, %v6006
        %v6012 = vmul.f32 %v5805, %v6006
        %v6013 = vmul.f32 %v5806, %v6006
        %v6014 = vmul.f32 %v5807, %v6006
        %v6015 = vmul.f32 %v5808, %v6006
        %v6016 = vmul.f32 %v5809, %v6006
        %v6017 = vmul.f32 %v5810, %v6006
        %v6018 = vmul.f32 %v5811, %v6006
        %v6019 = vmul.f32 %v5812, %v6006
        %v6020 = vmul.f32 %v5813, %v6006
        %v6021 = vmul.f32 %v5814, %v6006
        %v6022 = vmul.f32 %v5815, %v6006
        %v6023 = vadd.f32 %v6007, %v419
        %v6024 = vadd.f32 %v6008, %v420
        %v6025 = vadd.f32 %v6009, %v421
        %v6026 = vadd.f32 %v6010, %v422
        %v6027 = vadd.f32 %v6011, %v423
        %v6028 = vadd.f32 %v6012, %v424
        %v6029 = vadd.f32 %v6013, %v425
        %v6030 = vadd.f32 %v6014, %v426
        %v6031 = vadd.f32 %v6015, %v427
        %v6032 = vadd.f32 %v6016, %v428
        %v6033 = vadd.f32 %v6017, %v429
        %v6034 = vadd.f32 %v6018, %v430
        %v6035 = vadd.f32 %v6019, %v431
        %v6036 = vadd.f32 %v6020, %v432
        %v6037 = vadd.f32 %v6021, %v433
        %v6038 = vadd.f32 %v6022, %v434
        %v6039 = vmax.f32 %v6023, 0.0
        %v6040 = vmax.f32 %v6024, 0.0
        %v6041 = vmax.f32 %v6025, 0.0
        %v6042 = vmax.f32 %v6026, 0.0
        %v6043 = vmax.f32 %v6027, 0.0
        %v6044 = vmax.f32 %v6028, 0.0
        %v6045 = vmax.f32 %v6029, 0.0
        %v6046 = vmax.f32 %v6030, 0.0
        %v6047 = vmax.f32 %v6031, 0.0
        %v6048 = vmax.f32 %v6032, 0.0
        %v6049 = vmax.f32 %v6033, 0.0
        %v6050 = vmax.f32 %v6034, 0.0
        %v6051 = vmax.f32 %v6035, 0.0
        %v6052 = vmax.f32 %v6036, 0.0
        %v6053 = vmax.f32 %v6037, 0.0
        %v6054 = vmax.f32 %v6038, 0.0
        %6055 = vst [vmem:[%s417] sm:$0xff] %v6039
        %6056 = vst [vmem:[%s417 + $0x8] sm:$0xff] %v6040
        %6057 = vst [vmem:[%s417 + $0x10] sm:$0xff] %v6041
        %6058 = vst [vmem:[%s417 + $0x18] sm:$0xff] %v6042
        %6059 = vst [vmem:[%s417 + $0x20] sm:$0xff] %v6043
        %6060 = vst [vmem:[%s417 + $0x28] sm:$0xff] %v6044
        %6061 = vst [vmem:[%s417 + $0x30] sm:$0xff] %v6045
        %6062 = vst [vmem:[%s417 + $0x38] sm:$0xff] %v6046
        %6063 = vst [vmem:[%s417 + $0x40] sm:$0xff] %v6047
        %6064 = vst [vmem:[%s417 + $0x48] sm:$0xff] %v6048
        %6065 = vst [vmem:[%s417 + $0x50] sm:$0xff] %v6049
        %6066 = vst [vmem:[%s417 + $0x58] sm:$0xff] %v6050
        %6067 = vst [vmem:[%s417 + $0x60] sm:$0xff] %v6051
        %6068 = vst [vmem:[%s417 + $0x68] sm:$0xff] %v6052
        %6069 = vst [vmem:[%s417 + $0x70] sm:$0xff] %v6053
        %6070 = vst [vmem:[%s417 + $0x78] sm:$0xff] %v6054
        %s6071 = sand.u32 %s273, 1
        %s6072 = scalar_lea.sflag [#allocation4], %s6071
        %s6073 = sand.u32 %s273, 1
        %s6074 = smul.addr %s6073, 128
        %s6075 = scalar_lea.vmem [#allocation7], %s6074
        // Predicated region
        $region73: #{tpu_custom_call.1} parent=63 // pred_check
          %p6076 = pneg %p283
        $region74: #{tpu_custom_call.1} parent=63 // pred_check_branch
          %6078 = sbr.rel (%p6076) target = $region76
        $region75: #{tpu_custom_call.1} parent=63 // pred_region
          %s6080 = ssub.s32 2048, 2048
          %6081 = vsyncadd %s6072, %s6080
          %s6082 = smul.addr %s29, 16
          %s6083 = smul.addr %s6082, 128
          %s6084 = scalar_lea.hbm %s11, %s6083
          %s6085 = sshll.u32 %s6075, 4
          %s6086 = int_to_ptr.vmem [resolvable:$true] %s6085
          %6091 = dma.vmem_to_hbm [thread:$0]  %s6086, 2048, %s6084, %s6072, 128, 128, 8
        $region76: #{tpu_custom_call.1} parent=63 // pred_fallthru
          _
      $region64: #{tpu_custom_call.1} parent=5 // pred_fallthru
        _
      %p6092 = scmp.le.s32.totalorder 2, %s24
      // Predicated region
      $region77: #{tpu_custom_call.1} parent=5 // pred_check
        %p6093 = pneg %p6092
      $region78: #{tpu_custom_call.1} parent=5 // pred_check_branch
        %6095 = sbr.rel (%p6093) target = $region80
      $region79: #{tpu_custom_call.1} parent=5 // pred_region
        %s6096 = ssub.s32 %s24, 2
        // Predicated region
        $region81: #{tpu_custom_call.1} parent=79 // pred_check
          %p6097 = pneg %p289
        $region82: #{tpu_custom_call.1} parent=79 // pred_check_branch
          %6099 = sbr.rel (%p6097) target = $region84
        $region83: #{tpu_custom_call.1} parent=79 // pred_region
          %s6100 = sand.u32 %s274, 1
          %s6101 = scalar_lea.sflag [#allocation4], %s6100
          %s6102 = sand.u32 %s274, 1
          %s6103 = smul.addr %s6102, 128
          %s6104 = scalar_lea.vmem [#allocation7], %s6103
          %6105 = dma.done %s6101, 2048
        $region84: #{tpu_custom_call.1} parent=79 // pred_fallthru
          _
      $region80: #{tpu_custom_call.1} parent=5 // pred_fallthru
        _
    $region6: #{tpu_custom_call.1} parent=1 // loop_footer
      %s28 = sadd.s32 1, %s24
    $region7: #{tpu_custom_call.1} parent=1 // loop_footer_branch
      %23 = sbr.rel target = $region3
    $region8: #{tpu_custom_call.1} parent=1 // loop_exit
      _
    %6106 = vsyncpa [#allocation3], 1
    %s6107 = scalar_lea.sflag [#allocation3], 1
    %6108 = vsyncpa %s6107, 1
    %6109 = vsyncpa [#allocation6], 1
    %6110 = vsyncpa [#allocation4], 1
    %s6111 = scalar_lea.sflag [#allocation4], 1
    %6112 = vsyncpa %s6111, 1

</llo_original>
